<compile_context>
chip_gen: v7x
topology: tpu7x:2x2x1
jax: 0.10.0
libtpu: 0.0.40
codegen_flags: <defaults>
</compile_context>

<pallas_src>
import functools
import math

import jax
import jax.numpy as jnp
from jax.experimental import pallas as pl
from jax.experimental.pallas import tpu as pltpu


# ----------------------------- in-kernel helpers -----------------------------

def _mm(a, b):
    """MXU matmul: bf16 operands, f32 accumulation."""
    return jnp.dot(a.astype(jnp.bfloat16), b.astype(jnp.bfloat16),
                   preferred_element_type=jnp.float32)


def _ln(x, g, b, eps=1e-5):
    """Row-wise LayerNorm in f32 (PyTorch eps=1e-5)."""
    inv_n = 1.0 / x.shape[-1]
    mean = jnp.sum(x, axis=-1, keepdims=True) * inv_n
    xc = x - mean
    var = jnp.sum(xc * xc, axis=-1, keepdims=True) * inv_n
    return xc * jax.lax.rsqrt(var + eps) * g + b


# ----------------------------- fused kernels -----------------------------

def _vision_embed_kernel(patch_ref, convw_ref, cls_ref, pos_ref, g_ref, b_ref,
                         o_ref, *, B, N):
    """Patch matmul + class token + positional embedding + ln_pre, per batch element."""
    g = g_ref[...]
    bb = b_ref[...]
    cls = cls_ref[...]                                   # (1, W)
    for bi in range(B):
        # class token row
        o_ref[bi, 0:1, :] = _ln(cls + pos_ref[0:1, :], g, bb)
        # patch rows: (N, C*P*P) @ (C*P*P, W)
        pe = _mm(patch_ref[bi * N:(bi + 1) * N, :], convw_ref[...])
        o_ref[bi, 1:N + 1, :] = _ln(pe + pos_ref[1:N + 1, :], g, bb)


def _resblock_kernel(x_ref, ln1_g, ln1_b, wqkv, bqkv, wo, bo,
                     ln2_g, ln2_b, wfc, bfc, wpj, bpj,
                     o_ref, qkv_scr, attn_scr, *, n_heads, causal):
    """One full CLIP residual attention block for a single batch element (grid over B)."""
    T, D = x_ref.shape[1], x_ref.shape[2]
    Dh = D // n_heads
    scale = 1.0 / math.sqrt(Dh)

    x = x_ref[0].astype(jnp.float32)                     # (T, D)

    # --- attention branch ---
    h = _ln(x, ln1_g[...], ln1_b[...])
    qkv_scr[...] = _mm(h, wqkv[...]) + bqkv[...]         # (T, 3D)

    if causal:
        r = jax.lax.broadcasted_iota(jnp.int32, (T, T), 0)
        c = jax.lax.broadcasted_iota(jnp.int32, (T, T), 1)
        neg = jnp.where(c > r, jnp.float32(-1e9), jnp.float32(0.0))

    for hh in range(n_heads):
        q = qkv_scr[:, hh * Dh:(hh + 1) * Dh]
        k = qkv_scr[:, D + hh * Dh:D + (hh + 1) * Dh]
        v = qkv_scr[:, 2 * D + hh * Dh:2 * D + (hh + 1) * Dh]
        s = jax.lax.dot_general(
            q.astype(jnp.bfloat16), k.astype(jnp.bfloat16),
            (((1,), (1,)), ((), ())), preferred_element_type=jnp.float32) * scale
        if causal:
            s = s + neg
        s = s - jnp.max(s, axis=-1, keepdims=True)
        p = jnp.exp(s)
        p = p * pl.reciprocal(jnp.sum(p, axis=-1, keepdims=True), approx=True)
        attn_scr[:, hh * Dh:(hh + 1) * Dh] = _mm(p, v)   # (T, Dh)

    x = x + _mm(attn_scr[...], wo[...]) + bo[...]        # out-proj + residual

    # --- MLP branch ---
    h2 = _ln(x, ln2_g[...], ln2_b[...])
    h2 = _mm(h2, wfc[...]) + bfc[...]
    h2 = h2 * jax.nn.sigmoid(1.702 * h2)                 # QuickGELU
    x = x + _mm(h2, wpj[...]) + bpj[...]                 # proj + residual

    o_ref[0] = x.astype(o_ref.dtype)


def _head_kernel(imgc_ref, vg, vb, vproj, txte_ref, tg, tb, tproj,
                 w1, b1, w2, b2, pred_ref, imge_ref, lange_ref, *, ed):
    """ln_post + visual proj, ln_final + text proj, concat-fusion MLP (Linear-ReLU-Linear)."""
    img = _ln(imgc_ref[...], vg[...], vb[...])
    img_emb = _mm(img, vproj[...])                       # (B, ed)
    txt = _ln(txte_ref[...], tg[...], tb[...])
    lang_emb = _mm(txt, tproj[...])                      # (B, ed)

    # concat([img, lang]) @ W1  ==  img @ W1[:ed] + lang @ W1[ed:]
    h = _mm(img_emb, w1[0:ed, :]) + _mm(lang_emb, w1[ed:2 * ed, :]) + b1[...]
    h = jnp.maximum(h, 0.0)
    pred = _mm(h, w2[...]) + b2[...]

    pred_ref[...] = pred.astype(pred_ref.dtype)
    imge_ref[...] = img_emb.astype(imge_ref.dtype)
    lange_ref[...] = lang_emb.astype(lange_ref.dtype)


# ----------------------------- pallas_call wrappers -----------------------------

def vision_embed(patches, vp, B, N):
    width = vp["conv1_w"].shape[1]
    T = N + 1
    return pl.pallas_call(
        functools.partial(_vision_embed_kernel, B=B, N=N),
        out_shape=jax.ShapeDtypeStruct((B, T, width), jnp.float32),
    )(patches, vp["conv1_w"], vp["class_embedding"], vp["pos_embedding"],
      vp["ln_pre_g"], vp["ln_pre_b"])


def resblock(x, p, n_heads, causal):
    B, T, D = x.shape

    def wspec(shape):
        return pl.BlockSpec(shape, lambda b: (0,) * len(shape))

    return pl.pallas_call(
        functools.partial(_resblock_kernel, n_heads=n_heads, causal=causal),
        grid=(B,),
        in_specs=[
            pl.BlockSpec((1, T, D), lambda b: (b, 0, 0)),          # x
            wspec((1, D)), wspec((1, D)),                          # ln1
            wspec((D, 3 * D)), wspec((1, 3 * D)),                  # qkv
            wspec((D, D)), wspec((1, D)),                          # out proj
            wspec((1, D)), wspec((1, D)),                          # ln2
            wspec((D, 4 * D)), wspec((1, 4 * D)),                  # mlp fc
            wspec((4 * D, D)), wspec((1, D)),                      # mlp proj
        ],
        out_specs=pl.BlockSpec((1, T, D), lambda b: (b, 0, 0)),
        out_shape=jax.ShapeDtypeStruct((B, T, D), jnp.float32),
        scratch_shapes=[pltpu.VMEM((T, 3 * D), jnp.float32),
                        pltpu.VMEM((T, D), jnp.float32)],
        compiler_params=pltpu.CompilerParams(dimension_semantics=("parallel",)),
    )(x, p["ln1_g"], p["ln1_b"],
      p["attn"]["in_proj_w"], p["attn"]["in_proj_b"],
      p["attn"]["out_proj_w"], p["attn"]["out_proj_b"],
      p["ln2_g"], p["ln2_b"],
      p["mlp_fc_w"], p["mlp_fc_b"], p["mlp_proj_w"], p["mlp_proj_b"])


def fused_head(img_cls, txt_eot, vp, tp, fp, ed):
    B = img_cls.shape[0]
    out = jax.ShapeDtypeStruct((B, ed), jnp.float32)
    return pl.pallas_call(
        functools.partial(_head_kernel, ed=ed),
        out_shape=(out, out, out),
    )(img_cls, vp["ln_post_g"], vp["ln_post_b"], vp["proj"],
      txt_eot, tp["ln_final_g"], tp["ln_final_b"], tp["text_projection"],
      fp["w1"], fp["b1"], fp["w2"], fp["b2"])


# ----------------------------- model glue -----------------------------

def encode_image(img, vp, n_heads, patch_size):
    # img: (B, C, H, W) NCHW
    B, C, H, W = img.shape
    P = patch_size
    gh, gw = H // P, W // P
    N = gh * gw
    # patch extraction (glue): flatten each (C, P, P) patch in conv-weight order
    patches = (img.reshape(B, C, gh, P, gw, P)
                  .transpose(0, 2, 4, 1, 3, 5)
                  .reshape(B * N, C * P * P)).astype(jnp.float32)
    x = vision_embed(patches, vp, B, N)                  # (B, N+1, width), already ln_pre'd
    for blk in vp["blocks"]:
        x = resblock(x, blk, n_heads, causal=False)
    return x[:, 0, :]                                    # class token (pre ln_post)


def encode_text(tokens, tp, n_heads):
    B, T = tokens.shape
    # embedding gather stays in XLA glue (data-dependent gather)
    x = tp["token_embedding"][tokens] + tp["pos_embedding"][None]   # (B, T, width)
    for blk in tp["blocks"]:
        x = resblock(x, blk, n_heads, causal=True)
    eot = jnp.argmax(tokens, axis=-1)                    # highest token id = EOT
    return x[jnp.arange(B), eot]                         # (B, width), pre ln_final


def roboclip_forward(img, tokens, params, cfg):
    img_cls = encode_image(img, params["visual"], cfg["vision_heads"], cfg["patch_size"])
    txt_eot = encode_text(tokens, params["text"], cfg["text_heads"])
    # fusion_type == 'concat': ln_post/proj, ln_final/proj, cat -> Linear -> ReLU -> Linear
    pred_emb, img_emb, lang_emb = fused_head(
        img_cls, txt_eot, params["visual"], params["text"], params["fusion"],
        cfg["embed_dim"])
    return pred_emb, img_emb, lang_emb


# ----------------------------- deterministic params -----------------------------

def init_params(key, cfg):
    keys = iter(jax.random.split(key, 256))

    def nrm(shape, scale=0.02):
        return scale * jax.random.normal(next(keys), shape, jnp.float32)

    def init_block(d):
        return {
            "ln1_g": jnp.ones((1, d), jnp.float32), "ln1_b": jnp.zeros((1, d), jnp.float32),
            "ln2_g": jnp.ones((1, d), jnp.float32), "ln2_b": jnp.zeros((1, d), jnp.float32),
            "attn": {
                "in_proj_w": nrm((d, 3 * d)), "in_proj_b": jnp.zeros((1, 3 * d), jnp.float32),
                "out_proj_w": nrm((d, d)), "out_proj_b": jnp.zeros((1, d), jnp.float32),
            },
            "mlp_fc_w": nrm((d, 4 * d)), "mlp_fc_b": jnp.zeros((1, 4 * d), jnp.float32),
            "mlp_proj_w": nrm((4 * d, d)), "mlp_proj_b": jnp.zeros((1, d), jnp.float32),
        }

    C, P = cfg["channels"], cfg["patch_size"]
    vw, tw, ed = cfg["vision_width"], cfg["text_width"], cfg["embed_dim"]
    n_patches = (cfg["image_size"] // P) ** 2

    visual = {
        "conv1_w": nrm((C * P * P, vw)),
        "class_embedding": nrm((1, vw)),
        "pos_embedding": nrm((n_patches + 1, vw), 0.01),
        "ln_pre_g": jnp.ones((1, vw), jnp.float32), "ln_pre_b": jnp.zeros((1, vw), jnp.float32),
        "blocks": [init_block(vw) for _ in range(cfg["vision_layers"])],
        "ln_post_g": jnp.ones((1, vw), jnp.float32), "ln_post_b": jnp.zeros((1, vw), jnp.float32),
        "proj": nrm((vw, ed)),
    }
    text = {
        "token_embedding": nrm((cfg["vocab_size"], tw)),
        "pos_embedding": nrm((cfg["context_length"], tw), 0.01),
        "blocks": [init_block(tw) for _ in range(cfg["text_layers"])],
        "ln_final_g": jnp.ones((1, tw), jnp.float32), "ln_final_b": jnp.zeros((1, tw), jnp.float32),
        "text_projection": nrm((tw, ed)),
    }
    fusion = {
        "w1": nrm((2 * ed, ed)), "b1": jnp.zeros((1, ed), jnp.float32),
        "w2": nrm((ed, ed)), "b2": jnp.zeros((1, ed), jnp.float32),
    }
    # logit_scale exists as a trained parameter in RoboCLIP but is unused in forward().
    logit_scale = jnp.asarray(math.log(1.0 / 0.07), jnp.float32)
    return {"visual": visual, "text": text, "fusion": fusion, "logit_scale": logit_scale}


# ----------------------------- main -----------------------------

if __name__ == "__main__":
    # Lane-dense scaled-down config (widths / embed_dim = 128, heads = width // 64 like CLIP).
    cfg = dict(
        channels=3, image_size=16, patch_size=8,
        vision_width=128, vision_layers=2, vision_heads=2,
        embed_dim=128,
        text_width=128, text_layers=2, text_heads=2,
        context_length=8, vocab_size=64,
        batch=2,
    )

    key = jax.random.PRNGKey(0)
    k_params, k_img, k_txt = jax.random.split(key, 3)

    params = init_params(k_params, cfg)

    img = jax.random.normal(k_img, (cfg["batch"], cfg["channels"],
                                    cfg["image_size"], cfg["image_size"]), jnp.float32)

    # tokens: random ids in [1, vocab-2], with the highest id (EOT) placed at varying positions.
    tokens = jax.random.randint(k_txt, (cfg["batch"], cfg["context_length"]),
                                1, cfg["vocab_size"] - 1, dtype=jnp.int32)
    tokens = tokens.at[0, 5].set(cfg["vocab_size"] - 1)
    tokens = tokens.at[1, 7].set(cfg["vocab_size"] - 1)

    fwd = jax.jit(lambda im, tk, pr: roboclip_forward(im, tk, pr, cfg))
    pred_emb, img_emb, lang_emb = fwd(img, tokens, params)
    jax.block_until_ready((pred_emb, img_emb, lang_emb))

    assert pred_emb.shape == (cfg["batch"], cfg["embed_dim"])
    assert img_emb.shape == (cfg["batch"], cfg["embed_dim"])
    assert lang_emb.shape == (cfg["batch"], cfg["embed_dim"])
    assert bool(jnp.all(jnp.isfinite(pred_emb)))
    print("KERNEL_OK")
</pallas_src>

<mosaic_0001>
module attributes {stable_mosaic.version = 11 : i64} {
  func.func @_vision_embed_kernel(%arg0: memref<8x192xf32, #tpu.memory_space<vmem>>, %arg1: memref<192x128xf32, #tpu.memory_space<vmem>>, %arg2: memref<1x128xf32, #tpu.memory_space<vmem>>, %arg3: memref<5x128xf32, #tpu.memory_space<vmem>>, %arg4: memref<1x128xf32, #tpu.memory_space<vmem>>, %arg5: memref<1x128xf32, #tpu.memory_space<vmem>>, %arg6: memref<2x5x128xf32, #tpu.memory_space<vmem>>) attributes {dimension_semantics = [], scalar_prefetch = 0 : i64, scratch_operands = 0 : i64, tpu.core_type = #tpu.core_type<tc>} {
    %c0 = arith.constant 0 : index
    %c0_0 = arith.constant 0 : index
    %0 = vector.load %arg4[%c0, %c0_0] : memref<1x128xf32, #tpu.memory_space<vmem>>, vector<1x128xf32>
    %c0_1 = arith.constant 0 : index
    %c0_2 = arith.constant 0 : index
    %1 = vector.load %arg5[%c0_1, %c0_2] : memref<1x128xf32, #tpu.memory_space<vmem>>, vector<1x128xf32>
    %c0_3 = arith.constant 0 : index
    %c0_4 = arith.constant 0 : index
    %2 = vector.load %arg2[%c0_3, %c0_4] : memref<1x128xf32, #tpu.memory_space<vmem>>, vector<1x128xf32>
    %c0_5 = arith.constant 0 : index
    %c0_6 = arith.constant 0 : index
    %3 = vector.load %arg3[%c0_5, %c0_6] : memref<5x128xf32, #tpu.memory_space<vmem>>, vector<1x128xf32>
    %4 = arith.addf %2, %3 : vector<1x128xf32>
    %cst = arith.constant dense<0.000000e+00> : vector<1xf32>
    %5 = vector.multi_reduction <add>, %4, %cst [1] : vector<1x128xf32> to vector<1xf32>
    %6 = vector.shape_cast %5 : vector<1xf32> to vector<1x1xf32>
    %cst_7 = arith.constant 7.812500e-03 : f32
    %7 = vector.broadcast %cst_7 : f32 to vector<1x1xf32>
    %8 = arith.mulf %6, %7 : vector<1x1xf32>
    %9 = vector.broadcast %8 : vector<1x1xf32> to vector<1x128xf32>
    %10 = arith.subf %4, %9 : vector<1x128xf32>
    %11 = arith.mulf %10, %10 : vector<1x128xf32>
    %cst_8 = arith.constant dense<0.000000e+00> : vector<1xf32>
    %12 = vector.multi_reduction <add>, %11, %cst_8 [1] : vector<1x128xf32> to vector<1xf32>
    %13 = vector.shape_cast %12 : vector<1xf32> to vector<1x1xf32>
    %cst_9 = arith.constant 7.812500e-03 : f32
    %14 = vector.broadcast %cst_9 : f32 to vector<1x1xf32>
    %15 = arith.mulf %13, %14 : vector<1x1xf32>
    %cst_10 = arith.constant 9.99999974E-6 : f32
    %16 = vector.broadcast %cst_10 : f32 to vector<1x1xf32>
    %17 = arith.addf %15, %16 : vector<1x1xf32>
    %18 = math.rsqrt %17 : vector<1x1xf32>
    %19 = vector.broadcast %18 : vector<1x1xf32> to vector<1x128xf32>
    %20 = arith.mulf %10, %19 : vector<1x128xf32>
    %21 = arith.mulf %20, %0 : vector<1x128xf32>
    %22 = arith.addf %21, %1 : vector<1x128xf32>
    %c0_11 = arith.constant 0 : index
    %c0_12 = arith.constant 0 : index
    %c0_13 = arith.constant 0 : index
    %23 = vector.load %arg6[%c0_11, %c0_12, %c0_13] : memref<2x5x128xf32, #tpu.memory_space<vmem>>, vector<1x1x128xf32>
    %24 = vector.shape_cast %23 : vector<1x1x128xf32> to vector<1x128xf32>
    %25 = vector.shape_cast %22 : vector<1x128xf32> to vector<1x1x128xf32>
    tpu.vector_store %arg6[%c0_11, %c0_12, %c0_13], %25 {strides = array<i32>} : memref<2x5x128xf32, #tpu.memory_space<vmem>>, vector<1x1x128xf32>,
    %c0_14 = arith.constant 0 : index
    %c0_15 = arith.constant 0 : index
    %26 = vector.load %arg0[%c0_14, %c0_15] : memref<8x192xf32, #tpu.memory_space<vmem>>, vector<4x192xf32>
    %c0_16 = arith.constant 0 : index
    %c0_17 = arith.constant 0 : index
    %27 = vector.load %arg1[%c0_16, %c0_17] : memref<192x128xf32, #tpu.memory_space<vmem>>, vector<192x128xf32>
    %28 = arith.truncf %26 : vector<4x192xf32> to vector<4x192xbf16>
    %29 = arith.truncf %27 : vector<192x128xf32> to vector<192x128xbf16>
    %cst_18 = arith.constant dense<0.000000e+00> : vector<4x128xf32>
    %30 = tpu.matmul %28, %29, %cst_18 {dimension_numbers = #tpu.dot_dimension_numbers<[1], [0], [0], [1], [0, 0, 1, 1], [], []>} : vector<4x192xbf16>, vector<192x128xbf16>, vector<4x128xf32> -> vector<4x128xf32>
    %c1 = arith.constant 1 : index
    %c0_19 = arith.constant 0 : index
    %31 = vector.load %arg3[%c1, %c0_19] : memref<5x128xf32, #tpu.memory_space<vmem>>, vector<4x128xf32>
    %32 = arith.addf %30, %31 : vector<4x128xf32>
    %cst_20 = arith.constant dense<0.000000e+00> : vector<4xf32>
    %33 = vector.multi_reduction <add>, %32, %cst_20 [1] : vector<4x128xf32> to vector<4xf32>
    %34 = vector.shape_cast %33 : vector<4xf32> to vector<4x1xf32>
    %cst_21 = arith.constant 7.812500e-03 : f32
    %35 = vector.broadcast %cst_21 : f32 to vector<4x1xf32>
    %36 = arith.mulf %34, %35 : vector<4x1xf32>
    %37 = vector.broadcast %36 : vector<4x1xf32> to vector<4x128xf32>
    %38 = arith.subf %32, %37 : vector<4x128xf32>
    %39 = arith.mulf %38, %38 : vector<4x128xf32>
    %cst_22 = arith.constant dense<0.000000e+00> : vector<4xf32>
    %40 = vector.multi_reduction <add>, %39, %cst_22 [1] : vector<4x128xf32> to vector<4xf32>
    %41 = vector.shape_cast %40 : vector<4xf32> to vector<4x1xf32>
    %cst_23 = arith.constant 7.812500e-03 : f32
    %42 = vector.broadcast %cst_23 : f32 to vector<4x1xf32>
    %43 = arith.mulf %41, %42 : vector<4x1xf32>
    %cst_24 = arith.constant 9.99999974E-6 : f32
    %44 = vector.broadcast %cst_24 : f32 to vector<4x1xf32>
    %45 = arith.addf %43, %44 : vector<4x1xf32>
    %46 = math.rsqrt %45 : vector<4x1xf32>
    %47 = vector.broadcast %46 : vector<4x1xf32> to vector<4x128xf32>
    %48 = arith.mulf %38, %47 : vector<4x128xf32>
    %49 = vector.broadcast %0 : vector<1x128xf32> to vector<4x128xf32>
    %50 = arith.mulf %48, %49 : vector<4x128xf32>
    %51 = vector.broadcast %1 : vector<1x128xf32> to vector<4x128xf32>
    %52 = arith.addf %50, %51 : vector<4x128xf32>
    %c0_25 = arith.constant 0 : index
    %c1_26 = arith.constant 1 : index
    %c0_27 = arith.constant 0 : index
    %53 = vector.load %arg6[%c0_25, %c1_26, %c0_27] : memref<2x5x128xf32, #tpu.memory_space<vmem>>, vector<1x4x128xf32>
    %54 = vector.shape_cast %53 : vector<1x4x128xf32> to vector<4x128xf32>
    %55 = vector.shape_cast %52 : vector<4x128xf32> to vector<1x4x128xf32>
    tpu.vector_store %arg6[%c0_25, %c1_26, %c0_27], %55 {strides = array<i32>} : memref<2x5x128xf32, #tpu.memory_space<vmem>>, vector<1x4x128xf32>,
    %c0_28 = arith.constant 0 : index
    %c0_29 = arith.constant 0 : index
    %56 = vector.load %arg3[%c0_28, %c0_29] : memref<5x128xf32, #tpu.memory_space<vmem>>, vector<1x128xf32>
    %57 = arith.addf %2, %56 : vector<1x128xf32>
    %cst_30 = arith.constant dense<0.000000e+00> : vector<1xf32>
    %58 = vector.multi_reduction <add>, %57, %cst_30 [1] : vector<1x128xf32> to vector<1xf32>
    %59 = vector.shape_cast %58 : vector<1xf32> to vector<1x1xf32>
    %cst_31 = arith.constant 7.812500e-03 : f32
    %60 = vector.broadcast %cst_31 : f32 to vector<1x1xf32>
    %61 = arith.mulf %59, %60 : vector<1x1xf32>
    %62 = vector.broadcast %61 : vector<1x1xf32> to vector<1x128xf32>
    %63 = arith.subf %57, %62 : vector<1x128xf32>
    %64 = arith.mulf %63, %63 : vector<1x128xf32>
    %cst_32 = arith.constant dense<0.000000e+00> : vector<1xf32>
    %65 = vector.multi_reduction <add>, %64, %cst_32 [1] : vector<1x128xf32> to vector<1xf32>
    %66 = vector.shape_cast %65 : vector<1xf32> to vector<1x1xf32>
    %cst_33 = arith.constant 7.812500e-03 : f32
    %67 = vector.broadcast %cst_33 : f32 to vector<1x1xf32>
    %68 = arith.mulf %66, %67 : vector<1x1xf32>
    %cst_34 = arith.constant 9.99999974E-6 : f32
    %69 = vector.broadcast %cst_34 : f32 to vector<1x1xf32>
    %70 = arith.addf %68, %69 : vector<1x1xf32>
    %71 = math.rsqrt %70 : vector<1x1xf32>
    %72 = vector.broadcast %71 : vector<1x1xf32> to vector<1x128xf32>
    %73 = arith.mulf %63, %72 : vector<1x128xf32>
    %74 = arith.mulf %73, %0 : vector<1x128xf32>
    %75 = arith.addf %74, %1 : vector<1x128xf32>
    %c1_35 = arith.constant 1 : index
    %c0_36 = arith.constant 0 : index
    %c0_37 = arith.constant 0 : index
    %76 = vector.load %arg6[%c1_35, %c0_36, %c0_37] : memref<2x5x128xf32, #tpu.memory_space<vmem>>, vector<1x1x128xf32>
    %77 = vector.shape_cast %76 : vector<1x1x128xf32> to vector<1x128xf32>
    %78 = vector.shape_cast %75 : vector<1x128xf32> to vector<1x1x128xf32>
    tpu.vector_store %arg6[%c1_35, %c0_36, %c0_37], %78 {strides = array<i32>} : memref<2x5x128xf32, #tpu.memory_space<vmem>>, vector<1x1x128xf32>,
    %c4 = arith.constant 4 : index
    %c0_38 = arith.constant 0 : index
    %79 = vector.load %arg0[%c4, %c0_38] : memref<8x192xf32, #tpu.memory_space<vmem>>, vector<4x192xf32>
    %c0_39 = arith.constant 0 : index
    %c0_40 = arith.constant 0 : index
    %80 = vector.load %arg1[%c0_39, %c0_40] : memref<192x128xf32, #tpu.memory_space<vmem>>, vector<192x128xf32>
    %81 = arith.truncf %79 : vector<4x192xf32> to vector<4x192xbf16>
    %82 = arith.truncf %80 : vector<192x128xf32> to vector<192x128xbf16>
    %cst_41 = arith.constant dense<0.000000e+00> : vector<4x128xf32>
    %83 = tpu.matmul %81, %82, %cst_41 {dimension_numbers = #tpu.dot_dimension_numbers<[1], [0], [0], [1], [0, 0, 1, 1], [], []>} : vector<4x192xbf16>, vector<192x128xbf16>, vector<4x128xf32> -> vector<4x128xf32>
    %c1_42 = arith.constant 1 : index
    %c0_43 = arith.constant 0 : index
    %84 = vector.load %arg3[%c1_42, %c0_43] : memref<5x128xf32, #tpu.memory_space<vmem>>, vector<4x128xf32>
    %85 = arith.addf %83, %84 : vector<4x128xf32>
    %cst_44 = arith.constant dense<0.000000e+00> : vector<4xf32>
    %86 = vector.multi_reduction <add>, %85, %cst_44 [1] : vector<4x128xf32> to vector<4xf32>
    %87 = vector.shape_cast %86 : vector<4xf32> to vector<4x1xf32>
    %cst_45 = arith.constant 7.812500e-03 : f32
    %88 = vector.broadcast %cst_45 : f32 to vector<4x1xf32>
    %89 = arith.mulf %87, %88 : vector<4x1xf32>
    %90 = vector.broadcast %89 : vector<4x1xf32> to vector<4x128xf32>
    %91 = arith.subf %85, %90 : vector<4x128xf32>
    %92 = arith.mulf %91, %91 : vector<4x128xf32>
    %cst_46 = arith.constant dense<0.000000e+00> : vector<4xf32>
    %93 = vector.multi_reduction <add>, %92, %cst_46 [1] : vector<4x128xf32> to vector<4xf32>
    %94 = vector.shape_cast %93 : vector<4xf32> to vector<4x1xf32>
    %cst_47 = arith.constant 7.812500e-03 : f32
    %95 = vector.broadcast %cst_47 : f32 to vector<4x1xf32>
    %96 = arith.mulf %94, %95 : vector<4x1xf32>
    %cst_48 = arith.constant 9.99999974E-6 : f32
    %97 = vector.broadcast %cst_48 : f32 to vector<4x1xf32>
    %98 = arith.addf %96, %97 : vector<4x1xf32>
    %99 = math.rsqrt %98 : vector<4x1xf32>
    %100 = vector.broadcast %99 : vector<4x1xf32> to vector<4x128xf32>
    %101 = arith.mulf %91, %100 : vector<4x128xf32>
    %102 = vector.broadcast %0 : vector<1x128xf32> to vector<4x128xf32>
    %103 = arith.mulf %101, %102 : vector<4x128xf32>
    %104 = vector.broadcast %1 : vector<1x128xf32> to vector<4x128xf32>
    %105 = arith.addf %103, %104 : vector<4x128xf32>
    %c1_49 = arith.constant 1 : index
    %c1_50 = arith.constant 1 : index
    %c0_51 = arith.constant 0 : index
    %106 = vector.load %arg6[%c1_49, %c1_50, %c0_51] : memref<2x5x128xf32, #tpu.memory_space<vmem>>, vector<1x4x128xf32>
    %107 = vector.shape_cast %106 : vector<1x4x128xf32> to vector<4x128xf32>
    %108 = vector.shape_cast %105 : vector<4x128xf32> to vector<1x4x128xf32>
    tpu.vector_store %arg6[%c1_49, %c1_50, %c0_51], %108 {strides = array<i32>} : memref<2x5x128xf32, #tpu.memory_space<vmem>>, vector<1x4x128xf32>,
    return
  }
}

module attributes {stable_mosaic.version = 11 : i64} {
  func.func @_resblock_kernel(%arg0: i32, %arg1: memref<1x5x128xf32, #tpu.memory_space<vmem>>, %arg2: memref<1x128xf32, #tpu.memory_space<vmem>>, %arg3: memref<1x128xf32, #tpu.memory_space<vmem>>, %arg4: memref<128x384xf32, #tpu.memory_space<vmem>>, %arg5: memref<1x384xf32, #tpu.memory_space<vmem>>, %arg6: memref<128x128xf32, #tpu.memory_space<vmem>>, %arg7: memref<1x128xf32, #tpu.memory_space<vmem>>, %arg8: memref<1x128xf32, #tpu.memory_space<vmem>>, %arg9: memref<1x128xf32, #tpu.memory_space<vmem>>, %arg10: memref<128x512xf32, #tpu.memory_space<vmem>>, %arg11: memref<1x512xf32, #tpu.memory_space<vmem>>, %arg12: memref<512x128xf32, #tpu.memory_space<vmem>>, %arg13: memref<1x128xf32, #tpu.memory_space<vmem>>, %arg14: memref<1x5x128xf32, #tpu.memory_space<vmem>>, %arg15: memref<5x384xf32, #tpu.memory_space<vmem>>, %arg16: memref<5x128xf32, #tpu.memory_space<vmem>>) attributes {dimension_semantics = [#tpu.dimension_semantics<parallel>], iteration_bounds = array<i64: 2>, scalar_prefetch = 0 : i64, scratch_operands = 2 : i64, tpu.core_type = #tpu.core_type<tc>, window_params = [{transform_indices = @transform_0, window_bounds = array<i64: 1, 5, 128>}, {pipeline_mode = #tpu.pipeline_mode<synchronous>, transform_indices = @transform_1, window_bounds = array<i64: 1, 128>}, {pipeline_mode = #tpu.pipeline_mode<synchronous>, transform_indices = @transform_2, window_bounds = array<i64: 1, 128>}, {pipeline_mode = #tpu.pipeline_mode<synchronous>, transform_indices = @transform_3, window_bounds = array<i64: 128, 384>}, {pipeline_mode = #tpu.pipeline_mode<synchronous>, transform_indices = @transform_4, window_bounds = array<i64: 1, 384>}, {pipeline_mode = #tpu.pipeline_mode<synchronous>, transform_indices = @transform_5, window_bounds = array<i64: 128, 128>}, {pipeline_mode = #tpu.pipeline_mode<synchronous>, transform_indices = @transform_6, window_bounds = array<i64: 1, 128>}, {pipeline_mode = #tpu.pipeline_mode<synchronous>, transform_indices = @transform_7, window_bounds = array<i64: 1, 128>}, {pipeline_mode = #tpu.pipeline_mode<synchronous>, transform_indices = @transform_8, window_bounds = array<i64: 1, 128>}, {pipeline_mode = #tpu.pipeline_mode<synchronous>, transform_indices = @transform_9, window_bounds = array<i64: 128, 512>}, {pipeline_mode = #tpu.pipeline_mode<synchronous>, transform_indices = @transform_10, window_bounds = array<i64: 1, 512>}, {pipeline_mode = #tpu.pipeline_mode<synchronous>, transform_indices = @transform_11, window_bounds = array<i64: 512, 128>}, {pipeline_mode = #tpu.pipeline_mode<synchronous>, transform_indices = @transform_12, window_bounds = array<i64: 1, 128>}, {transform_indices = @transform_13, window_bounds = array<i64: 1, 5, 128>}]} {
    %c0 = arith.constant 0 : index
    %c0_0 = arith.constant 0 : index
    %c0_1 = arith.constant 0 : index
    %0 = vector.load %arg1[%c0, %c0_0, %c0_1] : memref<1x5x128xf32, #tpu.memory_space<vmem>>, vector<1x5x128xf32>
    %1 = vector.shape_cast %0 : vector<1x5x128xf32> to vector<5x128xf32>
    %c0_2 = arith.constant 0 : index
    %c0_3 = arith.constant 0 : index
    %2 = vector.load %arg2[%c0_2, %c0_3] : memref<1x128xf32, #tpu.memory_space<vmem>>, vector<1x128xf32>
    %c0_4 = arith.constant 0 : index
    %c0_5 = arith.constant 0 : index
    %3 = vector.load %arg3[%c0_4, %c0_5] : memref<1x128xf32, #tpu.memory_space<vmem>>, vector<1x128xf32>
    %cst = arith.constant dense<0.000000e+00> : vector<5xf32>
    %4 = vector.multi_reduction <add>, %1, %cst [1] : vector<5x128xf32> to vector<5xf32>
    %5 = vector.shape_cast %4 : vector<5xf32> to vector<5x1xf32>
    %cst_6 = arith.constant 7.812500e-03 : f32
    %6 = vector.broadcast %cst_6 : f32 to vector<5x1xf32>
    %7 = arith.mulf %5, %6 : vector<5x1xf32>
    %8 = vector.broadcast %7 : vector<5x1xf32> to vector<5x128xf32>
    %9 = arith.subf %1, %8 : vector<5x128xf32>
    %10 = arith.mulf %9, %9 : vector<5x128xf32>
    %cst_7 = arith.constant dense<0.000000e+00> : vector<5xf32>
    %11 = vector.multi_reduction <add>, %10, %cst_7 [1] : vector<5x128xf32> to vector<5xf32>
    %12 = vector.shape_cast %11 : vector<5xf32> to vector<5x1xf32>
    %cst_8 = arith.constant 7.812500e-03 : f32
    %13 = vector.broadcast %cst_8 : f32 to vector<5x1xf32>
    %14 = arith.mulf %12, %13 : vector<5x1xf32>
    %cst_9 = arith.constant 9.99999974E-6 : f32
    %15 = vector.broadcast %cst_9 : f32 to vector<5x1xf32>
    %16 = arith.addf %14, %15 : vector<5x1xf32>
    %17 = math.rsqrt %16 : vector<5x1xf32>
    %18 = vector.broadcast %17 : vector<5x1xf32> to vector<5x128xf32>
    %19 = arith.mulf %9, %18 : vector<5x128xf32>
    %20 = vector.broadcast %2 : vector<1x128xf32> to vector<5x128xf32>
    %21 = arith.mulf %19, %20 : vector<5x128xf32>
    %22 = vector.broadcast %3 : vector<1x128xf32> to vector<5x128xf32>
    %23 = arith.addf %21, %22 : vector<5x128xf32>
    %c0_10 = arith.constant 0 : index
    %c0_11 = arith.constant 0 : index
    %24 = vector.load %arg4[%c0_10, %c0_11] : memref<128x384xf32, #tpu.memory_space<vmem>>, vector<128x384xf32>
    %25 = arith.truncf %23 : vector<5x128xf32> to vector<5x128xbf16>
    %26 = arith.truncf %24 : vector<128x384xf32> to vector<128x384xbf16>
    %cst_12 = arith.constant dense<0.000000e+00> : vector<5x384xf32>
    %27 = tpu.matmul %25, %26, %cst_12 {dimension_numbers = #tpu.dot_dimension_numbers<[1], [0], [0], [1], [0, 0, 1, 1], [], []>} : vector<5x128xbf16>, vector<128x384xbf16>, vector<5x384xf32> -> vector<5x384xf32>
    %c0_13 = arith.constant 0 : index
    %c0_14 = arith.constant 0 : index
    %28 = vector.load %arg5[%c0_13, %c0_14] : memref<1x384xf32, #tpu.memory_space<vmem>>, vector<1x384xf32>
    %29 = vector.broadcast %28 : vector<1x384xf32> to vector<5x384xf32>
    %30 = arith.addf %27, %29 : vector<5x384xf32>
    %c0_15 = arith.constant 0 : index
    %c0_16 = arith.constant 0 : index
    %31 = vector.load %arg15[%c0_15, %c0_16] : memref<5x384xf32, #tpu.memory_space<vmem>>, vector<5x384xf32>
    tpu.vector_store %arg15[%c0_15, %c0_16], %30 {strides = array<i32>} : memref<5x384xf32, #tpu.memory_space<vmem>>, vector<5x384xf32>,
    %c0_17 = arith.constant 0 : index
    %c0_18 = arith.constant 0 : index
    %32 = vector.load %arg15[%c0_17, %c0_18] : memref<5x384xf32, #tpu.memory_space<vmem>>, vector<5x64xf32>
    %c0_19 = arith.constant 0 : index
    %c128 = arith.constant 128 : index
    %33 = vector.load %arg15[%c0_19, %c128] : memref<5x384xf32, #tpu.memory_space<vmem>>, vector<5x64xf32>
    %c0_20 = arith.constant 0 : index
    %c256 = arith.constant 256 : index
    %34 = vector.load %arg15[%c0_20, %c256] : memref<5x384xf32, #tpu.memory_space<vmem>>, vector<5x64xf32>
    %35 = arith.truncf %32 : vector<5x64xf32> to vector<5x64xbf16>
    %36 = arith.truncf %33 : vector<5x64xf32> to vector<5x64xbf16>
    %cst_21 = arith.constant dense<0.000000e+00> : vector<5x5xf32>
    %37 = tpu.matmul %35, %36, %cst_21 {dimension_numbers = #tpu.dot_dimension_numbers<[1], [1], [0], [0], [0, 0, 1, 0], [], []>} : vector<5x64xbf16>, vector<5x64xbf16>, vector<5x5xf32> -> vector<5x5xf32>
    %cst_22 = arith.constant 1.250000e-01 : f32
    %38 = vector.broadcast %cst_22 : f32 to vector<5x5xf32>
    %39 = arith.mulf %37, %38 : vector<5x5xf32>
    %cst_23 = arith.constant dense<0xFF800000> : vector<5xf32>
    %40 = vector.multi_reduction <maximumf>, %39, %cst_23 [1] : vector<5x5xf32> to vector<5xf32>
    %41 = vector.shape_cast %40 : vector<5xf32> to vector<5x1xf32>
    %42 = vector.broadcast %41 : vector<5x1xf32> to vector<5x5xf32>
    %43 = arith.subf %39, %42 : vector<5x5xf32>
    %44 = math.exp %43 : vector<5x5xf32>
    %cst_24 = arith.constant dense<0.000000e+00> : vector<5xf32>
    %45 = vector.multi_reduction <add>, %44, %cst_24 [1] : vector<5x5xf32> to vector<5xf32>
    %46 = vector.shape_cast %45 : vector<5xf32> to vector<5x1xf32>
    %47 = tpu.reciprocal %46 {approx = true} : vector<5x1xf32> -> vector<5x1xf32>
    %48 = vector.broadcast %47 : vector<5x1xf32> to vector<5x5xf32>
    %49 = arith.mulf %44, %48 : vector<5x5xf32>
    %50 = arith.truncf %49 : vector<5x5xf32> to vector<5x5xbf16>
    %51 = arith.truncf %34 : vector<5x64xf32> to vector<5x64xbf16>
    %cst_25 = arith.constant dense<0.000000e+00> : vector<5x64xf32>
    %52 = tpu.matmul %50, %51, %cst_25 {dimension_numbers = #tpu.dot_dimension_numbers<[1], [0], [0], [1], [0, 0, 1, 1], [], []>} : vector<5x5xbf16>, vector<5x64xbf16>, vector<5x64xf32> -> vector<5x64xf32>
    %c0_26 = arith.constant 0 : index
    %c0_27 = arith.constant 0 : index
    %53 = vector.load %arg16[%c0_26, %c0_27] : memref<5x128xf32, #tpu.memory_space<vmem>>, vector<5x64xf32>
    tpu.vector_store %arg16[%c0_26, %c0_27], %52 {strides = array<i32>} : memref<5x128xf32, #tpu.memory_space<vmem>>, vector<5x64xf32>,
    %c0_28 = arith.constant 0 : index
    %c64 = arith.constant 64 : index
    %54 = vector.load %arg15[%c0_28, %c64] : memref<5x384xf32, #tpu.memory_space<vmem>>, vector<5x64xf32>
    %c0_29 = arith.constant 0 : index
    %c192 = arith.constant 192 : index
    %55 = vector.load %arg15[%c0_29, %c192] : memref<5x384xf32, #tpu.memory_space<vmem>>, vector<5x64xf32>
    %c0_30 = arith.constant 0 : index
    %c320 = arith.constant 320 : index
    %56 = vector.load %arg15[%c0_30, %c320] : memref<5x384xf32, #tpu.memory_space<vmem>>, vector<5x64xf32>
    %57 = arith.truncf %54 : vector<5x64xf32> to vector<5x64xbf16>
    %58 = arith.truncf %55 : vector<5x64xf32> to vector<5x64xbf16>
    %cst_31 = arith.constant dense<0.000000e+00> : vector<5x5xf32>
    %59 = tpu.matmul %57, %58, %cst_31 {dimension_numbers = #tpu.dot_dimension_numbers<[1], [1], [0], [0], [0, 0, 1, 0], [], []>} : vector<5x64xbf16>, vector<5x64xbf16>, vector<5x5xf32> -> vector<5x5xf32>
    %cst_32 = arith.constant 1.250000e-01 : f32
    %60 = vector.broadcast %cst_32 : f32 to vector<5x5xf32>
    %61 = arith.mulf %59, %60 : vector<5x5xf32>
    %cst_33 = arith.constant dense<0xFF800000> : vector<5xf32>
    %62 = vector.multi_reduction <maximumf>, %61, %cst_33 [1] : vector<5x5xf32> to vector<5xf32>
    %63 = vector.shape_cast %62 : vector<5xf32> to vector<5x1xf32>
    %64 = vector.broadcast %63 : vector<5x1xf32> to vector<5x5xf32>
    %65 = arith.subf %61, %64 : vector<5x5xf32>
    %66 = math.exp %65 : vector<5x5xf32>
    %cst_34 = arith.constant dense<0.000000e+00> : vector<5xf32>
    %67 = vector.multi_reduction <add>, %66, %cst_34 [1] : vector<5x5xf32> to vector<5xf32>
    %68 = vector.shape_cast %67 : vector<5xf32> to vector<5x1xf32>
    %69 = tpu.reciprocal %68 {approx = true} : vector<5x1xf32> -> vector<5x1xf32>
    %70 = vector.broadcast %69 : vector<5x1xf32> to vector<5x5xf32>
    %71 = arith.mulf %66, %70 : vector<5x5xf32>
    %72 = arith.truncf %71 : vector<5x5xf32> to vector<5x5xbf16>
    %73 = arith.truncf %56 : vector<5x64xf32> to vector<5x64xbf16>
    %cst_35 = arith.constant dense<0.000000e+00> : vector<5x64xf32>
    %74 = tpu.matmul %72, %73, %cst_35 {dimension_numbers = #tpu.dot_dimension_numbers<[1], [0], [0], [1], [0, 0, 1, 1], [], []>} : vector<5x5xbf16>, vector<5x64xbf16>, vector<5x64xf32> -> vector<5x64xf32>
    %c0_36 = arith.constant 0 : index
    %c64_37 = arith.constant 64 : index
    %75 = vector.load %arg16[%c0_36, %c64_37] : memref<5x128xf32, #tpu.memory_space<vmem>>, vector<5x64xf32>
    tpu.vector_store %arg16[%c0_36, %c64_37], %74 {strides = array<i32>} : memref<5x128xf32, #tpu.memory_space<vmem>>, vector<5x64xf32>,
    %c0_38 = arith.constant 0 : index
    %c0_39 = arith.constant 0 : index
    %76 = vector.load %arg16[%c0_38, %c0_39] : memref<5x128xf32, #tpu.memory_space<vmem>>, vector<5x128xf32>
    %c0_40 = arith.constant 0 : index
    %c0_41 = arith.constant 0 : index
    %77 = vector.load %arg6[%c0_40, %c0_41] : memref<128x128xf32, #tpu.memory_space<vmem>>, vector<128x128xf32>
    %78 = arith.truncf %76 : vector<5x128xf32> to vector<5x128xbf16>
    %79 = arith.truncf %77 : vector<128x128xf32> to vector<128x128xbf16>
    %cst_42 = arith.constant dense<0.000000e+00> : vector<5x128xf32>
    %80 = tpu.matmul %78, %79, %cst_42 {dimension_numbers = #tpu.dot_dimension_numbers<[1], [0], [0], [1], [0, 0, 1, 1], [], []>} : vector<5x128xbf16>, vector<128x128xbf16>, vector<5x128xf32> -> vector<5x128xf32>
    %81 = arith.addf %1, %80 : vector<5x128xf32>
    %c0_43 = arith.constant 0 : index
    %c0_44 = arith.constant 0 : index
    %82 = vector.load %arg7[%c0_43, %c0_44] : memref<1x128xf32, #tpu.memory_space<vmem>>, vector<1x128xf32>
    %83 = vector.broadcast %82 : vector<1x128xf32> to vector<5x128xf32>
    %84 = arith.addf %81, %83 : vector<5x128xf32>
    %c0_45 = arith.constant 0 : index
    %c0_46 = arith.constant 0 : index
    %85 = vector.load %arg8[%c0_45, %c0_46] : memref<1x128xf32, #tpu.memory_space<vmem>>, vector<1x128xf32>
    %c0_47 = arith.constant 0 : index
    %c0_48 = arith.constant 0 : index
    %86 = vector.load %arg9[%c0_47, %c0_48] : memref<1x128xf32, #tpu.memory_space<vmem>>, vector<1x128xf32>
    %cst_49 = arith.constant dense<0.000000e+00> : vector<5xf32>
    %87 = vector.multi_reduction <add>, %84, %cst_49 [1] : vector<5x128xf32> to vector<5xf32>
    %88 = vector.shape_cast %87 : vector<5xf32> to vector<5x1xf32>
    %cst_50 = arith.constant 7.812500e-03 : f32
    %89 = vector.broadcast %cst_50 : f32 to vector<5x1xf32>
    %90 = arith.mulf %88, %89 : vector<5x1xf32>
    %91 = vector.broadcast %90 : vector<5x1xf32> to vector<5x128xf32>
    %92 = arith.subf %84, %91 : vector<5x128xf32>
    %93 = arith.mulf %92, %92 : vector<5x128xf32>
    %cst_51 = arith.constant dense<0.000000e+00> : vector<5xf32>
    %94 = vector.multi_reduction <add>, %93, %cst_51 [1] : vector<5x128xf32> to vector<5xf32>
    %95 = vector.shape_cast %94 : vector<5xf32> to vector<5x1xf32>
    %cst_52 = arith.constant 7.812500e-03 : f32
    %96 = vector.broadcast %cst_52 : f32 to vector<5x1xf32>
    %97 = arith.mulf %95, %96 : vector<5x1xf32>
    %cst_53 = arith.constant 9.99999974E-6 : f32
    %98 = vector.broadcast %cst_53 : f32 to vector<5x1xf32>
    %99 = arith.addf %97, %98 : vector<5x1xf32>
    %100 = math.rsqrt %99 : vector<5x1xf32>
    %101 = vector.broadcast %100 : vector<5x1xf32> to vector<5x128xf32>
    %102 = arith.mulf %92, %101 : vector<5x128xf32>
    %103 = vector.broadcast %85 : vector<1x128xf32> to vector<5x128xf32>
    %104 = arith.mulf %102, %103 : vector<5x128xf32>
    %105 = vector.broadcast %86 : vector<1x128xf32> to vector<5x128xf32>
    %106 = arith.addf %104, %105 : vector<5x128xf32>
    %c0_54 = arith.constant 0 : index
    %c0_55 = arith.constant 0 : index
    %107 = vector.load %arg10[%c0_54, %c0_55] : memref<128x512xf32, #tpu.memory_space<vmem>>, vector<128x512xf32>
    %108 = arith.truncf %106 : vector<5x128xf32> to vector<5x128xbf16>
    %109 = arith.truncf %107 : vector<128x512xf32> to vector<128x512xbf16>
    %cst_56 = arith.constant dense<0.000000e+00> : vector<5x512xf32>
    %110 = tpu.matmul %108, %109, %cst_56 {dimension_numbers = #tpu.dot_dimension_numbers<[1], [0], [0], [1], [0, 0, 1, 1], [], []>} : vector<5x128xbf16>, vector<128x512xbf16>, vector<5x512xf32> -> vector<5x512xf32>
    %c0_57 = arith.constant 0 : index
    %c0_58 = arith.constant 0 : index
    %111 = vector.load %arg11[%c0_57, %c0_58] : memref<1x512xf32, #tpu.memory_space<vmem>>, vector<1x512xf32>
    %112 = vector.broadcast %111 : vector<1x512xf32> to vector<5x512xf32>
    %113 = arith.addf %110, %112 : vector<5x512xf32>
    %cst_59 = arith.constant 1.702000e+00 : f32
    %114 = vector.broadcast %cst_59 : f32 to vector<5x512xf32>
    %115 = arith.mulf %114, %113 : vector<5x512xf32>
    %116 = arith.negf %115 : vector<5x512xf32>
    %117 = math.exp %116 : vector<5x512xf32>
    %cst_60 = arith.constant 1.000000e+00 : f32
    %118 = vector.broadcast %cst_60 : f32 to vector<5x512xf32>
    %119 = arith.addf %118, %117 : vector<5x512xf32>
    %120 = arith.divf %118, %119 : vector<5x512xf32>
    %121 = arith.mulf %113, %120 : vector<5x512xf32>
    %c0_61 = arith.constant 0 : index
    %c0_62 = arith.constant 0 : index
    %122 = vector.load %arg12[%c0_61, %c0_62] : memref<512x128xf32, #tpu.memory_space<vmem>>, vector<512x128xf32>
    %123 = arith.truncf %121 : vector<5x512xf32> to vector<5x512xbf16>
    %124 = arith.truncf %122 : vector<512x128xf32> to vector<512x128xbf16>
    %cst_63 = arith.constant dense<0.000000e+00> : vector<5x128xf32>
    %125 = tpu.matmul %123, %124, %cst_63 {dimension_numbers = #tpu.dot_dimension_numbers<[1], [0], [0], [1], [0, 0, 1, 1], [], []>} : vector<5x512xbf16>, vector<512x128xbf16>, vector<5x128xf32> -> vector<5x128xf32>
    %126 = arith.addf %84, %125 : vector<5x128xf32>
    %c0_64 = arith.constant 0 : index
    %c0_65 = arith.constant 0 : index
    %127 = vector.load %arg13[%c0_64, %c0_65] : memref<1x128xf32, #tpu.memory_space<vmem>>, vector<1x128xf32>
    %128 = vector.broadcast %127 : vector<1x128xf32> to vector<5x128xf32>
    %129 = arith.addf %126, %128 : vector<5x128xf32>
    %c0_66 = arith.constant 0 : index
    %c0_67 = arith.constant 0 : index
    %c0_68 = arith.constant 0 : index
    %130 = vector.load %arg14[%c0_66, %c0_67, %c0_68] : memref<1x5x128xf32, #tpu.memory_space<vmem>>, vector<1x5x128xf32>
    %131 = vector.shape_cast %130 : vector<1x5x128xf32> to vector<5x128xf32>
    %132 = vector.shape_cast %129 : vector<5x128xf32> to vector<1x5x128xf32>
    tpu.vector_store %arg14[%c0_66, %c0_67, %c0_68], %132 {strides = array<i32>} : memref<1x5x128xf32, #tpu.memory_space<vmem>>, vector<1x5x128xf32>,
    return
  }
  func.func @transform_0(%arg0: i32) -> (i32, i32, i32) {
    %c0_i32 = arith.constant 0 : i32
    %c0_i32_0 = arith.constant 0 : i32
    %c0_i32_1 = arith.constant 0 : i32
    return %arg0, %c0_i32, %c0_i32_0 : i32, i32, i32
  }
  func.func @transform_1(%arg0: i32) -> (i32, i32) {
    %c0_i32 = arith.constant 0 : i32
    %c0_i32_0 = arith.constant 0 : i32
    %c0_i32_1 = arith.constant 0 : i32
    return %c0_i32, %c0_i32_0 : i32, i32
  }
  func.func @transform_2(%arg0: i32) -> (i32, i32) {
    %c0_i32 = arith.constant 0 : i32
    %c0_i32_0 = arith.constant 0 : i32
    %c0_i32_1 = arith.constant 0 : i32
    return %c0_i32, %c0_i32_0 : i32, i32
  }
  func.func @transform_3(%arg0: i32) -> (i32, i32) {
    %c0_i32 = arith.constant 0 : i32
    %c0_i32_0 = arith.constant 0 : i32
    %c0_i32_1 = arith.constant 0 : i32
    return %c0_i32, %c0_i32_0 : i32, i32
  }
  func.func @transform_4(%arg0: i32) -> (i32, i32) {
    %c0_i32 = arith.constant 0 : i32
    %c0_i32_0 = arith.constant 0 : i32
    %c0_i32_1 = arith.constant 0 : i32
    return %c0_i32, %c0_i32_0 : i32, i32
  }
  func.func @transform_5(%arg0: i32) -> (i32, i32) {
    %c0_i32 = arith.constant 0 : i32
    %c0_i32_0 = arith.constant 0 : i32
    %c0_i32_1 = arith.constant 0 : i32
    return %c0_i32, %c0_i32_0 : i32, i32
  }
  func.func @transform_6(%arg0: i32) -> (i32, i32) {
    %c0_i32 = arith.constant 0 : i32
    %c0_i32_0 = arith.constant 0 : i32
    %c0_i32_1 = arith.constant 0 : i32
    return %c0_i32, %c0_i32_0 : i32, i32
  }
  func.func @transform_7(%arg0: i32) -> (i32, i32) {
    %c0_i32 = arith.constant 0 : i32
    %c0_i32_0 = arith.constant 0 : i32
    %c0_i32_1 = arith.constant 0 : i32
    return %c0_i32, %c0_i32_0 : i32, i32
  }
  func.func @transform_8(%arg0: i32) -> (i32, i32) {
    %c0_i32 = arith.constant 0 : i32
    %c0_i32_0 = arith.constant 0 : i32
    %c0_i32_1 = arith.constant 0 : i32
    return %c0_i32, %c0_i32_0 : i32, i32
  }
  func.func @transform_9(%arg0: i32) -> (i32, i32) {
    %c0_i32 = arith.constant 0 : i32
    %c0_i32_0 = arith.constant 0 : i32
    %c0_i32_1 = arith.constant 0 : i32
    return %c0_i32, %c0_i32_0 : i32, i32
  }
  func.func @transform_10(%arg0: i32) -> (i32, i32) {
    %c0_i32 = arith.constant 0 : i32
    %c0_i32_0 = arith.constant 0 : i32
    %c0_i32_1 = arith.constant 0 : i32
    return %c0_i32, %c0_i32_0 : i32, i32
  }
  func.func @transform_11(%arg0: i32) -> (i32, i32) {
    %c0_i32 = arith.constant 0 : i32
    %c0_i32_0 = arith.constant 0 : i32
    %c0_i32_1 = arith.constant 0 : i32
    return %c0_i32, %c0_i32_0 : i32, i32
  }
  func.func @transform_12(%arg0: i32) -> (i32, i32) {
    %c0_i32 = arith.constant 0 : i32
    %c0_i32_0 = arith.constant 0 : i32
    %c0_i32_1 = arith.constant 0 : i32
    return %c0_i32, %c0_i32_0 : i32, i32
  }
  func.func @transform_13(%arg0: i32) -> (i32, i32, i32) {
    %c0_i32 = arith.constant 0 : i32
    %c0_i32_0 = arith.constant 0 : i32
    %c0_i32_1 = arith.constant 0 : i32
    return %arg0, %c0_i32, %c0_i32_0 : i32, i32, i32
  }
}

module attributes {stable_mosaic.version = 11 : i64} {
  func.func @_resblock_kernel(%arg0: i32, %arg1: memref<1x5x128xf32, #tpu.memory_space<vmem>>, %arg2: memref<1x128xf32, #tpu.memory_space<vmem>>, %arg3: memref<1x128xf32, #tpu.memory_space<vmem>>, %arg4: memref<128x384xf32, #tpu.memory_space<vmem>>, %arg5: memref<1x384xf32, #tpu.memory_space<vmem>>, %arg6: memref<128x128xf32, #tpu.memory_space<vmem>>, %arg7: memref<1x128xf32, #tpu.memory_space<vmem>>, %arg8: memref<1x128xf32, #tpu.memory_space<vmem>>, %arg9: memref<1x128xf32, #tpu.memory_space<vmem>>, %arg10: memref<128x512xf32, #tpu.memory_space<vmem>>, %arg11: memref<1x512xf32, #tpu.memory_space<vmem>>, %arg12: memref<512x128xf32, #tpu.memory_space<vmem>>, %arg13: memref<1x128xf32, #tpu.memory_space<vmem>>, %arg14: memref<1x5x128xf32, #tpu.memory_space<vmem>>, %arg15: memref<5x384xf32, #tpu.memory_space<vmem>>, %arg16: memref<5x128xf32, #tpu.memory_space<vmem>>) attributes {dimension_semantics = [#tpu.dimension_semantics<parallel>], iteration_bounds = array<i64: 2>, scalar_prefetch = 0 : i64, scratch_operands = 2 : i64, tpu.core_type = #tpu.core_type<tc>, window_params = [{transform_indices = @transform_0, window_bounds = array<i64: 1, 5, 128>}, {pipeline_mode = #tpu.pipeline_mode<synchronous>, transform_indices = @transform_1, window_bounds = array<i64: 1, 128>}, {pipeline_mode = #tpu.pipeline_mode<synchronous>, transform_indices = @transform_2, window_bounds = array<i64: 1, 128>}, {pipeline_mode = #tpu.pipeline_mode<synchronous>, transform_indices = @transform_3, window_bounds = array<i64: 128, 384>}, {pipeline_mode = #tpu.pipeline_mode<synchronous>, transform_indices = @transform_4, window_bounds = array<i64: 1, 384>}, {pipeline_mode = #tpu.pipeline_mode<synchronous>, transform_indices = @transform_5, window_bounds = array<i64: 128, 128>}, {pipeline_mode = #tpu.pipeline_mode<synchronous>, transform_indices = @transform_6, window_bounds = array<i64: 1, 128>}, {pipeline_mode = #tpu.pipeline_mode<synchronous>, transform_indices = @transform_7, window_bounds = array<i64: 1, 128>}, {pipeline_mode = #tpu.pipeline_mode<synchronous>, transform_indices = @transform_8, window_bounds = array<i64: 1, 128>}, {pipeline_mode = #tpu.pipeline_mode<synchronous>, transform_indices = @transform_9, window_bounds = array<i64: 128, 512>}, {pipeline_mode = #tpu.pipeline_mode<synchronous>, transform_indices = @transform_10, window_bounds = array<i64: 1, 512>}, {pipeline_mode = #tpu.pipeline_mode<synchronous>, transform_indices = @transform_11, window_bounds = array<i64: 512, 128>}, {pipeline_mode = #tpu.pipeline_mode<synchronous>, transform_indices = @transform_12, window_bounds = array<i64: 1, 128>}, {transform_indices = @transform_13, window_bounds = array<i64: 1, 5, 128>}]} {
    %c0 = arith.constant 0 : index
    %c0_0 = arith.constant 0 : index
    %c0_1 = arith.constant 0 : index
    %0 = vector.load %arg1[%c0, %c0_0, %c0_1] : memref<1x5x128xf32, #tpu.memory_space<vmem>>, vector<1x5x128xf32>
    %1 = vector.shape_cast %0 : vector<1x5x128xf32> to vector<5x128xf32>
    %c0_2 = arith.constant 0 : index
    %c0_3 = arith.constant 0 : index
    %2 = vector.load %arg2[%c0_2, %c0_3] : memref<1x128xf32, #tpu.memory_space<vmem>>, vector<1x128xf32>
    %c0_4 = arith.constant 0 : index
    %c0_5 = arith.constant 0 : index
    %3 = vector.load %arg3[%c0_4, %c0_5] : memref<1x128xf32, #tpu.memory_space<vmem>>, vector<1x128xf32>
    %cst = arith.constant dense<0.000000e+00> : vector<5xf32>
    %4 = vector.multi_reduction <add>, %1, %cst [1] : vector<5x128xf32> to vector<5xf32>
    %5 = vector.shape_cast %4 : vector<5xf32> to vector<5x1xf32>
    %cst_6 = arith.constant 7.812500e-03 : f32
    %6 = vector.broadcast %cst_6 : f32 to vector<5x1xf32>
    %7 = arith.mulf %5, %6 : vector<5x1xf32>
    %8 = vector.broadcast %7 : vector<5x1xf32> to vector<5x128xf32>
    %9 = arith.subf %1, %8 : vector<5x128xf32>
    %10 = arith.mulf %9, %9 : vector<5x128xf32>
    %cst_7 = arith.constant dense<0.000000e+00> : vector<5xf32>
    %11 = vector.multi_reduction <add>, %10, %cst_7 [1] : vector<5x128xf32> to vector<5xf32>
    %12 = vector.shape_cast %11 : vector<5xf32> to vector<5x1xf32>
    %cst_8 = arith.constant 7.812500e-03 : f32
    %13 = vector.broadcast %cst_8 : f32 to vector<5x1xf32>
    %14 = arith.mulf %12, %13 : vector<5x1xf32>
    %cst_9 = arith.constant 9.99999974E-6 : f32
    %15 = vector.broadcast %cst_9 : f32 to vector<5x1xf32>
    %16 = arith.addf %14, %15 : vector<5x1xf32>
    %17 = math.rsqrt %16 : vector<5x1xf32>
    %18 = vector.broadcast %17 : vector<5x1xf32> to vector<5x128xf32>
    %19 = arith.mulf %9, %18 : vector<5x128xf32>
    %20 = vector.broadcast %2 : vector<1x128xf32> to vector<5x128xf32>
    %21 = arith.mulf %19, %20 : vector<5x128xf32>
    %22 = vector.broadcast %3 : vector<1x128xf32> to vector<5x128xf32>
    %23 = arith.addf %21, %22 : vector<5x128xf32>
    %c0_10 = arith.constant 0 : index
    %c0_11 = arith.constant 0 : index
    %24 = vector.load %arg4[%c0_10, %c0_11] : memref<128x384xf32, #tpu.memory_space<vmem>>, vector<128x384xf32>
    %25 = arith.truncf %23 : vector<5x128xf32> to vector<5x128xbf16>
    %26 = arith.truncf %24 : vector<128x384xf32> to vector<128x384xbf16>
    %cst_12 = arith.constant dense<0.000000e+00> : vector<5x384xf32>
    %27 = tpu.matmul %25, %26, %cst_12 {dimension_numbers = #tpu.dot_dimension_numbers<[1], [0], [0], [1], [0, 0, 1, 1], [], []>} : vector<5x128xbf16>, vector<128x384xbf16>, vector<5x384xf32> -> vector<5x384xf32>
    %c0_13 = arith.constant 0 : index
    %c0_14 = arith.constant 0 : index
    %28 = vector.load %arg5[%c0_13, %c0_14] : memref<1x384xf32, #tpu.memory_space<vmem>>, vector<1x384xf32>
    %29 = vector.broadcast %28 : vector<1x384xf32> to vector<5x384xf32>
    %30 = arith.addf %27, %29 : vector<5x384xf32>
    %c0_15 = arith.constant 0 : index
    %c0_16 = arith.constant 0 : index
    %31 = vector.load %arg15[%c0_15, %c0_16] : memref<5x384xf32, #tpu.memory_space<vmem>>, vector<5x384xf32>
    tpu.vector_store %arg15[%c0_15, %c0_16], %30 {strides = array<i32>} : memref<5x384xf32, #tpu.memory_space<vmem>>, vector<5x384xf32>,
    %c0_17 = arith.constant 0 : index
    %c0_18 = arith.constant 0 : index
    %32 = vector.load %arg15[%c0_17, %c0_18] : memref<5x384xf32, #tpu.memory_space<vmem>>, vector<5x64xf32>
    %c0_19 = arith.constant 0 : index
    %c128 = arith.constant 128 : index
    %33 = vector.load %arg15[%c0_19, %c128] : memref<5x384xf32, #tpu.memory_space<vmem>>, vector<5x64xf32>
    %c0_20 = arith.constant 0 : index
    %c256 = arith.constant 256 : index
    %34 = vector.load %arg15[%c0_20, %c256] : memref<5x384xf32, #tpu.memory_space<vmem>>, vector<5x64xf32>
    %35 = arith.truncf %32 : vector<5x64xf32> to vector<5x64xbf16>
    %36 = arith.truncf %33 : vector<5x64xf32> to vector<5x64xbf16>
    %cst_21 = arith.constant dense<0.000000e+00> : vector<5x5xf32>
    %37 = tpu.matmul %35, %36, %cst_21 {dimension_numbers = #tpu.dot_dimension_numbers<[1], [1], [0], [0], [0, 0, 1, 0], [], []>} : vector<5x64xbf16>, vector<5x64xbf16>, vector<5x5xf32> -> vector<5x5xf32>
    %cst_22 = arith.constant 1.250000e-01 : f32
    %38 = vector.broadcast %cst_22 : f32 to vector<5x5xf32>
    %39 = arith.mulf %37, %38 : vector<5x5xf32>
    %cst_23 = arith.constant dense<0xFF800000> : vector<5xf32>
    %40 = vector.multi_reduction <maximumf>, %39, %cst_23 [1] : vector<5x5xf32> to vector<5xf32>
    %41 = vector.shape_cast %40 : vector<5xf32> to vector<5x1xf32>
    %42 = vector.broadcast %41 : vector<5x1xf32> to vector<5x5xf32>
    %43 = arith.subf %39, %42 : vector<5x5xf32>
    %44 = math.exp %43 : vector<5x5xf32>
    %cst_24 = arith.constant dense<0.000000e+00> : vector<5xf32>
    %45 = vector.multi_reduction <add>, %44, %cst_24 [1] : vector<5x5xf32> to vector<5xf32>
    %46 = vector.shape_cast %45 : vector<5xf32> to vector<5x1xf32>
    %47 = tpu.reciprocal %46 {approx = true} : vector<5x1xf32> -> vector<5x1xf32>
    %48 = vector.broadcast %47 : vector<5x1xf32> to vector<5x5xf32>
    %49 = arith.mulf %44, %48 : vector<5x5xf32>
    %50 = arith.truncf %49 : vector<5x5xf32> to vector<5x5xbf16>
    %51 = arith.truncf %34 : vector<5x64xf32> to vector<5x64xbf16>
    %cst_25 = arith.constant dense<0.000000e+00> : vector<5x64xf32>
    %52 = tpu.matmul %50, %51, %cst_25 {dimension_numbers = #tpu.dot_dimension_numbers<[1], [0], [0], [1], [0, 0, 1, 1], [], []>} : vector<5x5xbf16>, vector<5x64xbf16>, vector<5x64xf32> -> vector<5x64xf32>
    %c0_26 = arith.constant 0 : index
    %c0_27 = arith.constant 0 : index
    %53 = vector.load %arg16[%c0_26, %c0_27] : memref<5x128xf32, #tpu.memory_space<vmem>>, vector<5x64xf32>
    tpu.vector_store %arg16[%c0_26, %c0_27], %52 {strides = array<i32>} : memref<5x128xf32, #tpu.memory_space<vmem>>, vector<5x64xf32>,
    %c0_28 = arith.constant 0 : index
    %c64 = arith.constant 64 : index
    %54 = vector.load %arg15[%c0_28, %c64] : memref<5x384xf32, #tpu.memory_space<vmem>>, vector<5x64xf32>
    %c0_29 = arith.constant 0 : index
    %c192 = arith.constant 192 : index
    %55 = vector.load %arg15[%c0_29, %c192] : memref<5x384xf32, #tpu.memory_space<vmem>>, vector<5x64xf32>
    %c0_30 = arith.constant 0 : index
    %c320 = arith.constant 320 : index
    %56 = vector.load %arg15[%c0_30, %c320] : memref<5x384xf32, #tpu.memory_space<vmem>>, vector<5x64xf32>
    %57 = arith.truncf %54 : vector<5x64xf32> to vector<5x64xbf16>
    %58 = arith.truncf %55 : vector<5x64xf32> to vector<5x64xbf16>
    %cst_31 = arith.constant dense<0.000000e+00> : vector<5x5xf32>
    %59 = tpu.matmul %57, %58, %cst_31 {dimension_numbers = #tpu.dot_dimension_numbers<[1], [1], [0], [0], [0, 0, 1, 0], [], []>} : vector<5x64xbf16>, vector<5x64xbf16>, vector<5x5xf32> -> vector<5x5xf32>
    %cst_32 = arith.constant 1.250000e-01 : f32
    %60 = vector.broadcast %cst_32 : f32 to vector<5x5xf32>
    %61 = arith.mulf %59, %60 : vector<5x5xf32>
    %cst_33 = arith.constant dense<0xFF800000> : vector<5xf32>
    %62 = vector.multi_reduction <maximumf>, %61, %cst_33 [1] : vector<5x5xf32> to vector<5xf32>
    %63 = vector.shape_cast %62 : vector<5xf32> to vector<5x1xf32>
    %64 = vector.broadcast %63 : vector<5x1xf32> to vector<5x5xf32>
    %65 = arith.subf %61, %64 : vector<5x5xf32>
    %66 = math.exp %65 : vector<5x5xf32>
    %cst_34 = arith.constant dense<0.000000e+00> : vector<5xf32>
    %67 = vector.multi_reduction <add>, %66, %cst_34 [1] : vector<5x5xf32> to vector<5xf32>
    %68 = vector.shape_cast %67 : vector<5xf32> to vector<5x1xf32>
    %69 = tpu.reciprocal %68 {approx = true} : vector<5x1xf32> -> vector<5x1xf32>
    %70 = vector.broadcast %69 : vector<5x1xf32> to vector<5x5xf32>
    %71 = arith.mulf %66, %70 : vector<5x5xf32>
    %72 = arith.truncf %71 : vector<5x5xf32> to vector<5x5xbf16>
    %73 = arith.truncf %56 : vector<5x64xf32> to vector<5x64xbf16>
    %cst_35 = arith.constant dense<0.000000e+00> : vector<5x64xf32>
    %74 = tpu.matmul %72, %73, %cst_35 {dimension_numbers = #tpu.dot_dimension_numbers<[1], [0], [0], [1], [0, 0, 1, 1], [], []>} : vector<5x5xbf16>, vector<5x64xbf16>, vector<5x64xf32> -> vector<5x64xf32>
    %c0_36 = arith.constant 0 : index
    %c64_37 = arith.constant 64 : index
    %75 = vector.load %arg16[%c0_36, %c64_37] : memref<5x128xf32, #tpu.memory_space<vmem>>, vector<5x64xf32>
    tpu.vector_store %arg16[%c0_36, %c64_37], %74 {strides = array<i32>} : memref<5x128xf32, #tpu.memory_space<vmem>>, vector<5x64xf32>,
    %c0_38 = arith.constant 0 : index
    %c0_39 = arith.constant 0 : index
    %76 = vector.load %arg16[%c0_38, %c0_39] : memref<5x128xf32, #tpu.memory_space<vmem>>, vector<5x128xf32>
    %c0_40 = arith.constant 0 : index
    %c0_41 = arith.constant 0 : index
    %77 = vector.load %arg6[%c0_40, %c0_41] : memref<128x128xf32, #tpu.memory_space<vmem>>, vector<128x128xf32>
    %78 = arith.truncf %76 : vector<5x128xf32> to vector<5x128xbf16>
    %79 = arith.truncf %77 : vector<128x128xf32> to vector<128x128xbf16>
    %cst_42 = arith.constant dense<0.000000e+00> : vector<5x128xf32>
    %80 = tpu.matmul %78, %79, %cst_42 {dimension_numbers = #tpu.dot_dimension_numbers<[1], [0], [0], [1], [0, 0, 1, 1], [], []>} : vector<5x128xbf16>, vector<128x128xbf16>, vector<5x128xf32> -> vector<5x128xf32>
    %81 = arith.addf %1, %80 : vector<5x128xf32>
    %c0_43 = arith.constant 0 : index
    %c0_44 = arith.constant 0 : index
    %82 = vector.load %arg7[%c0_43, %c0_44] : memref<1x128xf32, #tpu.memory_space<vmem>>, vector<1x128xf32>
    %83 = vector.broadcast %82 : vector<1x128xf32> to vector<5x128xf32>
    %84 = arith.addf %81, %83 : vector<5x128xf32>
    %c0_45 = arith.constant 0 : index
    %c0_46 = arith.constant 0 : index
    %85 = vector.load %arg8[%c0_45, %c0_46] : memref<1x128xf32, #tpu.memory_space<vmem>>, vector<1x128xf32>
    %c0_47 = arith.constant 0 : index
    %c0_48 = arith.constant 0 : index
    %86 = vector.load %arg9[%c0_47, %c0_48] : memref<1x128xf32, #tpu.memory_space<vmem>>, vector<1x128xf32>
    %cst_49 = arith.constant dense<0.000000e+00> : vector<5xf32>
    %87 = vector.multi_reduction <add>, %84, %cst_49 [1] : vector<5x128xf32> to vector<5xf32>
    %88 = vector.shape_cast %87 : vector<5xf32> to vector<5x1xf32>
    %cst_50 = arith.constant 7.812500e-03 : f32
    %89 = vector.broadcast %cst_50 : f32 to vector<5x1xf32>
    %90 = arith.mulf %88, %89 : vector<5x1xf32>
    %91 = vector.broadcast %90 : vector<5x1xf32> to vector<5x128xf32>
    %92 = arith.subf %84, %91 : vector<5x128xf32>
    %93 = arith.mulf %92, %92 : vector<5x128xf32>
    %cst_51 = arith.constant dense<0.000000e+00> : vector<5xf32>
    %94 = vector.multi_reduction <add>, %93, %cst_51 [1] : vector<5x128xf32> to vector<5xf32>
    %95 = vector.shape_cast %94 : vector<5xf32> to vector<5x1xf32>
    %cst_52 = arith.constant 7.812500e-03 : f32
    %96 = vector.broadcast %cst_52 : f32 to vector<5x1xf32>
    %97 = arith.mulf %95, %96 : vector<5x1xf32>
    %cst_53 = arith.constant 9.99999974E-6 : f32
    %98 = vector.broadcast %cst_53 : f32 to vector<5x1xf32>
    %99 = arith.addf %97, %98 : vector<5x1xf32>
    %100 = math.rsqrt %99 : vector<5x1xf32>
    %101 = vector.broadcast %100 : vector<5x1xf32> to vector<5x128xf32>
    %102 = arith.mulf %92, %101 : vector<5x128xf32>
    %103 = vector.broadcast %85 : vector<1x128xf32> to vector<5x128xf32>
    %104 = arith.mulf %102, %103 : vector<5x128xf32>
    %105 = vector.broadcast %86 : vector<1x128xf32> to vector<5x128xf32>
    %106 = arith.addf %104, %105 : vector<5x128xf32>
    %c0_54 = arith.constant 0 : index
    %c0_55 = arith.constant 0 : index
    %107 = vector.load %arg10[%c0_54, %c0_55] : memref<128x512xf32, #tpu.memory_space<vmem>>, vector<128x512xf32>
    %108 = arith.truncf %106 : vector<5x128xf32> to vector<5x128xbf16>
    %109 = arith.truncf %107 : vector<128x512xf32> to vector<128x512xbf16>
    %cst_56 = arith.constant dense<0.000000e+00> : vector<5x512xf32>
    %110 = tpu.matmul %108, %109, %cst_56 {dimension_numbers = #tpu.dot_dimension_numbers<[1], [0], [0], [1], [0, 0, 1, 1], [], []>} : vector<5x128xbf16>, vector<128x512xbf16>, vector<5x512xf32> -> vector<5x512xf32>
    %c0_57 = arith.constant 0 : index
    %c0_58 = arith.constant 0 : index
    %111 = vector.load %arg11[%c0_57, %c0_58] : memref<1x512xf32, #tpu.memory_space<vmem>>, vector<1x512xf32>
    %112 = vector.broadcast %111 : vector<1x512xf32> to vector<5x512xf32>
    %113 = arith.addf %110, %112 : vector<5x512xf32>
    %cst_59 = arith.constant 1.702000e+00 : f32
    %114 = vector.broadcast %cst_59 : f32 to vector<5x512xf32>
    %115 = arith.mulf %114, %113 : vector<5x512xf32>
    %116 = arith.negf %115 : vector<5x512xf32>
    %117 = math.exp %116 : vector<5x512xf32>
    %cst_60 = arith.constant 1.000000e+00 : f32
    %118 = vector.broadcast %cst_60 : f32 to vector<5x512xf32>
    %119 = arith.addf %118, %117 : vector<5x512xf32>
    %120 = arith.divf %118, %119 : vector<5x512xf32>
    %121 = arith.mulf %113, %120 : vector<5x512xf32>
    %c0_61 = arith.constant 0 : index
    %c0_62 = arith.constant 0 : index
    %122 = vector.load %arg12[%c0_61, %c0_62] : memref<512x128xf32, #tpu.memory_space<vmem>>, vector<512x128xf32>
    %123 = arith.truncf %121 : vector<5x512xf32> to vector<5x512xbf16>
    %124 = arith.truncf %122 : vector<512x128xf32> to vector<512x128xbf16>
    %cst_63 = arith.constant dense<0.000000e+00> : vector<5x128xf32>
    %125 = tpu.matmul %123, %124, %cst_63 {dimension_numbers = #tpu.dot_dimension_numbers<[1], [0], [0], [1], [0, 0, 1, 1], [], []>} : vector<5x512xbf16>, vector<512x128xbf16>, vector<5x128xf32> -> vector<5x128xf32>
    %126 = arith.addf %84, %125 : vector<5x128xf32>
    %c0_64 = arith.constant 0 : index
    %c0_65 = arith.constant 0 : index
    %127 = vector.load %arg13[%c0_64, %c0_65] : memref<1x128xf32, #tpu.memory_space<vmem>>, vector<1x128xf32>
    %128 = vector.broadcast %127 : vector<1x128xf32> to vector<5x128xf32>
    %129 = arith.addf %126, %128 : vector<5x128xf32>
    %c0_66 = arith.constant 0 : index
    %c0_67 = arith.constant 0 : index
    %c0_68 = arith.constant 0 : index
    %130 = vector.load %arg14[%c0_66, %c0_67, %c0_68] : memref<1x5x128xf32, #tpu.memory_space<vmem>>, vector<1x5x128xf32>
    %131 = vector.shape_cast %130 : vector<1x5x128xf32> to vector<5x128xf32>
    %132 = vector.shape_cast %129 : vector<5x128xf32> to vector<1x5x128xf32>
    tpu.vector_store %arg14[%c0_66, %c0_67, %c0_68], %132 {strides = array<i32>} : memref<1x5x128xf32, #tpu.memory_space<vmem>>, vector<1x5x128xf32>,
    return
  }
  func.func @transform_0(%arg0: i32) -> (i32, i32, i32) {
    %c0_i32 = arith.constant 0 : i32
    %c0_i32_0 = arith.constant 0 : i32
    %c0_i32_1 = arith.constant 0 : i32
    return %arg0, %c0_i32, %c0_i32_0 : i32, i32, i32
  }
  func.func @transform_1(%arg0: i32) -> (i32, i32) {
    %c0_i32 = arith.constant 0 : i32
    %c0_i32_0 = arith.constant 0 : i32
    %c0_i32_1 = arith.constant 0 : i32
    return %c0_i32, %c0_i32_0 : i32, i32
  }
  func.func @transform_2(%arg0: i32) -> (i32, i32) {
    %c0_i32 = arith.constant 0 : i32
    %c0_i32_0 = arith.constant 0 : i32
    %c0_i32_1 = arith.constant 0 : i32
    return %c0_i32, %c0_i32_0 : i32, i32
  }
  func.func @transform_3(%arg0: i32) -> (i32, i32) {
    %c0_i32 = arith.constant 0 : i32
    %c0_i32_0 = arith.constant 0 : i32
    %c0_i32_1 = arith.constant 0 : i32
    return %c0_i32, %c0_i32_0 : i32, i32
  }
  func.func @transform_4(%arg0: i32) -> (i32, i32) {
    %c0_i32 = arith.constant 0 : i32
    %c0_i32_0 = arith.constant 0 : i32
    %c0_i32_1 = arith.constant 0 : i32
    return %c0_i32, %c0_i32_0 : i32, i32
  }
  func.func @transform_5(%arg0: i32) -> (i32, i32) {
    %c0_i32 = arith.constant 0 : i32
    %c0_i32_0 = arith.constant 0 : i32
    %c0_i32_1 = arith.constant 0 : i32
    return %c0_i32, %c0_i32_0 : i32, i32
  }
  func.func @transform_6(%arg0: i32) -> (i32, i32) {
    %c0_i32 = arith.constant 0 : i32
    %c0_i32_0 = arith.constant 0 : i32
    %c0_i32_1 = arith.constant 0 : i32
    return %c0_i32, %c0_i32_0 : i32, i32
  }
  func.func @transform_7(%arg0: i32) -> (i32, i32) {
    %c0_i32 = arith.constant 0 : i32
    %c0_i32_0 = arith.constant 0 : i32
    %c0_i32_1 = arith.constant 0 : i32
    return %c0_i32, %c0_i32_0 : i32, i32
  }
  func.func @transform_8(%arg0: i32) -> (i32, i32) {
    %c0_i32 = arith.constant 0 : i32
    %c0_i32_0 = arith.constant 0 : i32
    %c0_i32_1 = arith.constant 0 : i32
    return %c0_i32, %c0_i32_0 : i32, i32
  }
  func.func @transform_9(%arg0: i32) -> (i32, i32) {
    %c0_i32 = arith.constant 0 : i32
    %c0_i32_0 = arith.constant 0 : i32
    %c0_i32_1 = arith.constant 0 : i32
    return %c0_i32, %c0_i32_0 : i32, i32
  }
  func.func @transform_10(%arg0: i32) -> (i32, i32) {
    %c0_i32 = arith.constant 0 : i32
    %c0_i32_0 = arith.constant 0 : i32
    %c0_i32_1 = arith.constant 0 : i32
    return %c0_i32, %c0_i32_0 : i32, i32
  }
  func.func @transform_11(%arg0: i32) -> (i32, i32) {
    %c0_i32 = arith.constant 0 : i32
    %c0_i32_0 = arith.constant 0 : i32
    %c0_i32_1 = arith.constant 0 : i32
    return %c0_i32, %c0_i32_0 : i32, i32
  }
  func.func @transform_12(%arg0: i32) -> (i32, i32) {
    %c0_i32 = arith.constant 0 : i32
    %c0_i32_0 = arith.constant 0 : i32
    %c0_i32_1 = arith.constant 0 : i32
    return %c0_i32, %c0_i32_0 : i32, i32
  }
  func.func @transform_13(%arg0: i32) -> (i32, i32, i32) {
    %c0_i32 = arith.constant 0 : i32
    %c0_i32_0 = arith.constant 0 : i32
    %c0_i32_1 = arith.constant 0 : i32
    return %arg0, %c0_i32, %c0_i32_0 : i32, i32, i32
  }
}

module attributes {stable_mosaic.version = 11 : i64} {
  func.func @_resblock_kernel(%arg0: i32, %arg1: memref<1x8x128xf32, #tpu.memory_space<vmem>>, %arg2: memref<1x128xf32, #tpu.memory_space<vmem>>, %arg3: memref<1x128xf32, #tpu.memory_space<vmem>>, %arg4: memref<128x384xf32, #tpu.memory_space<vmem>>, %arg5: memref<1x384xf32, #tpu.memory_space<vmem>>, %arg6: memref<128x128xf32, #tpu.memory_space<vmem>>, %arg7: memref<1x128xf32, #tpu.memory_space<vmem>>, %arg8: memref<1x128xf32, #tpu.memory_space<vmem>>, %arg9: memref<1x128xf32, #tpu.memory_space<vmem>>, %arg10: memref<128x512xf32, #tpu.memory_space<vmem>>, %arg11: memref<1x512xf32, #tpu.memory_space<vmem>>, %arg12: memref<512x128xf32, #tpu.memory_space<vmem>>, %arg13: memref<1x128xf32, #tpu.memory_space<vmem>>, %arg14: memref<1x8x128xf32, #tpu.memory_space<vmem>>, %arg15: memref<8x384xf32, #tpu.memory_space<vmem>>, %arg16: memref<8x128xf32, #tpu.memory_space<vmem>>) attributes {dimension_semantics = [#tpu.dimension_semantics<parallel>], iteration_bounds = array<i64: 2>, scalar_prefetch = 0 : i64, scratch_operands = 2 : i64, tpu.core_type = #tpu.core_type<tc>, window_params = [{transform_indices = @transform_0, window_bounds = array<i64: 1, 8, 128>}, {pipeline_mode = #tpu.pipeline_mode<synchronous>, transform_indices = @transform_1, window_bounds = array<i64: 1, 128>}, {pipeline_mode = #tpu.pipeline_mode<synchronous>, transform_indices = @transform_2, window_bounds = array<i64: 1, 128>}, {pipeline_mode = #tpu.pipeline_mode<synchronous>, transform_indices = @transform_3, window_bounds = array<i64: 128, 384>}, {pipeline_mode = #tpu.pipeline_mode<synchronous>, transform_indices = @transform_4, window_bounds = array<i64: 1, 384>}, {pipeline_mode = #tpu.pipeline_mode<synchronous>, transform_indices = @transform_5, window_bounds = array<i64: 128, 128>}, {pipeline_mode = #tpu.pipeline_mode<synchronous>, transform_indices = @transform_6, window_bounds = array<i64: 1, 128>}, {pipeline_mode = #tpu.pipeline_mode<synchronous>, transform_indices = @transform_7, window_bounds = array<i64: 1, 128>}, {pipeline_mode = #tpu.pipeline_mode<synchronous>, transform_indices = @transform_8, window_bounds = array<i64: 1, 128>}, {pipeline_mode = #tpu.pipeline_mode<synchronous>, transform_indices = @transform_9, window_bounds = array<i64: 128, 512>}, {pipeline_mode = #tpu.pipeline_mode<synchronous>, transform_indices = @transform_10, window_bounds = array<i64: 1, 512>}, {pipeline_mode = #tpu.pipeline_mode<synchronous>, transform_indices = @transform_11, window_bounds = array<i64: 512, 128>}, {pipeline_mode = #tpu.pipeline_mode<synchronous>, transform_indices = @transform_12, window_bounds = array<i64: 1, 128>}, {transform_indices = @transform_13, window_bounds = array<i64: 1, 8, 128>}]} {
    %c0 = arith.constant 0 : index
    %c0_0 = arith.constant 0 : index
    %c0_1 = arith.constant 0 : index
    %0 = vector.load %arg1[%c0, %c0_0, %c0_1] : memref<1x8x128xf32, #tpu.memory_space<vmem>>, vector<1x8x128xf32>
    %1 = vector.shape_cast %0 : vector<1x8x128xf32> to vector<8x128xf32>
    %c0_2 = arith.constant 0 : index
    %c0_3 = arith.constant 0 : index
    %2 = vector.load %arg2[%c0_2, %c0_3] : memref<1x128xf32, #tpu.memory_space<vmem>>, vector<1x128xf32>
    %c0_4 = arith.constant 0 : index
    %c0_5 = arith.constant 0 : index
    %3 = vector.load %arg3[%c0_4, %c0_5] : memref<1x128xf32, #tpu.memory_space<vmem>>, vector<1x128xf32>
    %cst = arith.constant dense<0.000000e+00> : vector<8xf32>
    %4 = vector.multi_reduction <add>, %1, %cst [1] : vector<8x128xf32> to vector<8xf32>
    %5 = vector.shape_cast %4 : vector<8xf32> to vector<8x1xf32>
    %cst_6 = arith.constant 7.812500e-03 : f32
    %6 = vector.broadcast %cst_6 : f32 to vector<8x1xf32>
    %7 = arith.mulf %5, %6 : vector<8x1xf32>
    %8 = vector.broadcast %7 : vector<8x1xf32> to vector<8x128xf32>
    %9 = arith.subf %1, %8 : vector<8x128xf32>
    %10 = arith.mulf %9, %9 : vector<8x128xf32>
    %cst_7 = arith.constant dense<0.000000e+00> : vector<8xf32>
    %11 = vector.multi_reduction <add>, %10, %cst_7 [1] : vector<8x128xf32> to vector<8xf32>
    %12 = vector.shape_cast %11 : vector<8xf32> to vector<8x1xf32>
    %cst_8 = arith.constant 7.812500e-03 : f32
    %13 = vector.broadcast %cst_8 : f32 to vector<8x1xf32>
    %14 = arith.mulf %12, %13 : vector<8x1xf32>
    %cst_9 = arith.constant 9.99999974E-6 : f32
    %15 = vector.broadcast %cst_9 : f32 to vector<8x1xf32>
    %16 = arith.addf %14, %15 : vector<8x1xf32>
    %17 = math.rsqrt %16 : vector<8x1xf32>
    %18 = vector.broadcast %17 : vector<8x1xf32> to vector<8x128xf32>
    %19 = arith.mulf %9, %18 : vector<8x128xf32>
    %20 = vector.broadcast %2 : vector<1x128xf32> to vector<8x128xf32>
    %21 = arith.mulf %19, %20 : vector<8x128xf32>
    %22 = vector.broadcast %3 : vector<1x128xf32> to vector<8x128xf32>
    %23 = arith.addf %21, %22 : vector<8x128xf32>
    %c0_10 = arith.constant 0 : index
    %c0_11 = arith.constant 0 : index
    %24 = vector.load %arg4[%c0_10, %c0_11] : memref<128x384xf32, #tpu.memory_space<vmem>>, vector<128x384xf32>
    %25 = arith.truncf %23 : vector<8x128xf32> to vector<8x128xbf16>
    %26 = arith.truncf %24 : vector<128x384xf32> to vector<128x384xbf16>
    %cst_12 = arith.constant dense<0.000000e+00> : vector<8x384xf32>
    %27 = tpu.matmul %25, %26, %cst_12 {dimension_numbers = #tpu.dot_dimension_numbers<[1], [0], [0], [1], [0, 0, 1, 1], [], []>} : vector<8x128xbf16>, vector<128x384xbf16>, vector<8x384xf32> -> vector<8x384xf32>
    %c0_13 = arith.constant 0 : index
    %c0_14 = arith.constant 0 : index
    %28 = vector.load %arg5[%c0_13, %c0_14] : memref<1x384xf32, #tpu.memory_space<vmem>>, vector<1x384xf32>
    %29 = vector.broadcast %28 : vector<1x384xf32> to vector<8x384xf32>
    %30 = arith.addf %27, %29 : vector<8x384xf32>
    %c0_15 = arith.constant 0 : index
    %c0_16 = arith.constant 0 : index
    %31 = vector.load %arg15[%c0_15, %c0_16] : memref<8x384xf32, #tpu.memory_space<vmem>>, vector<8x384xf32>
    tpu.vector_store %arg15[%c0_15, %c0_16], %30 {strides = array<i32>} : memref<8x384xf32, #tpu.memory_space<vmem>>, vector<8x384xf32>,
    %32 = tpu.iota {dimensions = array<i32: 0>} : vector<8x8xi32>
    %33 = tpu.iota {dimensions = array<i32: 1>} : vector<8x8xi32>
    %34 = arith.cmpi sgt, %33, %32 : vector<8x8xi32>
    %cst_17 = arith.constant -1.000000e+09 : f32
    %cst_18 = arith.constant 0.000000e+00 : f32
    %35 = vector.broadcast %cst_17 : f32 to vector<8x8xf32>
    %36 = vector.broadcast %cst_18 : f32 to vector<8x8xf32>
    %37 = arith.select %34, %35, %36 : vector<8x8xi1>, vector<8x8xf32>
    %c0_19 = arith.constant 0 : index
    %c0_20 = arith.constant 0 : index
    %38 = vector.load %arg15[%c0_19, %c0_20] : memref<8x384xf32, #tpu.memory_space<vmem>>, vector<8x64xf32>
    %c0_21 = arith.constant 0 : index
    %c128 = arith.constant 128 : index
    %39 = vector.load %arg15[%c0_21, %c128] : memref<8x384xf32, #tpu.memory_space<vmem>>, vector<8x64xf32>
    %c0_22 = arith.constant 0 : index
    %c256 = arith.constant 256 : index
    %40 = vector.load %arg15[%c0_22, %c256] : memref<8x384xf32, #tpu.memory_space<vmem>>, vector<8x64xf32>
    %41 = arith.truncf %38 : vector<8x64xf32> to vector<8x64xbf16>
    %42 = arith.truncf %39 : vector<8x64xf32> to vector<8x64xbf16>
    %cst_23 = arith.constant dense<0.000000e+00> : vector<8x8xf32>
    %43 = tpu.matmul %41, %42, %cst_23 {dimension_numbers = #tpu.dot_dimension_numbers<[1], [1], [0], [0], [0, 0, 1, 0], [], []>} : vector<8x64xbf16>, vector<8x64xbf16>, vector<8x8xf32> -> vector<8x8xf32>
    %cst_24 = arith.constant 1.250000e-01 : f32
    %44 = vector.broadcast %cst_24 : f32 to vector<8x8xf32>
    %45 = arith.mulf %43, %44 : vector<8x8xf32>
    %46 = arith.addf %45, %37 : vector<8x8xf32>
    %cst_25 = arith.constant dense<0xFF800000> : vector<8xf32>
    %47 = vector.multi_reduction <maximumf>, %46, %cst_25 [1] : vector<8x8xf32> to vector<8xf32>
    %48 = vector.shape_cast %47 : vector<8xf32> to vector<8x1xf32>
    %49 = vector.broadcast %48 : vector<8x1xf32> to vector<8x8xf32>
    %50 = arith.subf %46, %49 : vector<8x8xf32>
    %51 = math.exp %50 : vector<8x8xf32>
    %cst_26 = arith.constant dense<0.000000e+00> : vector<8xf32>
    %52 = vector.multi_reduction <add>, %51, %cst_26 [1] : vector<8x8xf32> to vector<8xf32>
    %53 = vector.shape_cast %52 : vector<8xf32> to vector<8x1xf32>
    %54 = tpu.reciprocal %53 {approx = true} : vector<8x1xf32> -> vector<8x1xf32>
    %55 = vector.broadcast %54 : vector<8x1xf32> to vector<8x8xf32>
    %56 = arith.mulf %51, %55 : vector<8x8xf32>
    %57 = arith.truncf %56 : vector<8x8xf32> to vector<8x8xbf16>
    %58 = arith.truncf %40 : vector<8x64xf32> to vector<8x64xbf16>
    %cst_27 = arith.constant dense<0.000000e+00> : vector<8x64xf32>
    %59 = tpu.matmul %57, %58, %cst_27 {dimension_numbers = #tpu.dot_dimension_numbers<[1], [0], [0], [1], [0, 0, 1, 1], [], []>} : vector<8x8xbf16>, vector<8x64xbf16>, vector<8x64xf32> -> vector<8x64xf32>
    %c0_28 = arith.constant 0 : index
    %c0_29 = arith.constant 0 : index
    %60 = vector.load %arg16[%c0_28, %c0_29] : memref<8x128xf32, #tpu.memory_space<vmem>>, vector<8x64xf32>
    tpu.vector_store %arg16[%c0_28, %c0_29], %59 {strides = array<i32>} : memref<8x128xf32, #tpu.memory_space<vmem>>, vector<8x64xf32>,
    %c0_30 = arith.constant 0 : index
    %c64 = arith.constant 64 : index
    %61 = vector.load %arg15[%c0_30, %c64] : memref<8x384xf32, #tpu.memory_space<vmem>>, vector<8x64xf32>
    %c0_31 = arith.constant 0 : index
    %c192 = arith.constant 192 : index
    %62 = vector.load %arg15[%c0_31, %c192] : memref<8x384xf32, #tpu.memory_space<vmem>>, vector<8x64xf32>
    %c0_32 = arith.constant 0 : index
    %c320 = arith.constant 320 : index
    %63 = vector.load %arg15[%c0_32, %c320] : memref<8x384xf32, #tpu.memory_space<vmem>>, vector<8x64xf32>
    %64 = arith.truncf %61 : vector<8x64xf32> to vector<8x64xbf16>
    %65 = arith.truncf %62 : vector<8x64xf32> to vector<8x64xbf16>
    %cst_33 = arith.constant dense<0.000000e+00> : vector<8x8xf32>
    %66 = tpu.matmul %64, %65, %cst_33 {dimension_numbers = #tpu.dot_dimension_numbers<[1], [1], [0], [0], [0, 0, 1, 0], [], []>} : vector<8x64xbf16>, vector<8x64xbf16>, vector<8x8xf32> -> vector<8x8xf32>
    %cst_34 = arith.constant 1.250000e-01 : f32
    %67 = vector.broadcast %cst_34 : f32 to vector<8x8xf32>
    %68 = arith.mulf %66, %67 : vector<8x8xf32>
    %69 = arith.addf %68, %37 : vector<8x8xf32>
    %cst_35 = arith.constant dense<0xFF800000> : vector<8xf32>
    %70 = vector.multi_reduction <maximumf>, %69, %cst_35 [1] : vector<8x8xf32> to vector<8xf32>
    %71 = vector.shape_cast %70 : vector<8xf32> to vector<8x1xf32>
    %72 = vector.broadcast %71 : vector<8x1xf32> to vector<8x8xf32>
    %73 = arith.subf %69, %72 : vector<8x8xf32>
    %74 = math.exp %73 : vector<8x8xf32>
    %cst_36 = arith.constant dense<0.000000e+00> : vector<8xf32>
    %75 = vector.multi_reduction <add>, %74, %cst_36 [1] : vector<8x8xf32> to vector<8xf32>
    %76 = vector.shape_cast %75 : vector<8xf32> to vector<8x1xf32>
    %77 = tpu.reciprocal %76 {approx = true} : vector<8x1xf32> -> vector<8x1xf32>
    %78 = vector.broadcast %77 : vector<8x1xf32> to vector<8x8xf32>
    %79 = arith.mulf %74, %78 : vector<8x8xf32>
    %80 = arith.truncf %79 : vector<8x8xf32> to vector<8x8xbf16>
    %81 = arith.truncf %63 : vector<8x64xf32> to vector<8x64xbf16>
    %cst_37 = arith.constant dense<0.000000e+00> : vector<8x64xf32>
    %82 = tpu.matmul %80, %81, %cst_37 {dimension_numbers = #tpu.dot_dimension_numbers<[1], [0], [0], [1], [0, 0, 1, 1], [], []>} : vector<8x8xbf16>, vector<8x64xbf16>, vector<8x64xf32> -> vector<8x64xf32>
    %c0_38 = arith.constant 0 : index
    %c64_39 = arith.constant 64 : index
    %83 = vector.load %arg16[%c0_38, %c64_39] : memref<8x128xf32, #tpu.memory_space<vmem>>, vector<8x64xf32>
    tpu.vector_store %arg16[%c0_38, %c64_39], %82 {strides = array<i32>} : memref<8x128xf32, #tpu.memory_space<vmem>>, vector<8x64xf32>,
    %c0_40 = arith.constant 0 : index
    %c0_41 = arith.constant 0 : index
    %84 = vector.load %arg16[%c0_40, %c0_41] : memref<8x128xf32, #tpu.memory_space<vmem>>, vector<8x128xf32>
    %c0_42 = arith.constant 0 : index
    %c0_43 = arith.constant 0 : index
    %85 = vector.load %arg6[%c0_42, %c0_43] : memref<128x128xf32, #tpu.memory_space<vmem>>, vector<128x128xf32>
    %86 = arith.truncf %84 : vector<8x128xf32> to vector<8x128xbf16>
    %87 = arith.truncf %85 : vector<128x128xf32> to vector<128x128xbf16>
    %cst_44 = arith.constant dense<0.000000e+00> : vector<8x128xf32>
    %88 = tpu.matmul %86, %87, %cst_44 {dimension_numbers = #tpu.dot_dimension_numbers<[1], [0], [0], [1], [0, 0, 1, 1], [], []>} : vector<8x128xbf16>, vector<128x128xbf16>, vector<8x128xf32> -> vector<8x128xf32>
    %89 = arith.addf %1, %88 : vector<8x128xf32>
    %c0_45 = arith.constant 0 : index
    %c0_46 = arith.constant 0 : index
    %90 = vector.load %arg7[%c0_45, %c0_46] : memref<1x128xf32, #tpu.memory_space<vmem>>, vector<1x128xf32>
    %91 = vector.broadcast %90 : vector<1x128xf32> to vector<8x128xf32>
    %92 = arith.addf %89, %91 : vector<8x128xf32>
    %c0_47 = arith.constant 0 : index
    %c0_48 = arith.constant 0 : index
    %93 = vector.load %arg8[%c0_47, %c0_48] : memref<1x128xf32, #tpu.memory_space<vmem>>, vector<1x128xf32>
    %c0_49 = arith.constant 0 : index
    %c0_50 = arith.constant 0 : index
    %94 = vector.load %arg9[%c0_49, %c0_50] : memref<1x128xf32, #tpu.memory_space<vmem>>, vector<1x128xf32>
    %cst_51 = arith.constant dense<0.000000e+00> : vector<8xf32>
    %95 = vector.multi_reduction <add>, %92, %cst_51 [1] : vector<8x128xf32> to vector<8xf32>
    %96 = vector.shape_cast %95 : vector<8xf32> to vector<8x1xf32>
    %cst_52 = arith.constant 7.812500e-03 : f32
    %97 = vector.broadcast %cst_52 : f32 to vector<8x1xf32>
    %98 = arith.mulf %96, %97 : vector<8x1xf32>
    %99 = vector.broadcast %98 : vector<8x1xf32> to vector<8x128xf32>
    %100 = arith.subf %92, %99 : vector<8x128xf32>
    %101 = arith.mulf %100, %100 : vector<8x128xf32>
    %cst_53 = arith.constant dense<0.000000e+00> : vector<8xf32>
    %102 = vector.multi_reduction <add>, %101, %cst_53 [1] : vector<8x128xf32> to vector<8xf32>
    %103 = vector.shape_cast %102 : vector<8xf32> to vector<8x1xf32>
    %cst_54 = arith.constant 7.812500e-03 : f32
    %104 = vector.broadcast %cst_54 : f32 to vector<8x1xf32>
    %105 = arith.mulf %103, %104 : vector<8x1xf32>
    %cst_55 = arith.constant 9.99999974E-6 : f32
    %106 = vector.broadcast %cst_55 : f32 to vector<8x1xf32>
    %107 = arith.addf %105, %106 : vector<8x1xf32>
    %108 = math.rsqrt %107 : vector<8x1xf32>
    %109 = vector.broadcast %108 : vector<8x1xf32> to vector<8x128xf32>
    %110 = arith.mulf %100, %109 : vector<8x128xf32>
    %111 = vector.broadcast %93 : vector<1x128xf32> to vector<8x128xf32>
    %112 = arith.mulf %110, %111 : vector<8x128xf32>
    %113 = vector.broadcast %94 : vector<1x128xf32> to vector<8x128xf32>
    %114 = arith.addf %112, %113 : vector<8x128xf32>
    %c0_56 = arith.constant 0 : index
    %c0_57 = arith.constant 0 : index
    %115 = vector.load %arg10[%c0_56, %c0_57] : memref<128x512xf32, #tpu.memory_space<vmem>>, vector<128x512xf32>
    %116 = arith.truncf %114 : vector<8x128xf32> to vector<8x128xbf16>
    %117 = arith.truncf %115 : vector<128x512xf32> to vector<128x512xbf16>
    %cst_58 = arith.constant dense<0.000000e+00> : vector<8x512xf32>
    %118 = tpu.matmul %116, %117, %cst_58 {dimension_numbers = #tpu.dot_dimension_numbers<[1], [0], [0], [1], [0, 0, 1, 1], [], []>} : vector<8x128xbf16>, vector<128x512xbf16>, vector<8x512xf32> -> vector<8x512xf32>
    %c0_59 = arith.constant 0 : index
    %c0_60 = arith.constant 0 : index
    %119 = vector.load %arg11[%c0_59, %c0_60] : memref<1x512xf32, #tpu.memory_space<vmem>>, vector<1x512xf32>
    %120 = vector.broadcast %119 : vector<1x512xf32> to vector<8x512xf32>
    %121 = arith.addf %118, %120 : vector<8x512xf32>
    %cst_61 = arith.constant 1.702000e+00 : f32
    %122 = vector.broadcast %cst_61 : f32 to vector<8x512xf32>
    %123 = arith.mulf %122, %121 : vector<8x512xf32>
    %124 = arith.negf %123 : vector<8x512xf32>
    %125 = math.exp %124 : vector<8x512xf32>
    %cst_62 = arith.constant 1.000000e+00 : f32
    %126 = vector.broadcast %cst_62 : f32 to vector<8x512xf32>
    %127 = arith.addf %126, %125 : vector<8x512xf32>
    %128 = arith.divf %126, %127 : vector<8x512xf32>
    %129 = arith.mulf %121, %128 : vector<8x512xf32>
    %c0_63 = arith.constant 0 : index
    %c0_64 = arith.constant 0 : index
    %130 = vector.load %arg12[%c0_63, %c0_64] : memref<512x128xf32, #tpu.memory_space<vmem>>, vector<512x128xf32>
    %131 = arith.truncf %129 : vector<8x512xf32> to vector<8x512xbf16>
    %132 = arith.truncf %130 : vector<512x128xf32> to vector<512x128xbf16>
    %cst_65 = arith.constant dense<0.000000e+00> : vector<8x128xf32>
    %133 = tpu.matmul %131, %132, %cst_65 {dimension_numbers = #tpu.dot_dimension_numbers<[1], [0], [0], [1], [0, 0, 1, 1], [], []>} : vector<8x512xbf16>, vector<512x128xbf16>, vector<8x128xf32> -> vector<8x128xf32>
    %134 = arith.addf %92, %133 : vector<8x128xf32>
    %c0_66 = arith.constant 0 : index
    %c0_67 = arith.constant 0 : index
    %135 = vector.load %arg13[%c0_66, %c0_67] : memref<1x128xf32, #tpu.memory_space<vmem>>, vector<1x128xf32>
    %136 = vector.broadcast %135 : vector<1x128xf32> to vector<8x128xf32>
    %137 = arith.addf %134, %136 : vector<8x128xf32>
    %c0_68 = arith.constant 0 : index
    %c0_69 = arith.constant 0 : index
    %c0_70 = arith.constant 0 : index
    %138 = vector.load %arg14[%c0_68, %c0_69, %c0_70] : memref<1x8x128xf32, #tpu.memory_space<vmem>>, vector<1x8x128xf32>
    %139 = vector.shape_cast %138 : vector<1x8x128xf32> to vector<8x128xf32>
    %140 = vector.shape_cast %137 : vector<8x128xf32> to vector<1x8x128xf32>
    tpu.vector_store %arg14[%c0_68, %c0_69, %c0_70], %140 {strides = array<i32>} : memref<1x8x128xf32, #tpu.memory_space<vmem>>, vector<1x8x128xf32>,
    return
  }
  func.func @transform_0(%arg0: i32) -> (i32, i32, i32) {
    %c0_i32 = arith.constant 0 : i32
    %c0_i32_0 = arith.constant 0 : i32
    %c0_i32_1 = arith.constant 0 : i32
    return %arg0, %c0_i32, %c0_i32_0 : i32, i32, i32
  }
  func.func @transform_1(%arg0: i32) -> (i32, i32) {
    %c0_i32 = arith.constant 0 : i32
    %c0_i32_0 = arith.constant 0 : i32
    %c0_i32_1 = arith.constant 0 : i32
    return %c0_i32, %c0_i32_0 : i32, i32
  }
  func.func @transform_2(%arg0: i32) -> (i32, i32) {
    %c0_i32 = arith.constant 0 : i32
    %c0_i32_0 = arith.constant 0 : i32
    %c0_i32_1 = arith.constant 0 : i32
    return %c0_i32, %c0_i32_0 : i32, i32
  }
  func.func @transform_3(%arg0: i32) -> (i32, i32) {
    %c0_i32 = arith.constant 0 : i32
    %c0_i32_0 = arith.constant 0 : i32
    %c0_i32_1 = arith.constant 0 : i32
    return %c0_i32, %c0_i32_0 : i32, i32
  }
  func.func @transform_4(%arg0: i32) -> (i32, i32) {
    %c0_i32 = arith.constant 0 : i32
    %c0_i32_0 = arith.constant 0 : i32
    %c0_i32_1 = arith.constant 0 : i32
    return %c0_i32, %c0_i32_0 : i32, i32
  }
  func.func @transform_5(%arg0: i32) -> (i32, i32) {
    %c0_i32 = arith.constant 0 : i32
    %c0_i32_0 = arith.constant 0 : i32
    %c0_i32_1 = arith.constant 0 : i32
    return %c0_i32, %c0_i32_0 : i32, i32
  }
  func.func @transform_6(%arg0: i32) -> (i32, i32) {
    %c0_i32 = arith.constant 0 : i32
    %c0_i32_0 = arith.constant 0 : i32
    %c0_i32_1 = arith.constant 0 : i32
    return %c0_i32, %c0_i32_0 : i32, i32
  }
  func.func @transform_7(%arg0: i32) -> (i32, i32) {
    %c0_i32 = arith.constant 0 : i32
    %c0_i32_0 = arith.constant 0 : i32
    %c0_i32_1 = arith.constant 0 : i32
    return %c0_i32, %c0_i32_0 : i32, i32
  }
  func.func @transform_8(%arg0: i32) -> (i32, i32) {
    %c0_i32 = arith.constant 0 : i32
    %c0_i32_0 = arith.constant 0 : i32
    %c0_i32_1 = arith.constant 0 : i32
    return %c0_i32, %c0_i32_0 : i32, i32
  }
  func.func @transform_9(%arg0: i32) -> (i32, i32) {
    %c0_i32 = arith.constant 0 : i32
    %c0_i32_0 = arith.constant 0 : i32
    %c0_i32_1 = arith.constant 0 : i32
    return %c0_i32, %c0_i32_0 : i32, i32
  }
  func.func @transform_10(%arg0: i32) -> (i32, i32) {
    %c0_i32 = arith.constant 0 : i32
    %c0_i32_0 = arith.constant 0 : i32
    %c0_i32_1 = arith.constant 0 : i32
    return %c0_i32, %c0_i32_0 : i32, i32
  }
  func.func @transform_11(%arg0: i32) -> (i32, i32) {
    %c0_i32 = arith.constant 0 : i32
    %c0_i32_0 = arith.constant 0 : i32
    %c0_i32_1 = arith.constant 0 : i32
    return %c0_i32, %c0_i32_0 : i32, i32
  }
  func.func @transform_12(%arg0: i32) -> (i32, i32) {
    %c0_i32 = arith.constant 0 : i32
    %c0_i32_0 = arith.constant 0 : i32
    %c0_i32_1 = arith.constant 0 : i32
    return %c0_i32, %c0_i32_0 : i32, i32
  }
  func.func @transform_13(%arg0: i32) -> (i32, i32, i32) {
    %c0_i32 = arith.constant 0 : i32
    %c0_i32_0 = arith.constant 0 : i32
    %c0_i32_1 = arith.constant 0 : i32
    return %arg0, %c0_i32, %c0_i32_0 : i32, i32, i32
  }
}

module attributes {stable_mosaic.version = 11 : i64} {
  func.func @_head_kernel(%arg0: memref<2x128xf32, #tpu.memory_space<vmem>>, %arg1: memref<1x128xf32, #tpu.memory_space<vmem>>, %arg2: memref<1x128xf32, #tpu.memory_space<vmem>>, %arg3: memref<128x128xf32, #tpu.memory_space<vmem>>, %arg4: memref<2x128xf32, #tpu.memory_space<vmem>>, %arg5: memref<1x128xf32, #tpu.memory_space<vmem>>, %arg6: memref<1x128xf32, #tpu.memory_space<vmem>>, %arg7: memref<128x128xf32, #tpu.memory_space<vmem>>, %arg8: memref<256x128xf32, #tpu.memory_space<vmem>>, %arg9: memref<1x128xf32, #tpu.memory_space<vmem>>, %arg10: memref<128x128xf32, #tpu.memory_space<vmem>>, %arg11: memref<1x128xf32, #tpu.memory_space<vmem>>, %arg12: memref<2x128xf32, #tpu.memory_space<vmem>>, %arg13: memref<2x128xf32, #tpu.memory_space<vmem>>, %arg14: memref<2x128xf32, #tpu.memory_space<vmem>>) attributes {dimension_semantics = [], scalar_prefetch = 0 : i64, scratch_operands = 0 : i64, tpu.core_type = #tpu.core_type<tc>} {
    %c0 = arith.constant 0 : index
    %c0_0 = arith.constant 0 : index
    %0 = vector.load %arg0[%c0, %c0_0] : memref<2x128xf32, #tpu.memory_space<vmem>>, vector<2x128xf32>
    %c0_1 = arith.constant 0 : index
    %c0_2 = arith.constant 0 : index
    %1 = vector.load %arg1[%c0_1, %c0_2] : memref<1x128xf32, #tpu.memory_space<vmem>>, vector<1x128xf32>
    %c0_3 = arith.constant 0 : index
    %c0_4 = arith.constant 0 : index
    %2 = vector.load %arg2[%c0_3, %c0_4] : memref<1x128xf32, #tpu.memory_space<vmem>>, vector<1x128xf32>
    %cst = arith.constant dense<0.000000e+00> : vector<2xf32>
    %3 = vector.multi_reduction <add>, %0, %cst [1] : vector<2x128xf32> to vector<2xf32>
    %4 = vector.shape_cast %3 : vector<2xf32> to vector<2x1xf32>
    %cst_5 = arith.constant 7.812500e-03 : f32
    %5 = vector.broadcast %cst_5 : f32 to vector<2x1xf32>
    %6 = arith.mulf %4, %5 : vector<2x1xf32>
    %7 = vector.broadcast %6 : vector<2x1xf32> to vector<2x128xf32>
    %8 = arith.subf %0, %7 : vector<2x128xf32>
    %9 = arith.mulf %8, %8 : vector<2x128xf32>
    %cst_6 = arith.constant dense<0.000000e+00> : vector<2xf32>
    %10 = vector.multi_reduction <add>, %9, %cst_6 [1] : vector<2x128xf32> to vector<2xf32>
    %11 = vector.shape_cast %10 : vector<2xf32> to vector<2x1xf32>
    %cst_7 = arith.constant 7.812500e-03 : f32
    %12 = vector.broadcast %cst_7 : f32 to vector<2x1xf32>
    %13 = arith.mulf %11, %12 : vector<2x1xf32>
    %cst_8 = arith.constant 9.99999974E-6 : f32
    %14 = vector.broadcast %cst_8 : f32 to vector<2x1xf32>
    %15 = arith.addf %13, %14 : vector<2x1xf32>
    %16 = math.rsqrt %15 : vector<2x1xf32>
    %17 = vector.broadcast %16 : vector<2x1xf32> to vector<2x128xf32>
    %18 = arith.mulf %8, %17 : vector<2x128xf32>
    %19 = vector.broadcast %1 : vector<1x128xf32> to vector<2x128xf32>
    %20 = arith.mulf %18, %19 : vector<2x128xf32>
    %21 = vector.broadcast %2 : vector<1x128xf32> to vector<2x128xf32>
    %22 = arith.addf %20, %21 : vector<2x128xf32>
    %c0_9 = arith.constant 0 : index
    %c0_10 = arith.constant 0 : index
    %23 = vector.load %arg3[%c0_9, %c0_10] : memref<128x128xf32, #tpu.memory_space<vmem>>, vector<128x128xf32>
    %24 = arith.truncf %22 : vector<2x128xf32> to vector<2x128xbf16>
    %25 = arith.truncf %23 : vector<128x128xf32> to vector<128x128xbf16>
    %cst_11 = arith.constant dense<0.000000e+00> : vector<2x128xf32>
    %26 = tpu.matmul %24, %25, %cst_11 {dimension_numbers = #tpu.dot_dimension_numbers<[1], [0], [0], [1], [0, 0, 1, 1], [], []>} : vector<2x128xbf16>, vector<128x128xbf16>, vector<2x128xf32> -> vector<2x128xf32>
    %c0_12 = arith.constant 0 : index
    %c0_13 = arith.constant 0 : index
    %27 = vector.load %arg4[%c0_12, %c0_13] : memref<2x128xf32, #tpu.memory_space<vmem>>, vector<2x128xf32>
    %c0_14 = arith.constant 0 : index
    %c0_15 = arith.constant 0 : index
    %28 = vector.load %arg5[%c0_14, %c0_15] : memref<1x128xf32, #tpu.memory_space<vmem>>, vector<1x128xf32>
    %c0_16 = arith.constant 0 : index
    %c0_17 = arith.constant 0 : index
    %29 = vector.load %arg6[%c0_16, %c0_17] : memref<1x128xf32, #tpu.memory_space<vmem>>, vector<1x128xf32>
    %cst_18 = arith.constant dense<0.000000e+00> : vector<2xf32>
    %30 = vector.multi_reduction <add>, %27, %cst_18 [1] : vector<2x128xf32> to vector<2xf32>
    %31 = vector.shape_cast %30 : vector<2xf32> to vector<2x1xf32>
    %cst_19 = arith.constant 7.812500e-03 : f32
    %32 = vector.broadcast %cst_19 : f32 to vector<2x1xf32>
    %33 = arith.mulf %31, %32 : vector<2x1xf32>
    %34 = vector.broadcast %33 : vector<2x1xf32> to vector<2x128xf32>
    %35 = arith.subf %27, %34 : vector<2x128xf32>
    %36 = arith.mulf %35, %35 : vector<2x128xf32>
    %cst_20 = arith.constant dense<0.000000e+00> : vector<2xf32>
    %37 = vector.multi_reduction <add>, %36, %cst_20 [1] : vector<2x128xf32> to vector<2xf32>
    %38 = vector.shape_cast %37 : vector<2xf32> to vector<2x1xf32>
    %cst_21 = arith.constant 7.812500e-03 : f32
    %39 = vector.broadcast %cst_21 : f32 to vector<2x1xf32>
    %40 = arith.mulf %38, %39 : vector<2x1xf32>
    %cst_22 = arith.constant 9.99999974E-6 : f32
    %41 = vector.broadcast %cst_22 : f32 to vector<2x1xf32>
    %42 = arith.addf %40, %41 : vector<2x1xf32>
    %43 = math.rsqrt %42 : vector<2x1xf32>
    %44 = vector.broadcast %43 : vector<2x1xf32> to vector<2x128xf32>
    %45 = arith.mulf %35, %44 : vector<2x128xf32>
    %46 = vector.broadcast %28 : vector<1x128xf32> to vector<2x128xf32>
    %47 = arith.mulf %45, %46 : vector<2x128xf32>
    %48 = vector.broadcast %29 : vector<1x128xf32> to vector<2x128xf32>
    %49 = arith.addf %47, %48 : vector<2x128xf32>
    %c0_23 = arith.constant 0 : index
    %c0_24 = arith.constant 0 : index
    %50 = vector.load %arg7[%c0_23, %c0_24] : memref<128x128xf32, #tpu.memory_space<vmem>>, vector<128x128xf32>
    %51 = arith.truncf %49 : vector<2x128xf32> to vector<2x128xbf16>
    %52 = arith.truncf %50 : vector<128x128xf32> to vector<128x128xbf16>
    %cst_25 = arith.constant dense<0.000000e+00> : vector<2x128xf32>
    %53 = tpu.matmul %51, %52, %cst_25 {dimension_numbers = #tpu.dot_dimension_numbers<[1], [0], [0], [1], [0, 0, 1, 1], [], []>} : vector<2x128xbf16>, vector<128x128xbf16>, vector<2x128xf32> -> vector<2x128xf32>
    %c0_26 = arith.constant 0 : index
    %c0_27 = arith.constant 0 : index
    %54 = vector.load %arg8[%c0_26, %c0_27] : memref<256x128xf32, #tpu.memory_space<vmem>>, vector<128x128xf32>
    %55 = arith.truncf %26 : vector<2x128xf32> to vector<2x128xbf16>
    %56 = arith.truncf %54 : vector<128x128xf32> to vector<128x128xbf16>
    %cst_28 = arith.constant dense<0.000000e+00> : vector<2x128xf32>
    %57 = tpu.matmul %55, %56, %cst_28 {dimension_numbers = #tpu.dot_dimension_numbers<[1], [0], [0], [1], [0, 0, 1, 1], [], []>} : vector<2x128xbf16>, vector<128x128xbf16>, vector<2x128xf32> -> vector<2x128xf32>
    %c128 = arith.constant 128 : index
    %c0_29 = arith.constant 0 : index
    %58 = vector.load %arg8[%c128, %c0_29] : memref<256x128xf32, #tpu.memory_space<vmem>>, vector<128x128xf32>
    %59 = arith.truncf %53 : vector<2x128xf32> to vector<2x128xbf16>
    %60 = arith.truncf %58 : vector<128x128xf32> to vector<128x128xbf16>
    %cst_30 = arith.constant dense<0.000000e+00> : vector<2x128xf32>
    %61 = tpu.matmul %59, %60, %cst_30 {dimension_numbers = #tpu.dot_dimension_numbers<[1], [0], [0], [1], [0, 0, 1, 1], [], []>} : vector<2x128xbf16>, vector<128x128xbf16>, vector<2x128xf32> -> vector<2x128xf32>
    %62 = arith.addf %57, %61 : vector<2x128xf32>
    %c0_31 = arith.constant 0 : index
    %c0_32 = arith.constant 0 : index
    %63 = vector.load %arg9[%c0_31, %c0_32] : memref<1x128xf32, #tpu.memory_space<vmem>>, vector<1x128xf32>
    %64 = vector.broadcast %63 : vector<1x128xf32> to vector<2x128xf32>
    %65 = arith.addf %62, %64 : vector<2x128xf32>
    %cst_33 = arith.constant 0.000000e+00 : f32
    %66 = vector.broadcast %cst_33 : f32 to vector<2x128xf32>
    %67 = arith.maximumf %65, %66 : vector<2x128xf32>
    %c0_34 = arith.constant 0 : index
    %c0_35 = arith.constant 0 : index
    %68 = vector.load %arg10[%c0_34, %c0_35] : memref<128x128xf32, #tpu.memory_space<vmem>>, vector<128x128xf32>
    %69 = arith.truncf %67 : vector<2x128xf32> to vector<2x128xbf16>
    %70 = arith.truncf %68 : vector<128x128xf32> to vector<128x128xbf16>
    %cst_36 = arith.constant dense<0.000000e+00> : vector<2x128xf32>
    %71 = tpu.matmul %69, %70, %cst_36 {dimension_numbers = #tpu.dot_dimension_numbers<[1], [0], [0], [1], [0, 0, 1, 1], [], []>} : vector<2x128xbf16>, vector<128x128xbf16>, vector<2x128xf32> -> vector<2x128xf32>
    %c0_37 = arith.constant 0 : index
    %c0_38 = arith.constant 0 : index
    %72 = vector.load %arg11[%c0_37, %c0_38] : memref<1x128xf32, #tpu.memory_space<vmem>>, vector<1x128xf32>
    %73 = vector.broadcast %72 : vector<1x128xf32> to vector<2x128xf32>
    %74 = arith.addf %71, %73 : vector<2x128xf32>
    %c0_39 = arith.constant 0 : index
    %c0_40 = arith.constant 0 : index
    %75 = vector.load %arg12[%c0_39, %c0_40] : memref<2x128xf32, #tpu.memory_space<vmem>>, vector<2x128xf32>
    tpu.vector_store %arg12[%c0_39, %c0_40], %74 {strides = array<i32>} : memref<2x128xf32, #tpu.memory_space<vmem>>, vector<2x128xf32>,
    %c0_41 = arith.constant 0 : index
    %c0_42 = arith.constant 0 : index
    %76 = vector.load %arg13[%c0_41, %c0_42] : memref<2x128xf32, #tpu.memory_space<vmem>>, vector<2x128xf32>
    tpu.vector_store %arg13[%c0_41, %c0_42], %26 {strides = array<i32>} : memref<2x128xf32, #tpu.memory_space<vmem>>, vector<2x128xf32>,
    %c0_43 = arith.constant 0 : index
    %c0_44 = arith.constant 0 : index
    %77 = vector.load %arg14[%c0_43, %c0_44] : memref<2x128xf32, #tpu.memory_space<vmem>>, vector<2x128xf32>
    tpu.vector_store %arg14[%c0_43, %c0_44], %53 {strides = array<i32>} : memref<2x128xf32, #tpu.memory_space<vmem>>, vector<2x128xf32>,
    return
  }
}

</mosaic_0001>

<llo_original>
// kernel: _lambda_.6
$region0: #{_lambda_.6}
  #allocation0 [shape = 'u32[]', space=smem, size = 0x4, offset = 0x4, fixed_abs, tag = 'smem constant byte address 0x4 - core index']
  #allocation1 [shape = 'u32[144,128]{1,0:T(1,128)}', space=vmem, size = 0x12000, scoped, tag = 'internal scratch']
  %s0 = inlined_call_operand.vmem [shape: f32[8,192], index: 0, kind: input, shape index: {}]
  %s1 = inlined_call_operand.vmem [shape: f32[192,128], index: 1, kind: input, shape index: {}]
  %s2 = inlined_call_operand.vmem [shape: f32[1,128], index: 2, kind: input, shape index: {}]
  %s3 = inlined_call_operand.vmem [shape: f32[5,128], index: 3, kind: input, shape index: {}]
  %s4 = inlined_call_operand.vmem [shape: f32[1,128], index: 4, kind: input, shape index: {}]
  %s5 = inlined_call_operand.vmem [shape: f32[1,128], index: 5, kind: input, shape index: {}]
  %s6 = inlined_call_operand.vmem [shape: f32[2,5,128], index: 6, kind: output, shape index: {}]
  %s7 = sld [smem:[#allocation0]]
  $region34: #{_lambda_.6} parent=0
    _
  %s9 = ssub.s32 1, %s7
  %s10 = scalar_select 0, %s9, %s7
  // Predicated region
  $region2: #{_lambda_.6} parent=0 // pred_check
    _
  $region3: #{_lambda_.6} parent=0 // pred_check_branch
    %12 = sbr.rel (0) target = $region5
  $region4: #{_lambda_.6} parent=0 // pred_region
    _
  $region5: #{_lambda_.6} parent=0 // pred_fallthru
    _
  // Predicated region
  $region6: #{_lambda_.6} parent=0 // pred_check
    _
  $region7: #{_lambda_.6} parent=0 // pred_check_branch
    %14 = sbr.rel (0) target = $region9
  $region8: #{_lambda_.6} parent=0 // pred_region
    _
  $region9: #{_lambda_.6} parent=0 // pred_fallthru
    _
  // Predicated region
  $region10: #{_lambda_.6} parent=0 // pred_check
    _
  $region11: #{_lambda_.6} parent=0 // pred_check_branch
    %16 = sbr.rel (0) target = $region13
  $region12: #{_lambda_.6} parent=0 // pred_region
    _
  $region13: #{_lambda_.6} parent=0 // pred_fallthru
    _
  // Predicated region
  $region14: #{_lambda_.6} parent=0 // pred_check
    _
  $region15: #{_lambda_.6} parent=0 // pred_check_branch
    %18 = sbr.rel (0) target = $region17
  $region16: #{_lambda_.6} parent=0 // pred_region
    _
  $region17: #{_lambda_.6} parent=0 // pred_fallthru
    _
  // Predicated region
  $region18: #{_lambda_.6} parent=0 // pred_check
    _
  $region19: #{_lambda_.6} parent=0 // pred_check_branch
    %20 = sbr.rel (0) target = $region21
  $region20: #{_lambda_.6} parent=0 // pred_region
    _
  $region21: #{_lambda_.6} parent=0 // pred_fallthru
    _
  // Predicated region
  $region22: #{_lambda_.6} parent=0 // pred_check
    _
  $region23: #{_lambda_.6} parent=0 // pred_check_branch
    %22 = sbr.rel (0) target = $region25
  $region24: #{_lambda_.6} parent=0 // pred_region
    _
  $region25: #{_lambda_.6} parent=0 // pred_fallthru
    _
  %v24 = vld [vmem:[%s4] sm:$0x1]
  %v25 = vld [vmem:[%s5] sm:$0x1]
  %v26 = vld [vmem:[%s2] sm:$0x1]
  %v27 = vld [vmem:[%s3] sm:$0x1]
  %v28 = vadd.f32 %v26, %v27
  %vm29 = vcmask 1040384
  %v30 = vsel %vm29, %v28, 0.0
  %31 = vadd.xlane.f32.xlu0 %v30
  %v32 = vpop.xlane.xlu0 %31
  %v33 = vmul.f32 %v32, 0.0078125
  %v34 = vsub.f32 %v28, %v33
  %v35 = vmul.f32 %v34, %v34
  %v36 = vsel %vm29, %v35, 0.0
  %37 = vadd.xlane.f32.xlu0 %v36
  %v38 = vpop.xlane.xlu0 %37
  %v39 = vmul.f32 %v38, 0.0078125
  %v40 = vadd.f32 %v39, 1e-05
  %v41 = vrsqrt.pop %v40
  %v42 = vmul.f32 %v34, %v41
  %v43 = vmul.f32 %v42, %v24
  %v44 = vadd.f32 %v43, %v25
  %45 = vst [vmem:[%s6] sm:$0x1] %v44
  %v46 = vld [vmem:[%s0] sm:$0xf]
  %v47 = vld [vmem:[%s0 + $0x8] sm:$0xf]
  %v48 = vld [vmem:[%s1] sm:$0xff]
  %v49 = vld [vmem:[%s1 + $0x8] sm:$0xff]
  %v50 = vld [vmem:[%s1 + $0x10] sm:$0xff]
  %v51 = vld [vmem:[%s1 + $0x18] sm:$0xff]
  %v52 = vld [vmem:[%s1 + $0x20] sm:$0xff]
  %v53 = vld [vmem:[%s1 + $0x28] sm:$0xff]
  %v54 = vld [vmem:[%s1 + $0x30] sm:$0xff]
  %v55 = vld [vmem:[%s1 + $0x38] sm:$0xff]
  %v56 = vld [vmem:[%s1 + $0x40] sm:$0xff]
  %v57 = vld [vmem:[%s1 + $0x48] sm:$0xff]
  %v58 = vld [vmem:[%s1 + $0x50] sm:$0xff]
  %v59 = vld [vmem:[%s1 + $0x58] sm:$0xff]
  %v60 = vld [vmem:[%s1 + $0x60] sm:$0xff]
  %v61 = vld [vmem:[%s1 + $0x68] sm:$0xff]
  %v62 = vld [vmem:[%s1 + $0x70] sm:$0xff]
  %v63 = vld [vmem:[%s1 + $0x78] sm:$0xff]
  %v64 = vld [vmem:[%s1 + $0x80] sm:$0xff]
  %v65 = vld [vmem:[%s1 + $0x88] sm:$0xff]
  %v66 = vld [vmem:[%s1 + $0x90] sm:$0xff]
  %v67 = vld [vmem:[%s1 + $0x98] sm:$0xff]
  %v68 = vld [vmem:[%s1 + $0xa0] sm:$0xff]
  %v69 = vld [vmem:[%s1 + $0xa8] sm:$0xff]
  %v70 = vld [vmem:[%s1 + $0xb0] sm:$0xff]
  %v71 = vld [vmem:[%s1 + $0xb8] sm:$0xff]
  %v72 = vpack.c.bf16 %v46, %v46
  %v73 = vpack.c.bf16 %v47, %v47
  %v74 = vpack.c.bf16 %v49, %v48
  %v75 = vpack.c.bf16 %v51, %v50
  %v76 = vpack.c.bf16 %v53, %v52
  %v77 = vpack.c.bf16 %v55, %v54
  %v78 = vpack.c.bf16 %v57, %v56
  %v79 = vpack.c.bf16 %v59, %v58
  %v80 = vpack.c.bf16 %v61, %v60
  %v81 = vpack.c.bf16 %v63, %v62
  %v82 = vpack.c.bf16 %v65, %v64
  %v83 = vpack.c.bf16 %v67, %v66
  %v84 = vpack.c.bf16 %v69, %v68
  %v85 = vpack.c.bf16 %v71, %v70
  %v86 = vld [vmem:[%s3 + $0x1] sm:$0xf]
  %vm87 = vcmask 523264
  %v89 = vsel %vm87, %v73, 0
  %91 = vmatprep.subr.bf16.mxu0 0
  %92 = vmatpush1.bf16.msra.mxu0 %v74
  %93 = vmatprep.subr.bf16.mxu0 0
  %94 = vmatpush1.bf16.msra.mxu0 %v75
  %95 = vmatprep.subr.bf16.mxu0 0
  %96 = vmatpush1.bf16.msra.mxu0 %v76
  %97 = vmatprep.subr.bf16.mxu0 0
  %98 = vmatpush1.bf16.msra.mxu0 %v77
  %99 = vmatprep.subr.bf16.mxu0 0
  %100 = vmatpush1.bf16.msra.mxu0 %v78
  %101 = vmatprep.subr.bf16.mxu0 0
  %102 = vmatpush1.bf16.msra.mxu0 %v79
  %103 = vmatprep.subr.bf16.mxu0 0
  %104 = vmatpush1.bf16.msra.mxu0 %v80
  %105 = vmatprep.subr.bf16.mxu0 0
  %106 = vmatpush1.bf16.msra.mxu0 %v81
  %107 = vmatprep.subr.bf16.mxu0 0
  %108 = vmatpush1.bf16.msra.mxu0 %v82
  %109 = vmatprep.subr.bf16.mxu0 0
  %110 = vmatpush1.bf16.msra.mxu0 %v83
  %111 = vmatprep.subr.bf16.mxu0 0
  %112 = vmatpush1.bf16.msra.mxu0 %v84
  %113 = vmatprep.subr.bf16.mxu0 0
  %114 = vmatpush1.bf16.msra.mxu0 %v85
  %115 = vmatprep.subr.bf16.mxu0 0
  %116 = vmatpush1.bf16.msra.mxu0 0
  %117 = vmatprep.subr.bf16.mxu0 0
  %118 = vmatpush1.bf16.msra.mxu0 0
  %119 = vmatprep.subr.bf16.mxu0 0
  %120 = vmatpush1.bf16.msra.mxu0 0
  %121 = vmatprep.subr.bf16.mxu0 0
  %122 = vmatpush1.bf16.msra.mxu0 0
  %123 = vmatprep.mubr.bf16.mxu0 %v89
  %124 = vmatmul.mubr.bf16.gmra.mrb[0].mxu0 %v72
  %v125 = vpop.f32.mrb[0].mxu0
  %v126 = vadd.f32 %v86, %v125
  %v127 = vpop.f32.mrb[0].mxu0
  %v128 = vpop.f32.mrb[0].mxu0
  %v129 = vpop.f32.mrb[0].mxu0
  %130 = vdwg.mxu0
  %vm131 = vcmask 1043456
  %v132 = vsel %vm131, %v126, 0.0
  %133 = vadd.xlane.f32.xlu0 %v132
  %v134 = vpop.xlane.xlu0 %133
  %v135 = vmul.f32 %v134, 0.0078125
  %v136 = vsub.f32 %v126, %v135
  %v137 = vmul.f32 %v136, %v136
  %v138 = vsel %vm131, %v137, 0.0
  %139 = vadd.xlane.f32.xlu0 %v138
  %v140 = vpop.xlane.xlu0 %139
  %v141 = vmul.f32 %v140, 0.0078125
  %v142 = vadd.f32 %v141, 1e-05
  %v143 = vrsqrt.pop %v142
  %v144 = vmul.f32 %v136, %v143
  %v146 = vlaneseq
  %v147 = vshrl.u32 %v146, 7
  %v148 = vsub.s32 0, %v147
  %v149 = vrot.slane %v24, %v148
  %v151 = vmul.f32 %v144, %v149
  %v153 = vlaneseq
  %v154 = vshrl.u32 %v153, 7
  %v155 = vsub.s32 0, %v154
  %v156 = vrot.slane %v25, %v155
  %v158 = vadd.f32 %v151, %v156
  %159 = vst [vmem:[%s6 + $0x1] sm:$0xf] %v158
  %v160 = vld [vmem:[%s3] sm:$0x1]
  %v161 = vadd.f32 %v26, %v160
  %v162 = vsel %vm29, %v161, 0.0
  %163 = vadd.xlane.f32.xlu0 %v162
  %v164 = vpop.xlane.xlu0 %163
  %v165 = vmul.f32 %v164, 0.0078125
  %v166 = vsub.f32 %v161, %v165
  %v167 = vmul.f32 %v166, %v166
  %v168 = vsel %vm29, %v167, 0.0
  %169 = vadd.xlane.f32.xlu0 %v168
  %v170 = vpop.xlane.xlu0 %169
  %v171 = vmul.f32 %v170, 0.0078125
  %v172 = vadd.f32 %v171, 1e-05
  %v173 = vrsqrt.pop %v172
  %v174 = vmul.f32 %v166, %v173
  %v175 = vmul.f32 %v174, %v24
  %v176 = vadd.f32 %v175, %v25
  %s177 = scalar_lea.vmem %s6, 8
  %178 = vst [vmem:[%s177] sm:$0x1] %v176
  %v179 = vld [vmem:[%s0] sm:$0xf0]
  %v180 = vld [vmem:[%s0 + $0x8] sm:$0xf0]
  %v181 = vld [vmem:[%s1] sm:$0xff]
  %v182 = vld [vmem:[%s1 + $0x8] sm:$0xff]
  %v183 = vld [vmem:[%s1 + $0x10] sm:$0xff]
  %v184 = vld [vmem:[%s1 + $0x18] sm:$0xff]
  %v185 = vld [vmem:[%s1 + $0x20] sm:$0xff]
  %v186 = vld [vmem:[%s1 + $0x28] sm:$0xff]
  %v187 = vld [vmem:[%s1 + $0x30] sm:$0xff]
  %v188 = vld [vmem:[%s1 + $0x38] sm:$0xff]
  %v189 = vld [vmem:[%s1 + $0x40] sm:$0xff]
  %v190 = vld [vmem:[%s1 + $0x48] sm:$0xff]
  %v191 = vld [vmem:[%s1 + $0x50] sm:$0xff]
  %v192 = vld [vmem:[%s1 + $0x58] sm:$0xff]
  %v193 = vld [vmem:[%s1 + $0x60] sm:$0xff]
  %v194 = vld [vmem:[%s1 + $0x68] sm:$0xff]
  %v195 = vld [vmem:[%s1 + $0x70] sm:$0xff]
  %v196 = vld [vmem:[%s1 + $0x78] sm:$0xff]
  %v197 = vld [vmem:[%s1 + $0x80] sm:$0xff]
  %v198 = vld [vmem:[%s1 + $0x88] sm:$0xff]
  %v199 = vld [vmem:[%s1 + $0x90] sm:$0xff]
  %v200 = vld [vmem:[%s1 + $0x98] sm:$0xff]
  %v201 = vld [vmem:[%s1 + $0xa0] sm:$0xff]
  %v202 = vld [vmem:[%s1 + $0xa8] sm:$0xff]
  %v203 = vld [vmem:[%s1 + $0xb0] sm:$0xff]
  %v204 = vld [vmem:[%s1 + $0xb8] sm:$0xff]
  %v205 = vpack.c.bf16 %v179, %v179
  %v206 = vpack.c.bf16 %v180, %v180
  %v207 = vpack.c.bf16 %v182, %v181
  %v208 = vpack.c.bf16 %v184, %v183
  %v209 = vpack.c.bf16 %v186, %v185
  %v210 = vpack.c.bf16 %v188, %v187
  %v211 = vpack.c.bf16 %v190, %v189
  %v212 = vpack.c.bf16 %v192, %v191
  %v213 = vpack.c.bf16 %v194, %v193
  %v214 = vpack.c.bf16 %v196, %v195
  %v215 = vpack.c.bf16 %v198, %v197
  %v216 = vpack.c.bf16 %v200, %v199
  %v217 = vpack.c.bf16 %v202, %v201
  %v218 = vpack.c.bf16 %v204, %v203
  %v219 = vld [vmem:[%s3 + $0x1] sm:$0xf]
  %v222 = vrot.slane %v205, 2
  %v223 = vrot.slane %v206, 2
  %v226 = vsel %vm87, %v223, 0
  %228 = vmatprep.subr.bf16.mxu0 0
  %229 = vmatpush1.bf16.msra.mxu0 %v207
  %230 = vmatprep.subr.bf16.mxu0 0
  %231 = vmatpush1.bf16.msra.mxu0 %v208
  %232 = vmatprep.subr.bf16.mxu0 0
  %233 = vmatpush1.bf16.msra.mxu0 %v209
  %234 = vmatprep.subr.bf16.mxu0 0
  %235 = vmatpush1.bf16.msra.mxu0 %v210
  %236 = vmatprep.subr.bf16.mxu0 0
  %237 = vmatpush1.bf16.msra.mxu0 %v211
  %238 = vmatprep.subr.bf16.mxu0 0
  %239 = vmatpush1.bf16.msra.mxu0 %v212
  %240 = vmatprep.subr.bf16.mxu0 0
  %241 = vmatpush1.bf16.msra.mxu0 %v213
  %242 = vmatprep.subr.bf16.mxu0 0
  %243 = vmatpush1.bf16.msra.mxu0 %v214
  %244 = vmatprep.subr.bf16.mxu0 0
  %245 = vmatpush1.bf16.msra.mxu0 %v215
  %246 = vmatprep.subr.bf16.mxu0 0
  %247 = vmatpush1.bf16.msra.mxu0 %v216
  %248 = vmatprep.subr.bf16.mxu0 0
  %249 = vmatpush1.bf16.msra.mxu0 %v217
  %250 = vmatprep.subr.bf16.mxu0 0
  %251 = vmatpush1.bf16.msra.mxu0 %v218
  %252 = vmatprep.subr.bf16.mxu0 0
  %253 = vmatpush1.bf16.msra.mxu0 0
  %254 = vmatprep.subr.bf16.mxu0 0
  %255 = vmatpush1.bf16.msra.mxu0 0
  %256 = vmatprep.subr.bf16.mxu0 0
  %257 = vmatpush1.bf16.msra.mxu0 0
  %258 = vmatprep.subr.bf16.mxu0 0
  %259 = vmatpush1.bf16.msra.mxu0 0
  %260 = vmatprep.mubr.bf16.mxu0 %v226
  %261 = vmatmul.mubr.bf16.gmra.mrb[0].mxu0 %v222
  %v262 = vpop.f32.mrb[0].mxu0
  %v263 = vadd.f32 %v219, %v262
  %v264 = vpop.f32.mrb[0].mxu0
  %v265 = vpop.f32.mrb[0].mxu0
  %v266 = vpop.f32.mrb[0].mxu0
  %267 = vdwg.mxu0
  %v268 = vsel %vm131, %v263, 0.0
  %269 = vadd.xlane.f32.xlu0 %v268
  %v270 = vpop.xlane.xlu0 %269
  %v271 = vmul.f32 %v270, 0.0078125
  %v272 = vsub.f32 %v263, %v271
  %v273 = vmul.f32 %v272, %v272
  %v274 = vsel %vm131, %v273, 0.0
  %275 = vadd.xlane.f32.xlu0 %v274
  %v276 = vpop.xlane.xlu0 %275
  %v277 = vmul.f32 %v276, 0.0078125
  %v278 = vadd.f32 %v277, 1e-05
  %v279 = vrsqrt.pop %v278
  %v280 = vmul.f32 %v272, %v279
  %v281 = vmul.f32 %v280, %v149
  %v282 = vadd.f32 %v281, %v156
  %283 = vst [vmem:[%s177 + $0x1] sm:$0xf] %v282
  // Predicated region
  $region26: #{_lambda_.6} parent=0 // pred_check
    _
  $region27: #{_lambda_.6} parent=0 // pred_check_branch
    %285 = sbr.rel (0) target = $region29
  $region28: #{_lambda_.6} parent=0 // pred_region
    _
  $region29: #{_lambda_.6} parent=0 // pred_fallthru
    _
  // Predicated region
  $region30: #{_lambda_.6} parent=0 // pred_check
    _
  $region31: #{_lambda_.6} parent=0 // pred_check_branch
    %287 = sbr.rel (0) target = $region33
  $region32: #{_lambda_.6} parent=0 // pred_region
    _
  $region33: #{_lambda_.6} parent=0 // pred_fallthru
    _

// kernel: _lambda_.8
$region0: #{_lambda_.8}
  #allocation0 [shape = 'u32[]', space=smem, size = 0x4, offset = 0x4, fixed_abs, tag = 'smem constant byte address 0x4 - core index']
  #allocation1 [shape = 'u32[144,128]{1,0:T(1,128)}', space=vmem, size = 0x12000, scoped, tag = 'internal scratch']
  #allocation2 [shape = 'f32[5,384]{1,0:T(8,128)}', space=vmem, size = 0x3000, scoped, tag = 'scratch operand']
  #allocation3 [shape = 'f32[5,128]{1,0:T(8,128)}', space=vmem, size = 0x1000, scoped, tag = 'scratch operand']
  %s0 = inlined_call_operand.vmem [shape: f32[2,5,128], index: 0, kind: input, shape index: {}]
  %s1 = inlined_call_operand.vmem [shape: f32[1,128], index: 1, kind: input, shape index: {}]
  %s2 = inlined_call_operand.vmem [shape: f32[1,128], index: 2, kind: input, shape index: {}]
  %s3 = inlined_call_operand.vmem [shape: f32[128,384], index: 3, kind: input, shape index: {}]
  %s4 = inlined_call_operand.vmem [shape: f32[1,384], index: 4, kind: input, shape index: {}]
  %s5 = inlined_call_operand.vmem [shape: f32[128,128], index: 5, kind: input, shape index: {}]
  %s6 = inlined_call_operand.vmem [shape: f32[1,128], index: 6, kind: input, shape index: {}]
  %s7 = inlined_call_operand.vmem [shape: f32[1,128], index: 7, kind: input, shape index: {}]
  %s8 = inlined_call_operand.vmem [shape: f32[1,128], index: 8, kind: input, shape index: {}]
  %s9 = inlined_call_operand.vmem [shape: f32[128,512], index: 9, kind: input, shape index: {}]
  %s10 = inlined_call_operand.vmem [shape: f32[1,512], index: 10, kind: input, shape index: {}]
  %s11 = inlined_call_operand.vmem [shape: f32[512,128], index: 11, kind: input, shape index: {}]
  %s12 = inlined_call_operand.vmem [shape: f32[1,128], index: 12, kind: input, shape index: {}]
  %s13 = inlined_call_operand.vmem [shape: f32[2,5,128], index: 13, kind: output, shape index: {}]
  %s14 = sld [smem:[#allocation0]]
  $region85: #{_lambda_.8} parent=0
    _
  %s16 = ssub.s32 1, %s14
  %s17 = scalar_select 0, %s16, %s14
  loop: start=0, step=1, limit=4
  $region2: #{_lambda_.8} parent=0 // loop_pre_header
    _
  $region3: #{_lambda_.8} parent=0 // loop_header
    %s19 = sphi 0, %s23
    %p20 = scmp.ge.s32.totalorder %s19, 4
    %s29 = sphi 0, %s31
    %s32 = sphi 0, %s29
    %s33 = sphi 0, %s32
    %s49 = sphi 0, %s33
    %s53 = sphi 0, %s53
    %s55 = sphi 0, %s53
    %s56 = sphi 0, %s55
    %s70 = sphi 0, %s56
    %s74 = sphi 0, %s74
    %s76 = sphi 0, %s74
    %s77 = sphi 0, %s76
    %s91 = sphi 0, %s77
    %s95 = sphi 0, %s95
    %s97 = sphi 0, %s95
    %s98 = sphi 0, %s97
    %s112 = sphi 0, %s98
    %s116 = sphi 0, %s116
    %s118 = sphi 0, %s116
    %s119 = sphi 0, %s118
    %s133 = sphi 0, %s119
    %s137 = sphi 0, %s137
    %s139 = sphi 0, %s137
    %s140 = sphi 0, %s139
    %s154 = sphi 0, %s140
    %s158 = sphi 0, %s158
    %s160 = sphi 0, %s158
    %s161 = sphi 0, %s160
    %s175 = sphi 0, %s161
    %s179 = sphi 0, %s179
    %s181 = sphi 0, %s179
    %s182 = sphi 0, %s181
    %s196 = sphi 0, %s182
    %s200 = sphi 0, %s200
    %s202 = sphi 0, %s200
    %s203 = sphi 0, %s202
    %s217 = sphi 0, %s203
    %s221 = sphi 0, %s221
    %s223 = sphi 0, %s221
    %s224 = sphi 0, %s223
    %s238 = sphi 0, %s224
    %s242 = sphi 0, %s242
    %s244 = sphi 0, %s242
    %s245 = sphi 0, %s244
    %s259 = sphi 0, %s245
    %s263 = sphi 0, %s263
    %s265 = sphi 0, %s263
    %s266 = sphi 0, %s265
    %s280 = sphi 0, %s266
    %s284 = sphi 0, %s284
    %s286 = sphi 0, %s284
    %s287 = sphi 0, %s286
    %s301 = sphi 0, %s287
    %s307 = sphi 0, %s309
    %s310 = sphi 0, %s307
    %s311 = sphi 0, %s310
    %s327 = sphi 0, %s311
  $region4: #{_lambda_.8} parent=0 // loop_header_branch
    %22 = sbr.rel (%p20) target = $region8
  $region5: #{_lambda_.8} parent=0 // loop_body
    %s24 = ssub.s32 %s19, 1
    %s25 = ssub.s32 %s19, 2
    %s26 = sadd.s32 %s19, 1
    %s27 = ssub.s32 %s19, %s26
    %p28 = scmp.eq.s32.totalorder %s27, 0
    %s30 = sadd.s32 %s29, 1
    %s31 = scalar_select %p28, %s29, %s30
    %p34 = pneg %p28
    %p35 = scmp.eq.s32.totalorder %s19, 1
    %p36 = por %p34, %p35
    %p37 = scmp.ne.s32.totalorder %s29, %s32
    %p38 = scmp.eq.s32.totalorder %s19, 0
    %p39 = por %p37, %p38
    %p40 = scmp.ne.s32.totalorder %s29, %s32
    %p41 = scmp.eq.s32.totalorder %s24, 1
    %p42 = por %p40, %p41
    %p43 = scmp.ne.s32.totalorder %s32, %s33
    %p44 = scmp.eq.s32.totalorder %s24, 0
    %p45 = por %p43, %p44
    %p46 = scmp.ne.s32.totalorder %s32, %s33
    %p47 = scmp.eq.s32.totalorder %s25, 1
    %p48 = por %p46, %p47
    %p50 = scmp.ne.s32.totalorder %s33, %s49
    %p51 = scmp.eq.s32.totalorder %s25, 0
    %p52 = por %p50, %p51
    %s54 = sadd.s32 %s53, 1
    %p57 = scmp.eq.s32.totalorder %s19, 1
    %p58 = scmp.ne.s32.totalorder %s53, %s55
    %p59 = scmp.eq.s32.totalorder %s19, 0
    %p60 = por %p58, %p59
    %p61 = scmp.ne.s32.totalorder %s53, %s55
    %p62 = scmp.eq.s32.totalorder %s24, 1
    %p63 = por %p61, %p62
    %p64 = scmp.ne.s32.totalorder %s55, %s56
    %p65 = scmp.eq.s32.totalorder %s24, 0
    %p66 = por %p64, %p65
    %p67 = scmp.ne.s32.totalorder %s55, %s56
    %p68 = scmp.eq.s32.totalorder %s25, 1
    %p69 = por %p67, %p68
    %p71 = scmp.ne.s32.totalorder %s56, %s70
    %p72 = scmp.eq.s32.totalorder %s25, 0
    %p73 = por %p71, %p72
    %s75 = sadd.s32 %s74, 1
    %p78 = scmp.eq.s32.totalorder %s19, 1
    %p79 = scmp.ne.s32.totalorder %s74, %s76
    %p80 = scmp.eq.s32.totalorder %s19, 0
    %p81 = por %p79, %p80
    %p82 = scmp.ne.s32.totalorder %s74, %s76
    %p83 = scmp.eq.s32.totalorder %s24, 1
    %p84 = por %p82, %p83
    %p85 = scmp.ne.s32.totalorder %s76, %s77
    %p86 = scmp.eq.s32.totalorder %s24, 0
    %p87 = por %p85, %p86
    %p88 = scmp.ne.s32.totalorder %s76, %s77
    %p89 = scmp.eq.s32.totalorder %s25, 1
    %p90 = por %p88, %p89
    %p92 = scmp.ne.s32.totalorder %s77, %s91
    %p93 = scmp.eq.s32.totalorder %s25, 0
    %p94 = por %p92, %p93
    %s96 = sadd.s32 %s95, 1
    %p99 = scmp.eq.s32.totalorder %s19, 1
    %p100 = scmp.ne.s32.totalorder %s95, %s97
    %p101 = scmp.eq.s32.totalorder %s19, 0
    %p102 = por %p100, %p101
    %p103 = scmp.ne.s32.totalorder %s95, %s97
    %p104 = scmp.eq.s32.totalorder %s24, 1
    %p105 = por %p103, %p104
    %p106 = scmp.ne.s32.totalorder %s97, %s98
    %p107 = scmp.eq.s32.totalorder %s24, 0
    %p108 = por %p106, %p107
    %p109 = scmp.ne.s32.totalorder %s97, %s98
    %p110 = scmp.eq.s32.totalorder %s25, 1
    %p111 = por %p109, %p110
    %p113 = scmp.ne.s32.totalorder %s98, %s112
    %p114 = scmp.eq.s32.totalorder %s25, 0
    %p115 = por %p113, %p114
    %s117 = sadd.s32 %s116, 1
    %p120 = scmp.eq.s32.totalorder %s19, 1
    %p121 = scmp.ne.s32.totalorder %s116, %s118
    %p122 = scmp.eq.s32.totalorder %s19, 0
    %p123 = por %p121, %p122
    %p124 = scmp.ne.s32.totalorder %s116, %s118
    %p125 = scmp.eq.s32.totalorder %s24, 1
    %p126 = por %p124, %p125
    %p127 = scmp.ne.s32.totalorder %s118, %s119
    %p128 = scmp.eq.s32.totalorder %s24, 0
    %p129 = por %p127, %p128
    %p130 = scmp.ne.s32.totalorder %s118, %s119
    %p131 = scmp.eq.s32.totalorder %s25, 1
    %p132 = por %p130, %p131
    %p134 = scmp.ne.s32.totalorder %s119, %s133
    %p135 = scmp.eq.s32.totalorder %s25, 0
    %p136 = por %p134, %p135
    %s138 = sadd.s32 %s137, 1
    %p141 = scmp.eq.s32.totalorder %s19, 1
    %p142 = scmp.ne.s32.totalorder %s137, %s139
    %p143 = scmp.eq.s32.totalorder %s19, 0
    %p144 = por %p142, %p143
    %p145 = scmp.ne.s32.totalorder %s137, %s139
    %p146 = scmp.eq.s32.totalorder %s24, 1
    %p147 = por %p145, %p146
    %p148 = scmp.ne.s32.totalorder %s139, %s140
    %p149 = scmp.eq.s32.totalorder %s24, 0
    %p150 = por %p148, %p149
    %p151 = scmp.ne.s32.totalorder %s139, %s140
    %p152 = scmp.eq.s32.totalorder %s25, 1
    %p153 = por %p151, %p152
    %p155 = scmp.ne.s32.totalorder %s140, %s154
    %p156 = scmp.eq.s32.totalorder %s25, 0
    %p157 = por %p155, %p156
    %s159 = sadd.s32 %s158, 1
    %p162 = scmp.eq.s32.totalorder %s19, 1
    %p163 = scmp.ne.s32.totalorder %s158, %s160
    %p164 = scmp.eq.s32.totalorder %s19, 0
    %p165 = por %p163, %p164
    %p166 = scmp.ne.s32.totalorder %s158, %s160
    %p167 = scmp.eq.s32.totalorder %s24, 1
    %p168 = por %p166, %p167
    %p169 = scmp.ne.s32.totalorder %s160, %s161
    %p170 = scmp.eq.s32.totalorder %s24, 0
    %p171 = por %p169, %p170
    %p172 = scmp.ne.s32.totalorder %s160, %s161
    %p173 = scmp.eq.s32.totalorder %s25, 1
    %p174 = por %p172, %p173
    %p176 = scmp.ne.s32.totalorder %s161, %s175
    %p177 = scmp.eq.s32.totalorder %s25, 0
    %p178 = por %p176, %p177
    %s180 = sadd.s32 %s179, 1
    %p183 = scmp.eq.s32.totalorder %s19, 1
    %p184 = scmp.ne.s32.totalorder %s179, %s181
    %p185 = scmp.eq.s32.totalorder %s19, 0
    %p186 = por %p184, %p185
    %p187 = scmp.ne.s32.totalorder %s179, %s181
    %p188 = scmp.eq.s32.totalorder %s24, 1
    %p189 = por %p187, %p188
    %p190 = scmp.ne.s32.totalorder %s181, %s182
    %p191 = scmp.eq.s32.totalorder %s24, 0
    %p192 = por %p190, %p191
    %p193 = scmp.ne.s32.totalorder %s181, %s182
    %p194 = scmp.eq.s32.totalorder %s25, 1
    %p195 = por %p193, %p194
    %p197 = scmp.ne.s32.totalorder %s182, %s196
    %p198 = scmp.eq.s32.totalorder %s25, 0
    %p199 = por %p197, %p198
    %s201 = sadd.s32 %s200, 1
    %p204 = scmp.eq.s32.totalorder %s19, 1
    %p205 = scmp.ne.s32.totalorder %s200, %s202
    %p206 = scmp.eq.s32.totalorder %s19, 0
    %p207 = por %p205, %p206
    %p208 = scmp.ne.s32.totalorder %s200, %s202
    %p209 = scmp.eq.s32.totalorder %s24, 1
    %p210 = por %p208, %p209
    %p211 = scmp.ne.s32.totalorder %s202, %s203
    %p212 = scmp.eq.s32.totalorder %s24, 0
    %p213 = por %p211, %p212
    %p214 = scmp.ne.s32.totalorder %s202, %s203
    %p215 = scmp.eq.s32.totalorder %s25, 1
    %p216 = por %p214, %p215
    %p218 = scmp.ne.s32.totalorder %s203, %s217
    %p219 = scmp.eq.s32.totalorder %s25, 0
    %p220 = por %p218, %p219
    %s222 = sadd.s32 %s221, 1
    %p225 = scmp.eq.s32.totalorder %s19, 1
    %p226 = scmp.ne.s32.totalorder %s221, %s223
    %p227 = scmp.eq.s32.totalorder %s19, 0
    %p228 = por %p226, %p227
    %p229 = scmp.ne.s32.totalorder %s221, %s223
    %p230 = scmp.eq.s32.totalorder %s24, 1
    %p231 = por %p229, %p230
    %p232 = scmp.ne.s32.totalorder %s223, %s224
    %p233 = scmp.eq.s32.totalorder %s24, 0
    %p234 = por %p232, %p233
    %p235 = scmp.ne.s32.totalorder %s223, %s224
    %p236 = scmp.eq.s32.totalorder %s25, 1
    %p237 = por %p235, %p236
    %p239 = scmp.ne.s32.totalorder %s224, %s238
    %p240 = scmp.eq.s32.totalorder %s25, 0
    %p241 = por %p239, %p240
    %s243 = sadd.s32 %s242, 1
    %p246 = scmp.eq.s32.totalorder %s19, 1
    %p247 = scmp.ne.s32.totalorder %s242, %s244
    %p248 = scmp.eq.s32.totalorder %s19, 0
    %p249 = por %p247, %p248
    %p250 = scmp.ne.s32.totalorder %s242, %s244
    %p251 = scmp.eq.s32.totalorder %s24, 1
    %p252 = por %p250, %p251
    %p253 = scmp.ne.s32.totalorder %s244, %s245
    %p254 = scmp.eq.s32.totalorder %s24, 0
    %p255 = por %p253, %p254
    %p256 = scmp.ne.s32.totalorder %s244, %s245
    %p257 = scmp.eq.s32.totalorder %s25, 1
    %p258 = por %p256, %p257
    %p260 = scmp.ne.s32.totalorder %s245, %s259
    %p261 = scmp.eq.s32.totalorder %s25, 0
    %p262 = por %p260, %p261
    %s264 = sadd.s32 %s263, 1
    %p267 = scmp.eq.s32.totalorder %s19, 1
    %p268 = scmp.ne.s32.totalorder %s263, %s265
    %p269 = scmp.eq.s32.totalorder %s19, 0
    %p270 = por %p268, %p269
    %p271 = scmp.ne.s32.totalorder %s263, %s265
    %p272 = scmp.eq.s32.totalorder %s24, 1
    %p273 = por %p271, %p272
    %p274 = scmp.ne.s32.totalorder %s265, %s266
    %p275 = scmp.eq.s32.totalorder %s24, 0
    %p276 = por %p274, %p275
    %p277 = scmp.ne.s32.totalorder %s265, %s266
    %p278 = scmp.eq.s32.totalorder %s25, 1
    %p279 = por %p277, %p278
    %p281 = scmp.ne.s32.totalorder %s266, %s280
    %p282 = scmp.eq.s32.totalorder %s25, 0
    %p283 = por %p281, %p282
    %s285 = sadd.s32 %s284, 1
    %p288 = scmp.eq.s32.totalorder %s19, 1
    %p289 = scmp.ne.s32.totalorder %s284, %s286
    %p290 = scmp.eq.s32.totalorder %s19, 0
    %p291 = por %p289, %p290
    %p292 = scmp.ne.s32.totalorder %s284, %s286
    %p293 = scmp.eq.s32.totalorder %s24, 1
    %p294 = por %p292, %p293
    %p295 = scmp.ne.s32.totalorder %s286, %s287
    %p296 = scmp.eq.s32.totalorder %s24, 0
    %p297 = por %p295, %p296
    %p298 = scmp.ne.s32.totalorder %s286, %s287
    %p299 = scmp.eq.s32.totalorder %s25, 1
    %p300 = por %p298, %p299
    %p302 = scmp.ne.s32.totalorder %s287, %s301
    %p303 = scmp.eq.s32.totalorder %s25, 0
    %p304 = por %p302, %p303
    %s305 = ssub.s32 %s19, %s26
    %p306 = scmp.eq.s32.totalorder %s305, 0
    %s308 = sadd.s32 %s307, 1
    %s309 = scalar_select %p306, %s307, %s308
    %p312 = pneg %p306
    %p313 = scmp.eq.s32.totalorder %s19, 1
    %p314 = por %p312, %p313
    %p315 = scmp.ne.s32.totalorder %s307, %s310
    %p316 = scmp.eq.s32.totalorder %s19, 0
    %p317 = por %p315, %p316
    %p318 = scmp.ne.s32.totalorder %s307, %s310
    %p319 = scmp.eq.s32.totalorder %s24, 1
    %p320 = por %p318, %p319
    %p321 = scmp.ne.s32.totalorder %s310, %s311
    %p322 = scmp.eq.s32.totalorder %s24, 0
    %p323 = por %p321, %p322
    %p324 = scmp.ne.s32.totalorder %s310, %s311
    %p325 = scmp.eq.s32.totalorder %s25, 1
    %p326 = por %p324, %p325
    %p328 = scmp.ne.s32.totalorder %s311, %s327
    %p329 = scmp.eq.s32.totalorder %s25, 0
    %p330 = por %p328, %p329
    %p331 = scmp.le.s32.totalorder 1, %s19
    %p332 = scmp.lt.s32.totalorder %s19, 3
    %p333 = pnand %p331, %p332
    %p334 = pneg %p333
    // Predicated region
    $region9: #{_lambda_.8} parent=5 // pred_check
      _
    $region10: #{_lambda_.8} parent=5 // pred_check_branch
      %336 = sbr.rel (%p333) target = $region12
    $region11: #{_lambda_.8} parent=5 // pred_region
      %s337 = ssub.s32 %s19, 1
      // Predicated region
      $region13: #{_lambda_.8} parent=11 // pred_check
        %p338 = pneg %p66
      $region14: #{_lambda_.8} parent=11 // pred_check_branch
        %340 = sbr.rel (%p338) target = $region16
      $region15: #{_lambda_.8} parent=11 // pred_region
        _
      $region16: #{_lambda_.8} parent=11 // pred_fallthru
        _
      // Predicated region
      $region17: #{_lambda_.8} parent=11 // pred_check
        %p341 = pneg %p87
      $region18: #{_lambda_.8} parent=11 // pred_check_branch
        %343 = sbr.rel (%p341) target = $region20
      $region19: #{_lambda_.8} parent=11 // pred_region
        _
      $region20: #{_lambda_.8} parent=11 // pred_fallthru
        _
      // Predicated region
      $region21: #{_lambda_.8} parent=11 // pred_check
        %p344 = pneg %p108
      $region22: #{_lambda_.8} parent=11 // pred_check_branch
        %346 = sbr.rel (%p344) target = $region24
      $region23: #{_lambda_.8} parent=11 // pred_region
        _
      $region24: #{_lambda_.8} parent=11 // pred_fallthru
        _
      // Predicated region
      $region25: #{_lambda_.8} parent=11 // pred_check
        %p347 = pneg %p129
      $region26: #{_lambda_.8} parent=11 // pred_check_branch
        %349 = sbr.rel (%p347) target = $region28
      $region27: #{_lambda_.8} parent=11 // pred_region
        _
      $region28: #{_lambda_.8} parent=11 // pred_fallthru
        _
      // Predicated region
      $region29: #{_lambda_.8} parent=11 // pred_check
        %p350 = pneg %p150
      $region30: #{_lambda_.8} parent=11 // pred_check_branch
        %352 = sbr.rel (%p350) target = $region32
      $region31: #{_lambda_.8} parent=11 // pred_region
        _
      $region32: #{_lambda_.8} parent=11 // pred_fallthru
        _
      // Predicated region
      $region33: #{_lambda_.8} parent=11 // pred_check
        %p353 = pneg %p171
      $region34: #{_lambda_.8} parent=11 // pred_check_branch
        %355 = sbr.rel (%p353) target = $region36
      $region35: #{_lambda_.8} parent=11 // pred_region
        _
      $region36: #{_lambda_.8} parent=11 // pred_fallthru
        _
      // Predicated region
      $region37: #{_lambda_.8} parent=11 // pred_check
        %p356 = pneg %p192
      $region38: #{_lambda_.8} parent=11 // pred_check_branch
        %358 = sbr.rel (%p356) target = $region40
      $region39: #{_lambda_.8} parent=11 // pred_region
        _
      $region40: #{_lambda_.8} parent=11 // pred_fallthru
        _
      // Predicated region
      $region41: #{_lambda_.8} parent=11 // pred_check
        %p359 = pneg %p213
      $region42: #{_lambda_.8} parent=11 // pred_check_branch
        %361 = sbr.rel (%p359) target = $region44
      $region43: #{_lambda_.8} parent=11 // pred_region
        _
      $region44: #{_lambda_.8} parent=11 // pred_fallthru
        _
      // Predicated region
      $region45: #{_lambda_.8} parent=11 // pred_check
        %p362 = pneg %p234
      $region46: #{_lambda_.8} parent=11 // pred_check_branch
        %364 = sbr.rel (%p362) target = $region48
      $region47: #{_lambda_.8} parent=11 // pred_region
        _
      $region48: #{_lambda_.8} parent=11 // pred_fallthru
        _
      // Predicated region
      $region49: #{_lambda_.8} parent=11 // pred_check
        %p365 = pneg %p255
      $region50: #{_lambda_.8} parent=11 // pred_check_branch
        %367 = sbr.rel (%p365) target = $region52
      $region51: #{_lambda_.8} parent=11 // pred_region
        _
      $region52: #{_lambda_.8} parent=11 // pred_fallthru
        _
      // Predicated region
      $region53: #{_lambda_.8} parent=11 // pred_check
        %p368 = pneg %p276
      $region54: #{_lambda_.8} parent=11 // pred_check_branch
        %370 = sbr.rel (%p368) target = $region56
      $region55: #{_lambda_.8} parent=11 // pred_region
        _
      $region56: #{_lambda_.8} parent=11 // pred_fallthru
        _
      // Predicated region
      $region57: #{_lambda_.8} parent=11 // pred_check
        %p371 = pneg %p297
      $region58: #{_lambda_.8} parent=11 // pred_check_branch
        %373 = sbr.rel (%p371) target = $region60
      $region59: #{_lambda_.8} parent=11 // pred_region
        _
      $region60: #{_lambda_.8} parent=11 // pred_fallthru
        _
    $region12: #{_lambda_.8} parent=5 // pred_fallthru
      _
    %p374 = scmp.lt.s32.totalorder %s19, 2
    // Predicated region
    $region61: #{_lambda_.8} parent=5 // pred_check
      %p375 = pneg %p374
    $region62: #{_lambda_.8} parent=5 // pred_check_branch
      %377 = sbr.rel (%p375) target = $region64
    $region63: #{_lambda_.8} parent=5 // pred_region
      // Predicated region
      $region65: #{_lambda_.8} parent=63 // pred_check
        %p378 = pneg %p39
      $region66: #{_lambda_.8} parent=63 // pred_check_branch
        %380 = sbr.rel (%p378) target = $region68
      $region67: #{_lambda_.8} parent=63 // pred_region
        %p381 = scmp.lt.s32.totalorder %s19, 1
        %s382 = scalar_select %p381, %s19, 1
        %s383 = smul.addr %s382, 8
        %s384 = scalar_lea.vmem %s0, %s383
      $region68: #{_lambda_.8} parent=63 // pred_fallthru
        _
    $region64: #{_lambda_.8} parent=5 // pred_fallthru
      _
    %p385 = scmp.le.s32.totalorder 1, %s19
    %p386 = scmp.lt.s32.totalorder %s19, 3
    %p387 = pnand %p385, %p386
    %p388 = pneg %p387
    // Predicated region
    $region69: #{_lambda_.8} parent=5 // pred_check
      _
    $region70: #{_lambda_.8} parent=5 // pred_check_branch
      %390 = sbr.rel (%p387) target = $region72
    $region71: #{_lambda_.8} parent=5 // pred_region
      %s391 = ssub.s32 %s19, 1
      %p392 = scmp.lt.s32.totalorder %s24, 1
      %s393 = scalar_select %p392, %s24, 1
      %s394 = smul.addr %s393, 8
      %s395 = scalar_lea.vmem %s0, %s394
      %p396 = pneg %p45
      %p397 = pneg %p42
      %p398 = pneg %p66
      %p399 = pneg %p63
      %p400 = pneg %p87
      %p401 = pneg %p84
      %p402 = pneg %p108
      %p403 = pneg %p105
      %p404 = pneg %p129
      %p405 = pneg %p126
      %p406 = pneg %p150
      %p407 = pneg %p147
      %p408 = pneg %p171
      %p409 = pneg %p168
      %p410 = pneg %p192
      %p411 = pneg %p189
      %p412 = pneg %p213
      %p413 = pneg %p210
      %p414 = pneg %p234
      %p415 = pneg %p231
      %p416 = pneg %p255
      %p417 = pneg %p252
      %p418 = pneg %p276
      %p419 = pneg %p273
      %p420 = pneg %p297
      %p421 = pneg %p294
      %p422 = pneg %p323
      %p423 = pneg %p320
      %p424 = scmp.lt.s32.totalorder %s24, 1
      %s425 = scalar_select %p424, %s24, 1
      %s426 = smul.addr %s425, 8
      %s427 = scalar_lea.vmem %s13, %s426
      %p428 = scmp.lt.s32.totalorder %s24, 1
      %s429 = scalar_select %p428, %s24, 1
      %s430 = smul.addr %s429, 8
      %s431 = scalar_lea.vmem %s0, %s430
      %p432 = scmp.lt.s32.totalorder %s24, 1
      %s433 = scalar_select %p432, %s24, 1
      %s434 = smul.addr %s433, 8
      %s435 = scalar_lea.vmem %s13, %s434
      %v437 = vld [vmem:[%s431] sm:$0x1f]
      %v438 = vld [vmem:[%s1] sm:$0x1]
      %v439 = vld [vmem:[%s2] sm:$0x1]
      %vm440 = vcmask 1044480
      %v441 = vsel %vm440, %v437, 0.0
      %442 = vadd.xlane.f32.xlu0 %v441
      %v443 = vpop.xlane.xlu0 %442
      %v444 = vmul.f32 %v443, 0.0078125
      %v445 = vsub.f32 %v437, %v444
      %v446 = vmul.f32 %v445, %v445
      %v447 = vsel %vm440, %v446, 0.0
      %448 = vadd.xlane.f32.xlu0 %v447
      %v449 = vpop.xlane.xlu0 %448
      %v450 = vmul.f32 %v449, 0.0078125
      %v451 = vadd.f32 %v450, 1e-05
      %v452 = vrsqrt.pop %v451
      %v453 = vmul.f32 %v445, %v452
      %v455 = vlaneseq
      %v456 = vshrl.u32 %v455, 7
      %v457 = vsub.s32 0, %v456
      %v458 = vrot.slane %v438, %v457
      %v460 = vmul.f32 %v453, %v458
      %v462 = vlaneseq
      %v463 = vshrl.u32 %v462, 7
      %v464 = vsub.s32 0, %v463
      %v465 = vrot.slane %v439, %v464
      %v467 = vadd.f32 %v460, %v465
      %v468 = vld [vmem:[%s3] sm:$0xff]
      %v469 = vld [vmem:[%s3 + $0x8] sm:$0xff]
      %v470 = vld [vmem:[%s3 + $0x10] sm:$0xff]
      %v471 = vld [vmem:[%s3 + $0x18] sm:$0xff]
      %v472 = vld [vmem:[%s3 + $0x20] sm:$0xff]
      %v473 = vld [vmem:[%s3 + $0x28] sm:$0xff]
      %v474 = vld [vmem:[%s3 + $0x30] sm:$0xff]
      %v475 = vld [vmem:[%s3 + $0x38] sm:$0xff]
      %v476 = vld [vmem:[%s3 + $0x40] sm:$0xff]
      %v477 = vld [vmem:[%s3 + $0x48] sm:$0xff]
      %v478 = vld [vmem:[%s3 + $0x50] sm:$0xff]
      %v479 = vld [vmem:[%s3 + $0x58] sm:$0xff]
      %v480 = vld [vmem:[%s3 + $0x60] sm:$0xff]
      %v481 = vld [vmem:[%s3 + $0x68] sm:$0xff]
      %v482 = vld [vmem:[%s3 + $0x70] sm:$0xff]
      %v483 = vld [vmem:[%s3 + $0x78] sm:$0xff]
      %v484 = vld [vmem:[%s3 + $0x80] sm:$0xff]
      %v485 = vld [vmem:[%s3 + $0x88] sm:$0xff]
      %v486 = vld [vmem:[%s3 + $0x90] sm:$0xff]
      %v487 = vld [vmem:[%s3 + $0x98] sm:$0xff]
      %v488 = vld [vmem:[%s3 + $0xa0] sm:$0xff]
      %v489 = vld [vmem:[%s3 + $0xa8] sm:$0xff]
      %v490 = vld [vmem:[%s3 + $0xb0] sm:$0xff]
      %v491 = vld [vmem:[%s3 + $0xb8] sm:$0xff]
      %v492 = vld [vmem:[%s3 + $0xc0] sm:$0xff]
      %v493 = vld [vmem:[%s3 + $0xc8] sm:$0xff]
      %v494 = vld [vmem:[%s3 + $0xd0] sm:$0xff]
      %v495 = vld [vmem:[%s3 + $0xd8] sm:$0xff]
      %v496 = vld [vmem:[%s3 + $0xe0] sm:$0xff]
      %v497 = vld [vmem:[%s3 + $0xe8] sm:$0xff]
      %v498 = vld [vmem:[%s3 + $0xf0] sm:$0xff]
      %v499 = vld [vmem:[%s3 + $0xf8] sm:$0xff]
      %v500 = vld [vmem:[%s3 + $0x100] sm:$0xff]
      %v501 = vld [vmem:[%s3 + $0x108] sm:$0xff]
      %v502 = vld [vmem:[%s3 + $0x110] sm:$0xff]
      %v503 = vld [vmem:[%s3 + $0x118] sm:$0xff]
      %v504 = vld [vmem:[%s3 + $0x120] sm:$0xff]
      %v505 = vld [vmem:[%s3 + $0x128] sm:$0xff]
      %v506 = vld [vmem:[%s3 + $0x130] sm:$0xff]
      %v507 = vld [vmem:[%s3 + $0x138] sm:$0xff]
      %v508 = vld [vmem:[%s3 + $0x140] sm:$0xff]
      %v509 = vld [vmem:[%s3 + $0x148] sm:$0xff]
      %v510 = vld [vmem:[%s3 + $0x150] sm:$0xff]
      %v511 = vld [vmem:[%s3 + $0x158] sm:$0xff]
      %v512 = vld [vmem:[%s3 + $0x160] sm:$0xff]
      %v513 = vld [vmem:[%s3 + $0x168] sm:$0xff]
      %v514 = vld [vmem:[%s3 + $0x170] sm:$0xff]
      %v515 = vld [vmem:[%s3 + $0x178] sm:$0xff]
      %v516 = vpack.c.bf16 %v467, %v467
      %v517 = vpack.c.bf16 %v471, %v468
      %v518 = vpack.c.bf16 %v472, %v469
      %v519 = vpack.c.bf16 %v473, %v470
      %v520 = vpack.c.bf16 %v477, %v474
      %v521 = vpack.c.bf16 %v478, %v475
      %v522 = vpack.c.bf16 %v479, %v476
      %v523 = vpack.c.bf16 %v483, %v480
      %v524 = vpack.c.bf16 %v484, %v481
      %v525 = vpack.c.bf16 %v485, %v482
      %v526 = vpack.c.bf16 %v489, %v486
      %v527 = vpack.c.bf16 %v490, %v487
      %v528 = vpack.c.bf16 %v491, %v488
      %v529 = vpack.c.bf16 %v495, %v492
      %v530 = vpack.c.bf16 %v496, %v493
      %v531 = vpack.c.bf16 %v497, %v494
      %v532 = vpack.c.bf16 %v501, %v498
      %v533 = vpack.c.bf16 %v502, %v499
      %v534 = vpack.c.bf16 %v503, %v500
      %v535 = vpack.c.bf16 %v507, %v504
      %v536 = vpack.c.bf16 %v508, %v505
      %v537 = vpack.c.bf16 %v509, %v506
      %v538 = vpack.c.bf16 %v513, %v510
      %v539 = vpack.c.bf16 %v514, %v511
      %v540 = vpack.c.bf16 %v515, %v512
      %v541 = vld [vmem:[%s4] sm:$0x7]
      %v543 = vlaneseq
      %v544 = vshrl.u32 %v543, 7
      %v545 = vsub.s32 0, %v544
      %v546 = vrot.slane %v541, %v545
      %v547 = vlaneseq
      %v548 = vshrl.u32 %v547, 7
      %v549 = vsub.s32 1, %v548
      %v550 = vrot.slane %v541, %v549
      %v551 = vlaneseq
      %v552 = vshrl.u32 %v551, 7
      %v553 = vsub.s32 2, %v552
      %v554 = vrot.slane %v541, %v553
      %558 = vmatprep.subr.bf16.mxu0 %v518
      %559 = vmatpush1.bf16.msra.mxu0 %v517
      %560 = vmatprep.subr.bf16.mxu0 %v521
      %561 = vmatpush1.bf16.msra.mxu0 %v520
      %562 = vmatprep.subr.bf16.mxu0 %v524
      %563 = vmatpush1.bf16.msra.mxu0 %v523
      %564 = vmatprep.subr.bf16.mxu0 %v527
      %565 = vmatpush1.bf16.msra.mxu0 %v526
      %566 = vmatprep.subr.bf16.mxu0 %v530
      %567 = vmatpush1.bf16.msra.mxu0 %v529
      %568 = vmatprep.subr.bf16.mxu0 %v533
      %569 = vmatpush1.bf16.msra.mxu0 %v532
      %570 = vmatprep.subr.bf16.mxu0 %v536
      %571 = vmatpush1.bf16.msra.mxu0 %v535
      %572 = vmatprep.subr.bf16.mxu0 %v539
      %573 = vmatpush1.bf16.msra.mxu0 %v538
      %574 = vmatprep.subr.bf16.mxu0 0
      %575 = vmatpush1.bf16.msra.mxu0 0
      %576 = vmatprep.subr.bf16.mxu0 0
      %577 = vmatpush1.bf16.msra.mxu0 0
      %578 = vmatprep.subr.bf16.mxu0 0
      %579 = vmatpush1.bf16.msra.mxu0 0
      %580 = vmatprep.subr.bf16.mxu0 0
      %581 = vmatpush1.bf16.msra.mxu0 0
      %582 = vmatprep.subr.bf16.mxu0 0
      %583 = vmatpush1.bf16.msra.mxu0 0
      %584 = vmatprep.subr.bf16.mxu0 0
      %585 = vmatpush1.bf16.msra.mxu0 0
      %586 = vmatprep.subr.bf16.mxu0 0
      %587 = vmatpush1.bf16.msra.mxu0 0
      %588 = vmatprep.subr.bf16.mxu0 0
      %589 = vmatpush1.bf16.msra.mxu0 0
      %590 = vmatprep.mubr.bf16.mxu0 0
      %591 = vmatmul.mubr.bf16.gmra.mrb[0].mxu0 %v516
      %v592 = vpop.f32.mrb[0].mxu0
      %v593 = vadd.f32 %v546, %v592
      %v594 = vpop.f32.mrb[0].mxu0
      %v595 = vadd.f32 %v550, %v594
      %v596 = vpop.f32.mrb[0].mxu0
      %v597 = vpop.f32.mrb[0].mxu0
      %598 = vdwg.mxu0
      %599 = vmatprep.subr.bf16.mxu0 0
      %600 = vmatpush1.bf16.msra.mxu0 %v519
      %601 = vmatprep.subr.bf16.mxu0 0
      %602 = vmatpush1.bf16.msra.mxu0 %v522
      %603 = vmatprep.subr.bf16.mxu0 0
      %604 = vmatpush1.bf16.msra.mxu0 %v525
      %605 = vmatprep.subr.bf16.mxu0 0
      %606 = vmatpush1.bf16.msra.mxu0 %v528
      %607 = vmatprep.subr.bf16.mxu0 0
      %608 = vmatpush1.bf16.msra.mxu0 %v531
      %609 = vmatprep.subr.bf16.mxu0 0
      %610 = vmatpush1.bf16.msra.mxu0 %v534
      %611 = vmatprep.subr.bf16.mxu0 0
      %612 = vmatpush1.bf16.msra.mxu0 %v537
      %613 = vmatprep.subr.bf16.mxu0 0
      %614 = vmatpush1.bf16.msra.mxu0 %v540
      %615 = vmatprep.subr.bf16.mxu0 0
      %616 = vmatpush1.bf16.msra.mxu0 0
      %617 = vmatprep.subr.bf16.mxu0 0
      %618 = vmatpush1.bf16.msra.mxu0 0
      %619 = vmatprep.subr.bf16.mxu0 0
      %620 = vmatpush1.bf16.msra.mxu0 0
      %621 = vmatprep.subr.bf16.mxu0 0
      %622 = vmatpush1.bf16.msra.mxu0 0
      %623 = vmatprep.subr.bf16.mxu0 0
      %624 = vmatpush1.bf16.msra.mxu0 0
      %625 = vmatprep.subr.bf16.mxu0 0
      %626 = vmatpush1.bf16.msra.mxu0 0
      %627 = vmatprep.subr.bf16.mxu0 0
      %628 = vmatpush1.bf16.msra.mxu0 0
      %629 = vmatprep.subr.bf16.mxu0 0
      %630 = vmatpush1.bf16.msra.mxu0 0
      %631 = vmatprep.mubr.bf16.mxu0 0
      %632 = vmatmul.mubr.bf16.gmra.mrb[0].mxu0 %v516
      %v633 = vpop.f32.mrb[0].mxu0
      %v634 = vadd.f32 %v554, %v633
      %v635 = vpop.f32.mrb[0].mxu0
      %v636 = vpop.f32.mrb[0].mxu0
      %v637 = vpop.f32.mrb[0].mxu0
      %638 = vdwg.mxu0
      %639 = vst [vmem:[#allocation2] sm:$0x1f] %v593
      %640 = vst [vmem:[#allocation2 + $0x8] sm:$0x1f] %v595
      %641 = vst [vmem:[#allocation2 + $0x10] sm:$0x1f] %v634
      %v642 = vld [vmem:[#allocation2] sm:$0x1f]
      %v643 = vld [vmem:[#allocation2 + $0x8] sm:$0x1f]
      %v644 = vld [vmem:[#allocation2 + $0x10] sm:$0x1f]
      %v645 = vpack.c.bf16 %v642, %v642
      %v646 = vpack.c.bf16 %v643, %v643
      %vm647 = vcmask 523264
      %v649 = vsel %vm647, %v645, 0
      %v652 = vsel %vm647, %v646, 0
      %654 = vmatprep.subr.bf16.mxu0 0
      %655 = vmatpush1.bf16.xpose.msra.mxu0 %v652
      %656 = vmatprep.subr.bf16.mxu0 0
      %657 = vmatpush1.bf16.xpose.msra.mxu0 0
      %658 = vmatprep.subr.bf16.mxu0 0
      %659 = vmatpush1.bf16.xpose.msra.mxu0 0
      %660 = vmatprep.subr.bf16.mxu0 0
      %661 = vmatpush1.bf16.xpose.msra.mxu0 0
      %662 = vmatprep.subr.bf16.mxu0 0
      %663 = vmatpush1.bf16.xpose.msra.mxu0 0
      %664 = vmatprep.subr.bf16.mxu0 0
      %665 = vmatpush1.bf16.xpose.msra.mxu0 0
      %666 = vmatprep.subr.bf16.mxu0 0
      %667 = vmatpush1.bf16.xpose.msra.mxu0 0
      %668 = vmatprep.subr.bf16.mxu0 0
      %669 = vmatpush1.bf16.xpose.msra.mxu0 0
      %670 = vmatprep.subr.bf16.mxu0 0
      %671 = vmatpush1.bf16.xpose.msra.mxu0 0
      %672 = vmatprep.subr.bf16.mxu0 0
      %673 = vmatpush1.bf16.xpose.msra.mxu0 0
      %674 = vmatprep.subr.bf16.mxu0 0
      %675 = vmatpush1.bf16.xpose.msra.mxu0 0
      %676 = vmatprep.subr.bf16.mxu0 0
      %677 = vmatpush1.bf16.xpose.msra.mxu0 0
      %678 = vmatprep.subr.bf16.mxu0 0
      %679 = vmatpush1.bf16.xpose.msra.mxu0 0
      %680 = vmatprep.subr.bf16.mxu0 0
      %681 = vmatpush1.bf16.xpose.msra.mxu0 0
      %682 = vmatprep.subr.bf16.mxu0 0
      %683 = vmatpush1.bf16.xpose.msra.mxu0 0
      %684 = vmatprep.subr.bf16.mxu0 0
      %685 = vmatpush1.bf16.xpose.msra.mxu0 0
      %686 = vmatprep.mubr.bf16.mxu0 0
      %687 = vmatmul.mubr.bf16.gmra.mrb[0].mxu0 %v649
      %v688 = vpop.f32.mrb[0].mxu0
      %v689 = vadd.f32 0.0, %v688
      %v690 = vpop.f32.mrb[0].mxu0
      %v691 = vpop.f32.mrb[0].mxu0
      %v692 = vpop.f32.mrb[0].mxu0
      %693 = vdwg.mxu0
      %v694 = vmul.f32 %v689, 0.125
      %vm695 = vcmask 36864
      %v696 = vsel %vm695, %v694, -inf
      %697 = vmax.xlane.f32.xlu0 %v696
      %v698 = vpop.xlane.xlu0 %697
      %v699 = vsub.f32 %v694, %v698
      %v700 = vmul.f32 %v699, 1.442695
      %v701 = vpow.pop %v700
      %v702 = vsel %vm695, %v701, 0.0
      %703 = vadd.xlane.f32.xlu0 %v702
      %v704 = vpop.xlane.xlu0 %703
      %v705 = vrcp.pop %v704
      %v706 = vmul.f32 %v701, %v705
      %v707 = vpack.c.bf16 %v706, %v706
      %v708 = vpack.c.bf16 %v644, %v644
      %vm709 = vcmask 39936
      %v711 = vsel %vm709, %v707, 0
      %vm713 = vcmask 1041408
      %vm714 = vcmask 1042432
      %v715 = vsel %vm713, 4294967295, 65535
      %v716 = vsel %vm714, %v715, 0
      %v718 = vand.u32 %v708, %v716
      %720 = vmatprep.subr.bf16.mxu0 0
      %721 = vmatpush1.bf16.msra.mxu0 %v718
      %722 = vmatprep.subr.bf16.mxu0 0
      %723 = vmatpush1.bf16.msra.mxu0 0
      %724 = vmatprep.subr.bf16.mxu0 0
      %725 = vmatpush1.bf16.msra.mxu0 0
      %726 = vmatprep.subr.bf16.mxu0 0
      %727 = vmatpush1.bf16.msra.mxu0 0
      %728 = vmatprep.subr.bf16.mxu0 0
      %729 = vmatpush1.bf16.msra.mxu0 0
      %730 = vmatprep.subr.bf16.mxu0 0
      %731 = vmatpush1.bf16.msra.mxu0 0
      %732 = vmatprep.subr.bf16.mxu0 0
      %733 = vmatpush1.bf16.msra.mxu0 0
      %734 = vmatprep.subr.bf16.mxu0 0
      %735 = vmatpush1.bf16.msra.mxu0 0
      %736 = vmatprep.subr.bf16.mxu0 0
      %737 = vmatpush1.bf16.msra.mxu0 0
      %738 = vmatprep.subr.bf16.mxu0 0
      %739 = vmatpush1.bf16.msra.mxu0 0
      %740 = vmatprep.subr.bf16.mxu0 0
      %741 = vmatpush1.bf16.msra.mxu0 0
      %742 = vmatprep.subr.bf16.mxu0 0
      %743 = vmatpush1.bf16.msra.mxu0 0
      %744 = vmatprep.subr.bf16.mxu0 0
      %745 = vmatpush1.bf16.msra.mxu0 0
      %746 = vmatprep.subr.bf16.mxu0 0
      %747 = vmatpush1.bf16.msra.mxu0 0
      %748 = vmatprep.subr.bf16.mxu0 0
      %749 = vmatpush1.bf16.msra.mxu0 0
      %750 = vmatprep.subr.bf16.mxu0 0
      %751 = vmatpush1.bf16.msra.mxu0 0
      %752 = vmatprep.mubr.bf16.mxu0 0
      %753 = vmatmul.mubr.bf16.gmra.mrb[0].mxu0 %v711
      %v754 = vpop.f32.mrb[0].mxu0
      %v755 = vadd.f32 0.0, %v754
      %v756 = vpop.f32.mrb[0].mxu0
      %v757 = vpop.f32.mrb[0].mxu0
      %v758 = vpop.f32.mrb[0].mxu0
      %759 = vdwg.mxu0
      %vm760 = vcmask 520192
      %761 = vst.msk [vmem:[#allocation3] sm:$0x1f] %vm760, %v755
      %v762 = vld [vmem:[#allocation2] sm:$0x1f]
      %v763 = vld [vmem:[#allocation2 + $0x8] sm:$0x1f]
      %v764 = vld [vmem:[#allocation2 + $0x10] sm:$0x1f]
      %v765 = vpack.c.bf16 %v762, %v762
      %v766 = vpack.c.bf16 %v763, %v763
      %768 = vrot.lane.b32.xlu0 %v765, 64
      %v769 = vpop.permute.xlu0 %768
      %771 = vrot.lane.b32.xlu0 %v766, 64
      %v772 = vpop.permute.xlu0 %771
      %v774 = vsel %vm647, %v769, 0
      %v777 = vsel %vm647, %v772, 0
      %779 = vmatprep.subr.bf16.mxu0 0
      %780 = vmatpush1.bf16.xpose.msra.mxu0 %v777
      %781 = vmatprep.subr.bf16.mxu0 0
      %782 = vmatpush1.bf16.xpose.msra.mxu0 0
      %783 = vmatprep.subr.bf16.mxu0 0
      %784 = vmatpush1.bf16.xpose.msra.mxu0 0
      %785 = vmatprep.subr.bf16.mxu0 0
      %786 = vmatpush1.bf16.xpose.msra.mxu0 0
      %787 = vmatprep.subr.bf16.mxu0 0
      %788 = vmatpush1.bf16.xpose.msra.mxu0 0
      %789 = vmatprep.subr.bf16.mxu0 0
      %790 = vmatpush1.bf16.xpose.msra.mxu0 0
      %791 = vmatprep.subr.bf16.mxu0 0
      %792 = vmatpush1.bf16.xpose.msra.mxu0 0
      %793 = vmatprep.subr.bf16.mxu0 0
      %794 = vmatpush1.bf16.xpose.msra.mxu0 0
      %795 = vmatprep.subr.bf16.mxu0 0
      %796 = vmatpush1.bf16.xpose.msra.mxu0 0
      %797 = vmatprep.subr.bf16.mxu0 0
      %798 = vmatpush1.bf16.xpose.msra.mxu0 0
      %799 = vmatprep.subr.bf16.mxu0 0
      %800 = vmatpush1.bf16.xpose.msra.mxu0 0
      %801 = vmatprep.subr.bf16.mxu0 0
      %802 = vmatpush1.bf16.xpose.msra.mxu0 0
      %803 = vmatprep.subr.bf16.mxu0 0
      %804 = vmatpush1.bf16.xpose.msra.mxu0 0
      %805 = vmatprep.subr.bf16.mxu0 0
      %806 = vmatpush1.bf16.xpose.msra.mxu0 0
      %807 = vmatprep.subr.bf16.mxu0 0
      %808 = vmatpush1.bf16.xpose.msra.mxu0 0
      %809 = vmatprep.subr.bf16.mxu0 0
      %810 = vmatpush1.bf16.xpose.msra.mxu0 0
      %811 = vmatprep.mubr.bf16.mxu0 0
      %812 = vmatmul.mubr.bf16.gmra.mrb[0].mxu0 %v774
      %v813 = vpop.f32.mrb[0].mxu0
      %v814 = vadd.f32 0.0, %v813
      %v815 = vpop.f32.mrb[0].mxu0
      %v816 = vpop.f32.mrb[0].mxu0
      %v817 = vpop.f32.mrb[0].mxu0
      %818 = vdwg.mxu0
      %v819 = vmul.f32 %v814, 0.125
      %v820 = vsel %vm695, %v819, -inf
      %821 = vmax.xlane.f32.xlu0 %v820
      %v822 = vpop.xlane.xlu0 %821
      %v823 = vsub.f32 %v819, %v822
      %v824 = vmul.f32 %v823, 1.442695
      %v825 = vpow.pop %v824
      %v826 = vsel %vm695, %v825, 0.0
      %827 = vadd.xlane.f32.xlu0 %v826
      %v828 = vpop.xlane.xlu0 %827
      %v829 = vrcp.pop %v828
      %v830 = vmul.f32 %v825, %v829
      %v831 = vpack.c.bf16 %v830, %v830
      %v832 = vpack.c.bf16 %v764, %v764
      %834 = vrot.lane.b32.xlu0 %v832, 64
      %v835 = vpop.permute.xlu0 %834
      %v837 = vsel %vm709, %v831, 0
      %v840 = vand.u32 %v835, %v716
      %842 = vmatprep.subr.bf16.mxu0 0
      %843 = vmatpush1.bf16.msra.mxu0 %v840
      %844 = vmatprep.subr.bf16.mxu0 0
      %845 = vmatpush1.bf16.msra.mxu0 0
      %846 = vmatprep.subr.bf16.mxu0 0
      %847 = vmatpush1.bf16.msra.mxu0 0
      %848 = vmatprep.subr.bf16.mxu0 0
      %849 = vmatpush1.bf16.msra.mxu0 0
      %850 = vmatprep.subr.bf16.mxu0 0
      %851 = vmatpush1.bf16.msra.mxu0 0
      %852 = vmatprep.subr.bf16.mxu0 0
      %853 = vmatpush1.bf16.msra.mxu0 0
      %854 = vmatprep.subr.bf16.mxu0 0
      %855 = vmatpush1.bf16.msra.mxu0 0
      %856 = vmatprep.subr.bf16.mxu0 0
      %857 = vmatpush1.bf16.msra.mxu0 0
      %858 = vmatprep.subr.bf16.mxu0 0
      %859 = vmatpush1.bf16.msra.mxu0 0
      %860 = vmatprep.subr.bf16.mxu0 0
      %861 = vmatpush1.bf16.msra.mxu0 0
      %862 = vmatprep.subr.bf16.mxu0 0
      %863 = vmatpush1.bf16.msra.mxu0 0
      %864 = vmatprep.subr.bf16.mxu0 0
      %865 = vmatpush1.bf16.msra.mxu0 0
      %866 = vmatprep.subr.bf16.mxu0 0
      %867 = vmatpush1.bf16.msra.mxu0 0
      %868 = vmatprep.subr.bf16.mxu0 0
      %869 = vmatpush1.bf16.msra.mxu0 0
      %870 = vmatprep.subr.bf16.mxu0 0
      %871 = vmatpush1.bf16.msra.mxu0 0
      %872 = vmatprep.subr.bf16.mxu0 0
      %873 = vmatpush1.bf16.msra.mxu0 0
      %874 = vmatprep.mubr.bf16.mxu0 0
      %875 = vmatmul.mubr.bf16.gmra.mrb[0].mxu0 %v837
      %v876 = vpop.f32.mrb[0].mxu0
      %v877 = vadd.f32 0.0, %v876
      %v878 = vpop.f32.mrb[0].mxu0
      %v879 = vpop.f32.mrb[0].mxu0
      %v880 = vpop.f32.mrb[0].mxu0
      %881 = vdwg.mxu0
      %883 = vrot.lane.b32.xlu0 %v877, 64
      %v884 = vpop.permute.xlu0 %883
      %vm886 = vcmask 1044992
      %887 = vst.msk [vmem:[#allocation3] sm:$0x1f] %vm886, %v884
      %v888 = vld [vmem:[#allocation3] sm:$0x1f]
      %v889 = vld [vmem:[%s5] sm:$0xff]
      %v890 = vld [vmem:[%s5 + $0x8] sm:$0xff]
      %v891 = vld [vmem:[%s5 + $0x10] sm:$0xff]
      %v892 = vld [vmem:[%s5 + $0x18] sm:$0xff]
      %v893 = vld [vmem:[%s5 + $0x20] sm:$0xff]
      %v894 = vld [vmem:[%s5 + $0x28] sm:$0xff]
      %v895 = vld [vmem:[%s5 + $0x30] sm:$0xff]
      %v896 = vld [vmem:[%s5 + $0x38] sm:$0xff]
      %v897 = vld [vmem:[%s5 + $0x40] sm:$0xff]
      %v898 = vld [vmem:[%s5 + $0x48] sm:$0xff]
      %v899 = vld [vmem:[%s5 + $0x50] sm:$0xff]
      %v900 = vld [vmem:[%s5 + $0x58] sm:$0xff]
      %v901 = vld [vmem:[%s5 + $0x60] sm:$0xff]
      %v902 = vld [vmem:[%s5 + $0x68] sm:$0xff]
      %v903 = vld [vmem:[%s5 + $0x70] sm:$0xff]
      %v904 = vld [vmem:[%s5 + $0x78] sm:$0xff]
      %v905 = vpack.c.bf16 %v888, %v888
      %v906 = vpack.c.bf16 %v890, %v889
      %v907 = vpack.c.bf16 %v892, %v891
      %v908 = vpack.c.bf16 %v894, %v893
      %v909 = vpack.c.bf16 %v896, %v895
      %v910 = vpack.c.bf16 %v898, %v897
      %v911 = vpack.c.bf16 %v900, %v899
      %v912 = vpack.c.bf16 %v902, %v901
      %v913 = vpack.c.bf16 %v904, %v903
      %914 = vmatprep.subr.bf16.mxu0 0
      %915 = vmatpush1.bf16.msra.mxu0 %v906
      %916 = vmatprep.subr.bf16.mxu0 0
      %917 = vmatpush1.bf16.msra.mxu0 %v907
      %918 = vmatprep.subr.bf16.mxu0 0
      %919 = vmatpush1.bf16.msra.mxu0 %v908
      %920 = vmatprep.subr.bf16.mxu0 0
      %921 = vmatpush1.bf16.msra.mxu0 %v909
      %922 = vmatprep.subr.bf16.mxu0 0
      %923 = vmatpush1.bf16.msra.mxu0 %v910
      %924 = vmatprep.subr.bf16.mxu0 0
      %925 = vmatpush1.bf16.msra.mxu0 %v911
      %926 = vmatprep.subr.bf16.mxu0 0
      %927 = vmatpush1.bf16.msra.mxu0 %v912
      %928 = vmatprep.subr.bf16.mxu0 0
      %929 = vmatpush1.bf16.msra.mxu0 %v913
      %930 = vmatprep.subr.bf16.mxu0 0
      %931 = vmatpush1.bf16.msra.mxu0 0
      %932 = vmatprep.subr.bf16.mxu0 0
      %933 = vmatpush1.bf16.msra.mxu0 0
      %934 = vmatprep.subr.bf16.mxu0 0
      %935 = vmatpush1.bf16.msra.mxu0 0
      %936 = vmatprep.subr.bf16.mxu0 0
      %937 = vmatpush1.bf16.msra.mxu0 0
      %938 = vmatprep.subr.bf16.mxu0 0
      %939 = vmatpush1.bf16.msra.mxu0 0
      %940 = vmatprep.subr.bf16.mxu0 0
      %941 = vmatpush1.bf16.msra.mxu0 0
      %942 = vmatprep.subr.bf16.mxu0 0
      %943 = vmatpush1.bf16.msra.mxu0 0
      %944 = vmatprep.subr.bf16.mxu0 0
      %945 = vmatpush1.bf16.msra.mxu0 0
      %946 = vmatprep.mubr.bf16.mxu0 0
      %947 = vmatmul.mubr.bf16.gmra.mrb[0].mxu0 %v905
      %v948 = vpop.f32.mrb[0].mxu0
      %v949 = vadd.f32 0.0, %v948
      %v950 = vpop.f32.mrb[0].mxu0
      %v951 = vpop.f32.mrb[0].mxu0
      %v952 = vpop.f32.mrb[0].mxu0
      %953 = vdwg.mxu0
      %v954 = vadd.f32 %v437, %v949
      %v955 = vld [vmem:[%s6] sm:$0x1]
      %v957 = vlaneseq
      %v958 = vshrl.u32 %v957, 7
      %v959 = vsub.s32 0, %v958
      %v960 = vrot.slane %v955, %v959
      %v962 = vadd.f32 %v954, %v960
      %v963 = vld [vmem:[%s7] sm:$0x1]
      %v964 = vld [vmem:[%s8] sm:$0x1]
      %v965 = vsel %vm440, %v962, 0.0
      %966 = vadd.xlane.f32.xlu0 %v965
      %v967 = vpop.xlane.xlu0 %966
      %v968 = vmul.f32 %v967, 0.0078125
      %v969 = vsub.f32 %v962, %v968
      %v970 = vmul.f32 %v969, %v969
      %v971 = vsel %vm440, %v970, 0.0
      %972 = vadd.xlane.f32.xlu0 %v971
      %v973 = vpop.xlane.xlu0 %972
      %v974 = vmul.f32 %v973, 0.0078125
      %v975 = vadd.f32 %v974, 1e-05
      %v976 = vrsqrt.pop %v975
      %v977 = vmul.f32 %v969, %v976
      %v979 = vlaneseq
      %v980 = vshrl.u32 %v979, 7
      %v981 = vsub.s32 0, %v980
      %v982 = vrot.slane %v963, %v981
      %v984 = vmul.f32 %v977, %v982
      %v986 = vlaneseq
      %v987 = vshrl.u32 %v986, 7
      %v988 = vsub.s32 0, %v987
      %v989 = vrot.slane %v964, %v988
      %v991 = vadd.f32 %v984, %v989
      %v992 = vld [vmem:[%s9] sm:$0xff]
      %v993 = vld [vmem:[%s9 + $0x8] sm:$0xff]
      %v994 = vld [vmem:[%s9 + $0x10] sm:$0xff]
      %v995 = vld [vmem:[%s9 + $0x18] sm:$0xff]
      %v996 = vld [vmem:[%s9 + $0x20] sm:$0xff]
      %v997 = vld [vmem:[%s9 + $0x28] sm:$0xff]
      %v998 = vld [vmem:[%s9 + $0x30] sm:$0xff]
      %v999 = vld [vmem:[%s9 + $0x38] sm:$0xff]
      %v1000 = vld [vmem:[%s9 + $0x40] sm:$0xff]
      %v1001 = vld [vmem:[%s9 + $0x48] sm:$0xff]
      %v1002 = vld [vmem:[%s9 + $0x50] sm:$0xff]
      %v1003 = vld [vmem:[%s9 + $0x58] sm:$0xff]
      %v1004 = vld [vmem:[%s9 + $0x60] sm:$0xff]
      %v1005 = vld [vmem:[%s9 + $0x68] sm:$0xff]
      %v1006 = vld [vmem:[%s9 + $0x70] sm:$0xff]
      %v1007 = vld [vmem:[%s9 + $0x78] sm:$0xff]
      %v1008 = vld [vmem:[%s9 + $0x80] sm:$0xff]
      %v1009 = vld [vmem:[%s9 + $0x88] sm:$0xff]
      %v1010 = vld [vmem:[%s9 + $0x90] sm:$0xff]
      %v1011 = vld [vmem:[%s9 + $0x98] sm:$0xff]
      %v1012 = vld [vmem:[%s9 + $0xa0] sm:$0xff]
      %v1013 = vld [vmem:[%s9 + $0xa8] sm:$0xff]
      %v1014 = vld [vmem:[%s9 + $0xb0] sm:$0xff]
      %v1015 = vld [vmem:[%s9 + $0xb8] sm:$0xff]
      %v1016 = vld [vmem:[%s9 + $0xc0] sm:$0xff]
      %v1017 = vld [vmem:[%s9 + $0xc8] sm:$0xff]
      %v1018 = vld [vmem:[%s9 + $0xd0] sm:$0xff]
      %v1019 = vld [vmem:[%s9 + $0xd8] sm:$0xff]
      %v1020 = vld [vmem:[%s9 + $0xe0] sm:$0xff]
      %v1021 = vld [vmem:[%s9 + $0xe8] sm:$0xff]
      %v1022 = vld [vmem:[%s9 + $0xf0] sm:$0xff]
      %v1023 = vld [vmem:[%s9 + $0xf8] sm:$0xff]
      %v1024 = vld [vmem:[%s9 + $0x100] sm:$0xff]
      %v1025 = vld [vmem:[%s9 + $0x108] sm:$0xff]
      %v1026 = vld [vmem:[%s9 + $0x110] sm:$0xff]
      %v1027 = vld [vmem:[%s9 + $0x118] sm:$0xff]
      %v1028 = vld [vmem:[%s9 + $0x120] sm:$0xff]
      %v1029 = vld [vmem:[%s9 + $0x128] sm:$0xff]
      %v1030 = vld [vmem:[%s9 + $0x130] sm:$0xff]
      %v1031 = vld [vmem:[%s9 + $0x138] sm:$0xff]
      %v1032 = vld [vmem:[%s9 + $0x140] sm:$0xff]
      %v1033 = vld [vmem:[%s9 + $0x148] sm:$0xff]
      %v1034 = vld [vmem:[%s9 + $0x150] sm:$0xff]
      %v1035 = vld [vmem:[%s9 + $0x158] sm:$0xff]
      %v1036 = vld [vmem:[%s9 + $0x160] sm:$0xff]
      %v1037 = vld [vmem:[%s9 + $0x168] sm:$0xff]
      %v1038 = vld [vmem:[%s9 + $0x170] sm:$0xff]
      %v1039 = vld [vmem:[%s9 + $0x178] sm:$0xff]
      %v1040 = vld [vmem:[%s9 + $0x180] sm:$0xff]
      %v1041 = vld [vmem:[%s9 + $0x188] sm:$0xff]
      %v1042 = vld [vmem:[%s9 + $0x190] sm:$0xff]
      %v1043 = vld [vmem:[%s9 + $0x198] sm:$0xff]
      %v1044 = vld [vmem:[%s9 + $0x1a0] sm:$0xff]
      %v1045 = vld [vmem:[%s9 + $0x1a8] sm:$0xff]
      %v1046 = vld [vmem:[%s9 + $0x1b0] sm:$0xff]
      %v1047 = vld [vmem:[%s9 + $0x1b8] sm:$0xff]
      %v1048 = vld [vmem:[%s9 + $0x1c0] sm:$0xff]
      %v1049 = vld [vmem:[%s9 + $0x1c8] sm:$0xff]
      %v1050 = vld [vmem:[%s9 + $0x1d0] sm:$0xff]
      %v1051 = vld [vmem:[%s9 + $0x1d8] sm:$0xff]
      %v1052 = vld [vmem:[%s9 + $0x1e0] sm:$0xff]
      %v1053 = vld [vmem:[%s9 + $0x1e8] sm:$0xff]
      %v1054 = vld [vmem:[%s9 + $0x1f0] sm:$0xff]
      %v1055 = vld [vmem:[%s9 + $0x1f8] sm:$0xff]
      %v1056 = vpack.c.bf16 %v991, %v991
      %v1057 = vpack.c.bf16 %v996, %v992
      %v1058 = vpack.c.bf16 %v997, %v993
      %v1059 = vpack.c.bf16 %v998, %v994
      %v1060 = vpack.c.bf16 %v999, %v995
      %v1061 = vpack.c.bf16 %v1004, %v1000
      %v1062 = vpack.c.bf16 %v1005, %v1001
      %v1063 = vpack.c.bf16 %v1006, %v1002
      %v1064 = vpack.c.bf16 %v1007, %v1003
      %v1065 = vpack.c.bf16 %v1012, %v1008
      %v1066 = vpack.c.bf16 %v1013, %v1009
      %v1067 = vpack.c.bf16 %v1014, %v1010
      %v1068 = vpack.c.bf16 %v1015, %v1011
      %v1069 = vpack.c.bf16 %v1020, %v1016
      %v1070 = vpack.c.bf16 %v1021, %v1017
      %v1071 = vpack.c.bf16 %v1022, %v1018
      %v1072 = vpack.c.bf16 %v1023, %v1019
      %v1073 = vpack.c.bf16 %v1028, %v1024
      %v1074 = vpack.c.bf16 %v1029, %v1025
      %v1075 = vpack.c.bf16 %v1030, %v1026
      %v1076 = vpack.c.bf16 %v1031, %v1027
      %v1077 = vpack.c.bf16 %v1036, %v1032
      %v1078 = vpack.c.bf16 %v1037, %v1033
      %v1079 = vpack.c.bf16 %v1038, %v1034
      %v1080 = vpack.c.bf16 %v1039, %v1035
      %v1081 = vpack.c.bf16 %v1044, %v1040
      %v1082 = vpack.c.bf16 %v1045, %v1041
      %v1083 = vpack.c.bf16 %v1046, %v1042
      %v1084 = vpack.c.bf16 %v1047, %v1043
      %v1085 = vpack.c.bf16 %v1052, %v1048
      %v1086 = vpack.c.bf16 %v1053, %v1049
      %v1087 = vpack.c.bf16 %v1054, %v1050
      %v1088 = vpack.c.bf16 %v1055, %v1051
      %v1089 = vld [vmem:[%s10] sm:$0xf]
      %v1091 = vlaneseq
      %v1092 = vshrl.u32 %v1091, 7
      %v1093 = vsub.s32 0, %v1092
      %v1094 = vrot.slane %v1089, %v1093
      %v1095 = vlaneseq
      %v1096 = vshrl.u32 %v1095, 7
      %v1097 = vsub.s32 1, %v1096
      %v1098 = vrot.slane %v1089, %v1097
      %v1099 = vlaneseq
      %v1100 = vshrl.u32 %v1099, 7
      %v1101 = vsub.s32 2, %v1100
      %v1102 = vrot.slane %v1089, %v1101
      %v1103 = vlaneseq
      %v1104 = vshrl.u32 %v1103, 7
      %v1105 = vsub.s32 3, %v1104
      %v1106 = vrot.slane %v1089, %v1105
      %1111 = vmatprep.subr.bf16.mxu0 %v1058
      %1112 = vmatpush1.bf16.msra.mxu0 %v1057
      %1113 = vmatprep.subr.bf16.mxu0 %v1062
      %1114 = vmatpush1.bf16.msra.mxu0 %v1061
      %1115 = vmatprep.subr.bf16.mxu0 %v1066
      %1116 = vmatpush1.bf16.msra.mxu0 %v1065
      %1117 = vmatprep.subr.bf16.mxu0 %v1070
      %1118 = vmatpush1.bf16.msra.mxu0 %v1069
      %1119 = vmatprep.subr.bf16.mxu0 %v1074
      %1120 = vmatpush1.bf16.msra.mxu0 %v1073
      %1121 = vmatprep.subr.bf16.mxu0 %v1078
      %1122 = vmatpush1.bf16.msra.mxu0 %v1077
      %1123 = vmatprep.subr.bf16.mxu0 %v1082
      %1124 = vmatpush1.bf16.msra.mxu0 %v1081
      %1125 = vmatprep.subr.bf16.mxu0 %v1086
      %1126 = vmatpush1.bf16.msra.mxu0 %v1085
      %1127 = vmatprep.subr.bf16.mxu0 0
      %1128 = vmatpush1.bf16.msra.mxu0 0
      %1129 = vmatprep.subr.bf16.mxu0 0
      %1130 = vmatpush1.bf16.msra.mxu0 0
      %1131 = vmatprep.subr.bf16.mxu0 0
      %1132 = vmatpush1.bf16.msra.mxu0 0
      %1133 = vmatprep.subr.bf16.mxu0 0
      %1134 = vmatpush1.bf16.msra.mxu0 0
      %1135 = vmatprep.subr.bf16.mxu0 0
      %1136 = vmatpush1.bf16.msra.mxu0 0
      %1137 = vmatprep.subr.bf16.mxu0 0
      %1138 = vmatpush1.bf16.msra.mxu0 0
      %1139 = vmatprep.subr.bf16.mxu0 0
      %1140 = vmatpush1.bf16.msra.mxu0 0
      %1141 = vmatprep.subr.bf16.mxu0 0
      %1142 = vmatpush1.bf16.msra.mxu0 0
      %1143 = vmatprep.mubr.bf16.mxu0 0
      %1144 = vmatmul.mubr.bf16.gmra.mrb[0].mxu0 %v1056
      %v1145 = vpop.f32.mrb[0].mxu0
      %v1146 = vadd.f32 %v1094, %v1145
      %v1147 = vpop.f32.mrb[0].mxu0
      %v1148 = vadd.f32 %v1098, %v1147
      %v1149 = vpop.f32.mrb[0].mxu0
      %v1150 = vpop.f32.mrb[0].mxu0
      %1151 = vdwg.mxu0
      %1152 = vmatprep.subr.bf16.mxu0 %v1060
      %1153 = vmatpush1.bf16.msra.mxu0 %v1059
      %1154 = vmatprep.subr.bf16.mxu0 %v1064
      %1155 = vmatpush1.bf16.msra.mxu0 %v1063
      %1156 = vmatprep.subr.bf16.mxu0 %v1068
      %1157 = vmatpush1.bf16.msra.mxu0 %v1067
      %1158 = vmatprep.subr.bf16.mxu0 %v1072
      %1159 = vmatpush1.bf16.msra.mxu0 %v1071
      %1160 = vmatprep.subr.bf16.mxu0 %v1076
      %1161 = vmatpush1.bf16.msra.mxu0 %v1075
      %1162 = vmatprep.subr.bf16.mxu0 %v1080
      %1163 = vmatpush1.bf16.msra.mxu0 %v1079
      %1164 = vmatprep.subr.bf16.mxu0 %v1084
      %1165 = vmatpush1.bf16.msra.mxu0 %v1083
      %1166 = vmatprep.subr.bf16.mxu0 %v1088
      %1167 = vmatpush1.bf16.msra.mxu0 %v1087
      %1168 = vmatprep.subr.bf16.mxu0 0
      %1169 = vmatpush1.bf16.msra.mxu0 0
      %1170 = vmatprep.subr.bf16.mxu0 0
      %1171 = vmatpush1.bf16.msra.mxu0 0
      %1172 = vmatprep.subr.bf16.mxu0 0
      %1173 = vmatpush1.bf16.msra.mxu0 0
      %1174 = vmatprep.subr.bf16.mxu0 0
      %1175 = vmatpush1.bf16.msra.mxu0 0
      %1176 = vmatprep.subr.bf16.mxu0 0
      %1177 = vmatpush1.bf16.msra.mxu0 0
      %1178 = vmatprep.subr.bf16.mxu0 0
      %1179 = vmatpush1.bf16.msra.mxu0 0
      %1180 = vmatprep.subr.bf16.mxu0 0
      %1181 = vmatpush1.bf16.msra.mxu0 0
      %1182 = vmatprep.subr.bf16.mxu0 0
      %1183 = vmatpush1.bf16.msra.mxu0 0
      %1184 = vmatprep.mubr.bf16.mxu0 0
      %1185 = vmatmul.mubr.bf16.gmra.mrb[0].mxu0 %v1056
      %v1186 = vpop.f32.mrb[0].mxu0
      %v1187 = vadd.f32 %v1102, %v1186
      %v1188 = vpop.f32.mrb[0].mxu0
      %v1189 = vadd.f32 %v1106, %v1188
      %v1190 = vpop.f32.mrb[0].mxu0
      %v1191 = vpop.f32.mrb[0].mxu0
      %1192 = vdwg.mxu0
      %v1193 = vmul.f32 %v1146, 1.702
      %v1194 = vmul.f32 %v1148, 1.702
      %v1195 = vmul.f32 %v1187, 1.702
      %v1196 = vmul.f32 %v1189, 1.702
      %v1197 = vxor.u32 %v1193, 2147483648
      %v1198 = vxor.u32 %v1194, 2147483648
      %v1199 = vxor.u32 %v1195, 2147483648
      %v1200 = vxor.u32 %v1196, 2147483648
      %v1201 = vmul.f32 %v1197, 1.442695
      %v1202 = vpow.pop %v1201
      %v1203 = vmul.f32 %v1198, 1.442695
      %v1204 = vpow.pop %v1203
      %v1205 = vmul.f32 %v1199, 1.442695
      %v1206 = vpow.pop %v1205
      %v1207 = vmul.f32 %v1200, 1.442695
      %v1208 = vpow.pop %v1207
      %v1209 = vadd.f32 %v1202, 1.0
      %v1210 = vadd.f32 %v1204, 1.0
      %v1211 = vadd.f32 %v1206, 1.0
      %v1212 = vadd.f32 %v1208, 1.0
      %v1213 = vrcp.pop %v1209
      %v1214 = vmul.f32 1.0, %v1213
      %v1215 = vrcp.pop %v1210
      %v1216 = vmul.f32 1.0, %v1215
      %v1217 = vrcp.pop %v1211
      %v1218 = vmul.f32 1.0, %v1217
      %v1219 = vrcp.pop %v1212
      %v1220 = vmul.f32 1.0, %v1219
      %v1221 = vmul.f32 %v1146, %v1214
      %v1222 = vmul.f32 %v1148, %v1216
      %v1223 = vmul.f32 %v1187, %v1218
      %v1224 = vmul.f32 %v1189, %v1220
      %v1225 = vld [vmem:[%s11] sm:$0xff]
      %v1226 = vld [vmem:[%s11 + $0x8] sm:$0xff]
      %v1227 = vld [vmem:[%s11 + $0x10] sm:$0xff]
      %v1228 = vld [vmem:[%s11 + $0x18] sm:$0xff]
      %v1229 = vld [vmem:[%s11 + $0x20] sm:$0xff]
      %v1230 = vld [vmem:[%s11 + $0x28] sm:$0xff]
      %v1231 = vld [vmem:[%s11 + $0x30] sm:$0xff]
      %v1232 = vld [vmem:[%s11 + $0x38] sm:$0xff]
      %v1233 = vld [vmem:[%s11 + $0x40] sm:$0xff]
      %v1234 = vld [vmem:[%s11 + $0x48] sm:$0xff]
      %v1235 = vld [vmem:[%s11 + $0x50] sm:$0xff]
      %v1236 = vld [vmem:[%s11 + $0x58] sm:$0xff]
      %v1237 = vld [vmem:[%s11 + $0x60] sm:$0xff]
      %v1238 = vld [vmem:[%s11 + $0x68] sm:$0xff]
      %v1239 = vld [vmem:[%s11 + $0x70] sm:$0xff]
      %v1240 = vld [vmem:[%s11 + $0x78] sm:$0xff]
      %v1241 = vld [vmem:[%s11 + $0x80] sm:$0xff]
      %v1242 = vld [vmem:[%s11 + $0x88] sm:$0xff]
      %v1243 = vld [vmem:[%s11 + $0x90] sm:$0xff]
      %v1244 = vld [vmem:[%s11 + $0x98] sm:$0xff]
      %v1245 = vld [vmem:[%s11 + $0xa0] sm:$0xff]
      %v1246 = vld [vmem:[%s11 + $0xa8] sm:$0xff]
      %v1247 = vld [vmem:[%s11 + $0xb0] sm:$0xff]
      %v1248 = vld [vmem:[%s11 + $0xb8] sm:$0xff]
      %v1249 = vld [vmem:[%s11 + $0xc0] sm:$0xff]
      %v1250 = vld [vmem:[%s11 + $0xc8] sm:$0xff]
      %v1251 = vld [vmem:[%s11 + $0xd0] sm:$0xff]
      %v1252 = vld [vmem:[%s11 + $0xd8] sm:$0xff]
      %v1253 = vld [vmem:[%s11 + $0xe0] sm:$0xff]
      %v1254 = vld [vmem:[%s11 + $0xe8] sm:$0xff]
      %v1255 = vld [vmem:[%s11 + $0xf0] sm:$0xff]
      %v1256 = vld [vmem:[%s11 + $0xf8] sm:$0xff]
      %v1257 = vld [vmem:[%s11 + $0x100] sm:$0xff]
      %v1258 = vld [vmem:[%s11 + $0x108] sm:$0xff]
      %v1259 = vld [vmem:[%s11 + $0x110] sm:$0xff]
      %v1260 = vld [vmem:[%s11 + $0x118] sm:$0xff]
      %v1261 = vld [vmem:[%s11 + $0x120] sm:$0xff]
      %v1262 = vld [vmem:[%s11 + $0x128] sm:$0xff]
      %v1263 = vld [vmem:[%s11 + $0x130] sm:$0xff]
      %v1264 = vld [vmem:[%s11 + $0x138] sm:$0xff]
      %v1265 = vld [vmem:[%s11 + $0x140] sm:$0xff]
      %v1266 = vld [vmem:[%s11 + $0x148] sm:$0xff]
      %v1267 = vld [vmem:[%s11 + $0x150] sm:$0xff]
      %v1268 = vld [vmem:[%s11 + $0x158] sm:$0xff]
      %v1269 = vld [vmem:[%s11 + $0x160] sm:$0xff]
      %v1270 = vld [vmem:[%s11 + $0x168] sm:$0xff]
      %v1271 = vld [vmem:[%s11 + $0x170] sm:$0xff]
      %v1272 = vld [vmem:[%s11 + $0x178] sm:$0xff]
      %v1273 = vld [vmem:[%s11 + $0x180] sm:$0xff]
      %v1274 = vld [vmem:[%s11 + $0x188] sm:$0xff]
      %v1275 = vld [vmem:[%s11 + $0x190] sm:$0xff]
      %v1276 = vld [vmem:[%s11 + $0x198] sm:$0xff]
      %v1277 = vld [vmem:[%s11 + $0x1a0] sm:$0xff]
      %v1278 = vld [vmem:[%s11 + $0x1a8] sm:$0xff]
      %v1279 = vld [vmem:[%s11 + $0x1b0] sm:$0xff]
      %v1280 = vld [vmem:[%s11 + $0x1b8] sm:$0xff]
      %v1281 = vld [vmem:[%s11 + $0x1c0] sm:$0xff]
      %v1282 = vld [vmem:[%s11 + $0x1c8] sm:$0xff]
      %v1283 = vld [vmem:[%s11 + $0x1d0] sm:$0xff]
      %v1284 = vld [vmem:[%s11 + $0x1d8] sm:$0xff]
      %v1285 = vld [vmem:[%s11 + $0x1e0] sm:$0xff]
      %v1286 = vld [vmem:[%s11 + $0x1e8] sm:$0xff]
      %v1287 = vld [vmem:[%s11 + $0x1f0] sm:$0xff]
      %v1288 = vld [vmem:[%s11 + $0x1f8] sm:$0xff]
      %v1289 = vpack.c.bf16 %v1221, %v1221
      %v1290 = vpack.c.bf16 %v1222, %v1222
      %v1291 = vpack.c.bf16 %v1223, %v1223
      %v1292 = vpack.c.bf16 %v1224, %v1224
      %v1293 = vpack.c.bf16 %v1226, %v1225
      %v1294 = vpack.c.bf16 %v1228, %v1227
      %v1295 = vpack.c.bf16 %v1230, %v1229
      %v1296 = vpack.c.bf16 %v1232, %v1231
      %v1297 = vpack.c.bf16 %v1234, %v1233
      %v1298 = vpack.c.bf16 %v1236, %v1235
      %v1299 = vpack.c.bf16 %v1238, %v1237
      %v1300 = vpack.c.bf16 %v1240, %v1239
      %v1301 = vpack.c.bf16 %v1242, %v1241
      %v1302 = vpack.c.bf16 %v1244, %v1243
      %v1303 = vpack.c.bf16 %v1246, %v1245
      %v1304 = vpack.c.bf16 %v1248, %v1247
      %v1305 = vpack.c.bf16 %v1250, %v1249
      %v1306 = vpack.c.bf16 %v1252, %v1251
      %v1307 = vpack.c.bf16 %v1254, %v1253
      %v1308 = vpack.c.bf16 %v1256, %v1255
      %v1309 = vpack.c.bf16 %v1258, %v1257
      %v1310 = vpack.c.bf16 %v1260, %v1259
      %v1311 = vpack.c.bf16 %v1262, %v1261
      %v1312 = vpack.c.bf16 %v1264, %v1263
      %v1313 = vpack.c.bf16 %v1266, %v1265
      %v1314 = vpack.c.bf16 %v1268, %v1267
      %v1315 = vpack.c.bf16 %v1270, %v1269
      %v1316 = vpack.c.bf16 %v1272, %v1271
      %v1317 = vpack.c.bf16 %v1274, %v1273
      %v1318 = vpack.c.bf16 %v1276, %v1275
      %v1319 = vpack.c.bf16 %v1278, %v1277
      %v1320 = vpack.c.bf16 %v1280, %v1279
      %v1321 = vpack.c.bf16 %v1282, %v1281
      %v1322 = vpack.c.bf16 %v1284, %v1283
      %v1323 = vpack.c.bf16 %v1286, %v1285
      %v1324 = vpack.c.bf16 %v1288, %v1287
      %1325 = vmatprep.subr.bf16.mxu0 0
      %1326 = vmatpush1.bf16.msra.mxu0 %v1293
      %1327 = vmatprep.subr.bf16.mxu0 0
      %1328 = vmatpush1.bf16.msra.mxu0 %v1294
      %1329 = vmatprep.subr.bf16.mxu0 0
      %1330 = vmatpush1.bf16.msra.mxu0 %v1295
      %1331 = vmatprep.subr.bf16.mxu0 0
      %1332 = vmatpush1.bf16.msra.mxu0 %v1296
      %1333 = vmatprep.subr.bf16.mxu0 0
      %1334 = vmatpush1.bf16.msra.mxu0 %v1297
      %1335 = vmatprep.subr.bf16.mxu0 0
      %1336 = vmatpush1.bf16.msra.mxu0 %v1298
      %1337 = vmatprep.subr.bf16.mxu0 0
      %1338 = vmatpush1.bf16.msra.mxu0 %v1299
      %1339 = vmatprep.subr.bf16.mxu0 0
      %1340 = vmatpush1.bf16.msra.mxu0 %v1300
      %1341 = vmatprep.subr.bf16.mxu0 0
      %1342 = vmatpush1.bf16.msra.mxu0 %v1301
      %1343 = vmatprep.subr.bf16.mxu0 0
      %1344 = vmatpush1.bf16.msra.mxu0 %v1302
      %1345 = vmatprep.subr.bf16.mxu0 0
      %1346 = vmatpush1.bf16.msra.mxu0 %v1303
      %1347 = vmatprep.subr.bf16.mxu0 0
      %1348 = vmatpush1.bf16.msra.mxu0 %v1304
      %1349 = vmatprep.subr.bf16.mxu0 0
      %1350 = vmatpush1.bf16.msra.mxu0 %v1305
      %1351 = vmatprep.subr.bf16.mxu0 0
      %1352 = vmatpush1.bf16.msra.mxu0 %v1306
      %1353 = vmatprep.subr.bf16.mxu0 0
      %1354 = vmatpush1.bf16.msra.mxu0 %v1307
      %1355 = vmatprep.subr.bf16.mxu0 0
      %1356 = vmatpush1.bf16.msra.mxu0 %v1308
      %1357 = vmatprep.mubr.bf16.mxu0 %v1290
      %1358 = vmatmul.mubr.bf16.gmra.mrb[0].mxu0 %v1289
      %v1359 = vpop.f32.mrb[0].mxu0
      %v1360 = vadd.f32 0.0, %v1359
      %v1361 = vpop.f32.mrb[0].mxu0
      %v1362 = vpop.f32.mrb[0].mxu0
      %v1363 = vpop.f32.mrb[0].mxu0
      %1364 = vdwg.mxu0
      %1365 = vmatprep.subr.bf16.mxu0 0
      %1366 = vmatpush1.bf16.msra.mxu0 %v1309
      %1367 = vmatprep.subr.bf16.mxu0 0
      %1368 = vmatpush1.bf16.msra.mxu0 %v1310
      %1369 = vmatprep.subr.bf16.mxu0 0
      %1370 = vmatpush1.bf16.msra.mxu0 %v1311
      %1371 = vmatprep.subr.bf16.mxu0 0
      %1372 = vmatpush1.bf16.msra.mxu0 %v1312
      %1373 = vmatprep.subr.bf16.mxu0 0
      %1374 = vmatpush1.bf16.msra.mxu0 %v1313
      %1375 = vmatprep.subr.bf16.mxu0 0
      %1376 = vmatpush1.bf16.msra.mxu0 %v1314
      %1377 = vmatprep.subr.bf16.mxu0 0
      %1378 = vmatpush1.bf16.msra.mxu0 %v1315
      %1379 = vmatprep.subr.bf16.mxu0 0
      %1380 = vmatpush1.bf16.msra.mxu0 %v1316
      %1381 = vmatprep.subr.bf16.mxu0 0
      %1382 = vmatpush1.bf16.msra.mxu0 %v1317
      %1383 = vmatprep.subr.bf16.mxu0 0
      %1384 = vmatpush1.bf16.msra.mxu0 %v1318
      %1385 = vmatprep.subr.bf16.mxu0 0
      %1386 = vmatpush1.bf16.msra.mxu0 %v1319
      %1387 = vmatprep.subr.bf16.mxu0 0
      %1388 = vmatpush1.bf16.msra.mxu0 %v1320
      %1389 = vmatprep.subr.bf16.mxu0 0
      %1390 = vmatpush1.bf16.msra.mxu0 %v1321
      %1391 = vmatprep.subr.bf16.mxu0 0
      %1392 = vmatpush1.bf16.msra.mxu0 %v1322
      %1393 = vmatprep.subr.bf16.mxu0 0
      %1394 = vmatpush1.bf16.msra.mxu0 %v1323
      %1395 = vmatprep.subr.bf16.mxu0 0
      %1396 = vmatpush1.bf16.msra.mxu0 %v1324
      %1397 = vmatprep.mubr.bf16.mxu0 %v1292
      %1398 = vmatmul.mubr.bf16.gmra.mrb[0].mxu0 %v1291
      %v1399 = vpop.f32.mrb[0].mxu0
      %v1400 = vadd.f32 %v1360, %v1399
      %v1401 = vpop.f32.mrb[0].mxu0
      %v1402 = vpop.f32.mrb[0].mxu0
      %v1403 = vpop.f32.mrb[0].mxu0
      %1404 = vdwg.mxu0
      %v1405 = vadd.f32 %v962, %v1400
      %v1406 = vld [vmem:[%s12] sm:$0x1]
      %v1408 = vlaneseq
      %v1409 = vshrl.u32 %v1408, 7
      %v1410 = vsub.s32 0, %v1409
      %v1411 = vrot.slane %v1406, %v1410
      %v1413 = vadd.f32 %v1405, %v1411
      %1414 = vst [vmem:[%s435] sm:$0x1f] %v1413
      %p1415 = scmp.lt.s32.totalorder %s24, 1
      %s1416 = scalar_select %p1415, %s24, 1
      %s1417 = smul.addr %s1416, 8
      %s1418 = scalar_lea.vmem %s13, %s1417
      // Predicated region
      $region73: #{_lambda_.8} parent=71 // pred_check
        %p1419 = pneg %p320
      $region74: #{_lambda_.8} parent=71 // pred_check_branch
        %1421 = sbr.rel (%p1419) target = $region76
      $region75: #{_lambda_.8} parent=71 // pred_region
        _
      $region76: #{_lambda_.8} parent=71 // pred_fallthru
        _
    $region72: #{_lambda_.8} parent=5 // pred_fallthru
      _
    %p1422 = scmp.le.s32.totalorder 2, %s19
    // Predicated region
    $region77: #{_lambda_.8} parent=5 // pred_check
      %p1423 = pneg %p1422
    $region78: #{_lambda_.8} parent=5 // pred_check_branch
      %1425 = sbr.rel (%p1423) target = $region80
    $region79: #{_lambda_.8} parent=5 // pred_region
      %s1426 = ssub.s32 %s19, 2
      // Predicated region
      $region81: #{_lambda_.8} parent=79 // pred_check
        %p1427 = pneg %p326
      $region82: #{_lambda_.8} parent=79 // pred_check_branch
        %1429 = sbr.rel (%p1427) target = $region84
      $region83: #{_lambda_.8} parent=79 // pred_region
        %p1430 = scmp.lt.s32.totalorder %s25, 1
        %s1431 = scalar_select %p1430, %s25, 1
        %s1432 = smul.addr %s1431, 8
        %s1433 = scalar_lea.vmem %s13, %s1432
      $region84: #{_lambda_.8} parent=79 // pred_fallthru
        _
    $region80: #{_lambda_.8} parent=5 // pred_fallthru
      _
  $region6: #{_lambda_.8} parent=0 // loop_footer
    %s23 = sadd.s32 1, %s19
  $region7: #{_lambda_.8} parent=0 // loop_footer_branch
    %18 = sbr.rel target = $region3
  $region8: #{_lambda_.8} parent=0 // loop_exit
    _

// kernel: _lambda_.7
$region0: #{_lambda_.7}
  #allocation0 [shape = 'u32[]', space=smem, size = 0x4, offset = 0x4, fixed_abs, tag = 'smem constant byte address 0x4 - core index']
  #allocation1 [shape = 'u32[144,128]{1,0:T(1,128)}', space=vmem, size = 0x12000, scoped, tag = 'internal scratch']
  #allocation2 [shape = 'f32[5,384]{1,0:T(8,128)}', space=vmem, size = 0x3000, scoped, tag = 'scratch operand']
  #allocation3 [shape = 'f32[5,128]{1,0:T(8,128)}', space=vmem, size = 0x1000, scoped, tag = 'scratch operand']
  %s0 = inlined_call_operand.vmem [shape: f32[2,5,128], index: 0, kind: input, shape index: {}]
  %s1 = inlined_call_operand.hbm [shape: f32[1,128], index: 1, kind: input, shape index: {}]
  %s2 = inlined_call_operand.vmem [shape: f32[1,128], index: 2, kind: input, shape index: {}]
  %s3 = inlined_call_operand.hbm [shape: f32[128,384], index: 3, kind: input, shape index: {}]
  %s4 = inlined_call_operand.vmem [shape: f32[1,384], index: 4, kind: input, shape index: {}]
  %s5 = inlined_call_operand.hbm [shape: f32[128,128], index: 5, kind: input, shape index: {}]
  %s6 = inlined_call_operand.vmem [shape: f32[1,128], index: 6, kind: input, shape index: {}]
  %s7 = inlined_call_operand.hbm [shape: f32[1,128], index: 7, kind: input, shape index: {}]
  %s8 = inlined_call_operand.hbm [shape: f32[1,128], index: 8, kind: input, shape index: {}]
  %s9 = inlined_call_operand.vmem [shape: f32[128,512], index: 9, kind: input, shape index: {}]
  %s10 = inlined_call_operand.hbm [shape: f32[1,512], index: 10, kind: input, shape index: {}]
  %s11 = inlined_call_operand.vmem [shape: f32[512,128], index: 11, kind: input, shape index: {}]
  %s12 = inlined_call_operand.hbm [shape: f32[1,128], index: 12, kind: input, shape index: {}]
  %s13 = inlined_call_operand.vmem [shape: f32[2,5,128], index: 13, kind: output, shape index: {}]
  %s14 = sld [smem:[#allocation0]]
  $region113: #{_lambda_.7} parent=0
    _
  %s16 = ssub.s32 1, %s14
  %s17 = scalar_select 0, %s16, %s14
  $region1: #{_lambda_.7} parent=0
    #allocation4 [shape = 'u8[512]{0}', space=vmem, size = 0x400, scoped, tag = 'input window, operand 1, single buffered']
    #allocation5 [shape = 's32[2]{0}', space=sflag, size = 0x8, scoped, tag = 'scoped memory for _lambda_.7']
    #allocation6 [shape = 'u8[196608]{0}', space=vmem, size = 0x30000, scoped, tag = 'input window, operand 3, single buffered']
    #allocation7 [shape = 's32[1]{0}', space=sflag, size = 0x4, scoped, tag = 'scoped memory for _lambda_.7']
    #allocation8 [shape = 'u8[65536]{0}', space=vmem, size = 0x10000, scoped, tag = 'input window, operand 5, single buffered']
    #allocation9 [shape = 'u8[512]{0}', space=vmem, size = 0x400, scoped, tag = 'input window, operand 7, single buffered']
    #allocation10 [shape = 's32[1]{0}', space=sflag, size = 0x4, scoped, tag = 'scoped memory for _lambda_.7']
    #allocation11 [shape = 'u8[512]{0}', space=vmem, size = 0x400, scoped, tag = 'input window, operand 8, single buffered']
    #allocation12 [shape = 'u8[2048]{0}', space=vmem, size = 0x800, scoped, tag = 'input window, operand 10, single buffered']
    #allocation13 [shape = 's32[1]{0}', space=sflag, size = 0x4, scoped, tag = 'scoped memory for _lambda_.7']
    #allocation14 [shape = 'u8[512]{0}', space=vmem, size = 0x400, scoped, tag = 'input window, operand 12, single buffered']
    %18 = vsyncpa [#allocation5], 0
    %19 = vsyncpa [#allocation7], 0
    %20 = vsyncpa [#allocation10], 0
    %21 = vsyncpa [#allocation13], 0
    loop: start=0, step=1, limit=4
    $region2: #{_lambda_.7} parent=1 // loop_pre_header
      _
    $region3: #{_lambda_.7} parent=1 // loop_header
      %s23 = sphi 0, %s27
      %p24 = scmp.ge.s32.totalorder %s23, 4
      %s33 = sphi 0, %s35
      %s36 = sphi 0, %s33
      %s37 = sphi 0, %s36
      %s53 = sphi 0, %s37
      %s57 = sphi 0, %s57
      %s59 = sphi 0, %s57
      %s60 = sphi 0, %s59
      %s74 = sphi 0, %s60
      %s78 = sphi 0, %s78
      %s80 = sphi 0, %s78
      %s81 = sphi 0, %s80
      %s95 = sphi 0, %s81
      %s99 = sphi 0, %s99
      %s101 = sphi 0, %s99
      %s102 = sphi 0, %s101
      %s116 = sphi 0, %s102
      %s120 = sphi 0, %s120
      %s122 = sphi 0, %s120
      %s123 = sphi 0, %s122
      %s137 = sphi 0, %s123
      %s141 = sphi 0, %s141
      %s143 = sphi 0, %s141
      %s144 = sphi 0, %s143
      %s158 = sphi 0, %s144
      %s162 = sphi 0, %s162
      %s164 = sphi 0, %s162
      %s165 = sphi 0, %s164
      %s179 = sphi 0, %s165
      %s183 = sphi 0, %s183
      %s185 = sphi 0, %s183
      %s186 = sphi 0, %s185
      %s200 = sphi 0, %s186
      %s204 = sphi 0, %s204
      %s206 = sphi 0, %s204
      %s207 = sphi 0, %s206
      %s221 = sphi 0, %s207
      %s225 = sphi 0, %s225
      %s227 = sphi 0, %s225
      %s228 = sphi 0, %s227
      %s242 = sphi 0, %s228
      %s246 = sphi 0, %s246
      %s248 = sphi 0, %s246
      %s249 = sphi 0, %s248
      %s263 = sphi 0, %s249
      %s267 = sphi 0, %s267
      %s269 = sphi 0, %s267
      %s270 = sphi 0, %s269
      %s284 = sphi 0, %s270
      %s288 = sphi 0, %s288
      %s290 = sphi 0, %s288
      %s291 = sphi 0, %s290
      %s305 = sphi 0, %s291
      %s311 = sphi 0, %s313
      %s314 = sphi 0, %s311
      %s315 = sphi 0, %s314
      %s331 = sphi 0, %s315
    $region4: #{_lambda_.7} parent=1 // loop_header_branch
      %26 = sbr.rel (%p24) target = $region8
    $region5: #{_lambda_.7} parent=1 // loop_body
      %s28 = ssub.s32 %s23, 1
      %s29 = ssub.s32 %s23, 2
      %s30 = sadd.s32 %s23, 1
      %s31 = ssub.s32 %s23, %s30
      %p32 = scmp.eq.s32.totalorder %s31, 0
      %s34 = sadd.s32 %s33, 1
      %s35 = scalar_select %p32, %s33, %s34
      %p38 = pneg %p32
      %p39 = scmp.eq.s32.totalorder %s23, 1
      %p40 = por %p38, %p39
      %p41 = scmp.ne.s32.totalorder %s33, %s36
      %p42 = scmp.eq.s32.totalorder %s23, 0
      %p43 = por %p41, %p42
      %p44 = scmp.ne.s32.totalorder %s33, %s36
      %p45 = scmp.eq.s32.totalorder %s28, 1
      %p46 = por %p44, %p45
      %p47 = scmp.ne.s32.totalorder %s36, %s37
      %p48 = scmp.eq.s32.totalorder %s28, 0
      %p49 = por %p47, %p48
      %p50 = scmp.ne.s32.totalorder %s36, %s37
      %p51 = scmp.eq.s32.totalorder %s29, 1
      %p52 = por %p50, %p51
      %p54 = scmp.ne.s32.totalorder %s37, %s53
      %p55 = scmp.eq.s32.totalorder %s29, 0
      %p56 = por %p54, %p55
      %s58 = sadd.s32 %s57, 1
      %p61 = scmp.eq.s32.totalorder %s23, 1
      %p62 = scmp.ne.s32.totalorder %s57, %s59
      %p63 = scmp.eq.s32.totalorder %s23, 0
      %p64 = por %p62, %p63
      %p65 = scmp.ne.s32.totalorder %s57, %s59
      %p66 = scmp.eq.s32.totalorder %s28, 1
      %p67 = por %p65, %p66
      %p68 = scmp.ne.s32.totalorder %s59, %s60
      %p69 = scmp.eq.s32.totalorder %s28, 0
      %p70 = por %p68, %p69
      %p71 = scmp.ne.s32.totalorder %s59, %s60
      %p72 = scmp.eq.s32.totalorder %s29, 1
      %p73 = por %p71, %p72
      %p75 = scmp.ne.s32.totalorder %s60, %s74
      %p76 = scmp.eq.s32.totalorder %s29, 0
      %p77 = por %p75, %p76
      %s79 = sadd.s32 %s78, 1
      %p82 = scmp.eq.s32.totalorder %s23, 1
      %p83 = scmp.ne.s32.totalorder %s78, %s80
      %p84 = scmp.eq.s32.totalorder %s23, 0
      %p85 = por %p83, %p84
      %p86 = scmp.ne.s32.totalorder %s78, %s80
      %p87 = scmp.eq.s32.totalorder %s28, 1
      %p88 = por %p86, %p87
      %p89 = scmp.ne.s32.totalorder %s80, %s81
      %p90 = scmp.eq.s32.totalorder %s28, 0
      %p91 = por %p89, %p90
      %p92 = scmp.ne.s32.totalorder %s80, %s81
      %p93 = scmp.eq.s32.totalorder %s29, 1
      %p94 = por %p92, %p93
      %p96 = scmp.ne.s32.totalorder %s81, %s95
      %p97 = scmp.eq.s32.totalorder %s29, 0
      %p98 = por %p96, %p97
      %s100 = sadd.s32 %s99, 1
      %p103 = scmp.eq.s32.totalorder %s23, 1
      %p104 = scmp.ne.s32.totalorder %s99, %s101
      %p105 = scmp.eq.s32.totalorder %s23, 0
      %p106 = por %p104, %p105
      %p107 = scmp.ne.s32.totalorder %s99, %s101
      %p108 = scmp.eq.s32.totalorder %s28, 1
      %p109 = por %p107, %p108
      %p110 = scmp.ne.s32.totalorder %s101, %s102
      %p111 = scmp.eq.s32.totalorder %s28, 0
      %p112 = por %p110, %p111
      %p113 = scmp.ne.s32.totalorder %s101, %s102
      %p114 = scmp.eq.s32.totalorder %s29, 1
      %p115 = por %p113, %p114
      %p117 = scmp.ne.s32.totalorder %s102, %s116
      %p118 = scmp.eq.s32.totalorder %s29, 0
      %p119 = por %p117, %p118
      %s121 = sadd.s32 %s120, 1
      %p124 = scmp.eq.s32.totalorder %s23, 1
      %p125 = scmp.ne.s32.totalorder %s120, %s122
      %p126 = scmp.eq.s32.totalorder %s23, 0
      %p127 = por %p125, %p126
      %p128 = scmp.ne.s32.totalorder %s120, %s122
      %p129 = scmp.eq.s32.totalorder %s28, 1
      %p130 = por %p128, %p129
      %p131 = scmp.ne.s32.totalorder %s122, %s123
      %p132 = scmp.eq.s32.totalorder %s28, 0
      %p133 = por %p131, %p132
      %p134 = scmp.ne.s32.totalorder %s122, %s123
      %p135 = scmp.eq.s32.totalorder %s29, 1
      %p136 = por %p134, %p135
      %p138 = scmp.ne.s32.totalorder %s123, %s137
      %p139 = scmp.eq.s32.totalorder %s29, 0
      %p140 = por %p138, %p139
      %s142 = sadd.s32 %s141, 1
      %p145 = scmp.eq.s32.totalorder %s23, 1
      %p146 = scmp.ne.s32.totalorder %s141, %s143
      %p147 = scmp.eq.s32.totalorder %s23, 0
      %p148 = por %p146, %p147
      %p149 = scmp.ne.s32.totalorder %s141, %s143
      %p150 = scmp.eq.s32.totalorder %s28, 1
      %p151 = por %p149, %p150
      %p152 = scmp.ne.s32.totalorder %s143, %s144
      %p153 = scmp.eq.s32.totalorder %s28, 0
      %p154 = por %p152, %p153
      %p155 = scmp.ne.s32.totalorder %s143, %s144
      %p156 = scmp.eq.s32.totalorder %s29, 1
      %p157 = por %p155, %p156
      %p159 = scmp.ne.s32.totalorder %s144, %s158
      %p160 = scmp.eq.s32.totalorder %s29, 0
      %p161 = por %p159, %p160
      %s163 = sadd.s32 %s162, 1
      %p166 = scmp.eq.s32.totalorder %s23, 1
      %p167 = scmp.ne.s32.totalorder %s162, %s164
      %p168 = scmp.eq.s32.totalorder %s23, 0
      %p169 = por %p167, %p168
      %p170 = scmp.ne.s32.totalorder %s162, %s164
      %p171 = scmp.eq.s32.totalorder %s28, 1
      %p172 = por %p170, %p171
      %p173 = scmp.ne.s32.totalorder %s164, %s165
      %p174 = scmp.eq.s32.totalorder %s28, 0
      %p175 = por %p173, %p174
      %p176 = scmp.ne.s32.totalorder %s164, %s165
      %p177 = scmp.eq.s32.totalorder %s29, 1
      %p178 = por %p176, %p177
      %p180 = scmp.ne.s32.totalorder %s165, %s179
      %p181 = scmp.eq.s32.totalorder %s29, 0
      %p182 = por %p180, %p181
      %s184 = sadd.s32 %s183, 1
      %p187 = scmp.eq.s32.totalorder %s23, 1
      %p188 = scmp.ne.s32.totalorder %s183, %s185
      %p189 = scmp.eq.s32.totalorder %s23, 0
      %p190 = por %p188, %p189
      %p191 = scmp.ne.s32.totalorder %s183, %s185
      %p192 = scmp.eq.s32.totalorder %s28, 1
      %p193 = por %p191, %p192
      %p194 = scmp.ne.s32.totalorder %s185, %s186
      %p195 = scmp.eq.s32.totalorder %s28, 0
      %p196 = por %p194, %p195
      %p197 = scmp.ne.s32.totalorder %s185, %s186
      %p198 = scmp.eq.s32.totalorder %s29, 1
      %p199 = por %p197, %p198
      %p201 = scmp.ne.s32.totalorder %s186, %s200
      %p202 = scmp.eq.s32.totalorder %s29, 0
      %p203 = por %p201, %p202
      %s205 = sadd.s32 %s204, 1
      %p208 = scmp.eq.s32.totalorder %s23, 1
      %p209 = scmp.ne.s32.totalorder %s204, %s206
      %p210 = scmp.eq.s32.totalorder %s23, 0
      %p211 = por %p209, %p210
      %p212 = scmp.ne.s32.totalorder %s204, %s206
      %p213 = scmp.eq.s32.totalorder %s28, 1
      %p214 = por %p212, %p213
      %p215 = scmp.ne.s32.totalorder %s206, %s207
      %p216 = scmp.eq.s32.totalorder %s28, 0
      %p217 = por %p215, %p216
      %p218 = scmp.ne.s32.totalorder %s206, %s207
      %p219 = scmp.eq.s32.totalorder %s29, 1
      %p220 = por %p218, %p219
      %p222 = scmp.ne.s32.totalorder %s207, %s221
      %p223 = scmp.eq.s32.totalorder %s29, 0
      %p224 = por %p222, %p223
      %s226 = sadd.s32 %s225, 1
      %p229 = scmp.eq.s32.totalorder %s23, 1
      %p230 = scmp.ne.s32.totalorder %s225, %s227
      %p231 = scmp.eq.s32.totalorder %s23, 0
      %p232 = por %p230, %p231
      %p233 = scmp.ne.s32.totalorder %s225, %s227
      %p234 = scmp.eq.s32.totalorder %s28, 1
      %p235 = por %p233, %p234
      %p236 = scmp.ne.s32.totalorder %s227, %s228
      %p237 = scmp.eq.s32.totalorder %s28, 0
      %p238 = por %p236, %p237
      %p239 = scmp.ne.s32.totalorder %s227, %s228
      %p240 = scmp.eq.s32.totalorder %s29, 1
      %p241 = por %p239, %p240
      %p243 = scmp.ne.s32.totalorder %s228, %s242
      %p244 = scmp.eq.s32.totalorder %s29, 0
      %p245 = por %p243, %p244
      %s247 = sadd.s32 %s246, 1
      %p250 = scmp.eq.s32.totalorder %s23, 1
      %p251 = scmp.ne.s32.totalorder %s246, %s248
      %p252 = scmp.eq.s32.totalorder %s23, 0
      %p253 = por %p251, %p252
      %p254 = scmp.ne.s32.totalorder %s246, %s248
      %p255 = scmp.eq.s32.totalorder %s28, 1
      %p256 = por %p254, %p255
      %p257 = scmp.ne.s32.totalorder %s248, %s249
      %p258 = scmp.eq.s32.totalorder %s28, 0
      %p259 = por %p257, %p258
      %p260 = scmp.ne.s32.totalorder %s248, %s249
      %p261 = scmp.eq.s32.totalorder %s29, 1
      %p262 = por %p260, %p261
      %p264 = scmp.ne.s32.totalorder %s249, %s263
      %p265 = scmp.eq.s32.totalorder %s29, 0
      %p266 = por %p264, %p265
      %s268 = sadd.s32 %s267, 1
      %p271 = scmp.eq.s32.totalorder %s23, 1
      %p272 = scmp.ne.s32.totalorder %s267, %s269
      %p273 = scmp.eq.s32.totalorder %s23, 0
      %p274 = por %p272, %p273
      %p275 = scmp.ne.s32.totalorder %s267, %s269
      %p276 = scmp.eq.s32.totalorder %s28, 1
      %p277 = por %p275, %p276
      %p278 = scmp.ne.s32.totalorder %s269, %s270
      %p279 = scmp.eq.s32.totalorder %s28, 0
      %p280 = por %p278, %p279
      %p281 = scmp.ne.s32.totalorder %s269, %s270
      %p282 = scmp.eq.s32.totalorder %s29, 1
      %p283 = por %p281, %p282
      %p285 = scmp.ne.s32.totalorder %s270, %s284
      %p286 = scmp.eq.s32.totalorder %s29, 0
      %p287 = por %p285, %p286
      %s289 = sadd.s32 %s288, 1
      %p292 = scmp.eq.s32.totalorder %s23, 1
      %p293 = scmp.ne.s32.totalorder %s288, %s290
      %p294 = scmp.eq.s32.totalorder %s23, 0
      %p295 = por %p293, %p294
      %p296 = scmp.ne.s32.totalorder %s288, %s290
      %p297 = scmp.eq.s32.totalorder %s28, 1
      %p298 = por %p296, %p297
      %p299 = scmp.ne.s32.totalorder %s290, %s291
      %p300 = scmp.eq.s32.totalorder %s28, 0
      %p301 = por %p299, %p300
      %p302 = scmp.ne.s32.totalorder %s290, %s291
      %p303 = scmp.eq.s32.totalorder %s29, 1
      %p304 = por %p302, %p303
      %p306 = scmp.ne.s32.totalorder %s291, %s305
      %p307 = scmp.eq.s32.totalorder %s29, 0
      %p308 = por %p306, %p307
      %s309 = ssub.s32 %s23, %s30
      %p310 = scmp.eq.s32.totalorder %s309, 0
      %s312 = sadd.s32 %s311, 1
      %s313 = scalar_select %p310, %s311, %s312
      %p316 = pneg %p310
      %p317 = scmp.eq.s32.totalorder %s23, 1
      %p318 = por %p316, %p317
      %p319 = scmp.ne.s32.totalorder %s311, %s314
      %p320 = scmp.eq.s32.totalorder %s23, 0
      %p321 = por %p319, %p320
      %p322 = scmp.ne.s32.totalorder %s311, %s314
      %p323 = scmp.eq.s32.totalorder %s28, 1
      %p324 = por %p322, %p323
      %p325 = scmp.ne.s32.totalorder %s314, %s315
      %p326 = scmp.eq.s32.totalorder %s28, 0
      %p327 = por %p325, %p326
      %p328 = scmp.ne.s32.totalorder %s314, %s315
      %p329 = scmp.eq.s32.totalorder %s29, 1
      %p330 = por %p328, %p329
      %p332 = scmp.ne.s32.totalorder %s315, %s331
      %p333 = scmp.eq.s32.totalorder %s29, 0
      %p334 = por %p332, %p333
      %p335 = scmp.le.s32.totalorder 1, %s23
      %p336 = scmp.lt.s32.totalorder %s23, 3
      %p337 = pnand %p335, %p336
      %p338 = pneg %p337
      // Predicated region
      $region9: #{_lambda_.7} parent=5 // pred_check
        _
      $region10: #{_lambda_.7} parent=5 // pred_check_branch
        %340 = sbr.rel (%p337) target = $region12
      $region11: #{_lambda_.7} parent=5 // pred_region
        %s341 = ssub.s32 %s23, 1
        // Predicated region
        $region13: #{_lambda_.7} parent=11 // pred_check
          %p342 = pneg %p70
        $region14: #{_lambda_.7} parent=11 // pred_check_branch
          %344 = sbr.rel (%p342) target = $region16
        $region15: #{_lambda_.7} parent=11 // pred_region
          %s346 = ssub.s32 16, 16
          %347 = vsyncadd [#allocation5], %s346
          %s349 = sshll.u32 [#allocation4], 4
          %s350 = int_to_ptr.vmem [resolvable:$true] %s349
          %352 = dma.hbm_to_vmem [thread:$0]  %s1, 16, %s350, [#allocation5]
        $region16: #{_lambda_.7} parent=11 // pred_fallthru
          _
        // Predicated region
        $region17: #{_lambda_.7} parent=11 // pred_check
          %p353 = pneg %p91
        $region18: #{_lambda_.7} parent=11 // pred_check_branch
          %355 = sbr.rel (%p353) target = $region20
        $region19: #{_lambda_.7} parent=11 // pred_region
          _
        $region20: #{_lambda_.7} parent=11 // pred_fallthru
          _
        // Predicated region
        $region21: #{_lambda_.7} parent=11 // pred_check
          %p356 = pneg %p112
        $region22: #{_lambda_.7} parent=11 // pred_check_branch
          %358 = sbr.rel (%p356) target = $region24
        $region23: #{_lambda_.7} parent=11 // pred_region
          %s360 = ssub.s32 6144, 6144
          %361 = vsyncadd [#allocation7], %s360
          %s362 = sshll.u32 [#allocation6], 4
          %s363 = int_to_ptr.vmem [resolvable:$true] %s362
          %368 = dma.hbm_to_vmem [thread:$0]  %s3, 6144, %s363, [#allocation7], 384, 384, 24
        $region24: #{_lambda_.7} parent=11 // pred_fallthru
          _
        // Predicated region
        $region25: #{_lambda_.7} parent=11 // pred_check
          %p369 = pneg %p133
        $region26: #{_lambda_.7} parent=11 // pred_check_branch
          %371 = sbr.rel (%p369) target = $region28
        $region27: #{_lambda_.7} parent=11 // pred_region
          _
        $region28: #{_lambda_.7} parent=11 // pred_fallthru
          _
        // Predicated region
        $region29: #{_lambda_.7} parent=11 // pred_check
          %p372 = pneg %p154
        $region30: #{_lambda_.7} parent=11 // pred_check_branch
          %374 = sbr.rel (%p372) target = $region32
        $region31: #{_lambda_.7} parent=11 // pred_region
          %s376 = ssub.s32 2048, 2048
          %377 = vsyncadd [#allocation7], %s376
          %s378 = sshll.u32 [#allocation8], 4
          %s379 = int_to_ptr.vmem [resolvable:$true] %s378
          %384 = dma.hbm_to_vmem [thread:$0]  %s5, 2048, %s379, [#allocation7], 128, 128, 8
        $region32: #{_lambda_.7} parent=11 // pred_fallthru
          _
        // Predicated region
        $region33: #{_lambda_.7} parent=11 // pred_check
          %p385 = pneg %p175
        $region34: #{_lambda_.7} parent=11 // pred_check_branch
          %387 = sbr.rel (%p385) target = $region36
        $region35: #{_lambda_.7} parent=11 // pred_region
          _
        $region36: #{_lambda_.7} parent=11 // pred_fallthru
          _
        // Predicated region
        $region37: #{_lambda_.7} parent=11 // pred_check
          %p388 = pneg %p196
        $region38: #{_lambda_.7} parent=11 // pred_check_branch
          %390 = sbr.rel (%p388) target = $region40
        $region39: #{_lambda_.7} parent=11 // pred_region
          %s392 = ssub.s32 16, 16
          %393 = vsyncadd [#allocation10], %s392
          %s395 = sshll.u32 [#allocation9], 4
          %s396 = int_to_ptr.vmem [resolvable:$true] %s395
          %398 = dma.hbm_to_vmem [thread:$0]  %s7, 16, %s396, [#allocation10]
        $region40: #{_lambda_.7} parent=11 // pred_fallthru
          _
        // Predicated region
        $region41: #{_lambda_.7} parent=11 // pred_check
          %p399 = pneg %p217
        $region42: #{_lambda_.7} parent=11 // pred_check_branch
          %401 = sbr.rel (%p399) target = $region44
        $region43: #{_lambda_.7} parent=11 // pred_region
          %s403 = ssub.s32 16, 16
          %404 = vsyncadd [#allocation10], %s403
          %s406 = sshll.u32 [#allocation11], 4
          %s407 = int_to_ptr.vmem [resolvable:$true] %s406
          %409 = dma.hbm_to_vmem [thread:$0]  %s8, 16, %s407, [#allocation10]
        $region44: #{_lambda_.7} parent=11 // pred_fallthru
          _
        // Predicated region
        $region45: #{_lambda_.7} parent=11 // pred_check
          %p410 = pneg %p238
        $region46: #{_lambda_.7} parent=11 // pred_check_branch
          %412 = sbr.rel (%p410) target = $region48
        $region47: #{_lambda_.7} parent=11 // pred_region
          _
        $region48: #{_lambda_.7} parent=11 // pred_fallthru
          _
        // Predicated region
        $region49: #{_lambda_.7} parent=11 // pred_check
          %p413 = pneg %p259
        $region50: #{_lambda_.7} parent=11 // pred_check_branch
          %415 = sbr.rel (%p413) target = $region52
        $region51: #{_lambda_.7} parent=11 // pred_region
          %s417 = ssub.s32 64, 64
          %418 = vsyncadd [#allocation13], %s417
          %s420 = sshll.u32 [#allocation12], 4
          %s421 = int_to_ptr.vmem [resolvable:$true] %s420
          %423 = dma.hbm_to_vmem [thread:$0]  %s10, 64, %s421, [#allocation13]
        $region52: #{_lambda_.7} parent=11 // pred_fallthru
          _
        // Predicated region
        $region53: #{_lambda_.7} parent=11 // pred_check
          %p424 = pneg %p280
        $region54: #{_lambda_.7} parent=11 // pred_check_branch
          %426 = sbr.rel (%p424) target = $region56
        $region55: #{_lambda_.7} parent=11 // pred_region
          _
        $region56: #{_lambda_.7} parent=11 // pred_fallthru
          _
        // Predicated region
        $region57: #{_lambda_.7} parent=11 // pred_check
          %p427 = pneg %p301
        $region58: #{_lambda_.7} parent=11 // pred_check_branch
          %429 = sbr.rel (%p427) target = $region60
        $region59: #{_lambda_.7} parent=11 // pred_region
          %s431 = ssub.s32 16, 16
          %432 = vsyncadd [#allocation13], %s431
          %s434 = sshll.u32 [#allocation14], 4
          %s435 = int_to_ptr.vmem [resolvable:$true] %s434
          %437 = dma.hbm_to_vmem [thread:$0]  %s12, 16, %s435, [#allocation13]
        $region60: #{_lambda_.7} parent=11 // pred_fallthru
          _
      $region12: #{_lambda_.7} parent=5 // pred_fallthru
        _
      %p438 = scmp.lt.s32.totalorder %s23, 2
      // Predicated region
      $region61: #{_lambda_.7} parent=5 // pred_check
        %p439 = pneg %p438
      $region62: #{_lambda_.7} parent=5 // pred_check_branch
        %441 = sbr.rel (%p439) target = $region64
      $region63: #{_lambda_.7} parent=5 // pred_region
        // Predicated region
        $region65: #{_lambda_.7} parent=63 // pred_check
          %p442 = pneg %p43
        $region66: #{_lambda_.7} parent=63 // pred_check_branch
          %444 = sbr.rel (%p442) target = $region68
        $region67: #{_lambda_.7} parent=63 // pred_region
          %p445 = scmp.lt.s32.totalorder %s23, 1
          %s446 = scalar_select %p445, %s23, 1
          %s447 = smul.addr %s446, 8
          %s448 = scalar_lea.vmem %s0, %s447
        $region68: #{_lambda_.7} parent=63 // pred_fallthru
          _
      $region64: #{_lambda_.7} parent=5 // pred_fallthru
        _
      %p449 = scmp.le.s32.totalorder 1, %s23
      %p450 = scmp.lt.s32.totalorder %s23, 3
      %p451 = pnand %p449, %p450
      %p452 = pneg %p451
      // Predicated region
      $region69: #{_lambda_.7} parent=5 // pred_check
        _
      $region70: #{_lambda_.7} parent=5 // pred_check_branch
        %454 = sbr.rel (%p451) target = $region72
      $region71: #{_lambda_.7} parent=5 // pred_region
        %s455 = ssub.s32 %s23, 1
        // Predicated region
        $region73: #{_lambda_.7} parent=71 // pred_check
          %p456 = pneg %p70
        $region74: #{_lambda_.7} parent=71 // pred_check_branch
          %458 = sbr.rel (%p456) target = $region76
        $region75: #{_lambda_.7} parent=71 // pred_region
          %459 = dma.done [#allocation5], 16
        $region76: #{_lambda_.7} parent=71 // pred_fallthru
          _
        // Predicated region
        $region77: #{_lambda_.7} parent=71 // pred_check
          %p460 = pneg %p112
        $region78: #{_lambda_.7} parent=71 // pred_check_branch
          %462 = sbr.rel (%p460) target = $region80
        $region79: #{_lambda_.7} parent=71 // pred_region
          %463 = dma.done [#allocation7], 6144
        $region80: #{_lambda_.7} parent=71 // pred_fallthru
          _
        // Predicated region
        $region81: #{_lambda_.7} parent=71 // pred_check
          %p464 = pneg %p154
        $region82: #{_lambda_.7} parent=71 // pred_check_branch
          %466 = sbr.rel (%p464) target = $region84
        $region83: #{_lambda_.7} parent=71 // pred_region
          %467 = dma.done [#allocation7], 2048
        $region84: #{_lambda_.7} parent=71 // pred_fallthru
          _
        // Predicated region
        $region85: #{_lambda_.7} parent=71 // pred_check
          %p468 = pneg %p196
        $region86: #{_lambda_.7} parent=71 // pred_check_branch
          %470 = sbr.rel (%p468) target = $region88
        $region87: #{_lambda_.7} parent=71 // pred_region
          %471 = dma.done [#allocation10], 16
        $region88: #{_lambda_.7} parent=71 // pred_fallthru
          _
        // Predicated region
        $region89: #{_lambda_.7} parent=71 // pred_check
          %p472 = pneg %p217
        $region90: #{_lambda_.7} parent=71 // pred_check_branch
          %474 = sbr.rel (%p472) target = $region92
        $region91: #{_lambda_.7} parent=71 // pred_region
          %475 = dma.done [#allocation10], 16
        $region92: #{_lambda_.7} parent=71 // pred_fallthru
          _
        // Predicated region
        $region93: #{_lambda_.7} parent=71 // pred_check
          %p476 = pneg %p259
        $region94: #{_lambda_.7} parent=71 // pred_check_branch
          %478 = sbr.rel (%p476) target = $region96
        $region95: #{_lambda_.7} parent=71 // pred_region
          %479 = dma.done [#allocation13], 64
        $region96: #{_lambda_.7} parent=71 // pred_fallthru
          _
        // Predicated region
        $region97: #{_lambda_.7} parent=71 // pred_check
          %p480 = pneg %p301
        $region98: #{_lambda_.7} parent=71 // pred_check_branch
          %482 = sbr.rel (%p480) target = $region100
        $region99: #{_lambda_.7} parent=71 // pred_region
          %483 = dma.done [#allocation13], 16
        $region100: #{_lambda_.7} parent=71 // pred_fallthru
          _
        %p484 = scmp.lt.s32.totalorder %s28, 1
        %s485 = scalar_select %p484, %s28, 1
        %s486 = smul.addr %s485, 8
        %s487 = scalar_lea.vmem %s0, %s486
        %p488 = pneg %p49
        %p489 = pneg %p46
        %p490 = pneg %p70
        %p491 = pneg %p67
        %p492 = pneg %p91
        %p493 = pneg %p88
        %p494 = pneg %p112
        %p495 = pneg %p109
        %p496 = pneg %p133
        %p497 = pneg %p130
        %p498 = pneg %p154
        %p499 = pneg %p151
        %p500 = pneg %p175
        %p501 = pneg %p172
        %p502 = pneg %p196
        %p503 = pneg %p193
        %p504 = pneg %p217
        %p505 = pneg %p214
        %p506 = pneg %p238
        %p507 = pneg %p235
        %p508 = pneg %p259
        %p509 = pneg %p256
        %p510 = pneg %p280
        %p511 = pneg %p277
        %p512 = pneg %p301
        %p513 = pneg %p298
        %p514 = pneg %p327
        %p515 = pneg %p324
        %p516 = scmp.lt.s32.totalorder %s28, 1
        %s517 = scalar_select %p516, %s28, 1
        %s518 = smul.addr %s517, 8
        %s519 = scalar_lea.vmem %s13, %s518
        %p520 = scmp.lt.s32.totalorder %s28, 1
        %s521 = scalar_select %p520, %s28, 1
        %s522 = smul.addr %s521, 8
        %s523 = scalar_lea.vmem %s0, %s522
        %p524 = scmp.lt.s32.totalorder %s28, 1
        %s525 = scalar_select %p524, %s28, 1
        %s526 = smul.addr %s525, 8
        %s527 = scalar_lea.vmem %s13, %s526
        %v529 = vld [vmem:[%s523] sm:$0x1f]
        %v530 = vld [vmem:[#allocation4] sm:$0x1]
        %v531 = vld [vmem:[%s2] sm:$0x1]
        %vm532 = vcmask 1044480
        %v533 = vsel %vm532, %v529, 0.0
        %534 = vadd.xlane.f32.xlu0 %v533
        %v535 = vpop.xlane.xlu0 %534
        %v536 = vmul.f32 %v535, 0.0078125
        %v537 = vsub.f32 %v529, %v536
        %v538 = vmul.f32 %v537, %v537
        %v539 = vsel %vm532, %v538, 0.0
        %540 = vadd.xlane.f32.xlu0 %v539
        %v541 = vpop.xlane.xlu0 %540
        %v542 = vmul.f32 %v541, 0.0078125
        %v543 = vadd.f32 %v542, 1e-05
        %v544 = vrsqrt.pop %v543
        %v545 = vmul.f32 %v537, %v544
        %v547 = vlaneseq
        %v548 = vshrl.u32 %v547, 7
        %v549 = vsub.s32 0, %v548
        %v550 = vrot.slane %v530, %v549
        %v552 = vmul.f32 %v545, %v550
        %v554 = vlaneseq
        %v555 = vshrl.u32 %v554, 7
        %v556 = vsub.s32 0, %v555
        %v557 = vrot.slane %v531, %v556
        %v559 = vadd.f32 %v552, %v557
        %v560 = vld [vmem:[#allocation6] sm:$0xff]
        %v561 = vld [vmem:[#allocation6 + $0x8] sm:$0xff]
        %v562 = vld [vmem:[#allocation6 + $0x10] sm:$0xff]
        %v563 = vld [vmem:[#allocation6 + $0x18] sm:$0xff]
        %v564 = vld [vmem:[#allocation6 + $0x20] sm:$0xff]
        %v565 = vld [vmem:[#allocation6 + $0x28] sm:$0xff]
        %v566 = vld [vmem:[#allocation6 + $0x30] sm:$0xff]
        %v567 = vld [vmem:[#allocation6 + $0x38] sm:$0xff]
        %v568 = vld [vmem:[#allocation6 + $0x40] sm:$0xff]
        %v569 = vld [vmem:[#allocation6 + $0x48] sm:$0xff]
        %v570 = vld [vmem:[#allocation6 + $0x50] sm:$0xff]
        %v571 = vld [vmem:[#allocation6 + $0x58] sm:$0xff]
        %v572 = vld [vmem:[#allocation6 + $0x60] sm:$0xff]
        %v573 = vld [vmem:[#allocation6 + $0x68] sm:$0xff]
        %v574 = vld [vmem:[#allocation6 + $0x70] sm:$0xff]
        %v575 = vld [vmem:[#allocation6 + $0x78] sm:$0xff]
        %v576 = vld [vmem:[#allocation6 + $0x80] sm:$0xff]
        %v577 = vld [vmem:[#allocation6 + $0x88] sm:$0xff]
        %v578 = vld [vmem:[#allocation6 + $0x90] sm:$0xff]
        %v579 = vld [vmem:[#allocation6 + $0x98] sm:$0xff]
        %v580 = vld [vmem:[#allocation6 + $0xa0] sm:$0xff]
        %v581 = vld [vmem:[#allocation6 + $0xa8] sm:$0xff]
        %v582 = vld [vmem:[#allocation6 + $0xb0] sm:$0xff]
        %v583 = vld [vmem:[#allocation6 + $0xb8] sm:$0xff]
        %v584 = vld [vmem:[#allocation6 + $0xc0] sm:$0xff]
        %v585 = vld [vmem:[#allocation6 + $0xc8] sm:$0xff]
        %v586 = vld [vmem:[#allocation6 + $0xd0] sm:$0xff]
        %v587 = vld [vmem:[#allocation6 + $0xd8] sm:$0xff]
        %v588 = vld [vmem:[#allocation6 + $0xe0] sm:$0xff]
        %v589 = vld [vmem:[#allocation6 + $0xe8] sm:$0xff]
        %v590 = vld [vmem:[#allocation6 + $0xf0] sm:$0xff]
        %v591 = vld [vmem:[#allocation6 + $0xf8] sm:$0xff]
        %v592 = vld [vmem:[#allocation6 + $0x100] sm:$0xff]
        %v593 = vld [vmem:[#allocation6 + $0x108] sm:$0xff]
        %v594 = vld [vmem:[#allocation6 + $0x110] sm:$0xff]
        %v595 = vld [vmem:[#allocation6 + $0x118] sm:$0xff]
        %v596 = vld [vmem:[#allocation6 + $0x120] sm:$0xff]
        %v597 = vld [vmem:[#allocation6 + $0x128] sm:$0xff]
        %v598 = vld [vmem:[#allocation6 + $0x130] sm:$0xff]
        %v599 = vld [vmem:[#allocation6 + $0x138] sm:$0xff]
        %v600 = vld [vmem:[#allocation6 + $0x140] sm:$0xff]
        %v601 = vld [vmem:[#allocation6 + $0x148] sm:$0xff]
        %v602 = vld [vmem:[#allocation6 + $0x150] sm:$0xff]
        %v603 = vld [vmem:[#allocation6 + $0x158] sm:$0xff]
        %v604 = vld [vmem:[#allocation6 + $0x160] sm:$0xff]
        %v605 = vld [vmem:[#allocation6 + $0x168] sm:$0xff]
        %v606 = vld [vmem:[#allocation6 + $0x170] sm:$0xff]
        %v607 = vld [vmem:[#allocation6 + $0x178] sm:$0xff]
        %v608 = vpack.c.bf16 %v559, %v559
        %v609 = vpack.c.bf16 %v563, %v560
        %v610 = vpack.c.bf16 %v564, %v561
        %v611 = vpack.c.bf16 %v565, %v562
        %v612 = vpack.c.bf16 %v569, %v566
        %v613 = vpack.c.bf16 %v570, %v567
        %v614 = vpack.c.bf16 %v571, %v568
        %v615 = vpack.c.bf16 %v575, %v572
        %v616 = vpack.c.bf16 %v576, %v573
        %v617 = vpack.c.bf16 %v577, %v574
        %v618 = vpack.c.bf16 %v581, %v578
        %v619 = vpack.c.bf16 %v582, %v579
        %v620 = vpack.c.bf16 %v583, %v580
        %v621 = vpack.c.bf16 %v587, %v584
        %v622 = vpack.c.bf16 %v588, %v585
        %v623 = vpack.c.bf16 %v589, %v586
        %v624 = vpack.c.bf16 %v593, %v590
        %v625 = vpack.c.bf16 %v594, %v591
        %v626 = vpack.c.bf16 %v595, %v592
        %v627 = vpack.c.bf16 %v599, %v596
        %v628 = vpack.c.bf16 %v600, %v597
        %v629 = vpack.c.bf16 %v601, %v598
        %v630 = vpack.c.bf16 %v605, %v602
        %v631 = vpack.c.bf16 %v606, %v603
        %v632 = vpack.c.bf16 %v607, %v604
        %v633 = vld [vmem:[%s4] sm:$0x7]
        %v635 = vlaneseq
        %v636 = vshrl.u32 %v635, 7
        %v637 = vsub.s32 0, %v636
        %v638 = vrot.slane %v633, %v637
        %v639 = vlaneseq
        %v640 = vshrl.u32 %v639, 7
        %v641 = vsub.s32 1, %v640
        %v642 = vrot.slane %v633, %v641
        %v643 = vlaneseq
        %v644 = vshrl.u32 %v643, 7
        %v645 = vsub.s32 2, %v644
        %v646 = vrot.slane %v633, %v645
        %650 = vmatprep.subr.bf16.mxu0 %v610
        %651 = vmatpush1.bf16.msra.mxu0 %v609
        %652 = vmatprep.subr.bf16.mxu0 %v613
        %653 = vmatpush1.bf16.msra.mxu0 %v612
        %654 = vmatprep.subr.bf16.mxu0 %v616
        %655 = vmatpush1.bf16.msra.mxu0 %v615
        %656 = vmatprep.subr.bf16.mxu0 %v619
        %657 = vmatpush1.bf16.msra.mxu0 %v618
        %658 = vmatprep.subr.bf16.mxu0 %v622
        %659 = vmatpush1.bf16.msra.mxu0 %v621
        %660 = vmatprep.subr.bf16.mxu0 %v625
        %661 = vmatpush1.bf16.msra.mxu0 %v624
        %662 = vmatprep.subr.bf16.mxu0 %v628
        %663 = vmatpush1.bf16.msra.mxu0 %v627
        %664 = vmatprep.subr.bf16.mxu0 %v631
        %665 = vmatpush1.bf16.msra.mxu0 %v630
        %666 = vmatprep.subr.bf16.mxu0 0
        %667 = vmatpush1.bf16.msra.mxu0 0
        %668 = vmatprep.subr.bf16.mxu0 0
        %669 = vmatpush1.bf16.msra.mxu0 0
        %670 = vmatprep.subr.bf16.mxu0 0
        %671 = vmatpush1.bf16.msra.mxu0 0
        %672 = vmatprep.subr.bf16.mxu0 0
        %673 = vmatpush1.bf16.msra.mxu0 0
        %674 = vmatprep.subr.bf16.mxu0 0
        %675 = vmatpush1.bf16.msra.mxu0 0
        %676 = vmatprep.subr.bf16.mxu0 0
        %677 = vmatpush1.bf16.msra.mxu0 0
        %678 = vmatprep.subr.bf16.mxu0 0
        %679 = vmatpush1.bf16.msra.mxu0 0
        %680 = vmatprep.subr.bf16.mxu0 0
        %681 = vmatpush1.bf16.msra.mxu0 0
        %682 = vmatprep.mubr.bf16.mxu0 0
        %683 = vmatmul.mubr.bf16.gmra.mrb[0].mxu0 %v608
        %v684 = vpop.f32.mrb[0].mxu0
        %v685 = vadd.f32 %v638, %v684
        %v686 = vpop.f32.mrb[0].mxu0
        %v687 = vadd.f32 %v642, %v686
        %v688 = vpop.f32.mrb[0].mxu0
        %v689 = vpop.f32.mrb[0].mxu0
        %690 = vdwg.mxu0
        %691 = vmatprep.subr.bf16.mxu0 0
        %692 = vmatpush1.bf16.msra.mxu0 %v611
        %693 = vmatprep.subr.bf16.mxu0 0
        %694 = vmatpush1.bf16.msra.mxu0 %v614
        %695 = vmatprep.subr.bf16.mxu0 0
        %696 = vmatpush1.bf16.msra.mxu0 %v617
        %697 = vmatprep.subr.bf16.mxu0 0
        %698 = vmatpush1.bf16.msra.mxu0 %v620
        %699 = vmatprep.subr.bf16.mxu0 0
        %700 = vmatpush1.bf16.msra.mxu0 %v623
        %701 = vmatprep.subr.bf16.mxu0 0
        %702 = vmatpush1.bf16.msra.mxu0 %v626
        %703 = vmatprep.subr.bf16.mxu0 0
        %704 = vmatpush1.bf16.msra.mxu0 %v629
        %705 = vmatprep.subr.bf16.mxu0 0
        %706 = vmatpush1.bf16.msra.mxu0 %v632
        %707 = vmatprep.subr.bf16.mxu0 0
        %708 = vmatpush1.bf16.msra.mxu0 0
        %709 = vmatprep.subr.bf16.mxu0 0
        %710 = vmatpush1.bf16.msra.mxu0 0
        %711 = vmatprep.subr.bf16.mxu0 0
        %712 = vmatpush1.bf16.msra.mxu0 0
        %713 = vmatprep.subr.bf16.mxu0 0
        %714 = vmatpush1.bf16.msra.mxu0 0
        %715 = vmatprep.subr.bf16.mxu0 0
        %716 = vmatpush1.bf16.msra.mxu0 0
        %717 = vmatprep.subr.bf16.mxu0 0
        %718 = vmatpush1.bf16.msra.mxu0 0
        %719 = vmatprep.subr.bf16.mxu0 0
        %720 = vmatpush1.bf16.msra.mxu0 0
        %721 = vmatprep.subr.bf16.mxu0 0
        %722 = vmatpush1.bf16.msra.mxu0 0
        %723 = vmatprep.mubr.bf16.mxu0 0
        %724 = vmatmul.mubr.bf16.gmra.mrb[0].mxu0 %v608
        %v725 = vpop.f32.mrb[0].mxu0
        %v726 = vadd.f32 %v646, %v725
        %v727 = vpop.f32.mrb[0].mxu0
        %v728 = vpop.f32.mrb[0].mxu0
        %v729 = vpop.f32.mrb[0].mxu0
        %730 = vdwg.mxu0
        %731 = vst [vmem:[#allocation2] sm:$0x1f] %v685
        %732 = vst [vmem:[#allocation2 + $0x8] sm:$0x1f] %v687
        %733 = vst [vmem:[#allocation2 + $0x10] sm:$0x1f] %v726
        %v734 = vld [vmem:[#allocation2] sm:$0x1f]
        %v735 = vld [vmem:[#allocation2 + $0x8] sm:$0x1f]
        %v736 = vld [vmem:[#allocation2 + $0x10] sm:$0x1f]
        %v737 = vpack.c.bf16 %v734, %v734
        %v738 = vpack.c.bf16 %v735, %v735
        %vm739 = vcmask 523264
        %v741 = vsel %vm739, %v737, 0
        %v744 = vsel %vm739, %v738, 0
        %746 = vmatprep.subr.bf16.mxu0 0
        %747 = vmatpush1.bf16.xpose.msra.mxu0 %v744
        %748 = vmatprep.subr.bf16.mxu0 0
        %749 = vmatpush1.bf16.xpose.msra.mxu0 0
        %750 = vmatprep.subr.bf16.mxu0 0
        %751 = vmatpush1.bf16.xpose.msra.mxu0 0
        %752 = vmatprep.subr.bf16.mxu0 0
        %753 = vmatpush1.bf16.xpose.msra.mxu0 0
        %754 = vmatprep.subr.bf16.mxu0 0
        %755 = vmatpush1.bf16.xpose.msra.mxu0 0
        %756 = vmatprep.subr.bf16.mxu0 0
        %757 = vmatpush1.bf16.xpose.msra.mxu0 0
        %758 = vmatprep.subr.bf16.mxu0 0
        %759 = vmatpush1.bf16.xpose.msra.mxu0 0
        %760 = vmatprep.subr.bf16.mxu0 0
        %761 = vmatpush1.bf16.xpose.msra.mxu0 0
        %762 = vmatprep.subr.bf16.mxu0 0
        %763 = vmatpush1.bf16.xpose.msra.mxu0 0
        %764 = vmatprep.subr.bf16.mxu0 0
        %765 = vmatpush1.bf16.xpose.msra.mxu0 0
        %766 = vmatprep.subr.bf16.mxu0 0
        %767 = vmatpush1.bf16.xpose.msra.mxu0 0
        %768 = vmatprep.subr.bf16.mxu0 0
        %769 = vmatpush1.bf16.xpose.msra.mxu0 0
        %770 = vmatprep.subr.bf16.mxu0 0
        %771 = vmatpush1.bf16.xpose.msra.mxu0 0
        %772 = vmatprep.subr.bf16.mxu0 0
        %773 = vmatpush1.bf16.xpose.msra.mxu0 0
        %774 = vmatprep.subr.bf16.mxu0 0
        %775 = vmatpush1.bf16.xpose.msra.mxu0 0
        %776 = vmatprep.subr.bf16.mxu0 0
        %777 = vmatpush1.bf16.xpose.msra.mxu0 0
        %778 = vmatprep.mubr.bf16.mxu0 0
        %779 = vmatmul.mubr.bf16.gmra.mrb[0].mxu0 %v741
        %v780 = vpop.f32.mrb[0].mxu0
        %v781 = vadd.f32 0.0, %v780
        %v782 = vpop.f32.mrb[0].mxu0
        %v783 = vpop.f32.mrb[0].mxu0
        %v784 = vpop.f32.mrb[0].mxu0
        %785 = vdwg.mxu0
        %v786 = vmul.f32 %v781, 0.125
        %vm787 = vcmask 36864
        %v788 = vsel %vm787, %v786, -inf
        %789 = vmax.xlane.f32.xlu0 %v788
        %v790 = vpop.xlane.xlu0 %789
        %v791 = vsub.f32 %v786, %v790
        %v792 = vmul.f32 %v791, 1.442695
        %v793 = vpow.pop %v792
        %v794 = vsel %vm787, %v793, 0.0
        %795 = vadd.xlane.f32.xlu0 %v794
        %v796 = vpop.xlane.xlu0 %795
        %v797 = vrcp.pop %v796
        %v798 = vmul.f32 %v793, %v797
        %v799 = vpack.c.bf16 %v798, %v798
        %v800 = vpack.c.bf16 %v736, %v736
        %vm801 = vcmask 39936
        %v803 = vsel %vm801, %v799, 0
        %vm805 = vcmask 1041408
        %vm806 = vcmask 1042432
        %v807 = vsel %vm805, 4294967295, 65535
        %v808 = vsel %vm806, %v807, 0
        %v810 = vand.u32 %v800, %v808
        %812 = vmatprep.subr.bf16.mxu0 0
        %813 = vmatpush1.bf16.msra.mxu0 %v810
        %814 = vmatprep.subr.bf16.mxu0 0
        %815 = vmatpush1.bf16.msra.mxu0 0
        %816 = vmatprep.subr.bf16.mxu0 0
        %817 = vmatpush1.bf16.msra.mxu0 0
        %818 = vmatprep.subr.bf16.mxu0 0
        %819 = vmatpush1.bf16.msra.mxu0 0
        %820 = vmatprep.subr.bf16.mxu0 0
        %821 = vmatpush1.bf16.msra.mxu0 0
        %822 = vmatprep.subr.bf16.mxu0 0
        %823 = vmatpush1.bf16.msra.mxu0 0
        %824 = vmatprep.subr.bf16.mxu0 0
        %825 = vmatpush1.bf16.msra.mxu0 0
        %826 = vmatprep.subr.bf16.mxu0 0
        %827 = vmatpush1.bf16.msra.mxu0 0
        %828 = vmatprep.subr.bf16.mxu0 0
        %829 = vmatpush1.bf16.msra.mxu0 0
        %830 = vmatprep.subr.bf16.mxu0 0
        %831 = vmatpush1.bf16.msra.mxu0 0
        %832 = vmatprep.subr.bf16.mxu0 0
        %833 = vmatpush1.bf16.msra.mxu0 0
        %834 = vmatprep.subr.bf16.mxu0 0
        %835 = vmatpush1.bf16.msra.mxu0 0
        %836 = vmatprep.subr.bf16.mxu0 0
        %837 = vmatpush1.bf16.msra.mxu0 0
        %838 = vmatprep.subr.bf16.mxu0 0
        %839 = vmatpush1.bf16.msra.mxu0 0
        %840 = vmatprep.subr.bf16.mxu0 0
        %841 = vmatpush1.bf16.msra.mxu0 0
        %842 = vmatprep.subr.bf16.mxu0 0
        %843 = vmatpush1.bf16.msra.mxu0 0
        %844 = vmatprep.mubr.bf16.mxu0 0
        %845 = vmatmul.mubr.bf16.gmra.mrb[0].mxu0 %v803
        %v846 = vpop.f32.mrb[0].mxu0
        %v847 = vadd.f32 0.0, %v846
        %v848 = vpop.f32.mrb[0].mxu0
        %v849 = vpop.f32.mrb[0].mxu0
        %v850 = vpop.f32.mrb[0].mxu0
        %851 = vdwg.mxu0
        %vm852 = vcmask 520192
        %853 = vst.msk [vmem:[#allocation3] sm:$0x1f] %vm852, %v847
        %v854 = vld [vmem:[#allocation2] sm:$0x1f]
        %v855 = vld [vmem:[#allocation2 + $0x8] sm:$0x1f]
        %v856 = vld [vmem:[#allocation2 + $0x10] sm:$0x1f]
        %v857 = vpack.c.bf16 %v854, %v854
        %v858 = vpack.c.bf16 %v855, %v855
        %860 = vrot.lane.b32.xlu0 %v857, 64
        %v861 = vpop.permute.xlu0 %860
        %863 = vrot.lane.b32.xlu0 %v858, 64
        %v864 = vpop.permute.xlu0 %863
        %v866 = vsel %vm739, %v861, 0
        %v869 = vsel %vm739, %v864, 0
        %871 = vmatprep.subr.bf16.mxu0 0
        %872 = vmatpush1.bf16.xpose.msra.mxu0 %v869
        %873 = vmatprep.subr.bf16.mxu0 0
        %874 = vmatpush1.bf16.xpose.msra.mxu0 0
        %875 = vmatprep.subr.bf16.mxu0 0
        %876 = vmatpush1.bf16.xpose.msra.mxu0 0
        %877 = vmatprep.subr.bf16.mxu0 0
        %878 = vmatpush1.bf16.xpose.msra.mxu0 0
        %879 = vmatprep.subr.bf16.mxu0 0
        %880 = vmatpush1.bf16.xpose.msra.mxu0 0
        %881 = vmatprep.subr.bf16.mxu0 0
        %882 = vmatpush1.bf16.xpose.msra.mxu0 0
        %883 = vmatprep.subr.bf16.mxu0 0
        %884 = vmatpush1.bf16.xpose.msra.mxu0 0
        %885 = vmatprep.subr.bf16.mxu0 0
        %886 = vmatpush1.bf16.xpose.msra.mxu0 0
        %887 = vmatprep.subr.bf16.mxu0 0
        %888 = vmatpush1.bf16.xpose.msra.mxu0 0
        %889 = vmatprep.subr.bf16.mxu0 0
        %890 = vmatpush1.bf16.xpose.msra.mxu0 0
        %891 = vmatprep.subr.bf16.mxu0 0
        %892 = vmatpush1.bf16.xpose.msra.mxu0 0
        %893 = vmatprep.subr.bf16.mxu0 0
        %894 = vmatpush1.bf16.xpose.msra.mxu0 0
        %895 = vmatprep.subr.bf16.mxu0 0
        %896 = vmatpush1.bf16.xpose.msra.mxu0 0
        %897 = vmatprep.subr.bf16.mxu0 0
        %898 = vmatpush1.bf16.xpose.msra.mxu0 0
        %899 = vmatprep.subr.bf16.mxu0 0
        %900 = vmatpush1.bf16.xpose.msra.mxu0 0
        %901 = vmatprep.subr.bf16.mxu0 0
        %902 = vmatpush1.bf16.xpose.msra.mxu0 0
        %903 = vmatprep.mubr.bf16.mxu0 0
        %904 = vmatmul.mubr.bf16.gmra.mrb[0].mxu0 %v866
        %v905 = vpop.f32.mrb[0].mxu0
        %v906 = vadd.f32 0.0, %v905
        %v907 = vpop.f32.mrb[0].mxu0
        %v908 = vpop.f32.mrb[0].mxu0
        %v909 = vpop.f32.mrb[0].mxu0
        %910 = vdwg.mxu0
        %v911 = vmul.f32 %v906, 0.125
        %v912 = vsel %vm787, %v911, -inf
        %913 = vmax.xlane.f32.xlu0 %v912
        %v914 = vpop.xlane.xlu0 %913
        %v915 = vsub.f32 %v911, %v914
        %v916 = vmul.f32 %v915, 1.442695
        %v917 = vpow.pop %v916
        %v918 = vsel %vm787, %v917, 0.0
        %919 = vadd.xlane.f32.xlu0 %v918
        %v920 = vpop.xlane.xlu0 %919
        %v921 = vrcp.pop %v920
        %v922 = vmul.f32 %v917, %v921
        %v923 = vpack.c.bf16 %v922, %v922
        %v924 = vpack.c.bf16 %v856, %v856
        %926 = vrot.lane.b32.xlu0 %v924, 64
        %v927 = vpop.permute.xlu0 %926
        %v929 = vsel %vm801, %v923, 0
        %v932 = vand.u32 %v927, %v808
        %934 = vmatprep.subr.bf16.mxu0 0
        %935 = vmatpush1.bf16.msra.mxu0 %v932
        %936 = vmatprep.subr.bf16.mxu0 0
        %937 = vmatpush1.bf16.msra.mxu0 0
        %938 = vmatprep.subr.bf16.mxu0 0
        %939 = vmatpush1.bf16.msra.mxu0 0
        %940 = vmatprep.subr.bf16.mxu0 0
        %941 = vmatpush1.bf16.msra.mxu0 0
        %942 = vmatprep.subr.bf16.mxu0 0
        %943 = vmatpush1.bf16.msra.mxu0 0
        %944 = vmatprep.subr.bf16.mxu0 0
        %945 = vmatpush1.bf16.msra.mxu0 0
        %946 = vmatprep.subr.bf16.mxu0 0
        %947 = vmatpush1.bf16.msra.mxu0 0
        %948 = vmatprep.subr.bf16.mxu0 0
        %949 = vmatpush1.bf16.msra.mxu0 0
        %950 = vmatprep.subr.bf16.mxu0 0
        %951 = vmatpush1.bf16.msra.mxu0 0
        %952 = vmatprep.subr.bf16.mxu0 0
        %953 = vmatpush1.bf16.msra.mxu0 0
        %954 = vmatprep.subr.bf16.mxu0 0
        %955 = vmatpush1.bf16.msra.mxu0 0
        %956 = vmatprep.subr.bf16.mxu0 0
        %957 = vmatpush1.bf16.msra.mxu0 0
        %958 = vmatprep.subr.bf16.mxu0 0
        %959 = vmatpush1.bf16.msra.mxu0 0
        %960 = vmatprep.subr.bf16.mxu0 0
        %961 = vmatpush1.bf16.msra.mxu0 0
        %962 = vmatprep.subr.bf16.mxu0 0
        %963 = vmatpush1.bf16.msra.mxu0 0
        %964 = vmatprep.subr.bf16.mxu0 0
        %965 = vmatpush1.bf16.msra.mxu0 0
        %966 = vmatprep.mubr.bf16.mxu0 0
        %967 = vmatmul.mubr.bf16.gmra.mrb[0].mxu0 %v929
        %v968 = vpop.f32.mrb[0].mxu0
        %v969 = vadd.f32 0.0, %v968
        %v970 = vpop.f32.mrb[0].mxu0
        %v971 = vpop.f32.mrb[0].mxu0
        %v972 = vpop.f32.mrb[0].mxu0
        %973 = vdwg.mxu0
        %975 = vrot.lane.b32.xlu0 %v969, 64
        %v976 = vpop.permute.xlu0 %975
        %vm978 = vcmask 1044992
        %979 = vst.msk [vmem:[#allocation3] sm:$0x1f] %vm978, %v976
        %v980 = vld [vmem:[#allocation3] sm:$0x1f]
        %v981 = vld [vmem:[#allocation8] sm:$0xff]
        %v982 = vld [vmem:[#allocation8 + $0x8] sm:$0xff]
        %v983 = vld [vmem:[#allocation8 + $0x10] sm:$0xff]
        %v984 = vld [vmem:[#allocation8 + $0x18] sm:$0xff]
        %v985 = vld [vmem:[#allocation8 + $0x20] sm:$0xff]
        %v986 = vld [vmem:[#allocation8 + $0x28] sm:$0xff]
        %v987 = vld [vmem:[#allocation8 + $0x30] sm:$0xff]
        %v988 = vld [vmem:[#allocation8 + $0x38] sm:$0xff]
        %v989 = vld [vmem:[#allocation8 + $0x40] sm:$0xff]
        %v990 = vld [vmem:[#allocation8 + $0x48] sm:$0xff]
        %v991 = vld [vmem:[#allocation8 + $0x50] sm:$0xff]
        %v992 = vld [vmem:[#allocation8 + $0x58] sm:$0xff]
        %v993 = vld [vmem:[#allocation8 + $0x60] sm:$0xff]
        %v994 = vld [vmem:[#allocation8 + $0x68] sm:$0xff]
        %v995 = vld [vmem:[#allocation8 + $0x70] sm:$0xff]
        %v996 = vld [vmem:[#allocation8 + $0x78] sm:$0xff]
        %v997 = vpack.c.bf16 %v980, %v980
        %v998 = vpack.c.bf16 %v982, %v981
        %v999 = vpack.c.bf16 %v984, %v983
        %v1000 = vpack.c.bf16 %v986, %v985
        %v1001 = vpack.c.bf16 %v988, %v987
        %v1002 = vpack.c.bf16 %v990, %v989
        %v1003 = vpack.c.bf16 %v992, %v991
        %v1004 = vpack.c.bf16 %v994, %v993
        %v1005 = vpack.c.bf16 %v996, %v995
        %1006 = vmatprep.subr.bf16.mxu0 0
        %1007 = vmatpush1.bf16.msra.mxu0 %v998
        %1008 = vmatprep.subr.bf16.mxu0 0
        %1009 = vmatpush1.bf16.msra.mxu0 %v999
        %1010 = vmatprep.subr.bf16.mxu0 0
        %1011 = vmatpush1.bf16.msra.mxu0 %v1000
        %1012 = vmatprep.subr.bf16.mxu0 0
        %1013 = vmatpush1.bf16.msra.mxu0 %v1001
        %1014 = vmatprep.subr.bf16.mxu0 0
        %1015 = vmatpush1.bf16.msra.mxu0 %v1002
        %1016 = vmatprep.subr.bf16.mxu0 0
        %1017 = vmatpush1.bf16.msra.mxu0 %v1003
        %1018 = vmatprep.subr.bf16.mxu0 0
        %1019 = vmatpush1.bf16.msra.mxu0 %v1004
        %1020 = vmatprep.subr.bf16.mxu0 0
        %1021 = vmatpush1.bf16.msra.mxu0 %v1005
        %1022 = vmatprep.subr.bf16.mxu0 0
        %1023 = vmatpush1.bf16.msra.mxu0 0
        %1024 = vmatprep.subr.bf16.mxu0 0
        %1025 = vmatpush1.bf16.msra.mxu0 0
        %1026 = vmatprep.subr.bf16.mxu0 0
        %1027 = vmatpush1.bf16.msra.mxu0 0
        %1028 = vmatprep.subr.bf16.mxu0 0
        %1029 = vmatpush1.bf16.msra.mxu0 0
        %1030 = vmatprep.subr.bf16.mxu0 0
        %1031 = vmatpush1.bf16.msra.mxu0 0
        %1032 = vmatprep.subr.bf16.mxu0 0
        %1033 = vmatpush1.bf16.msra.mxu0 0
        %1034 = vmatprep.subr.bf16.mxu0 0
        %1035 = vmatpush1.bf16.msra.mxu0 0
        %1036 = vmatprep.subr.bf16.mxu0 0
        %1037 = vmatpush1.bf16.msra.mxu0 0
        %1038 = vmatprep.mubr.bf16.mxu0 0
        %1039 = vmatmul.mubr.bf16.gmra.mrb[0].mxu0 %v997
        %v1040 = vpop.f32.mrb[0].mxu0
        %v1041 = vadd.f32 0.0, %v1040
        %v1042 = vpop.f32.mrb[0].mxu0
        %v1043 = vpop.f32.mrb[0].mxu0
        %v1044 = vpop.f32.mrb[0].mxu0
        %1045 = vdwg.mxu0
        %v1046 = vadd.f32 %v529, %v1041
        %v1047 = vld [vmem:[%s6] sm:$0x1]
        %v1049 = vlaneseq
        %v1050 = vshrl.u32 %v1049, 7
        %v1051 = vsub.s32 0, %v1050
        %v1052 = vrot.slane %v1047, %v1051
        %v1054 = vadd.f32 %v1046, %v1052
        %v1055 = vld [vmem:[#allocation9] sm:$0x1]
        %v1056 = vld [vmem:[#allocation11] sm:$0x1]
        %v1057 = vsel %vm532, %v1054, 0.0
        %1058 = vadd.xlane.f32.xlu0 %v1057
        %v1059 = vpop.xlane.xlu0 %1058
        %v1060 = vmul.f32 %v1059, 0.0078125
        %v1061 = vsub.f32 %v1054, %v1060
        %v1062 = vmul.f32 %v1061, %v1061
        %v1063 = vsel %vm532, %v1062, 0.0
        %1064 = vadd.xlane.f32.xlu0 %v1063
        %v1065 = vpop.xlane.xlu0 %1064
        %v1066 = vmul.f32 %v1065, 0.0078125
        %v1067 = vadd.f32 %v1066, 1e-05
        %v1068 = vrsqrt.pop %v1067
        %v1069 = vmul.f32 %v1061, %v1068
        %v1071 = vlaneseq
        %v1072 = vshrl.u32 %v1071, 7
        %v1073 = vsub.s32 0, %v1072
        %v1074 = vrot.slane %v1055, %v1073
        %v1076 = vmul.f32 %v1069, %v1074
        %v1078 = vlaneseq
        %v1079 = vshrl.u32 %v1078, 7
        %v1080 = vsub.s32 0, %v1079
        %v1081 = vrot.slane %v1056, %v1080
        %v1083 = vadd.f32 %v1076, %v1081
        %v1084 = vld [vmem:[%s9] sm:$0xff]
        %v1085 = vld [vmem:[%s9 + $0x8] sm:$0xff]
        %v1086 = vld [vmem:[%s9 + $0x10] sm:$0xff]
        %v1087 = vld [vmem:[%s9 + $0x18] sm:$0xff]
        %v1088 = vld [vmem:[%s9 + $0x20] sm:$0xff]
        %v1089 = vld [vmem:[%s9 + $0x28] sm:$0xff]
        %v1090 = vld [vmem:[%s9 + $0x30] sm:$0xff]
        %v1091 = vld [vmem:[%s9 + $0x38] sm:$0xff]
        %v1092 = vld [vmem:[%s9 + $0x40] sm:$0xff]
        %v1093 = vld [vmem:[%s9 + $0x48] sm:$0xff]
        %v1094 = vld [vmem:[%s9 + $0x50] sm:$0xff]
        %v1095 = vld [vmem:[%s9 + $0x58] sm:$0xff]
        %v1096 = vld [vmem:[%s9 + $0x60] sm:$0xff]
        %v1097 = vld [vmem:[%s9 + $0x68] sm:$0xff]
        %v1098 = vld [vmem:[%s9 + $0x70] sm:$0xff]
        %v1099 = vld [vmem:[%s9 + $0x78] sm:$0xff]
        %v1100 = vld [vmem:[%s9 + $0x80] sm:$0xff]
        %v1101 = vld [vmem:[%s9 + $0x88] sm:$0xff]
        %v1102 = vld [vmem:[%s9 + $0x90] sm:$0xff]
        %v1103 = vld [vmem:[%s9 + $0x98] sm:$0xff]
        %v1104 = vld [vmem:[%s9 + $0xa0] sm:$0xff]
        %v1105 = vld [vmem:[%s9 + $0xa8] sm:$0xff]
        %v1106 = vld [vmem:[%s9 + $0xb0] sm:$0xff]
        %v1107 = vld [vmem:[%s9 + $0xb8] sm:$0xff]
        %v1108 = vld [vmem:[%s9 + $0xc0] sm:$0xff]
        %v1109 = vld [vmem:[%s9 + $0xc8] sm:$0xff]
        %v1110 = vld [vmem:[%s9 + $0xd0] sm:$0xff]
        %v1111 = vld [vmem:[%s9 + $0xd8] sm:$0xff]
        %v1112 = vld [vmem:[%s9 + $0xe0] sm:$0xff]
        %v1113 = vld [vmem:[%s9 + $0xe8] sm:$0xff]
        %v1114 = vld [vmem:[%s9 + $0xf0] sm:$0xff]
        %v1115 = vld [vmem:[%s9 + $0xf8] sm:$0xff]
        %v1116 = vld [vmem:[%s9 + $0x100] sm:$0xff]
        %v1117 = vld [vmem:[%s9 + $0x108] sm:$0xff]
        %v1118 = vld [vmem:[%s9 + $0x110] sm:$0xff]
        %v1119 = vld [vmem:[%s9 + $0x118] sm:$0xff]
        %v1120 = vld [vmem:[%s9 + $0x120] sm:$0xff]
        %v1121 = vld [vmem:[%s9 + $0x128] sm:$0xff]
        %v1122 = vld [vmem:[%s9 + $0x130] sm:$0xff]
        %v1123 = vld [vmem:[%s9 + $0x138] sm:$0xff]
        %v1124 = vld [vmem:[%s9 + $0x140] sm:$0xff]
        %v1125 = vld [vmem:[%s9 + $0x148] sm:$0xff]
        %v1126 = vld [vmem:[%s9 + $0x150] sm:$0xff]
        %v1127 = vld [vmem:[%s9 + $0x158] sm:$0xff]
        %v1128 = vld [vmem:[%s9 + $0x160] sm:$0xff]
        %v1129 = vld [vmem:[%s9 + $0x168] sm:$0xff]
        %v1130 = vld [vmem:[%s9 + $0x170] sm:$0xff]
        %v1131 = vld [vmem:[%s9 + $0x178] sm:$0xff]
        %v1132 = vld [vmem:[%s9 + $0x180] sm:$0xff]
        %v1133 = vld [vmem:[%s9 + $0x188] sm:$0xff]
        %v1134 = vld [vmem:[%s9 + $0x190] sm:$0xff]
        %v1135 = vld [vmem:[%s9 + $0x198] sm:$0xff]
        %v1136 = vld [vmem:[%s9 + $0x1a0] sm:$0xff]
        %v1137 = vld [vmem:[%s9 + $0x1a8] sm:$0xff]
        %v1138 = vld [vmem:[%s9 + $0x1b0] sm:$0xff]
        %v1139 = vld [vmem:[%s9 + $0x1b8] sm:$0xff]
        %v1140 = vld [vmem:[%s9 + $0x1c0] sm:$0xff]
        %v1141 = vld [vmem:[%s9 + $0x1c8] sm:$0xff]
        %v1142 = vld [vmem:[%s9 + $0x1d0] sm:$0xff]
        %v1143 = vld [vmem:[%s9 + $0x1d8] sm:$0xff]
        %v1144 = vld [vmem:[%s9 + $0x1e0] sm:$0xff]
        %v1145 = vld [vmem:[%s9 + $0x1e8] sm:$0xff]
        %v1146 = vld [vmem:[%s9 + $0x1f0] sm:$0xff]
        %v1147 = vld [vmem:[%s9 + $0x1f8] sm:$0xff]
        %v1148 = vpack.c.bf16 %v1083, %v1083
        %v1149 = vpack.c.bf16 %v1088, %v1084
        %v1150 = vpack.c.bf16 %v1089, %v1085
        %v1151 = vpack.c.bf16 %v1090, %v1086
        %v1152 = vpack.c.bf16 %v1091, %v1087
        %v1153 = vpack.c.bf16 %v1096, %v1092
        %v1154 = vpack.c.bf16 %v1097, %v1093
        %v1155 = vpack.c.bf16 %v1098, %v1094
        %v1156 = vpack.c.bf16 %v1099, %v1095
        %v1157 = vpack.c.bf16 %v1104, %v1100
        %v1158 = vpack.c.bf16 %v1105, %v1101
        %v1159 = vpack.c.bf16 %v1106, %v1102
        %v1160 = vpack.c.bf16 %v1107, %v1103
        %v1161 = vpack.c.bf16 %v1112, %v1108
        %v1162 = vpack.c.bf16 %v1113, %v1109
        %v1163 = vpack.c.bf16 %v1114, %v1110
        %v1164 = vpack.c.bf16 %v1115, %v1111
        %v1165 = vpack.c.bf16 %v1120, %v1116
        %v1166 = vpack.c.bf16 %v1121, %v1117
        %v1167 = vpack.c.bf16 %v1122, %v1118
        %v1168 = vpack.c.bf16 %v1123, %v1119
        %v1169 = vpack.c.bf16 %v1128, %v1124
        %v1170 = vpack.c.bf16 %v1129, %v1125
        %v1171 = vpack.c.bf16 %v1130, %v1126
        %v1172 = vpack.c.bf16 %v1131, %v1127
        %v1173 = vpack.c.bf16 %v1136, %v1132
        %v1174 = vpack.c.bf16 %v1137, %v1133
        %v1175 = vpack.c.bf16 %v1138, %v1134
        %v1176 = vpack.c.bf16 %v1139, %v1135
        %v1177 = vpack.c.bf16 %v1144, %v1140
        %v1178 = vpack.c.bf16 %v1145, %v1141
        %v1179 = vpack.c.bf16 %v1146, %v1142
        %v1180 = vpack.c.bf16 %v1147, %v1143
        %v1181 = vld [vmem:[#allocation12] sm:$0xf]
        %v1183 = vlaneseq
        %v1184 = vshrl.u32 %v1183, 7
        %v1185 = vsub.s32 0, %v1184
        %v1186 = vrot.slane %v1181, %v1185
        %v1187 = vlaneseq
        %v1188 = vshrl.u32 %v1187, 7
        %v1189 = vsub.s32 1, %v1188
        %v1190 = vrot.slane %v1181, %v1189
        %v1191 = vlaneseq
        %v1192 = vshrl.u32 %v1191, 7
        %v1193 = vsub.s32 2, %v1192
        %v1194 = vrot.slane %v1181, %v1193
        %v1195 = vlaneseq
        %v1196 = vshrl.u32 %v1195, 7
        %v1197 = vsub.s32 3, %v1196
        %v1198 = vrot.slane %v1181, %v1197
        %1203 = vmatprep.subr.bf16.mxu0 %v1150
        %1204 = vmatpush1.bf16.msra.mxu0 %v1149
        %1205 = vmatprep.subr.bf16.mxu0 %v1154
        %1206 = vmatpush1.bf16.msra.mxu0 %v1153
        %1207 = vmatprep.subr.bf16.mxu0 %v1158
        %1208 = vmatpush1.bf16.msra.mxu0 %v1157
        %1209 = vmatprep.subr.bf16.mxu0 %v1162
        %1210 = vmatpush1.bf16.msra.mxu0 %v1161
        %1211 = vmatprep.subr.bf16.mxu0 %v1166
        %1212 = vmatpush1.bf16.msra.mxu0 %v1165
        %1213 = vmatprep.subr.bf16.mxu0 %v1170
        %1214 = vmatpush1.bf16.msra.mxu0 %v1169
        %1215 = vmatprep.subr.bf16.mxu0 %v1174
        %1216 = vmatpush1.bf16.msra.mxu0 %v1173
        %1217 = vmatprep.subr.bf16.mxu0 %v1178
        %1218 = vmatpush1.bf16.msra.mxu0 %v1177
        %1219 = vmatprep.subr.bf16.mxu0 0
        %1220 = vmatpush1.bf16.msra.mxu0 0
        %1221 = vmatprep.subr.bf16.mxu0 0
        %1222 = vmatpush1.bf16.msra.mxu0 0
        %1223 = vmatprep.subr.bf16.mxu0 0
        %1224 = vmatpush1.bf16.msra.mxu0 0
        %1225 = vmatprep.subr.bf16.mxu0 0
        %1226 = vmatpush1.bf16.msra.mxu0 0
        %1227 = vmatprep.subr.bf16.mxu0 0
        %1228 = vmatpush1.bf16.msra.mxu0 0
        %1229 = vmatprep.subr.bf16.mxu0 0
        %1230 = vmatpush1.bf16.msra.mxu0 0
        %1231 = vmatprep.subr.bf16.mxu0 0
        %1232 = vmatpush1.bf16.msra.mxu0 0
        %1233 = vmatprep.subr.bf16.mxu0 0
        %1234 = vmatpush1.bf16.msra.mxu0 0
        %1235 = vmatprep.mubr.bf16.mxu0 0
        %1236 = vmatmul.mubr.bf16.gmra.mrb[0].mxu0 %v1148
        %v1237 = vpop.f32.mrb[0].mxu0
        %v1238 = vadd.f32 %v1186, %v1237
        %v1239 = vpop.f32.mrb[0].mxu0
        %v1240 = vadd.f32 %v1190, %v1239
        %v1241 = vpop.f32.mrb[0].mxu0
        %v1242 = vpop.f32.mrb[0].mxu0
        %1243 = vdwg.mxu0
        %1244 = vmatprep.subr.bf16.mxu0 %v1152
        %1245 = vmatpush1.bf16.msra.mxu0 %v1151
        %1246 = vmatprep.subr.bf16.mxu0 %v1156
        %1247 = vmatpush1.bf16.msra.mxu0 %v1155
        %1248 = vmatprep.subr.bf16.mxu0 %v1160
        %1249 = vmatpush1.bf16.msra.mxu0 %v1159
        %1250 = vmatprep.subr.bf16.mxu0 %v1164
        %1251 = vmatpush1.bf16.msra.mxu0 %v1163
        %1252 = vmatprep.subr.bf16.mxu0 %v1168
        %1253 = vmatpush1.bf16.msra.mxu0 %v1167
        %1254 = vmatprep.subr.bf16.mxu0 %v1172
        %1255 = vmatpush1.bf16.msra.mxu0 %v1171
        %1256 = vmatprep.subr.bf16.mxu0 %v1176
        %1257 = vmatpush1.bf16.msra.mxu0 %v1175
        %1258 = vmatprep.subr.bf16.mxu0 %v1180
        %1259 = vmatpush1.bf16.msra.mxu0 %v1179
        %1260 = vmatprep.subr.bf16.mxu0 0
        %1261 = vmatpush1.bf16.msra.mxu0 0
        %1262 = vmatprep.subr.bf16.mxu0 0
        %1263 = vmatpush1.bf16.msra.mxu0 0
        %1264 = vmatprep.subr.bf16.mxu0 0
        %1265 = vmatpush1.bf16.msra.mxu0 0
        %1266 = vmatprep.subr.bf16.mxu0 0
        %1267 = vmatpush1.bf16.msra.mxu0 0
        %1268 = vmatprep.subr.bf16.mxu0 0
        %1269 = vmatpush1.bf16.msra.mxu0 0
        %1270 = vmatprep.subr.bf16.mxu0 0
        %1271 = vmatpush1.bf16.msra.mxu0 0
        %1272 = vmatprep.subr.bf16.mxu0 0
        %1273 = vmatpush1.bf16.msra.mxu0 0
        %1274 = vmatprep.subr.bf16.mxu0 0
        %1275 = vmatpush1.bf16.msra.mxu0 0
        %1276 = vmatprep.mubr.bf16.mxu0 0
        %1277 = vmatmul.mubr.bf16.gmra.mrb[0].mxu0 %v1148
        %v1278 = vpop.f32.mrb[0].mxu0
        %v1279 = vadd.f32 %v1194, %v1278
        %v1280 = vpop.f32.mrb[0].mxu0
        %v1281 = vadd.f32 %v1198, %v1280
        %v1282 = vpop.f32.mrb[0].mxu0
        %v1283 = vpop.f32.mrb[0].mxu0
        %1284 = vdwg.mxu0
        %v1285 = vmul.f32 %v1238, 1.702
        %v1286 = vmul.f32 %v1240, 1.702
        %v1287 = vmul.f32 %v1279, 1.702
        %v1288 = vmul.f32 %v1281, 1.702
        %v1289 = vxor.u32 %v1285, 2147483648
        %v1290 = vxor.u32 %v1286, 2147483648
        %v1291 = vxor.u32 %v1287, 2147483648
        %v1292 = vxor.u32 %v1288, 2147483648
        %v1293 = vmul.f32 %v1289, 1.442695
        %v1294 = vpow.pop %v1293
        %v1295 = vmul.f32 %v1290, 1.442695
        %v1296 = vpow.pop %v1295
        %v1297 = vmul.f32 %v1291, 1.442695
        %v1298 = vpow.pop %v1297
        %v1299 = vmul.f32 %v1292, 1.442695
        %v1300 = vpow.pop %v1299
        %v1301 = vadd.f32 %v1294, 1.0
        %v1302 = vadd.f32 %v1296, 1.0
        %v1303 = vadd.f32 %v1298, 1.0
        %v1304 = vadd.f32 %v1300, 1.0
        %v1305 = vrcp.pop %v1301
        %v1306 = vmul.f32 1.0, %v1305
        %v1307 = vrcp.pop %v1302
        %v1308 = vmul.f32 1.0, %v1307
        %v1309 = vrcp.pop %v1303
        %v1310 = vmul.f32 1.0, %v1309
        %v1311 = vrcp.pop %v1304
        %v1312 = vmul.f32 1.0, %v1311
        %v1313 = vmul.f32 %v1238, %v1306
        %v1314 = vmul.f32 %v1240, %v1308
        %v1315 = vmul.f32 %v1279, %v1310
        %v1316 = vmul.f32 %v1281, %v1312
        %v1317 = vld [vmem:[%s11] sm:$0xff]
        %v1318 = vld [vmem:[%s11 + $0x8] sm:$0xff]
        %v1319 = vld [vmem:[%s11 + $0x10] sm:$0xff]
        %v1320 = vld [vmem:[%s11 + $0x18] sm:$0xff]
        %v1321 = vld [vmem:[%s11 + $0x20] sm:$0xff]
        %v1322 = vld [vmem:[%s11 + $0x28] sm:$0xff]
        %v1323 = vld [vmem:[%s11 + $0x30] sm:$0xff]
        %v1324 = vld [vmem:[%s11 + $0x38] sm:$0xff]
        %v1325 = vld [vmem:[%s11 + $0x40] sm:$0xff]
        %v1326 = vld [vmem:[%s11 + $0x48] sm:$0xff]
        %v1327 = vld [vmem:[%s11 + $0x50] sm:$0xff]
        %v1328 = vld [vmem:[%s11 + $0x58] sm:$0xff]
        %v1329 = vld [vmem:[%s11 + $0x60] sm:$0xff]
        %v1330 = vld [vmem:[%s11 + $0x68] sm:$0xff]
        %v1331 = vld [vmem:[%s11 + $0x70] sm:$0xff]
        %v1332 = vld [vmem:[%s11 + $0x78] sm:$0xff]
        %v1333 = vld [vmem:[%s11 + $0x80] sm:$0xff]
        %v1334 = vld [vmem:[%s11 + $0x88] sm:$0xff]
        %v1335 = vld [vmem:[%s11 + $0x90] sm:$0xff]
        %v1336 = vld [vmem:[%s11 + $0x98] sm:$0xff]
        %v1337 = vld [vmem:[%s11 + $0xa0] sm:$0xff]
        %v1338 = vld [vmem:[%s11 + $0xa8] sm:$0xff]
        %v1339 = vld [vmem:[%s11 + $0xb0] sm:$0xff]
        %v1340 = vld [vmem:[%s11 + $0xb8] sm:$0xff]
        %v1341 = vld [vmem:[%s11 + $0xc0] sm:$0xff]
        %v1342 = vld [vmem:[%s11 + $0xc8] sm:$0xff]
        %v1343 = vld [vmem:[%s11 + $0xd0] sm:$0xff]
        %v1344 = vld [vmem:[%s11 + $0xd8] sm:$0xff]
        %v1345 = vld [vmem:[%s11 + $0xe0] sm:$0xff]
        %v1346 = vld [vmem:[%s11 + $0xe8] sm:$0xff]
        %v1347 = vld [vmem:[%s11 + $0xf0] sm:$0xff]
        %v1348 = vld [vmem:[%s11 + $0xf8] sm:$0xff]
        %v1349 = vld [vmem:[%s11 + $0x100] sm:$0xff]
        %v1350 = vld [vmem:[%s11 + $0x108] sm:$0xff]
        %v1351 = vld [vmem:[%s11 + $0x110] sm:$0xff]
        %v1352 = vld [vmem:[%s11 + $0x118] sm:$0xff]
        %v1353 = vld [vmem:[%s11 + $0x120] sm:$0xff]
        %v1354 = vld [vmem:[%s11 + $0x128] sm:$0xff]
        %v1355 = vld [vmem:[%s11 + $0x130] sm:$0xff]
        %v1356 = vld [vmem:[%s11 + $0x138] sm:$0xff]
        %v1357 = vld [vmem:[%s11 + $0x140] sm:$0xff]
        %v1358 = vld [vmem:[%s11 + $0x148] sm:$0xff]
        %v1359 = vld [vmem:[%s11 + $0x150] sm:$0xff]
        %v1360 = vld [vmem:[%s11 + $0x158] sm:$0xff]
        %v1361 = vld [vmem:[%s11 + $0x160] sm:$0xff]
        %v1362 = vld [vmem:[%s11 + $0x168] sm:$0xff]
        %v1363 = vld [vmem:[%s11 + $0x170] sm:$0xff]
        %v1364 = vld [vmem:[%s11 + $0x178] sm:$0xff]
        %v1365 = vld [vmem:[%s11 + $0x180] sm:$0xff]
        %v1366 = vld [vmem:[%s11 + $0x188] sm:$0xff]
        %v1367 = vld [vmem:[%s11 + $0x190] sm:$0xff]
        %v1368 = vld [vmem:[%s11 + $0x198] sm:$0xff]
        %v1369 = vld [vmem:[%s11 + $0x1a0] sm:$0xff]
        %v1370 = vld [vmem:[%s11 + $0x1a8] sm:$0xff]
        %v1371 = vld [vmem:[%s11 + $0x1b0] sm:$0xff]
        %v1372 = vld [vmem:[%s11 + $0x1b8] sm:$0xff]
        %v1373 = vld [vmem:[%s11 + $0x1c0] sm:$0xff]
        %v1374 = vld [vmem:[%s11 + $0x1c8] sm:$0xff]
        %v1375 = vld [vmem:[%s11 + $0x1d0] sm:$0xff]
        %v1376 = vld [vmem:[%s11 + $0x1d8] sm:$0xff]
        %v1377 = vld [vmem:[%s11 + $0x1e0] sm:$0xff]
        %v1378 = vld [vmem:[%s11 + $0x1e8] sm:$0xff]
        %v1379 = vld [vmem:[%s11 + $0x1f0] sm:$0xff]
        %v1380 = vld [vmem:[%s11 + $0x1f8] sm:$0xff]
        %v1381 = vpack.c.bf16 %v1313, %v1313
        %v1382 = vpack.c.bf16 %v1314, %v1314
        %v1383 = vpack.c.bf16 %v1315, %v1315
        %v1384 = vpack.c.bf16 %v1316, %v1316
        %v1385 = vpack.c.bf16 %v1318, %v1317
        %v1386 = vpack.c.bf16 %v1320, %v1319
        %v1387 = vpack.c.bf16 %v1322, %v1321
        %v1388 = vpack.c.bf16 %v1324, %v1323
        %v1389 = vpack.c.bf16 %v1326, %v1325
        %v1390 = vpack.c.bf16 %v1328, %v1327
        %v1391 = vpack.c.bf16 %v1330, %v1329
        %v1392 = vpack.c.bf16 %v1332, %v1331
        %v1393 = vpack.c.bf16 %v1334, %v1333
        %v1394 = vpack.c.bf16 %v1336, %v1335
        %v1395 = vpack.c.bf16 %v1338, %v1337
        %v1396 = vpack.c.bf16 %v1340, %v1339
        %v1397 = vpack.c.bf16 %v1342, %v1341
        %v1398 = vpack.c.bf16 %v1344, %v1343
        %v1399 = vpack.c.bf16 %v1346, %v1345
        %v1400 = vpack.c.bf16 %v1348, %v1347
        %v1401 = vpack.c.bf16 %v1350, %v1349
        %v1402 = vpack.c.bf16 %v1352, %v1351
        %v1403 = vpack.c.bf16 %v1354, %v1353
        %v1404 = vpack.c.bf16 %v1356, %v1355
        %v1405 = vpack.c.bf16 %v1358, %v1357
        %v1406 = vpack.c.bf16 %v1360, %v1359
        %v1407 = vpack.c.bf16 %v1362, %v1361
        %v1408 = vpack.c.bf16 %v1364, %v1363
        %v1409 = vpack.c.bf16 %v1366, %v1365
        %v1410 = vpack.c.bf16 %v1368, %v1367
        %v1411 = vpack.c.bf16 %v1370, %v1369
        %v1412 = vpack.c.bf16 %v1372, %v1371
        %v1413 = vpack.c.bf16 %v1374, %v1373
        %v1414 = vpack.c.bf16 %v1376, %v1375
        %v1415 = vpack.c.bf16 %v1378, %v1377
        %v1416 = vpack.c.bf16 %v1380, %v1379
        %1417 = vmatprep.subr.bf16.mxu0 0
        %1418 = vmatpush1.bf16.msra.mxu0 %v1385
        %1419 = vmatprep.subr.bf16.mxu0 0
        %1420 = vmatpush1.bf16.msra.mxu0 %v1386
        %1421 = vmatprep.subr.bf16.mxu0 0
        %1422 = vmatpush1.bf16.msra.mxu0 %v1387
        %1423 = vmatprep.subr.bf16.mxu0 0
        %1424 = vmatpush1.bf16.msra.mxu0 %v1388
        %1425 = vmatprep.subr.bf16.mxu0 0
        %1426 = vmatpush1.bf16.msra.mxu0 %v1389
        %1427 = vmatprep.subr.bf16.mxu0 0
        %1428 = vmatpush1.bf16.msra.mxu0 %v1390
        %1429 = vmatprep.subr.bf16.mxu0 0
        %1430 = vmatpush1.bf16.msra.mxu0 %v1391
        %1431 = vmatprep.subr.bf16.mxu0 0
        %1432 = vmatpush1.bf16.msra.mxu0 %v1392
        %1433 = vmatprep.subr.bf16.mxu0 0
        %1434 = vmatpush1.bf16.msra.mxu0 %v1393
        %1435 = vmatprep.subr.bf16.mxu0 0
        %1436 = vmatpush1.bf16.msra.mxu0 %v1394
        %1437 = vmatprep.subr.bf16.mxu0 0
        %1438 = vmatpush1.bf16.msra.mxu0 %v1395
        %1439 = vmatprep.subr.bf16.mxu0 0
        %1440 = vmatpush1.bf16.msra.mxu0 %v1396
        %1441 = vmatprep.subr.bf16.mxu0 0
        %1442 = vmatpush1.bf16.msra.mxu0 %v1397
        %1443 = vmatprep.subr.bf16.mxu0 0
        %1444 = vmatpush1.bf16.msra.mxu0 %v1398
        %1445 = vmatprep.subr.bf16.mxu0 0
        %1446 = vmatpush1.bf16.msra.mxu0 %v1399
        %1447 = vmatprep.subr.bf16.mxu0 0
        %1448 = vmatpush1.bf16.msra.mxu0 %v1400
        %1449 = vmatprep.mubr.bf16.mxu0 %v1382
        %1450 = vmatmul.mubr.bf16.gmra.mrb[0].mxu0 %v1381
        %v1451 = vpop.f32.mrb[0].mxu0
        %v1452 = vadd.f32 0.0, %v1451
        %v1453 = vpop.f32.mrb[0].mxu0
        %v1454 = vpop.f32.mrb[0].mxu0
        %v1455 = vpop.f32.mrb[0].mxu0
        %1456 = vdwg.mxu0
        %1457 = vmatprep.subr.bf16.mxu0 0
        %1458 = vmatpush1.bf16.msra.mxu0 %v1401
        %1459 = vmatprep.subr.bf16.mxu0 0
        %1460 = vmatpush1.bf16.msra.mxu0 %v1402
        %1461 = vmatprep.subr.bf16.mxu0 0
        %1462 = vmatpush1.bf16.msra.mxu0 %v1403
        %1463 = vmatprep.subr.bf16.mxu0 0
        %1464 = vmatpush1.bf16.msra.mxu0 %v1404
        %1465 = vmatprep.subr.bf16.mxu0 0
        %1466 = vmatpush1.bf16.msra.mxu0 %v1405
        %1467 = vmatprep.subr.bf16.mxu0 0
        %1468 = vmatpush1.bf16.msra.mxu0 %v1406
        %1469 = vmatprep.subr.bf16.mxu0 0
        %1470 = vmatpush1.bf16.msra.mxu0 %v1407
        %1471 = vmatprep.subr.bf16.mxu0 0
        %1472 = vmatpush1.bf16.msra.mxu0 %v1408
        %1473 = vmatprep.subr.bf16.mxu0 0
        %1474 = vmatpush1.bf16.msra.mxu0 %v1409
        %1475 = vmatprep.subr.bf16.mxu0 0
        %1476 = vmatpush1.bf16.msra.mxu0 %v1410
        %1477 = vmatprep.subr.bf16.mxu0 0
        %1478 = vmatpush1.bf16.msra.mxu0 %v1411
        %1479 = vmatprep.subr.bf16.mxu0 0
        %1480 = vmatpush1.bf16.msra.mxu0 %v1412
        %1481 = vmatprep.subr.bf16.mxu0 0
        %1482 = vmatpush1.bf16.msra.mxu0 %v1413
        %1483 = vmatprep.subr.bf16.mxu0 0
        %1484 = vmatpush1.bf16.msra.mxu0 %v1414
        %1485 = vmatprep.subr.bf16.mxu0 0
        %1486 = vmatpush1.bf16.msra.mxu0 %v1415
        %1487 = vmatprep.subr.bf16.mxu0 0
        %1488 = vmatpush1.bf16.msra.mxu0 %v1416
        %1489 = vmatprep.mubr.bf16.mxu0 %v1384
        %1490 = vmatmul.mubr.bf16.gmra.mrb[0].mxu0 %v1383
        %v1491 = vpop.f32.mrb[0].mxu0
        %v1492 = vadd.f32 %v1452, %v1491
        %v1493 = vpop.f32.mrb[0].mxu0
        %v1494 = vpop.f32.mrb[0].mxu0
        %v1495 = vpop.f32.mrb[0].mxu0
        %1496 = vdwg.mxu0
        %v1497 = vadd.f32 %v1054, %v1492
        %v1498 = vld [vmem:[#allocation14] sm:$0x1]
        %v1500 = vlaneseq
        %v1501 = vshrl.u32 %v1500, 7
        %v1502 = vsub.s32 0, %v1501
        %v1503 = vrot.slane %v1498, %v1502
        %v1505 = vadd.f32 %v1497, %v1503
        %1506 = vst [vmem:[%s527] sm:$0x1f] %v1505
        %p1507 = scmp.lt.s32.totalorder %s28, 1
        %s1508 = scalar_select %p1507, %s28, 1
        %s1509 = smul.addr %s1508, 8
        %s1510 = scalar_lea.vmem %s13, %s1509
        // Predicated region
        $region101: #{_lambda_.7} parent=71 // pred_check
          %p1511 = pneg %p324
        $region102: #{_lambda_.7} parent=71 // pred_check_branch
          %1513 = sbr.rel (%p1511) target = $region104
        $region103: #{_lambda_.7} parent=71 // pred_region
          _
        $region104: #{_lambda_.7} parent=71 // pred_fallthru
          _
      $region72: #{_lambda_.7} parent=5 // pred_fallthru
        _
      %p1514 = scmp.le.s32.totalorder 2, %s23
      // Predicated region
      $region105: #{_lambda_.7} parent=5 // pred_check
        %p1515 = pneg %p1514
      $region106: #{_lambda_.7} parent=5 // pred_check_branch
        %1517 = sbr.rel (%p1515) target = $region108
      $region107: #{_lambda_.7} parent=5 // pred_region
        %s1518 = ssub.s32 %s23, 2
        // Predicated region
        $region109: #{_lambda_.7} parent=107 // pred_check
          %p1519 = pneg %p330
        $region110: #{_lambda_.7} parent=107 // pred_check_branch
          %1521 = sbr.rel (%p1519) target = $region112
        $region111: #{_lambda_.7} parent=107 // pred_region
          %p1522 = scmp.lt.s32.totalorder %s29, 1
          %s1523 = scalar_select %p1522, %s29, 1
          %s1524 = smul.addr %s1523, 8
          %s1525 = scalar_lea.vmem %s13, %s1524
        $region112: #{_lambda_.7} parent=107 // pred_fallthru
          _
      $region108: #{_lambda_.7} parent=5 // pred_fallthru
        _
    $region6: #{_lambda_.7} parent=1 // loop_footer
      %s27 = sadd.s32 1, %s23
    $region7: #{_lambda_.7} parent=1 // loop_footer_branch
      %22 = sbr.rel target = $region3
    $region8: #{_lambda_.7} parent=1 // loop_exit
      _
    %1526 = vsyncpa [#allocation5], 1
    %s1527 = scalar_lea.sflag [#allocation5], 1
    %1528 = vsyncpa %s1527, 1
    %1529 = vsyncpa [#allocation7], 1
    %1530 = vsyncpa [#allocation10], 1
    %1531 = vsyncpa [#allocation13], 1

// kernel: _lambda_.9
$region0: #{_lambda_.9}
  #allocation0 [shape = 'u32[]', space=smem, size = 0x4, offset = 0x4, fixed_abs, tag = 'smem constant byte address 0x4 - core index']
  #allocation1 [shape = 'u32[144,128]{1,0:T(1,128)}', space=vmem, size = 0x12000, scoped, tag = 'internal scratch']
  #allocation2 [shape = 'f32[8,384]{1,0:T(8,128)}', space=vmem, size = 0x3000, scoped, tag = 'scratch operand']
  #allocation3 [shape = 'f32[8,128]{1,0:T(8,128)}', space=vmem, size = 0x1000, scoped, tag = 'scratch operand']
  %s0 = inlined_call_operand.vmem [shape: f32[2,8,128], index: 0, kind: input, shape index: {}]
  %s1 = inlined_call_operand.vmem [shape: f32[1,128], index: 1, kind: input, shape index: {}]
  %s2 = inlined_call_operand.vmem [shape: f32[1,128], index: 2, kind: input, shape index: {}]
  %s3 = inlined_call_operand.vmem [shape: f32[128,384], index: 3, kind: input, shape index: {}]
  %s4 = inlined_call_operand.vmem [shape: f32[1,384], index: 4, kind: input, shape index: {}]
  %s5 = inlined_call_operand.vmem [shape: f32[128,128], index: 5, kind: input, shape index: {}]
  %s6 = inlined_call_operand.vmem [shape: f32[1,128], index: 6, kind: input, shape index: {}]
  %s7 = inlined_call_operand.vmem [shape: f32[1,128], index: 7, kind: input, shape index: {}]
  %s8 = inlined_call_operand.vmem [shape: f32[1,128], index: 8, kind: input, shape index: {}]
  %s9 = inlined_call_operand.vmem [shape: f32[128,512], index: 9, kind: input, shape index: {}]
  %s10 = inlined_call_operand.vmem [shape: f32[1,512], index: 10, kind: input, shape index: {}]
  %s11 = inlined_call_operand.vmem [shape: f32[512,128], index: 11, kind: input, shape index: {}]
  %s12 = inlined_call_operand.vmem [shape: f32[1,128], index: 12, kind: input, shape index: {}]
  %s13 = inlined_call_operand.vmem [shape: f32[2,8,128], index: 13, kind: output, shape index: {}]
  %s14 = sld [smem:[#allocation0]]
  $region85: #{_lambda_.9} parent=0
    _
  %s16 = ssub.s32 1, %s14
  %s17 = scalar_select 0, %s16, %s14
  loop: start=0, step=1, limit=4
  $region2: #{_lambda_.9} parent=0 // loop_pre_header
    _
  $region3: #{_lambda_.9} parent=0 // loop_header
    %s19 = sphi 0, %s23
    %p20 = scmp.ge.s32.totalorder %s19, 4
    %s29 = sphi 0, %s31
    %s32 = sphi 0, %s29
    %s33 = sphi 0, %s32
    %s49 = sphi 0, %s33
    %s53 = sphi 0, %s53
    %s55 = sphi 0, %s53
    %s56 = sphi 0, %s55
    %s70 = sphi 0, %s56
    %s74 = sphi 0, %s74
    %s76 = sphi 0, %s74
    %s77 = sphi 0, %s76
    %s91 = sphi 0, %s77
    %s95 = sphi 0, %s95
    %s97 = sphi 0, %s95
    %s98 = sphi 0, %s97
    %s112 = sphi 0, %s98
    %s116 = sphi 0, %s116
    %s118 = sphi 0, %s116
    %s119 = sphi 0, %s118
    %s133 = sphi 0, %s119
    %s137 = sphi 0, %s137
    %s139 = sphi 0, %s137
    %s140 = sphi 0, %s139
    %s154 = sphi 0, %s140
    %s158 = sphi 0, %s158
    %s160 = sphi 0, %s158
    %s161 = sphi 0, %s160
    %s175 = sphi 0, %s161
    %s179 = sphi 0, %s179
    %s181 = sphi 0, %s179
    %s182 = sphi 0, %s181
    %s196 = sphi 0, %s182
    %s200 = sphi 0, %s200
    %s202 = sphi 0, %s200
    %s203 = sphi 0, %s202
    %s217 = sphi 0, %s203
    %s221 = sphi 0, %s221
    %s223 = sphi 0, %s221
    %s224 = sphi 0, %s223
    %s238 = sphi 0, %s224
    %s242 = sphi 0, %s242
    %s244 = sphi 0, %s242
    %s245 = sphi 0, %s244
    %s259 = sphi 0, %s245
    %s263 = sphi 0, %s263
    %s265 = sphi 0, %s263
    %s266 = sphi 0, %s265
    %s280 = sphi 0, %s266
    %s284 = sphi 0, %s284
    %s286 = sphi 0, %s284
    %s287 = sphi 0, %s286
    %s301 = sphi 0, %s287
    %s307 = sphi 0, %s309
    %s310 = sphi 0, %s307
    %s311 = sphi 0, %s310
    %s327 = sphi 0, %s311
  $region4: #{_lambda_.9} parent=0 // loop_header_branch
    %22 = sbr.rel (%p20) target = $region8
  $region5: #{_lambda_.9} parent=0 // loop_body
    %s24 = ssub.s32 %s19, 1
    %s25 = ssub.s32 %s19, 2
    %s26 = sadd.s32 %s19, 1
    %s27 = ssub.s32 %s19, %s26
    %p28 = scmp.eq.s32.totalorder %s27, 0
    %s30 = sadd.s32 %s29, 1
    %s31 = scalar_select %p28, %s29, %s30
    %p34 = pneg %p28
    %p35 = scmp.eq.s32.totalorder %s19, 1
    %p36 = por %p34, %p35
    %p37 = scmp.ne.s32.totalorder %s29, %s32
    %p38 = scmp.eq.s32.totalorder %s19, 0
    %p39 = por %p37, %p38
    %p40 = scmp.ne.s32.totalorder %s29, %s32
    %p41 = scmp.eq.s32.totalorder %s24, 1
    %p42 = por %p40, %p41
    %p43 = scmp.ne.s32.totalorder %s32, %s33
    %p44 = scmp.eq.s32.totalorder %s24, 0
    %p45 = por %p43, %p44
    %p46 = scmp.ne.s32.totalorder %s32, %s33
    %p47 = scmp.eq.s32.totalorder %s25, 1
    %p48 = por %p46, %p47
    %p50 = scmp.ne.s32.totalorder %s33, %s49
    %p51 = scmp.eq.s32.totalorder %s25, 0
    %p52 = por %p50, %p51
    %s54 = sadd.s32 %s53, 1
    %p57 = scmp.eq.s32.totalorder %s19, 1
    %p58 = scmp.ne.s32.totalorder %s53, %s55
    %p59 = scmp.eq.s32.totalorder %s19, 0
    %p60 = por %p58, %p59
    %p61 = scmp.ne.s32.totalorder %s53, %s55
    %p62 = scmp.eq.s32.totalorder %s24, 1
    %p63 = por %p61, %p62
    %p64 = scmp.ne.s32.totalorder %s55, %s56
    %p65 = scmp.eq.s32.totalorder %s24, 0
    %p66 = por %p64, %p65
    %p67 = scmp.ne.s32.totalorder %s55, %s56
    %p68 = scmp.eq.s32.totalorder %s25, 1
    %p69 = por %p67, %p68
    %p71 = scmp.ne.s32.totalorder %s56, %s70
    %p72 = scmp.eq.s32.totalorder %s25, 0
    %p73 = por %p71, %p72
    %s75 = sadd.s32 %s74, 1
    %p78 = scmp.eq.s32.totalorder %s19, 1
    %p79 = scmp.ne.s32.totalorder %s74, %s76
    %p80 = scmp.eq.s32.totalorder %s19, 0
    %p81 = por %p79, %p80
    %p82 = scmp.ne.s32.totalorder %s74, %s76
    %p83 = scmp.eq.s32.totalorder %s24, 1
    %p84 = por %p82, %p83
    %p85 = scmp.ne.s32.totalorder %s76, %s77
    %p86 = scmp.eq.s32.totalorder %s24, 0
    %p87 = por %p85, %p86
    %p88 = scmp.ne.s32.totalorder %s76, %s77
    %p89 = scmp.eq.s32.totalorder %s25, 1
    %p90 = por %p88, %p89
    %p92 = scmp.ne.s32.totalorder %s77, %s91
    %p93 = scmp.eq.s32.totalorder %s25, 0
    %p94 = por %p92, %p93
    %s96 = sadd.s32 %s95, 1
    %p99 = scmp.eq.s32.totalorder %s19, 1
    %p100 = scmp.ne.s32.totalorder %s95, %s97
    %p101 = scmp.eq.s32.totalorder %s19, 0
    %p102 = por %p100, %p101
    %p103 = scmp.ne.s32.totalorder %s95, %s97
    %p104 = scmp.eq.s32.totalorder %s24, 1
    %p105 = por %p103, %p104
    %p106 = scmp.ne.s32.totalorder %s97, %s98
    %p107 = scmp.eq.s32.totalorder %s24, 0
    %p108 = por %p106, %p107
    %p109 = scmp.ne.s32.totalorder %s97, %s98
    %p110 = scmp.eq.s32.totalorder %s25, 1
    %p111 = por %p109, %p110
    %p113 = scmp.ne.s32.totalorder %s98, %s112
    %p114 = scmp.eq.s32.totalorder %s25, 0
    %p115 = por %p113, %p114
    %s117 = sadd.s32 %s116, 1
    %p120 = scmp.eq.s32.totalorder %s19, 1
    %p121 = scmp.ne.s32.totalorder %s116, %s118
    %p122 = scmp.eq.s32.totalorder %s19, 0
    %p123 = por %p121, %p122
    %p124 = scmp.ne.s32.totalorder %s116, %s118
    %p125 = scmp.eq.s32.totalorder %s24, 1
    %p126 = por %p124, %p125
    %p127 = scmp.ne.s32.totalorder %s118, %s119
    %p128 = scmp.eq.s32.totalorder %s24, 0
    %p129 = por %p127, %p128
    %p130 = scmp.ne.s32.totalorder %s118, %s119
    %p131 = scmp.eq.s32.totalorder %s25, 1
    %p132 = por %p130, %p131
    %p134 = scmp.ne.s32.totalorder %s119, %s133
    %p135 = scmp.eq.s32.totalorder %s25, 0
    %p136 = por %p134, %p135
    %s138 = sadd.s32 %s137, 1
    %p141 = scmp.eq.s32.totalorder %s19, 1
    %p142 = scmp.ne.s32.totalorder %s137, %s139
    %p143 = scmp.eq.s32.totalorder %s19, 0
    %p144 = por %p142, %p143
    %p145 = scmp.ne.s32.totalorder %s137, %s139
    %p146 = scmp.eq.s32.totalorder %s24, 1
    %p147 = por %p145, %p146
    %p148 = scmp.ne.s32.totalorder %s139, %s140
    %p149 = scmp.eq.s32.totalorder %s24, 0
    %p150 = por %p148, %p149
    %p151 = scmp.ne.s32.totalorder %s139, %s140
    %p152 = scmp.eq.s32.totalorder %s25, 1
    %p153 = por %p151, %p152
    %p155 = scmp.ne.s32.totalorder %s140, %s154
    %p156 = scmp.eq.s32.totalorder %s25, 0
    %p157 = por %p155, %p156
    %s159 = sadd.s32 %s158, 1
    %p162 = scmp.eq.s32.totalorder %s19, 1
    %p163 = scmp.ne.s32.totalorder %s158, %s160
    %p164 = scmp.eq.s32.totalorder %s19, 0
    %p165 = por %p163, %p164
    %p166 = scmp.ne.s32.totalorder %s158, %s160
    %p167 = scmp.eq.s32.totalorder %s24, 1
    %p168 = por %p166, %p167
    %p169 = scmp.ne.s32.totalorder %s160, %s161
    %p170 = scmp.eq.s32.totalorder %s24, 0
    %p171 = por %p169, %p170
    %p172 = scmp.ne.s32.totalorder %s160, %s161
    %p173 = scmp.eq.s32.totalorder %s25, 1
    %p174 = por %p172, %p173
    %p176 = scmp.ne.s32.totalorder %s161, %s175
    %p177 = scmp.eq.s32.totalorder %s25, 0
    %p178 = por %p176, %p177
    %s180 = sadd.s32 %s179, 1
    %p183 = scmp.eq.s32.totalorder %s19, 1
    %p184 = scmp.ne.s32.totalorder %s179, %s181
    %p185 = scmp.eq.s32.totalorder %s19, 0
    %p186 = por %p184, %p185
    %p187 = scmp.ne.s32.totalorder %s179, %s181
    %p188 = scmp.eq.s32.totalorder %s24, 1
    %p189 = por %p187, %p188
    %p190 = scmp.ne.s32.totalorder %s181, %s182
    %p191 = scmp.eq.s32.totalorder %s24, 0
    %p192 = por %p190, %p191
    %p193 = scmp.ne.s32.totalorder %s181, %s182
    %p194 = scmp.eq.s32.totalorder %s25, 1
    %p195 = por %p193, %p194
    %p197 = scmp.ne.s32.totalorder %s182, %s196
    %p198 = scmp.eq.s32.totalorder %s25, 0
    %p199 = por %p197, %p198
    %s201 = sadd.s32 %s200, 1
    %p204 = scmp.eq.s32.totalorder %s19, 1
    %p205 = scmp.ne.s32.totalorder %s200, %s202
    %p206 = scmp.eq.s32.totalorder %s19, 0
    %p207 = por %p205, %p206
    %p208 = scmp.ne.s32.totalorder %s200, %s202
    %p209 = scmp.eq.s32.totalorder %s24, 1
    %p210 = por %p208, %p209
    %p211 = scmp.ne.s32.totalorder %s202, %s203
    %p212 = scmp.eq.s32.totalorder %s24, 0
    %p213 = por %p211, %p212
    %p214 = scmp.ne.s32.totalorder %s202, %s203
    %p215 = scmp.eq.s32.totalorder %s25, 1
    %p216 = por %p214, %p215
    %p218 = scmp.ne.s32.totalorder %s203, %s217
    %p219 = scmp.eq.s32.totalorder %s25, 0
    %p220 = por %p218, %p219
    %s222 = sadd.s32 %s221, 1
    %p225 = scmp.eq.s32.totalorder %s19, 1
    %p226 = scmp.ne.s32.totalorder %s221, %s223
    %p227 = scmp.eq.s32.totalorder %s19, 0
    %p228 = por %p226, %p227
    %p229 = scmp.ne.s32.totalorder %s221, %s223
    %p230 = scmp.eq.s32.totalorder %s24, 1
    %p231 = por %p229, %p230
    %p232 = scmp.ne.s32.totalorder %s223, %s224
    %p233 = scmp.eq.s32.totalorder %s24, 0
    %p234 = por %p232, %p233
    %p235 = scmp.ne.s32.totalorder %s223, %s224
    %p236 = scmp.eq.s32.totalorder %s25, 1
    %p237 = por %p235, %p236
    %p239 = scmp.ne.s32.totalorder %s224, %s238
    %p240 = scmp.eq.s32.totalorder %s25, 0
    %p241 = por %p239, %p240
    %s243 = sadd.s32 %s242, 1
    %p246 = scmp.eq.s32.totalorder %s19, 1
    %p247 = scmp.ne.s32.totalorder %s242, %s244
    %p248 = scmp.eq.s32.totalorder %s19, 0
    %p249 = por %p247, %p248
    %p250 = scmp.ne.s32.totalorder %s242, %s244
    %p251 = scmp.eq.s32.totalorder %s24, 1
    %p252 = por %p250, %p251
    %p253 = scmp.ne.s32.totalorder %s244, %s245
    %p254 = scmp.eq.s32.totalorder %s24, 0
    %p255 = por %p253, %p254
    %p256 = scmp.ne.s32.totalorder %s244, %s245
    %p257 = scmp.eq.s32.totalorder %s25, 1
    %p258 = por %p256, %p257
    %p260 = scmp.ne.s32.totalorder %s245, %s259
    %p261 = scmp.eq.s32.totalorder %s25, 0
    %p262 = por %p260, %p261
    %s264 = sadd.s32 %s263, 1
    %p267 = scmp.eq.s32.totalorder %s19, 1
    %p268 = scmp.ne.s32.totalorder %s263, %s265
    %p269 = scmp.eq.s32.totalorder %s19, 0
    %p270 = por %p268, %p269
    %p271 = scmp.ne.s32.totalorder %s263, %s265
    %p272 = scmp.eq.s32.totalorder %s24, 1
    %p273 = por %p271, %p272
    %p274 = scmp.ne.s32.totalorder %s265, %s266
    %p275 = scmp.eq.s32.totalorder %s24, 0
    %p276 = por %p274, %p275
    %p277 = scmp.ne.s32.totalorder %s265, %s266
    %p278 = scmp.eq.s32.totalorder %s25, 1
    %p279 = por %p277, %p278
    %p281 = scmp.ne.s32.totalorder %s266, %s280
    %p282 = scmp.eq.s32.totalorder %s25, 0
    %p283 = por %p281, %p282
    %s285 = sadd.s32 %s284, 1
    %p288 = scmp.eq.s32.totalorder %s19, 1
    %p289 = scmp.ne.s32.totalorder %s284, %s286
    %p290 = scmp.eq.s32.totalorder %s19, 0
    %p291 = por %p289, %p290
    %p292 = scmp.ne.s32.totalorder %s284, %s286
    %p293 = scmp.eq.s32.totalorder %s24, 1
    %p294 = por %p292, %p293
    %p295 = scmp.ne.s32.totalorder %s286, %s287
    %p296 = scmp.eq.s32.totalorder %s24, 0
    %p297 = por %p295, %p296
    %p298 = scmp.ne.s32.totalorder %s286, %s287
    %p299 = scmp.eq.s32.totalorder %s25, 1
    %p300 = por %p298, %p299
    %p302 = scmp.ne.s32.totalorder %s287, %s301
    %p303 = scmp.eq.s32.totalorder %s25, 0
    %p304 = por %p302, %p303
    %s305 = ssub.s32 %s19, %s26
    %p306 = scmp.eq.s32.totalorder %s305, 0
    %s308 = sadd.s32 %s307, 1
    %s309 = scalar_select %p306, %s307, %s308
    %p312 = pneg %p306
    %p313 = scmp.eq.s32.totalorder %s19, 1
    %p314 = por %p312, %p313
    %p315 = scmp.ne.s32.totalorder %s307, %s310
    %p316 = scmp.eq.s32.totalorder %s19, 0
    %p317 = por %p315, %p316
    %p318 = scmp.ne.s32.totalorder %s307, %s310
    %p319 = scmp.eq.s32.totalorder %s24, 1
    %p320 = por %p318, %p319
    %p321 = scmp.ne.s32.totalorder %s310, %s311
    %p322 = scmp.eq.s32.totalorder %s24, 0
    %p323 = por %p321, %p322
    %p324 = scmp.ne.s32.totalorder %s310, %s311
    %p325 = scmp.eq.s32.totalorder %s25, 1
    %p326 = por %p324, %p325
    %p328 = scmp.ne.s32.totalorder %s311, %s327
    %p329 = scmp.eq.s32.totalorder %s25, 0
    %p330 = por %p328, %p329
    %p331 = scmp.le.s32.totalorder 1, %s19
    %p332 = scmp.lt.s32.totalorder %s19, 3
    %p333 = pnand %p331, %p332
    %p334 = pneg %p333
    // Predicated region
    $region9: #{_lambda_.9} parent=5 // pred_check
      _
    $region10: #{_lambda_.9} parent=5 // pred_check_branch
      %336 = sbr.rel (%p333) target = $region12
    $region11: #{_lambda_.9} parent=5 // pred_region
      %s337 = ssub.s32 %s19, 1
      // Predicated region
      $region13: #{_lambda_.9} parent=11 // pred_check
        %p338 = pneg %p66
      $region14: #{_lambda_.9} parent=11 // pred_check_branch
        %340 = sbr.rel (%p338) target = $region16
      $region15: #{_lambda_.9} parent=11 // pred_region
        _
      $region16: #{_lambda_.9} parent=11 // pred_fallthru
        _
      // Predicated region
      $region17: #{_lambda_.9} parent=11 // pred_check
        %p341 = pneg %p87
      $region18: #{_lambda_.9} parent=11 // pred_check_branch
        %343 = sbr.rel (%p341) target = $region20
      $region19: #{_lambda_.9} parent=11 // pred_region
        _
      $region20: #{_lambda_.9} parent=11 // pred_fallthru
        _
      // Predicated region
      $region21: #{_lambda_.9} parent=11 // pred_check
        %p344 = pneg %p108
      $region22: #{_lambda_.9} parent=11 // pred_check_branch
        %346 = sbr.rel (%p344) target = $region24
      $region23: #{_lambda_.9} parent=11 // pred_region
        _
      $region24: #{_lambda_.9} parent=11 // pred_fallthru
        _
      // Predicated region
      $region25: #{_lambda_.9} parent=11 // pred_check
        %p347 = pneg %p129
      $region26: #{_lambda_.9} parent=11 // pred_check_branch
        %349 = sbr.rel (%p347) target = $region28
      $region27: #{_lambda_.9} parent=11 // pred_region
        _
      $region28: #{_lambda_.9} parent=11 // pred_fallthru
        _
      // Predicated region
      $region29: #{_lambda_.9} parent=11 // pred_check
        %p350 = pneg %p150
      $region30: #{_lambda_.9} parent=11 // pred_check_branch
        %352 = sbr.rel (%p350) target = $region32
      $region31: #{_lambda_.9} parent=11 // pred_region
        _
      $region32: #{_lambda_.9} parent=11 // pred_fallthru
        _
      // Predicated region
      $region33: #{_lambda_.9} parent=11 // pred_check
        %p353 = pneg %p171
      $region34: #{_lambda_.9} parent=11 // pred_check_branch
        %355 = sbr.rel (%p353) target = $region36
      $region35: #{_lambda_.9} parent=11 // pred_region
        _
      $region36: #{_lambda_.9} parent=11 // pred_fallthru
        _
      // Predicated region
      $region37: #{_lambda_.9} parent=11 // pred_check
        %p356 = pneg %p192
      $region38: #{_lambda_.9} parent=11 // pred_check_branch
        %358 = sbr.rel (%p356) target = $region40
      $region39: #{_lambda_.9} parent=11 // pred_region
        _
      $region40: #{_lambda_.9} parent=11 // pred_fallthru
        _
      // Predicated region
      $region41: #{_lambda_.9} parent=11 // pred_check
        %p359 = pneg %p213
      $region42: #{_lambda_.9} parent=11 // pred_check_branch
        %361 = sbr.rel (%p359) target = $region44
      $region43: #{_lambda_.9} parent=11 // pred_region
        _
      $region44: #{_lambda_.9} parent=11 // pred_fallthru
        _
      // Predicated region
      $region45: #{_lambda_.9} parent=11 // pred_check
        %p362 = pneg %p234
      $region46: #{_lambda_.9} parent=11 // pred_check_branch
        %364 = sbr.rel (%p362) target = $region48
      $region47: #{_lambda_.9} parent=11 // pred_region
        _
      $region48: #{_lambda_.9} parent=11 // pred_fallthru
        _
      // Predicated region
      $region49: #{_lambda_.9} parent=11 // pred_check
        %p365 = pneg %p255
      $region50: #{_lambda_.9} parent=11 // pred_check_branch
        %367 = sbr.rel (%p365) target = $region52
      $region51: #{_lambda_.9} parent=11 // pred_region
        _
      $region52: #{_lambda_.9} parent=11 // pred_fallthru
        _
      // Predicated region
      $region53: #{_lambda_.9} parent=11 // pred_check
        %p368 = pneg %p276
      $region54: #{_lambda_.9} parent=11 // pred_check_branch
        %370 = sbr.rel (%p368) target = $region56
      $region55: #{_lambda_.9} parent=11 // pred_region
        _
      $region56: #{_lambda_.9} parent=11 // pred_fallthru
        _
      // Predicated region
      $region57: #{_lambda_.9} parent=11 // pred_check
        %p371 = pneg %p297
      $region58: #{_lambda_.9} parent=11 // pred_check_branch
        %373 = sbr.rel (%p371) target = $region60
      $region59: #{_lambda_.9} parent=11 // pred_region
        _
      $region60: #{_lambda_.9} parent=11 // pred_fallthru
        _
    $region12: #{_lambda_.9} parent=5 // pred_fallthru
      _
    %p374 = scmp.lt.s32.totalorder %s19, 2
    // Predicated region
    $region61: #{_lambda_.9} parent=5 // pred_check
      %p375 = pneg %p374
    $region62: #{_lambda_.9} parent=5 // pred_check_branch
      %377 = sbr.rel (%p375) target = $region64
    $region63: #{_lambda_.9} parent=5 // pred_region
      // Predicated region
      $region65: #{_lambda_.9} parent=63 // pred_check
        %p378 = pneg %p39
      $region66: #{_lambda_.9} parent=63 // pred_check_branch
        %380 = sbr.rel (%p378) target = $region68
      $region67: #{_lambda_.9} parent=63 // pred_region
        %p381 = scmp.lt.s32.totalorder %s19, 1
        %s382 = scalar_select %p381, %s19, 1
        %s383 = smul.addr %s382, 8
        %s384 = scalar_lea.vmem %s0, %s383
      $region68: #{_lambda_.9} parent=63 // pred_fallthru
        _
    $region64: #{_lambda_.9} parent=5 // pred_fallthru
      _
    %p385 = scmp.le.s32.totalorder 1, %s19
    %p386 = scmp.lt.s32.totalorder %s19, 3
    %p387 = pnand %p385, %p386
    %p388 = pneg %p387
    // Predicated region
    $region69: #{_lambda_.9} parent=5 // pred_check
      _
    $region70: #{_lambda_.9} parent=5 // pred_check_branch
      %390 = sbr.rel (%p387) target = $region72
    $region71: #{_lambda_.9} parent=5 // pred_region
      %s391 = ssub.s32 %s19, 1
      %p392 = scmp.lt.s32.totalorder %s24, 1
      %s393 = scalar_select %p392, %s24, 1
      %s394 = smul.addr %s393, 8
      %s395 = scalar_lea.vmem %s0, %s394
      %p396 = pneg %p45
      %p397 = pneg %p42
      %p398 = pneg %p66
      %p399 = pneg %p63
      %p400 = pneg %p87
      %p401 = pneg %p84
      %p402 = pneg %p108
      %p403 = pneg %p105
      %p404 = pneg %p129
      %p405 = pneg %p126
      %p406 = pneg %p150
      %p407 = pneg %p147
      %p408 = pneg %p171
      %p409 = pneg %p168
      %p410 = pneg %p192
      %p411 = pneg %p189
      %p412 = pneg %p213
      %p413 = pneg %p210
      %p414 = pneg %p234
      %p415 = pneg %p231
      %p416 = pneg %p255
      %p417 = pneg %p252
      %p418 = pneg %p276
      %p419 = pneg %p273
      %p420 = pneg %p297
      %p421 = pneg %p294
      %p422 = pneg %p323
      %p423 = pneg %p320
      %p424 = scmp.lt.s32.totalorder %s24, 1
      %s425 = scalar_select %p424, %s24, 1
      %s426 = smul.addr %s425, 8
      %s427 = scalar_lea.vmem %s13, %s426
      %p428 = scmp.lt.s32.totalorder %s24, 1
      %s429 = scalar_select %p428, %s24, 1
      %s430 = smul.addr %s429, 8
      %s431 = scalar_lea.vmem %s0, %s430
      %p432 = scmp.lt.s32.totalorder %s24, 1
      %s433 = scalar_select %p432, %s24, 1
      %s434 = smul.addr %s433, 8
      %s435 = scalar_lea.vmem %s13, %s434
      %v437 = vld [vmem:[%s431] sm:$0xff]
      %v438 = vld [vmem:[%s1] sm:$0x1]
      %v439 = vld [vmem:[%s2] sm:$0x1]
      %440 = vadd.xlane.f32.xlu0 %v437
      %v441 = vpop.xlane.xlu0 %440
      %v442 = vmul.f32 %v441, 0.0078125
      %v443 = vsub.f32 %v437, %v442
      %v444 = vmul.f32 %v443, %v443
      %445 = vadd.xlane.f32.xlu0 %v444
      %v446 = vpop.xlane.xlu0 %445
      %v447 = vmul.f32 %v446, 0.0078125
      %v448 = vadd.f32 %v447, 1e-05
      %v449 = vrsqrt.pop %v448
      %v450 = vmul.f32 %v443, %v449
      %v452 = vlaneseq
      %v453 = vshrl.u32 %v452, 7
      %v454 = vsub.s32 0, %v453
      %v455 = vrot.slane %v438, %v454
      %v457 = vmul.f32 %v450, %v455
      %v459 = vlaneseq
      %v460 = vshrl.u32 %v459, 7
      %v461 = vsub.s32 0, %v460
      %v462 = vrot.slane %v439, %v461
      %v464 = vadd.f32 %v457, %v462
      %v465 = vld [vmem:[%s3] sm:$0xff]
      %v466 = vld [vmem:[%s3 + $0x8] sm:$0xff]
      %v467 = vld [vmem:[%s3 + $0x10] sm:$0xff]
      %v468 = vld [vmem:[%s3 + $0x18] sm:$0xff]
      %v469 = vld [vmem:[%s3 + $0x20] sm:$0xff]
      %v470 = vld [vmem:[%s3 + $0x28] sm:$0xff]
      %v471 = vld [vmem:[%s3 + $0x30] sm:$0xff]
      %v472 = vld [vmem:[%s3 + $0x38] sm:$0xff]
      %v473 = vld [vmem:[%s3 + $0x40] sm:$0xff]
      %v474 = vld [vmem:[%s3 + $0x48] sm:$0xff]
      %v475 = vld [vmem:[%s3 + $0x50] sm:$0xff]
      %v476 = vld [vmem:[%s3 + $0x58] sm:$0xff]
      %v477 = vld [vmem:[%s3 + $0x60] sm:$0xff]
      %v478 = vld [vmem:[%s3 + $0x68] sm:$0xff]
      %v479 = vld [vmem:[%s3 + $0x70] sm:$0xff]
      %v480 = vld [vmem:[%s3 + $0x78] sm:$0xff]
      %v481 = vld [vmem:[%s3 + $0x80] sm:$0xff]
      %v482 = vld [vmem:[%s3 + $0x88] sm:$0xff]
      %v483 = vld [vmem:[%s3 + $0x90] sm:$0xff]
      %v484 = vld [vmem:[%s3 + $0x98] sm:$0xff]
      %v485 = vld [vmem:[%s3 + $0xa0] sm:$0xff]
      %v486 = vld [vmem:[%s3 + $0xa8] sm:$0xff]
      %v487 = vld [vmem:[%s3 + $0xb0] sm:$0xff]
      %v488 = vld [vmem:[%s3 + $0xb8] sm:$0xff]
      %v489 = vld [vmem:[%s3 + $0xc0] sm:$0xff]
      %v490 = vld [vmem:[%s3 + $0xc8] sm:$0xff]
      %v491 = vld [vmem:[%s3 + $0xd0] sm:$0xff]
      %v492 = vld [vmem:[%s3 + $0xd8] sm:$0xff]
      %v493 = vld [vmem:[%s3 + $0xe0] sm:$0xff]
      %v494 = vld [vmem:[%s3 + $0xe8] sm:$0xff]
      %v495 = vld [vmem:[%s3 + $0xf0] sm:$0xff]
      %v496 = vld [vmem:[%s3 + $0xf8] sm:$0xff]
      %v497 = vld [vmem:[%s3 + $0x100] sm:$0xff]
      %v498 = vld [vmem:[%s3 + $0x108] sm:$0xff]
      %v499 = vld [vmem:[%s3 + $0x110] sm:$0xff]
      %v500 = vld [vmem:[%s3 + $0x118] sm:$0xff]
      %v501 = vld [vmem:[%s3 + $0x120] sm:$0xff]
      %v502 = vld [vmem:[%s3 + $0x128] sm:$0xff]
      %v503 = vld [vmem:[%s3 + $0x130] sm:$0xff]
      %v504 = vld [vmem:[%s3 + $0x138] sm:$0xff]
      %v505 = vld [vmem:[%s3 + $0x140] sm:$0xff]
      %v506 = vld [vmem:[%s3 + $0x148] sm:$0xff]
      %v507 = vld [vmem:[%s3 + $0x150] sm:$0xff]
      %v508 = vld [vmem:[%s3 + $0x158] sm:$0xff]
      %v509 = vld [vmem:[%s3 + $0x160] sm:$0xff]
      %v510 = vld [vmem:[%s3 + $0x168] sm:$0xff]
      %v511 = vld [vmem:[%s3 + $0x170] sm:$0xff]
      %v512 = vld [vmem:[%s3 + $0x178] sm:$0xff]
      %v513 = vpack.c.bf16 %v464, %v464
      %v514 = vpack.c.bf16 %v468, %v465
      %v515 = vpack.c.bf16 %v469, %v466
      %v516 = vpack.c.bf16 %v470, %v467
      %v517 = vpack.c.bf16 %v474, %v471
      %v518 = vpack.c.bf16 %v475, %v472
      %v519 = vpack.c.bf16 %v476, %v473
      %v520 = vpack.c.bf16 %v480, %v477
      %v521 = vpack.c.bf16 %v481, %v478
      %v522 = vpack.c.bf16 %v482, %v479
      %v523 = vpack.c.bf16 %v486, %v483
      %v524 = vpack.c.bf16 %v487, %v484
      %v525 = vpack.c.bf16 %v488, %v485
      %v526 = vpack.c.bf16 %v492, %v489
      %v527 = vpack.c.bf16 %v493, %v490
      %v528 = vpack.c.bf16 %v494, %v491
      %v529 = vpack.c.bf16 %v498, %v495
      %v530 = vpack.c.bf16 %v499, %v496
      %v531 = vpack.c.bf16 %v500, %v497
      %v532 = vpack.c.bf16 %v504, %v501
      %v533 = vpack.c.bf16 %v505, %v502
      %v534 = vpack.c.bf16 %v506, %v503
      %v535 = vpack.c.bf16 %v510, %v507
      %v536 = vpack.c.bf16 %v511, %v508
      %v537 = vpack.c.bf16 %v512, %v509
      %v538 = vld [vmem:[%s4] sm:$0x7]
      %v540 = vlaneseq
      %v541 = vshrl.u32 %v540, 7
      %v542 = vsub.s32 0, %v541
      %v543 = vrot.slane %v538, %v542
      %v544 = vlaneseq
      %v545 = vshrl.u32 %v544, 7
      %v546 = vsub.s32 1, %v545
      %v547 = vrot.slane %v538, %v546
      %v548 = vlaneseq
      %v549 = vshrl.u32 %v548, 7
      %v550 = vsub.s32 2, %v549
      %v551 = vrot.slane %v538, %v550
      %555 = vmatprep.subr.bf16.mxu0 %v515
      %556 = vmatpush1.bf16.msra.mxu0 %v514
      %557 = vmatprep.subr.bf16.mxu0 %v518
      %558 = vmatpush1.bf16.msra.mxu0 %v517
      %559 = vmatprep.subr.bf16.mxu0 %v521
      %560 = vmatpush1.bf16.msra.mxu0 %v520
      %561 = vmatprep.subr.bf16.mxu0 %v524
      %562 = vmatpush1.bf16.msra.mxu0 %v523
      %563 = vmatprep.subr.bf16.mxu0 %v527
      %564 = vmatpush1.bf16.msra.mxu0 %v526
      %565 = vmatprep.subr.bf16.mxu0 %v530
      %566 = vmatpush1.bf16.msra.mxu0 %v529
      %567 = vmatprep.subr.bf16.mxu0 %v533
      %568 = vmatpush1.bf16.msra.mxu0 %v532
      %569 = vmatprep.subr.bf16.mxu0 %v536
      %570 = vmatpush1.bf16.msra.mxu0 %v535
      %571 = vmatprep.subr.bf16.mxu0 0
      %572 = vmatpush1.bf16.msra.mxu0 0
      %573 = vmatprep.subr.bf16.mxu0 0
      %574 = vmatpush1.bf16.msra.mxu0 0
      %575 = vmatprep.subr.bf16.mxu0 0
      %576 = vmatpush1.bf16.msra.mxu0 0
      %577 = vmatprep.subr.bf16.mxu0 0
      %578 = vmatpush1.bf16.msra.mxu0 0
      %579 = vmatprep.subr.bf16.mxu0 0
      %580 = vmatpush1.bf16.msra.mxu0 0
      %581 = vmatprep.subr.bf16.mxu0 0
      %582 = vmatpush1.bf16.msra.mxu0 0
      %583 = vmatprep.subr.bf16.mxu0 0
      %584 = vmatpush1.bf16.msra.mxu0 0
      %585 = vmatprep.subr.bf16.mxu0 0
      %586 = vmatpush1.bf16.msra.mxu0 0
      %587 = vmatprep.mubr.bf16.mxu0 0
      %588 = vmatmul.mubr.bf16.gmra.mrb[0].mxu0 %v513
      %v589 = vpop.f32.mrb[0].mxu0
      %v590 = vadd.f32 %v543, %v589
      %v591 = vpop.f32.mrb[0].mxu0
      %v592 = vadd.f32 %v547, %v591
      %v593 = vpop.f32.mrb[0].mxu0
      %v594 = vpop.f32.mrb[0].mxu0
      %595 = vdwg.mxu0
      %596 = vmatprep.subr.bf16.mxu0 0
      %597 = vmatpush1.bf16.msra.mxu0 %v516
      %598 = vmatprep.subr.bf16.mxu0 0
      %599 = vmatpush1.bf16.msra.mxu0 %v519
      %600 = vmatprep.subr.bf16.mxu0 0
      %601 = vmatpush1.bf16.msra.mxu0 %v522
      %602 = vmatprep.subr.bf16.mxu0 0
      %603 = vmatpush1.bf16.msra.mxu0 %v525
      %604 = vmatprep.subr.bf16.mxu0 0
      %605 = vmatpush1.bf16.msra.mxu0 %v528
      %606 = vmatprep.subr.bf16.mxu0 0
      %607 = vmatpush1.bf16.msra.mxu0 %v531
      %608 = vmatprep.subr.bf16.mxu0 0
      %609 = vmatpush1.bf16.msra.mxu0 %v534
      %610 = vmatprep.subr.bf16.mxu0 0
      %611 = vmatpush1.bf16.msra.mxu0 %v537
      %612 = vmatprep.subr.bf16.mxu0 0
      %613 = vmatpush1.bf16.msra.mxu0 0
      %614 = vmatprep.subr.bf16.mxu0 0
      %615 = vmatpush1.bf16.msra.mxu0 0
      %616 = vmatprep.subr.bf16.mxu0 0
      %617 = vmatpush1.bf16.msra.mxu0 0
      %618 = vmatprep.subr.bf16.mxu0 0
      %619 = vmatpush1.bf16.msra.mxu0 0
      %620 = vmatprep.subr.bf16.mxu0 0
      %621 = vmatpush1.bf16.msra.mxu0 0
      %622 = vmatprep.subr.bf16.mxu0 0
      %623 = vmatpush1.bf16.msra.mxu0 0
      %624 = vmatprep.subr.bf16.mxu0 0
      %625 = vmatpush1.bf16.msra.mxu0 0
      %626 = vmatprep.subr.bf16.mxu0 0
      %627 = vmatpush1.bf16.msra.mxu0 0
      %628 = vmatprep.mubr.bf16.mxu0 0
      %629 = vmatmul.mubr.bf16.gmra.mrb[0].mxu0 %v513
      %v630 = vpop.f32.mrb[0].mxu0
      %v631 = vadd.f32 %v551, %v630
      %v632 = vpop.f32.mrb[0].mxu0
      %v633 = vpop.f32.mrb[0].mxu0
      %v634 = vpop.f32.mrb[0].mxu0
      %635 = vdwg.mxu0
      %636 = vst [vmem:[#allocation2] sm:$0xff] %v590
      %637 = vst [vmem:[#allocation2 + $0x8] sm:$0xff] %v592
      %638 = vst [vmem:[#allocation2 + $0x10] sm:$0xff] %v631
      %v639 = vlaneseq
      %v640 = vshrl.u32 %v639, 7
      %v641 = vlaneseq
      %v642 = vand.u32 %v641, 127
      %vm643 = vcmp.gt.s32.totalorder %v642, %v640
      %v644 = vsel %vm643, -1e+09, 0.0
      %v645 = vld [vmem:[#allocation2] sm:$0xff]
      %v646 = vld [vmem:[#allocation2 + $0x8] sm:$0xff]
      %v647 = vld [vmem:[#allocation2 + $0x10] sm:$0xff]
      %v648 = vpack.c.bf16 %v645, %v645
      %v649 = vpack.c.bf16 %v646, %v646
      %vm650 = vcmask 523264
      %v652 = vsel %vm650, %v648, 0
      %v655 = vsel %vm650, %v649, 0
      %657 = vmatprep.subr.bf16.mxu0 0
      %658 = vmatpush1.bf16.xpose.msra.mxu0 %v655
      %659 = vmatprep.subr.bf16.mxu0 0
      %660 = vmatpush1.bf16.xpose.msra.mxu0 0
      %661 = vmatprep.subr.bf16.mxu0 0
      %662 = vmatpush1.bf16.xpose.msra.mxu0 0
      %663 = vmatprep.subr.bf16.mxu0 0
      %664 = vmatpush1.bf16.xpose.msra.mxu0 0
      %665 = vmatprep.subr.bf16.mxu0 0
      %666 = vmatpush1.bf16.xpose.msra.mxu0 0
      %667 = vmatprep.subr.bf16.mxu0 0
      %668 = vmatpush1.bf16.xpose.msra.mxu0 0
      %669 = vmatprep.subr.bf16.mxu0 0
      %670 = vmatpush1.bf16.xpose.msra.mxu0 0
      %671 = vmatprep.subr.bf16.mxu0 0
      %672 = vmatpush1.bf16.xpose.msra.mxu0 0
      %673 = vmatprep.subr.bf16.mxu0 0
      %674 = vmatpush1.bf16.xpose.msra.mxu0 0
      %675 = vmatprep.subr.bf16.mxu0 0
      %676 = vmatpush1.bf16.xpose.msra.mxu0 0
      %677 = vmatprep.subr.bf16.mxu0 0
      %678 = vmatpush1.bf16.xpose.msra.mxu0 0
      %679 = vmatprep.subr.bf16.mxu0 0
      %680 = vmatpush1.bf16.xpose.msra.mxu0 0
      %681 = vmatprep.subr.bf16.mxu0 0
      %682 = vmatpush1.bf16.xpose.msra.mxu0 0
      %683 = vmatprep.subr.bf16.mxu0 0
      %684 = vmatpush1.bf16.xpose.msra.mxu0 0
      %685 = vmatprep.subr.bf16.mxu0 0
      %686 = vmatpush1.bf16.xpose.msra.mxu0 0
      %687 = vmatprep.subr.bf16.mxu0 0
      %688 = vmatpush1.bf16.xpose.msra.mxu0 0
      %689 = vmatprep.mubr.bf16.mxu0 0
      %690 = vmatmul.mubr.bf16.gmra.mrb[0].mxu0 %v652
      %v691 = vpop.f32.mrb[0].mxu0
      %v692 = vadd.f32 0.0, %v691
      %v693 = vpop.f32.mrb[0].mxu0
      %v694 = vpop.f32.mrb[0].mxu0
      %v695 = vpop.f32.mrb[0].mxu0
      %696 = vdwg.mxu0
      %v697 = vmul.f32 %v692, 0.125
      %v698 = vadd.f32 %v697, %v644
      %vm699 = vcmask 64512
      %v700 = vsel %vm699, %v698, -inf
      %701 = vmax.xlane.f32.xlu0 %v700
      %v702 = vpop.xlane.xlu0 %701
      %v703 = vsub.f32 %v698, %v702
      %v704 = vmul.f32 %v703, 1.442695
      %v705 = vpow.pop %v704
      %v706 = vsel %vm699, %v705, 0.0
      %707 = vadd.xlane.f32.xlu0 %v706
      %v708 = vpop.xlane.xlu0 %707
      %v709 = vrcp.pop %v708
      %v710 = vmul.f32 %v705, %v709
      %v711 = vpack.c.bf16 %v710, %v710
      %v712 = vpack.c.bf16 %v647, %v647
      %v714 = vsel %vm699, %v711, 0
      %vm716 = vcmask 1043456
      %v718 = vsel %vm716, %v712, 0
      %720 = vmatprep.subr.bf16.mxu0 0
      %721 = vmatpush1.bf16.msra.mxu0 %v718
      %722 = vmatprep.subr.bf16.mxu0 0
      %723 = vmatpush1.bf16.msra.mxu0 0
      %724 = vmatprep.subr.bf16.mxu0 0
      %725 = vmatpush1.bf16.msra.mxu0 0
      %726 = vmatprep.subr.bf16.mxu0 0
      %727 = vmatpush1.bf16.msra.mxu0 0
      %728 = vmatprep.subr.bf16.mxu0 0
      %729 = vmatpush1.bf16.msra.mxu0 0
      %730 = vmatprep.subr.bf16.mxu0 0
      %731 = vmatpush1.bf16.msra.mxu0 0
      %732 = vmatprep.subr.bf16.mxu0 0
      %733 = vmatpush1.bf16.msra.mxu0 0
      %734 = vmatprep.subr.bf16.mxu0 0
      %735 = vmatpush1.bf16.msra.mxu0 0
      %736 = vmatprep.subr.bf16.mxu0 0
      %737 = vmatpush1.bf16.msra.mxu0 0
      %738 = vmatprep.subr.bf16.mxu0 0
      %739 = vmatpush1.bf16.msra.mxu0 0
      %740 = vmatprep.subr.bf16.mxu0 0
      %741 = vmatpush1.bf16.msra.mxu0 0
      %742 = vmatprep.subr.bf16.mxu0 0
      %743 = vmatpush1.bf16.msra.mxu0 0
      %744 = vmatprep.subr.bf16.mxu0 0
      %745 = vmatpush1.bf16.msra.mxu0 0
      %746 = vmatprep.subr.bf16.mxu0 0
      %747 = vmatpush1.bf16.msra.mxu0 0
      %748 = vmatprep.subr.bf16.mxu0 0
      %749 = vmatpush1.bf16.msra.mxu0 0
      %750 = vmatprep.subr.bf16.mxu0 0
      %751 = vmatpush1.bf16.msra.mxu0 0
      %752 = vmatprep.mubr.bf16.mxu0 0
      %753 = vmatmul.mubr.bf16.gmra.mrb[0].mxu0 %v714
      %v754 = vpop.f32.mrb[0].mxu0
      %v755 = vadd.f32 0.0, %v754
      %v756 = vpop.f32.mrb[0].mxu0
      %v757 = vpop.f32.mrb[0].mxu0
      %v758 = vpop.f32.mrb[0].mxu0
      %759 = vdwg.mxu0
      %760 = vst.msk [vmem:[#allocation3] sm:$0xff] %vm650, %v755
      %v761 = vld [vmem:[#allocation2] sm:$0xff]
      %v762 = vld [vmem:[#allocation2 + $0x8] sm:$0xff]
      %v763 = vld [vmem:[#allocation2 + $0x10] sm:$0xff]
      %v764 = vpack.c.bf16 %v761, %v761
      %v765 = vpack.c.bf16 %v762, %v762
      %767 = vrot.lane.b32.xlu0 %v764, 64
      %v768 = vpop.permute.xlu0 %767
      %770 = vrot.lane.b32.xlu0 %v765, 64
      %v771 = vpop.permute.xlu0 %770
      %v773 = vsel %vm650, %v768, 0
      %v776 = vsel %vm650, %v771, 0
      %778 = vmatprep.subr.bf16.mxu0 0
      %779 = vmatpush1.bf16.xpose.msra.mxu0 %v776
      %780 = vmatprep.subr.bf16.mxu0 0
      %781 = vmatpush1.bf16.xpose.msra.mxu0 0
      %782 = vmatprep.subr.bf16.mxu0 0
      %783 = vmatpush1.bf16.xpose.msra.mxu0 0
      %784 = vmatprep.subr.bf16.mxu0 0
      %785 = vmatpush1.bf16.xpose.msra.mxu0 0
      %786 = vmatprep.subr.bf16.mxu0 0
      %787 = vmatpush1.bf16.xpose.msra.mxu0 0
      %788 = vmatprep.subr.bf16.mxu0 0
      %789 = vmatpush1.bf16.xpose.msra.mxu0 0
      %790 = vmatprep.subr.bf16.mxu0 0
      %791 = vmatpush1.bf16.xpose.msra.mxu0 0
      %792 = vmatprep.subr.bf16.mxu0 0
      %793 = vmatpush1.bf16.xpose.msra.mxu0 0
      %794 = vmatprep.subr.bf16.mxu0 0
      %795 = vmatpush1.bf16.xpose.msra.mxu0 0
      %796 = vmatprep.subr.bf16.mxu0 0
      %797 = vmatpush1.bf16.xpose.msra.mxu0 0
      %798 = vmatprep.subr.bf16.mxu0 0
      %799 = vmatpush1.bf16.xpose.msra.mxu0 0
      %800 = vmatprep.subr.bf16.mxu0 0
      %801 = vmatpush1.bf16.xpose.msra.mxu0 0
      %802 = vmatprep.subr.bf16.mxu0 0
      %803 = vmatpush1.bf16.xpose.msra.mxu0 0
      %804 = vmatprep.subr.bf16.mxu0 0
      %805 = vmatpush1.bf16.xpose.msra.mxu0 0
      %806 = vmatprep.subr.bf16.mxu0 0
      %807 = vmatpush1.bf16.xpose.msra.mxu0 0
      %808 = vmatprep.subr.bf16.mxu0 0
      %809 = vmatpush1.bf16.xpose.msra.mxu0 0
      %810 = vmatprep.mubr.bf16.mxu0 0
      %811 = vmatmul.mubr.bf16.gmra.mrb[0].mxu0 %v773
      %v812 = vpop.f32.mrb[0].mxu0
      %v813 = vadd.f32 0.0, %v812
      %v814 = vpop.f32.mrb[0].mxu0
      %v815 = vpop.f32.mrb[0].mxu0
      %v816 = vpop.f32.mrb[0].mxu0
      %817 = vdwg.mxu0
      %v818 = vmul.f32 %v813, 0.125
      %v819 = vadd.f32 %v818, %v644
      %v820 = vsel %vm699, %v819, -inf
      %821 = vmax.xlane.f32.xlu0 %v820
      %v822 = vpop.xlane.xlu0 %821
      %v823 = vsub.f32 %v819, %v822
      %v824 = vmul.f32 %v823, 1.442695
      %v825 = vpow.pop %v824
      %v826 = vsel %vm699, %v825, 0.0
      %827 = vadd.xlane.f32.xlu0 %v826
      %v828 = vpop.xlane.xlu0 %827
      %v829 = vrcp.pop %v828
      %v830 = vmul.f32 %v825, %v829
      %v831 = vpack.c.bf16 %v830, %v830
      %v832 = vpack.c.bf16 %v763, %v763
      %834 = vrot.lane.b32.xlu0 %v832, 64
      %v835 = vpop.permute.xlu0 %834
      %v837 = vsel %vm699, %v831, 0
      %v840 = vsel %vm716, %v835, 0
      %842 = vmatprep.subr.bf16.mxu0 0
      %843 = vmatpush1.bf16.msra.mxu0 %v840
      %844 = vmatprep.subr.bf16.mxu0 0
      %845 = vmatpush1.bf16.msra.mxu0 0
      %846 = vmatprep.subr.bf16.mxu0 0
      %847 = vmatpush1.bf16.msra.mxu0 0
      %848 = vmatprep.subr.bf16.mxu0 0
      %849 = vmatpush1.bf16.msra.mxu0 0
      %850 = vmatprep.subr.bf16.mxu0 0
      %851 = vmatpush1.bf16.msra.mxu0 0
      %852 = vmatprep.subr.bf16.mxu0 0
      %853 = vmatpush1.bf16.msra.mxu0 0
      %854 = vmatprep.subr.bf16.mxu0 0
      %855 = vmatpush1.bf16.msra.mxu0 0
      %856 = vmatprep.subr.bf16.mxu0 0
      %857 = vmatpush1.bf16.msra.mxu0 0
      %858 = vmatprep.subr.bf16.mxu0 0
      %859 = vmatpush1.bf16.msra.mxu0 0
      %860 = vmatprep.subr.bf16.mxu0 0
      %861 = vmatpush1.bf16.msra.mxu0 0
      %862 = vmatprep.subr.bf16.mxu0 0
      %863 = vmatpush1.bf16.msra.mxu0 0
      %864 = vmatprep.subr.bf16.mxu0 0
      %865 = vmatpush1.bf16.msra.mxu0 0
      %866 = vmatprep.subr.bf16.mxu0 0
      %867 = vmatpush1.bf16.msra.mxu0 0
      %868 = vmatprep.subr.bf16.mxu0 0
      %869 = vmatpush1.bf16.msra.mxu0 0
      %870 = vmatprep.subr.bf16.mxu0 0
      %871 = vmatpush1.bf16.msra.mxu0 0
      %872 = vmatprep.subr.bf16.mxu0 0
      %873 = vmatpush1.bf16.msra.mxu0 0
      %874 = vmatprep.mubr.bf16.mxu0 0
      %875 = vmatmul.mubr.bf16.gmra.mrb[0].mxu0 %v837
      %v876 = vpop.f32.mrb[0].mxu0
      %v877 = vadd.f32 0.0, %v876
      %v878 = vpop.f32.mrb[0].mxu0
      %v879 = vpop.f32.mrb[0].mxu0
      %v880 = vpop.f32.mrb[0].mxu0
      %881 = vdwg.mxu0
      %883 = vrot.lane.b32.xlu0 %v877, 64
      %v884 = vpop.permute.xlu0 %883
      %vm886 = vcmask 1048064
      %887 = vst.msk [vmem:[#allocation3] sm:$0xff] %vm886, %v884
      %v888 = vld [vmem:[#allocation3] sm:$0xff]
      %v889 = vld [vmem:[%s5] sm:$0xff]
      %v890 = vld [vmem:[%s5 + $0x8] sm:$0xff]
      %v891 = vld [vmem:[%s5 + $0x10] sm:$0xff]
      %v892 = vld [vmem:[%s5 + $0x18] sm:$0xff]
      %v893 = vld [vmem:[%s5 + $0x20] sm:$0xff]
      %v894 = vld [vmem:[%s5 + $0x28] sm:$0xff]
      %v895 = vld [vmem:[%s5 + $0x30] sm:$0xff]
      %v896 = vld [vmem:[%s5 + $0x38] sm:$0xff]
      %v897 = vld [vmem:[%s5 + $0x40] sm:$0xff]
      %v898 = vld [vmem:[%s5 + $0x48] sm:$0xff]
      %v899 = vld [vmem:[%s5 + $0x50] sm:$0xff]
      %v900 = vld [vmem:[%s5 + $0x58] sm:$0xff]
      %v901 = vld [vmem:[%s5 + $0x60] sm:$0xff]
      %v902 = vld [vmem:[%s5 + $0x68] sm:$0xff]
      %v903 = vld [vmem:[%s5 + $0x70] sm:$0xff]
      %v904 = vld [vmem:[%s5 + $0x78] sm:$0xff]
      %v905 = vpack.c.bf16 %v888, %v888
      %v906 = vpack.c.bf16 %v890, %v889
      %v907 = vpack.c.bf16 %v892, %v891
      %v908 = vpack.c.bf16 %v894, %v893
      %v909 = vpack.c.bf16 %v896, %v895
      %v910 = vpack.c.bf16 %v898, %v897
      %v911 = vpack.c.bf16 %v900, %v899
      %v912 = vpack.c.bf16 %v902, %v901
      %v913 = vpack.c.bf16 %v904, %v903
      %914 = vmatprep.subr.bf16.mxu0 0
      %915 = vmatpush1.bf16.msra.mxu0 %v906
      %916 = vmatprep.subr.bf16.mxu0 0
      %917 = vmatpush1.bf16.msra.mxu0 %v907
      %918 = vmatprep.subr.bf16.mxu0 0
      %919 = vmatpush1.bf16.msra.mxu0 %v908
      %920 = vmatprep.subr.bf16.mxu0 0
      %921 = vmatpush1.bf16.msra.mxu0 %v909
      %922 = vmatprep.subr.bf16.mxu0 0
      %923 = vmatpush1.bf16.msra.mxu0 %v910
      %924 = vmatprep.subr.bf16.mxu0 0
      %925 = vmatpush1.bf16.msra.mxu0 %v911
      %926 = vmatprep.subr.bf16.mxu0 0
      %927 = vmatpush1.bf16.msra.mxu0 %v912
      %928 = vmatprep.subr.bf16.mxu0 0
      %929 = vmatpush1.bf16.msra.mxu0 %v913
      %930 = vmatprep.subr.bf16.mxu0 0
      %931 = vmatpush1.bf16.msra.mxu0 0
      %932 = vmatprep.subr.bf16.mxu0 0
      %933 = vmatpush1.bf16.msra.mxu0 0
      %934 = vmatprep.subr.bf16.mxu0 0
      %935 = vmatpush1.bf16.msra.mxu0 0
      %936 = vmatprep.subr.bf16.mxu0 0
      %937 = vmatpush1.bf16.msra.mxu0 0
      %938 = vmatprep.subr.bf16.mxu0 0
      %939 = vmatpush1.bf16.msra.mxu0 0
      %940 = vmatprep.subr.bf16.mxu0 0
      %941 = vmatpush1.bf16.msra.mxu0 0
      %942 = vmatprep.subr.bf16.mxu0 0
      %943 = vmatpush1.bf16.msra.mxu0 0
      %944 = vmatprep.subr.bf16.mxu0 0
      %945 = vmatpush1.bf16.msra.mxu0 0
      %946 = vmatprep.mubr.bf16.mxu0 0
      %947 = vmatmul.mubr.bf16.gmra.mrb[0].mxu0 %v905
      %v948 = vpop.f32.mrb[0].mxu0
      %v949 = vadd.f32 0.0, %v948
      %v950 = vpop.f32.mrb[0].mxu0
      %v951 = vpop.f32.mrb[0].mxu0
      %v952 = vpop.f32.mrb[0].mxu0
      %953 = vdwg.mxu0
      %v954 = vadd.f32 %v437, %v949
      %v955 = vld [vmem:[%s6] sm:$0x1]
      %v957 = vlaneseq
      %v958 = vshrl.u32 %v957, 7
      %v959 = vsub.s32 0, %v958
      %v960 = vrot.slane %v955, %v959
      %v962 = vadd.f32 %v954, %v960
      %v963 = vld [vmem:[%s7] sm:$0x1]
      %v964 = vld [vmem:[%s8] sm:$0x1]
      %965 = vadd.xlane.f32.xlu0 %v962
      %v966 = vpop.xlane.xlu0 %965
      %v967 = vmul.f32 %v966, 0.0078125
      %v968 = vsub.f32 %v962, %v967
      %v969 = vmul.f32 %v968, %v968
      %970 = vadd.xlane.f32.xlu0 %v969
      %v971 = vpop.xlane.xlu0 %970
      %v972 = vmul.f32 %v971, 0.0078125
      %v973 = vadd.f32 %v972, 1e-05
      %v974 = vrsqrt.pop %v973
      %v975 = vmul.f32 %v968, %v974
      %v977 = vlaneseq
      %v978 = vshrl.u32 %v977, 7
      %v979 = vsub.s32 0, %v978
      %v980 = vrot.slane %v963, %v979
      %v982 = vmul.f32 %v975, %v980
      %v984 = vlaneseq
      %v985 = vshrl.u32 %v984, 7
      %v986 = vsub.s32 0, %v985
      %v987 = vrot.slane %v964, %v986
      %v989 = vadd.f32 %v982, %v987
      %v990 = vld [vmem:[%s9] sm:$0xff]
      %v991 = vld [vmem:[%s9 + $0x8] sm:$0xff]
      %v992 = vld [vmem:[%s9 + $0x10] sm:$0xff]
      %v993 = vld [vmem:[%s9 + $0x18] sm:$0xff]
      %v994 = vld [vmem:[%s9 + $0x20] sm:$0xff]
      %v995 = vld [vmem:[%s9 + $0x28] sm:$0xff]
      %v996 = vld [vmem:[%s9 + $0x30] sm:$0xff]
      %v997 = vld [vmem:[%s9 + $0x38] sm:$0xff]
      %v998 = vld [vmem:[%s9 + $0x40] sm:$0xff]
      %v999 = vld [vmem:[%s9 + $0x48] sm:$0xff]
      %v1000 = vld [vmem:[%s9 + $0x50] sm:$0xff]
      %v1001 = vld [vmem:[%s9 + $0x58] sm:$0xff]
      %v1002 = vld [vmem:[%s9 + $0x60] sm:$0xff]
      %v1003 = vld [vmem:[%s9 + $0x68] sm:$0xff]
      %v1004 = vld [vmem:[%s9 + $0x70] sm:$0xff]
      %v1005 = vld [vmem:[%s9 + $0x78] sm:$0xff]
      %v1006 = vld [vmem:[%s9 + $0x80] sm:$0xff]
      %v1007 = vld [vmem:[%s9 + $0x88] sm:$0xff]
      %v1008 = vld [vmem:[%s9 + $0x90] sm:$0xff]
      %v1009 = vld [vmem:[%s9 + $0x98] sm:$0xff]
      %v1010 = vld [vmem:[%s9 + $0xa0] sm:$0xff]
      %v1011 = vld [vmem:[%s9 + $0xa8] sm:$0xff]
      %v1012 = vld [vmem:[%s9 + $0xb0] sm:$0xff]
      %v1013 = vld [vmem:[%s9 + $0xb8] sm:$0xff]
      %v1014 = vld [vmem:[%s9 + $0xc0] sm:$0xff]
      %v1015 = vld [vmem:[%s9 + $0xc8] sm:$0xff]
      %v1016 = vld [vmem:[%s9 + $0xd0] sm:$0xff]
      %v1017 = vld [vmem:[%s9 + $0xd8] sm:$0xff]
      %v1018 = vld [vmem:[%s9 + $0xe0] sm:$0xff]
      %v1019 = vld [vmem:[%s9 + $0xe8] sm:$0xff]
      %v1020 = vld [vmem:[%s9 + $0xf0] sm:$0xff]
      %v1021 = vld [vmem:[%s9 + $0xf8] sm:$0xff]
      %v1022 = vld [vmem:[%s9 + $0x100] sm:$0xff]
      %v1023 = vld [vmem:[%s9 + $0x108] sm:$0xff]
      %v1024 = vld [vmem:[%s9 + $0x110] sm:$0xff]
      %v1025 = vld [vmem:[%s9 + $0x118] sm:$0xff]
      %v1026 = vld [vmem:[%s9 + $0x120] sm:$0xff]
      %v1027 = vld [vmem:[%s9 + $0x128] sm:$0xff]
      %v1028 = vld [vmem:[%s9 + $0x130] sm:$0xff]
      %v1029 = vld [vmem:[%s9 + $0x138] sm:$0xff]
      %v1030 = vld [vmem:[%s9 + $0x140] sm:$0xff]
      %v1031 = vld [vmem:[%s9 + $0x148] sm:$0xff]
      %v1032 = vld [vmem:[%s9 + $0x150] sm:$0xff]
      %v1033 = vld [vmem:[%s9 + $0x158] sm:$0xff]
      %v1034 = vld [vmem:[%s9 + $0x160] sm:$0xff]
      %v1035 = vld [vmem:[%s9 + $0x168] sm:$0xff]
      %v1036 = vld [vmem:[%s9 + $0x170] sm:$0xff]
      %v1037 = vld [vmem:[%s9 + $0x178] sm:$0xff]
      %v1038 = vld [vmem:[%s9 + $0x180] sm:$0xff]
      %v1039 = vld [vmem:[%s9 + $0x188] sm:$0xff]
      %v1040 = vld [vmem:[%s9 + $0x190] sm:$0xff]
      %v1041 = vld [vmem:[%s9 + $0x198] sm:$0xff]
      %v1042 = vld [vmem:[%s9 + $0x1a0] sm:$0xff]
      %v1043 = vld [vmem:[%s9 + $0x1a8] sm:$0xff]
      %v1044 = vld [vmem:[%s9 + $0x1b0] sm:$0xff]
      %v1045 = vld [vmem:[%s9 + $0x1b8] sm:$0xff]
      %v1046 = vld [vmem:[%s9 + $0x1c0] sm:$0xff]
      %v1047 = vld [vmem:[%s9 + $0x1c8] sm:$0xff]
      %v1048 = vld [vmem:[%s9 + $0x1d0] sm:$0xff]
      %v1049 = vld [vmem:[%s9 + $0x1d8] sm:$0xff]
      %v1050 = vld [vmem:[%s9 + $0x1e0] sm:$0xff]
      %v1051 = vld [vmem:[%s9 + $0x1e8] sm:$0xff]
      %v1052 = vld [vmem:[%s9 + $0x1f0] sm:$0xff]
      %v1053 = vld [vmem:[%s9 + $0x1f8] sm:$0xff]
      %v1054 = vpack.c.bf16 %v989, %v989
      %v1055 = vpack.c.bf16 %v994, %v990
      %v1056 = vpack.c.bf16 %v995, %v991
      %v1057 = vpack.c.bf16 %v996, %v992
      %v1058 = vpack.c.bf16 %v997, %v993
      %v1059 = vpack.c.bf16 %v1002, %v998
      %v1060 = vpack.c.bf16 %v1003, %v999
      %v1061 = vpack.c.bf16 %v1004, %v1000
      %v1062 = vpack.c.bf16 %v1005, %v1001
      %v1063 = vpack.c.bf16 %v1010, %v1006
      %v1064 = vpack.c.bf16 %v1011, %v1007
      %v1065 = vpack.c.bf16 %v1012, %v1008
      %v1066 = vpack.c.bf16 %v1013, %v1009
      %v1067 = vpack.c.bf16 %v1018, %v1014
      %v1068 = vpack.c.bf16 %v1019, %v1015
      %v1069 = vpack.c.bf16 %v1020, %v1016
      %v1070 = vpack.c.bf16 %v1021, %v1017
      %v1071 = vpack.c.bf16 %v1026, %v1022
      %v1072 = vpack.c.bf16 %v1027, %v1023
      %v1073 = vpack.c.bf16 %v1028, %v1024
      %v1074 = vpack.c.bf16 %v1029, %v1025
      %v1075 = vpack.c.bf16 %v1034, %v1030
      %v1076 = vpack.c.bf16 %v1035, %v1031
      %v1077 = vpack.c.bf16 %v1036, %v1032
      %v1078 = vpack.c.bf16 %v1037, %v1033
      %v1079 = vpack.c.bf16 %v1042, %v1038
      %v1080 = vpack.c.bf16 %v1043, %v1039
      %v1081 = vpack.c.bf16 %v1044, %v1040
      %v1082 = vpack.c.bf16 %v1045, %v1041
      %v1083 = vpack.c.bf16 %v1050, %v1046
      %v1084 = vpack.c.bf16 %v1051, %v1047
      %v1085 = vpack.c.bf16 %v1052, %v1048
      %v1086 = vpack.c.bf16 %v1053, %v1049
      %v1087 = vld [vmem:[%s10] sm:$0xf]
      %v1089 = vlaneseq
      %v1090 = vshrl.u32 %v1089, 7
      %v1091 = vsub.s32 0, %v1090
      %v1092 = vrot.slane %v1087, %v1091
      %v1093 = vlaneseq
      %v1094 = vshrl.u32 %v1093, 7
      %v1095 = vsub.s32 1, %v1094
      %v1096 = vrot.slane %v1087, %v1095
      %v1097 = vlaneseq
      %v1098 = vshrl.u32 %v1097, 7
      %v1099 = vsub.s32 2, %v1098
      %v1100 = vrot.slane %v1087, %v1099
      %v1101 = vlaneseq
      %v1102 = vshrl.u32 %v1101, 7
      %v1103 = vsub.s32 3, %v1102
      %v1104 = vrot.slane %v1087, %v1103
      %1109 = vmatprep.subr.bf16.mxu0 %v1056
      %1110 = vmatpush1.bf16.msra.mxu0 %v1055
      %1111 = vmatprep.subr.bf16.mxu0 %v1060
      %1112 = vmatpush1.bf16.msra.mxu0 %v1059
      %1113 = vmatprep.subr.bf16.mxu0 %v1064
      %1114 = vmatpush1.bf16.msra.mxu0 %v1063
      %1115 = vmatprep.subr.bf16.mxu0 %v1068
      %1116 = vmatpush1.bf16.msra.mxu0 %v1067
      %1117 = vmatprep.subr.bf16.mxu0 %v1072
      %1118 = vmatpush1.bf16.msra.mxu0 %v1071
      %1119 = vmatprep.subr.bf16.mxu0 %v1076
      %1120 = vmatpush1.bf16.msra.mxu0 %v1075
      %1121 = vmatprep.subr.bf16.mxu0 %v1080
      %1122 = vmatpush1.bf16.msra.mxu0 %v1079
      %1123 = vmatprep.subr.bf16.mxu0 %v1084
      %1124 = vmatpush1.bf16.msra.mxu0 %v1083
      %1125 = vmatprep.subr.bf16.mxu0 0
      %1126 = vmatpush1.bf16.msra.mxu0 0
      %1127 = vmatprep.subr.bf16.mxu0 0
      %1128 = vmatpush1.bf16.msra.mxu0 0
      %1129 = vmatprep.subr.bf16.mxu0 0
      %1130 = vmatpush1.bf16.msra.mxu0 0
      %1131 = vmatprep.subr.bf16.mxu0 0
      %1132 = vmatpush1.bf16.msra.mxu0 0
      %1133 = vmatprep.subr.bf16.mxu0 0
      %1134 = vmatpush1.bf16.msra.mxu0 0
      %1135 = vmatprep.subr.bf16.mxu0 0
      %1136 = vmatpush1.bf16.msra.mxu0 0
      %1137 = vmatprep.subr.bf16.mxu0 0
      %1138 = vmatpush1.bf16.msra.mxu0 0
      %1139 = vmatprep.subr.bf16.mxu0 0
      %1140 = vmatpush1.bf16.msra.mxu0 0
      %1141 = vmatprep.mubr.bf16.mxu0 0
      %1142 = vmatmul.mubr.bf16.gmra.mrb[0].mxu0 %v1054
      %v1143 = vpop.f32.mrb[0].mxu0
      %v1144 = vadd.f32 %v1092, %v1143
      %v1145 = vpop.f32.mrb[0].mxu0
      %v1146 = vadd.f32 %v1096, %v1145
      %v1147 = vpop.f32.mrb[0].mxu0
      %v1148 = vpop.f32.mrb[0].mxu0
      %1149 = vdwg.mxu0
      %1150 = vmatprep.subr.bf16.mxu0 %v1058
      %1151 = vmatpush1.bf16.msra.mxu0 %v1057
      %1152 = vmatprep.subr.bf16.mxu0 %v1062
      %1153 = vmatpush1.bf16.msra.mxu0 %v1061
      %1154 = vmatprep.subr.bf16.mxu0 %v1066
      %1155 = vmatpush1.bf16.msra.mxu0 %v1065
      %1156 = vmatprep.subr.bf16.mxu0 %v1070
      %1157 = vmatpush1.bf16.msra.mxu0 %v1069
      %1158 = vmatprep.subr.bf16.mxu0 %v1074
      %1159 = vmatpush1.bf16.msra.mxu0 %v1073
      %1160 = vmatprep.subr.bf16.mxu0 %v1078
      %1161 = vmatpush1.bf16.msra.mxu0 %v1077
      %1162 = vmatprep.subr.bf16.mxu0 %v1082
      %1163 = vmatpush1.bf16.msra.mxu0 %v1081
      %1164 = vmatprep.subr.bf16.mxu0 %v1086
      %1165 = vmatpush1.bf16.msra.mxu0 %v1085
      %1166 = vmatprep.subr.bf16.mxu0 0
      %1167 = vmatpush1.bf16.msra.mxu0 0
      %1168 = vmatprep.subr.bf16.mxu0 0
      %1169 = vmatpush1.bf16.msra.mxu0 0
      %1170 = vmatprep.subr.bf16.mxu0 0
      %1171 = vmatpush1.bf16.msra.mxu0 0
      %1172 = vmatprep.subr.bf16.mxu0 0
      %1173 = vmatpush1.bf16.msra.mxu0 0
      %1174 = vmatprep.subr.bf16.mxu0 0
      %1175 = vmatpush1.bf16.msra.mxu0 0
      %1176 = vmatprep.subr.bf16.mxu0 0
      %1177 = vmatpush1.bf16.msra.mxu0 0
      %1178 = vmatprep.subr.bf16.mxu0 0
      %1179 = vmatpush1.bf16.msra.mxu0 0
      %1180 = vmatprep.subr.bf16.mxu0 0
      %1181 = vmatpush1.bf16.msra.mxu0 0
      %1182 = vmatprep.mubr.bf16.mxu0 0
      %1183 = vmatmul.mubr.bf16.gmra.mrb[0].mxu0 %v1054
      %v1184 = vpop.f32.mrb[0].mxu0
      %v1185 = vadd.f32 %v1100, %v1184
      %v1186 = vpop.f32.mrb[0].mxu0
      %v1187 = vadd.f32 %v1104, %v1186
      %v1188 = vpop.f32.mrb[0].mxu0
      %v1189 = vpop.f32.mrb[0].mxu0
      %1190 = vdwg.mxu0
      %v1191 = vmul.f32 %v1144, 1.702
      %v1192 = vmul.f32 %v1146, 1.702
      %v1193 = vmul.f32 %v1185, 1.702
      %v1194 = vmul.f32 %v1187, 1.702
      %v1195 = vxor.u32 %v1191, 2147483648
      %v1196 = vxor.u32 %v1192, 2147483648
      %v1197 = vxor.u32 %v1193, 2147483648
      %v1198 = vxor.u32 %v1194, 2147483648
      %v1199 = vmul.f32 %v1195, 1.442695
      %v1200 = vpow.pop %v1199
      %v1201 = vmul.f32 %v1196, 1.442695
      %v1202 = vpow.pop %v1201
      %v1203 = vmul.f32 %v1197, 1.442695
      %v1204 = vpow.pop %v1203
      %v1205 = vmul.f32 %v1198, 1.442695
      %v1206 = vpow.pop %v1205
      %v1207 = vadd.f32 %v1200, 1.0
      %v1208 = vadd.f32 %v1202, 1.0
      %v1209 = vadd.f32 %v1204, 1.0
      %v1210 = vadd.f32 %v1206, 1.0
      %v1211 = vrcp.pop %v1207
      %v1212 = vmul.f32 1.0, %v1211
      %v1213 = vrcp.pop %v1208
      %v1214 = vmul.f32 1.0, %v1213
      %v1215 = vrcp.pop %v1209
      %v1216 = vmul.f32 1.0, %v1215
      %v1217 = vrcp.pop %v1210
      %v1218 = vmul.f32 1.0, %v1217
      %v1219 = vmul.f32 %v1144, %v1212
      %v1220 = vmul.f32 %v1146, %v1214
      %v1221 = vmul.f32 %v1185, %v1216
      %v1222 = vmul.f32 %v1187, %v1218
      %v1223 = vld [vmem:[%s11] sm:$0xff]
      %v1224 = vld [vmem:[%s11 + $0x8] sm:$0xff]
      %v1225 = vld [vmem:[%s11 + $0x10] sm:$0xff]
      %v1226 = vld [vmem:[%s11 + $0x18] sm:$0xff]
      %v1227 = vld [vmem:[%s11 + $0x20] sm:$0xff]
      %v1228 = vld [vmem:[%s11 + $0x28] sm:$0xff]
      %v1229 = vld [vmem:[%s11 + $0x30] sm:$0xff]
      %v1230 = vld [vmem:[%s11 + $0x38] sm:$0xff]
      %v1231 = vld [vmem:[%s11 + $0x40] sm:$0xff]
      %v1232 = vld [vmem:[%s11 + $0x48] sm:$0xff]
      %v1233 = vld [vmem:[%s11 + $0x50] sm:$0xff]
      %v1234 = vld [vmem:[%s11 + $0x58] sm:$0xff]
      %v1235 = vld [vmem:[%s11 + $0x60] sm:$0xff]
      %v1236 = vld [vmem:[%s11 + $0x68] sm:$0xff]
      %v1237 = vld [vmem:[%s11 + $0x70] sm:$0xff]
      %v1238 = vld [vmem:[%s11 + $0x78] sm:$0xff]
      %v1239 = vld [vmem:[%s11 + $0x80] sm:$0xff]
      %v1240 = vld [vmem:[%s11 + $0x88] sm:$0xff]
      %v1241 = vld [vmem:[%s11 + $0x90] sm:$0xff]
      %v1242 = vld [vmem:[%s11 + $0x98] sm:$0xff]
      %v1243 = vld [vmem:[%s11 + $0xa0] sm:$0xff]
      %v1244 = vld [vmem:[%s11 + $0xa8] sm:$0xff]
      %v1245 = vld [vmem:[%s11 + $0xb0] sm:$0xff]
      %v1246 = vld [vmem:[%s11 + $0xb8] sm:$0xff]
      %v1247 = vld [vmem:[%s11 + $0xc0] sm:$0xff]
      %v1248 = vld [vmem:[%s11 + $0xc8] sm:$0xff]
      %v1249 = vld [vmem:[%s11 + $0xd0] sm:$0xff]
      %v1250 = vld [vmem:[%s11 + $0xd8] sm:$0xff]
      %v1251 = vld [vmem:[%s11 + $0xe0] sm:$0xff]
      %v1252 = vld [vmem:[%s11 + $0xe8] sm:$0xff]
      %v1253 = vld [vmem:[%s11 + $0xf0] sm:$0xff]
      %v1254 = vld [vmem:[%s11 + $0xf8] sm:$0xff]
      %v1255 = vld [vmem:[%s11 + $0x100] sm:$0xff]
      %v1256 = vld [vmem:[%s11 + $0x108] sm:$0xff]
      %v1257 = vld [vmem:[%s11 + $0x110] sm:$0xff]
      %v1258 = vld [vmem:[%s11 + $0x118] sm:$0xff]
      %v1259 = vld [vmem:[%s11 + $0x120] sm:$0xff]
      %v1260 = vld [vmem:[%s11 + $0x128] sm:$0xff]
      %v1261 = vld [vmem:[%s11 + $0x130] sm:$0xff]
      %v1262 = vld [vmem:[%s11 + $0x138] sm:$0xff]
      %v1263 = vld [vmem:[%s11 + $0x140] sm:$0xff]
      %v1264 = vld [vmem:[%s11 + $0x148] sm:$0xff]
      %v1265 = vld [vmem:[%s11 + $0x150] sm:$0xff]
      %v1266 = vld [vmem:[%s11 + $0x158] sm:$0xff]
      %v1267 = vld [vmem:[%s11 + $0x160] sm:$0xff]
      %v1268 = vld [vmem:[%s11 + $0x168] sm:$0xff]
      %v1269 = vld [vmem:[%s11 + $0x170] sm:$0xff]
      %v1270 = vld [vmem:[%s11 + $0x178] sm:$0xff]
      %v1271 = vld [vmem:[%s11 + $0x180] sm:$0xff]
      %v1272 = vld [vmem:[%s11 + $0x188] sm:$0xff]
      %v1273 = vld [vmem:[%s11 + $0x190] sm:$0xff]
      %v1274 = vld [vmem:[%s11 + $0x198] sm:$0xff]
      %v1275 = vld [vmem:[%s11 + $0x1a0] sm:$0xff]
      %v1276 = vld [vmem:[%s11 + $0x1a8] sm:$0xff]
      %v1277 = vld [vmem:[%s11 + $0x1b0] sm:$0xff]
      %v1278 = vld [vmem:[%s11 + $0x1b8] sm:$0xff]
      %v1279 = vld [vmem:[%s11 + $0x1c0] sm:$0xff]
      %v1280 = vld [vmem:[%s11 + $0x1c8] sm:$0xff]
      %v1281 = vld [vmem:[%s11 + $0x1d0] sm:$0xff]
      %v1282 = vld [vmem:[%s11 + $0x1d8] sm:$0xff]
      %v1283 = vld [vmem:[%s11 + $0x1e0] sm:$0xff]
      %v1284 = vld [vmem:[%s11 + $0x1e8] sm:$0xff]
      %v1285 = vld [vmem:[%s11 + $0x1f0] sm:$0xff]
      %v1286 = vld [vmem:[%s11 + $0x1f8] sm:$0xff]
      %v1287 = vpack.c.bf16 %v1219, %v1219
      %v1288 = vpack.c.bf16 %v1220, %v1220
      %v1289 = vpack.c.bf16 %v1221, %v1221
      %v1290 = vpack.c.bf16 %v1222, %v1222
      %v1291 = vpack.c.bf16 %v1224, %v1223
      %v1292 = vpack.c.bf16 %v1226, %v1225
      %v1293 = vpack.c.bf16 %v1228, %v1227
      %v1294 = vpack.c.bf16 %v1230, %v1229
      %v1295 = vpack.c.bf16 %v1232, %v1231
      %v1296 = vpack.c.bf16 %v1234, %v1233
      %v1297 = vpack.c.bf16 %v1236, %v1235
      %v1298 = vpack.c.bf16 %v1238, %v1237
      %v1299 = vpack.c.bf16 %v1240, %v1239
      %v1300 = vpack.c.bf16 %v1242, %v1241
      %v1301 = vpack.c.bf16 %v1244, %v1243
      %v1302 = vpack.c.bf16 %v1246, %v1245
      %v1303 = vpack.c.bf16 %v1248, %v1247
      %v1304 = vpack.c.bf16 %v1250, %v1249
      %v1305 = vpack.c.bf16 %v1252, %v1251
      %v1306 = vpack.c.bf16 %v1254, %v1253
      %v1307 = vpack.c.bf16 %v1256, %v1255
      %v1308 = vpack.c.bf16 %v1258, %v1257
      %v1309 = vpack.c.bf16 %v1260, %v1259
      %v1310 = vpack.c.bf16 %v1262, %v1261
      %v1311 = vpack.c.bf16 %v1264, %v1263
      %v1312 = vpack.c.bf16 %v1266, %v1265
      %v1313 = vpack.c.bf16 %v1268, %v1267
      %v1314 = vpack.c.bf16 %v1270, %v1269
      %v1315 = vpack.c.bf16 %v1272, %v1271
      %v1316 = vpack.c.bf16 %v1274, %v1273
      %v1317 = vpack.c.bf16 %v1276, %v1275
      %v1318 = vpack.c.bf16 %v1278, %v1277
      %v1319 = vpack.c.bf16 %v1280, %v1279
      %v1320 = vpack.c.bf16 %v1282, %v1281
      %v1321 = vpack.c.bf16 %v1284, %v1283
      %v1322 = vpack.c.bf16 %v1286, %v1285
      %1323 = vmatprep.subr.bf16.mxu0 0
      %1324 = vmatpush1.bf16.msra.mxu0 %v1291
      %1325 = vmatprep.subr.bf16.mxu0 0
      %1326 = vmatpush1.bf16.msra.mxu0 %v1292
      %1327 = vmatprep.subr.bf16.mxu0 0
      %1328 = vmatpush1.bf16.msra.mxu0 %v1293
      %1329 = vmatprep.subr.bf16.mxu0 0
      %1330 = vmatpush1.bf16.msra.mxu0 %v1294
      %1331 = vmatprep.subr.bf16.mxu0 0
      %1332 = vmatpush1.bf16.msra.mxu0 %v1295
      %1333 = vmatprep.subr.bf16.mxu0 0
      %1334 = vmatpush1.bf16.msra.mxu0 %v1296
      %1335 = vmatprep.subr.bf16.mxu0 0
      %1336 = vmatpush1.bf16.msra.mxu0 %v1297
      %1337 = vmatprep.subr.bf16.mxu0 0
      %1338 = vmatpush1.bf16.msra.mxu0 %v1298
      %1339 = vmatprep.subr.bf16.mxu0 0
      %1340 = vmatpush1.bf16.msra.mxu0 %v1299
      %1341 = vmatprep.subr.bf16.mxu0 0
      %1342 = vmatpush1.bf16.msra.mxu0 %v1300
      %1343 = vmatprep.subr.bf16.mxu0 0
      %1344 = vmatpush1.bf16.msra.mxu0 %v1301
      %1345 = vmatprep.subr.bf16.mxu0 0
      %1346 = vmatpush1.bf16.msra.mxu0 %v1302
      %1347 = vmatprep.subr.bf16.mxu0 0
      %1348 = vmatpush1.bf16.msra.mxu0 %v1303
      %1349 = vmatprep.subr.bf16.mxu0 0
      %1350 = vmatpush1.bf16.msra.mxu0 %v1304
      %1351 = vmatprep.subr.bf16.mxu0 0
      %1352 = vmatpush1.bf16.msra.mxu0 %v1305
      %1353 = vmatprep.subr.bf16.mxu0 0
      %1354 = vmatpush1.bf16.msra.mxu0 %v1306
      %1355 = vmatprep.mubr.bf16.mxu0 %v1288
      %1356 = vmatmul.mubr.bf16.gmra.mrb[0].mxu0 %v1287
      %v1357 = vpop.f32.mrb[0].mxu0
      %v1358 = vadd.f32 0.0, %v1357
      %v1359 = vpop.f32.mrb[0].mxu0
      %v1360 = vpop.f32.mrb[0].mxu0
      %v1361 = vpop.f32.mrb[0].mxu0
      %1362 = vdwg.mxu0
      %1363 = vmatprep.subr.bf16.mxu0 0
      %1364 = vmatpush1.bf16.msra.mxu0 %v1307
      %1365 = vmatprep.subr.bf16.mxu0 0
      %1366 = vmatpush1.bf16.msra.mxu0 %v1308
      %1367 = vmatprep.subr.bf16.mxu0 0
      %1368 = vmatpush1.bf16.msra.mxu0 %v1309
      %1369 = vmatprep.subr.bf16.mxu0 0
      %1370 = vmatpush1.bf16.msra.mxu0 %v1310
      %1371 = vmatprep.subr.bf16.mxu0 0
      %1372 = vmatpush1.bf16.msra.mxu0 %v1311
      %1373 = vmatprep.subr.bf16.mxu0 0
      %1374 = vmatpush1.bf16.msra.mxu0 %v1312
      %1375 = vmatprep.subr.bf16.mxu0 0
      %1376 = vmatpush1.bf16.msra.mxu0 %v1313
      %1377 = vmatprep.subr.bf16.mxu0 0
      %1378 = vmatpush1.bf16.msra.mxu0 %v1314
      %1379 = vmatprep.subr.bf16.mxu0 0
      %1380 = vmatpush1.bf16.msra.mxu0 %v1315
      %1381 = vmatprep.subr.bf16.mxu0 0
      %1382 = vmatpush1.bf16.msra.mxu0 %v1316
      %1383 = vmatprep.subr.bf16.mxu0 0
      %1384 = vmatpush1.bf16.msra.mxu0 %v1317
      %1385 = vmatprep.subr.bf16.mxu0 0
      %1386 = vmatpush1.bf16.msra.mxu0 %v1318
      %1387 = vmatprep.subr.bf16.mxu0 0
      %1388 = vmatpush1.bf16.msra.mxu0 %v1319
      %1389 = vmatprep.subr.bf16.mxu0 0
      %1390 = vmatpush1.bf16.msra.mxu0 %v1320
      %1391 = vmatprep.subr.bf16.mxu0 0
      %1392 = vmatpush1.bf16.msra.mxu0 %v1321
      %1393 = vmatprep.subr.bf16.mxu0 0
      %1394 = vmatpush1.bf16.msra.mxu0 %v1322
      %1395 = vmatprep.mubr.bf16.mxu0 %v1290
      %1396 = vmatmul.mubr.bf16.gmra.mrb[0].mxu0 %v1289
      %v1397 = vpop.f32.mrb[0].mxu0
      %v1398 = vadd.f32 %v1358, %v1397
      %v1399 = vpop.f32.mrb[0].mxu0
      %v1400 = vpop.f32.mrb[0].mxu0
      %v1401 = vpop.f32.mrb[0].mxu0
      %1402 = vdwg.mxu0
      %v1403 = vadd.f32 %v962, %v1398
      %v1404 = vld [vmem:[%s12] sm:$0x1]
      %v1406 = vlaneseq
      %v1407 = vshrl.u32 %v1406, 7
      %v1408 = vsub.s32 0, %v1407
      %v1409 = vrot.slane %v1404, %v1408
      %v1411 = vadd.f32 %v1403, %v1409
      %1412 = vst [vmem:[%s435] sm:$0xff] %v1411
      %p1413 = scmp.lt.s32.totalorder %s24, 1
      %s1414 = scalar_select %p1413, %s24, 1
      %s1415 = smul.addr %s1414, 8
      %s1416 = scalar_lea.vmem %s13, %s1415
      // Predicated region
      $region73: #{_lambda_.9} parent=71 // pred_check
        %p1417 = pneg %p320
      $region74: #{_lambda_.9} parent=71 // pred_check_branch
        %1419 = sbr.rel (%p1417) target = $region76
      $region75: #{_lambda_.9} parent=71 // pred_region
        _
      $region76: #{_lambda_.9} parent=71 // pred_fallthru
        _
    $region72: #{_lambda_.9} parent=5 // pred_fallthru
      _
    %p1420 = scmp.le.s32.totalorder 2, %s19
    // Predicated region
    $region77: #{_lambda_.9} parent=5 // pred_check
      %p1421 = pneg %p1420
    $region78: #{_lambda_.9} parent=5 // pred_check_branch
      %1423 = sbr.rel (%p1421) target = $region80
    $region79: #{_lambda_.9} parent=5 // pred_region
      %s1424 = ssub.s32 %s19, 2
      // Predicated region
      $region81: #{_lambda_.9} parent=79 // pred_check
        %p1425 = pneg %p326
      $region82: #{_lambda_.9} parent=79 // pred_check_branch
        %1427 = sbr.rel (%p1425) target = $region84
      $region83: #{_lambda_.9} parent=79 // pred_region
        %p1428 = scmp.lt.s32.totalorder %s25, 1
        %s1429 = scalar_select %p1428, %s25, 1
        %s1430 = smul.addr %s1429, 8
        %s1431 = scalar_lea.vmem %s13, %s1430
      $region84: #{_lambda_.9} parent=79 // pred_fallthru
        _
    $region80: #{_lambda_.9} parent=5 // pred_fallthru
      _
  $region6: #{_lambda_.9} parent=0 // loop_footer
    %s23 = sadd.s32 1, %s19
  $region7: #{_lambda_.9} parent=0 // loop_footer_branch
    %18 = sbr.rel target = $region3
  $region8: #{_lambda_.9} parent=0 // loop_exit
    _

// kernel: _lambda_.11
$region0: #{_lambda_.11}
  #allocation0 [shape = 'u32[]', space=smem, size = 0x4, offset = 0x4, fixed_abs, tag = 'smem constant byte address 0x4 - core index']
  #allocation1 [shape = 'u32[144,128]{1,0:T(1,128)}', space=vmem, size = 0x12000, scoped, tag = 'internal scratch']
  %s0 = inlined_call_operand.vmem [shape: f32[2,128], index: 0, kind: input, shape index: {}]
  %s1 = inlined_call_operand.vmem [shape: f32[1,128], index: 1, kind: input, shape index: {}]
  %s2 = inlined_call_operand.vmem [shape: f32[1,128], index: 2, kind: input, shape index: {}]
  %s3 = inlined_call_operand.vmem [shape: f32[128,128], index: 3, kind: input, shape index: {}]
  %s4 = inlined_call_operand.vmem [shape: f32[2,128], index: 4, kind: input, shape index: {}]
  %s5 = inlined_call_operand.vmem [shape: f32[1,128], index: 5, kind: input, shape index: {}]
  %s6 = inlined_call_operand.vmem [shape: f32[1,128], index: 6, kind: input, shape index: {}]
  %s7 = inlined_call_operand.vmem [shape: f32[128,128], index: 7, kind: input, shape index: {}]
  %s8 = inlined_call_operand.vmem [shape: f32[256,128], index: 8, kind: input, shape index: {}]
  %s9 = inlined_call_operand.vmem [shape: f32[1,128], index: 9, kind: input, shape index: {}]
  %s10 = inlined_call_operand.vmem [shape: f32[128,128], index: 10, kind: input, shape index: {}]
  %s11 = inlined_call_operand.vmem [shape: f32[1,128], index: 11, kind: input, shape index: {}]
  %s12 = inlined_call_operand.hbm [shape: f32[2,128], index: 12, kind: output, shape index: {0}]
  %s13 = inlined_call_operand.hbm [shape: f32[2,128], index: 13, kind: output, shape index: {1}]
  %s14 = inlined_call_operand.hbm [shape: f32[2,128], index: 14, kind: output, shape index: {2}]
  %15 = xla_tuple %s12, %s13, %s14
  %s16 = sld [smem:[#allocation0]]
  $region74: #{_lambda_.11} parent=0
    _
  %s18 = ssub.s32 1, %s16
  %s19 = scalar_select 0, %s18, %s16
  $region1: #{_lambda_.11} parent=0
    #allocation2 [shape = 'u8[1024]{0}', space=vmem, size = 0x400, scoped, tag = 'output window, operand 0, single buffered']
    #allocation3 [shape = 's32[1]{0}', space=sflag, size = 0x4, scoped, tag = 'scoped memory for _lambda_.11']
    #allocation4 [shape = 'u8[1024]{0}', space=vmem, size = 0x400, scoped, tag = 'output window, operand 1, single buffered']
    #allocation5 [shape = 's32[1]{0}', space=sflag, size = 0x4, scoped, tag = 'scoped memory for _lambda_.11']
    #allocation6 [shape = 'u8[1024]{0}', space=vmem, size = 0x400, scoped, tag = 'output window, operand 2, single buffered']
    %20 = vsyncpa [#allocation3], 0
    %21 = vsyncpa [#allocation5], 0
    // Predicated region
    $region2: #{_lambda_.11} parent=1 // pred_check
      _
    $region3: #{_lambda_.11} parent=1 // pred_check_branch
      %23 = sbr.rel (0) target = $region5
    $region4: #{_lambda_.11} parent=1 // pred_region
      _
    $region5: #{_lambda_.11} parent=1 // pred_fallthru
      _
    // Predicated region
    $region6: #{_lambda_.11} parent=1 // pred_check
      _
    $region7: #{_lambda_.11} parent=1 // pred_check_branch
      %25 = sbr.rel (0) target = $region9
    $region8: #{_lambda_.11} parent=1 // pred_region
      _
    $region9: #{_lambda_.11} parent=1 // pred_fallthru
      _
    // Predicated region
    $region10: #{_lambda_.11} parent=1 // pred_check
      _
    $region11: #{_lambda_.11} parent=1 // pred_check_branch
      %27 = sbr.rel (0) target = $region13
    $region12: #{_lambda_.11} parent=1 // pred_region
      _
    $region13: #{_lambda_.11} parent=1 // pred_fallthru
      _
    // Predicated region
    $region14: #{_lambda_.11} parent=1 // pred_check
      _
    $region15: #{_lambda_.11} parent=1 // pred_check_branch
      %29 = sbr.rel (0) target = $region17
    $region16: #{_lambda_.11} parent=1 // pred_region
      _
    $region17: #{_lambda_.11} parent=1 // pred_fallthru
      _
    // Predicated region
    $region18: #{_lambda_.11} parent=1 // pred_check
      _
    $region19: #{_lambda_.11} parent=1 // pred_check_branch
      %31 = sbr.rel (0) target = $region21
    $region20: #{_lambda_.11} parent=1 // pred_region
      _
    $region21: #{_lambda_.11} parent=1 // pred_fallthru
      _
    // Predicated region
    $region22: #{_lambda_.11} parent=1 // pred_check
      _
    $region23: #{_lambda_.11} parent=1 // pred_check_branch
      %33 = sbr.rel (0) target = $region25
    $region24: #{_lambda_.11} parent=1 // pred_region
      _
    $region25: #{_lambda_.11} parent=1 // pred_fallthru
      _
    // Predicated region
    $region26: #{_lambda_.11} parent=1 // pred_check
      _
    $region27: #{_lambda_.11} parent=1 // pred_check_branch
      %35 = sbr.rel (0) target = $region29
    $region28: #{_lambda_.11} parent=1 // pred_region
      _
    $region29: #{_lambda_.11} parent=1 // pred_fallthru
      _
    // Predicated region
    $region30: #{_lambda_.11} parent=1 // pred_check
      _
    $region31: #{_lambda_.11} parent=1 // pred_check_branch
      %37 = sbr.rel (0) target = $region33
    $region32: #{_lambda_.11} parent=1 // pred_region
      _
    $region33: #{_lambda_.11} parent=1 // pred_fallthru
      _
    // Predicated region
    $region34: #{_lambda_.11} parent=1 // pred_check
      _
    $region35: #{_lambda_.11} parent=1 // pred_check_branch
      %39 = sbr.rel (0) target = $region37
    $region36: #{_lambda_.11} parent=1 // pred_region
      _
    $region37: #{_lambda_.11} parent=1 // pred_fallthru
      _
    // Predicated region
    $region38: #{_lambda_.11} parent=1 // pred_check
      _
    $region39: #{_lambda_.11} parent=1 // pred_check_branch
      %41 = sbr.rel (0) target = $region41
    $region40: #{_lambda_.11} parent=1 // pred_region
      _
    $region41: #{_lambda_.11} parent=1 // pred_fallthru
      _
    // Predicated region
    $region42: #{_lambda_.11} parent=1 // pred_check
      _
    $region43: #{_lambda_.11} parent=1 // pred_check_branch
      %43 = sbr.rel (0) target = $region45
    $region44: #{_lambda_.11} parent=1 // pred_region
      _
    $region45: #{_lambda_.11} parent=1 // pred_fallthru
      _
    // Predicated region
    $region46: #{_lambda_.11} parent=1 // pred_check
      _
    $region47: #{_lambda_.11} parent=1 // pred_check_branch
      %45 = sbr.rel (0) target = $region49
    $region48: #{_lambda_.11} parent=1 // pred_region
      _
    $region49: #{_lambda_.11} parent=1 // pred_fallthru
      _
    %v47 = vld [vmem:[%s0] sm:$0x3]
    %v48 = vld [vmem:[%s1] sm:$0x1]
    %v49 = vld [vmem:[%s2] sm:$0x1]
    %vm50 = vcmask 1041408
    %v51 = vsel %vm50, %v47, 0.0
    %52 = vadd.xlane.f32.xlu0 %v51
    %v53 = vpop.xlane.xlu0 %52
    %v54 = vmul.f32 %v53, 0.0078125
    %v55 = vsub.f32 %v47, %v54
    %v56 = vmul.f32 %v55, %v55
    %v57 = vsel %vm50, %v56, 0.0
    %58 = vadd.xlane.f32.xlu0 %v57
    %v59 = vpop.xlane.xlu0 %58
    %v60 = vmul.f32 %v59, 0.0078125
    %v61 = vadd.f32 %v60, 1e-05
    %v62 = vrsqrt.pop %v61
    %v63 = vmul.f32 %v55, %v62
    %v65 = vlaneseq
    %v66 = vshrl.u32 %v65, 7
    %v67 = vsub.s32 0, %v66
    %v68 = vrot.slane %v48, %v67
    %v70 = vmul.f32 %v63, %v68
    %v72 = vlaneseq
    %v73 = vshrl.u32 %v72, 7
    %v74 = vsub.s32 0, %v73
    %v75 = vrot.slane %v49, %v74
    %v77 = vadd.f32 %v70, %v75
    %v78 = vld [vmem:[%s3] sm:$0xff]
    %v79 = vld [vmem:[%s3 + $0x8] sm:$0xff]
    %v80 = vld [vmem:[%s3 + $0x10] sm:$0xff]
    %v81 = vld [vmem:[%s3 + $0x18] sm:$0xff]
    %v82 = vld [vmem:[%s3 + $0x20] sm:$0xff]
    %v83 = vld [vmem:[%s3 + $0x28] sm:$0xff]
    %v84 = vld [vmem:[%s3 + $0x30] sm:$0xff]
    %v85 = vld [vmem:[%s3 + $0x38] sm:$0xff]
    %v86 = vld [vmem:[%s3 + $0x40] sm:$0xff]
    %v87 = vld [vmem:[%s3 + $0x48] sm:$0xff]
    %v88 = vld [vmem:[%s3 + $0x50] sm:$0xff]
    %v89 = vld [vmem:[%s3 + $0x58] sm:$0xff]
    %v90 = vld [vmem:[%s3 + $0x60] sm:$0xff]
    %v91 = vld [vmem:[%s3 + $0x68] sm:$0xff]
    %v92 = vld [vmem:[%s3 + $0x70] sm:$0xff]
    %v93 = vld [vmem:[%s3 + $0x78] sm:$0xff]
    %v94 = vpack.c.bf16 %v77, %v77
    %v95 = vpack.c.bf16 %v79, %v78
    %v96 = vpack.c.bf16 %v81, %v80
    %v97 = vpack.c.bf16 %v83, %v82
    %v98 = vpack.c.bf16 %v85, %v84
    %v99 = vpack.c.bf16 %v87, %v86
    %v100 = vpack.c.bf16 %v89, %v88
    %v101 = vpack.c.bf16 %v91, %v90
    %v102 = vpack.c.bf16 %v93, %v92
    %103 = vmatprep.subr.bf16.mxu0 0
    %104 = vmatpush1.bf16.msra.mxu0 %v95
    %105 = vmatprep.subr.bf16.mxu0 0
    %106 = vmatpush1.bf16.msra.mxu0 %v96
    %107 = vmatprep.subr.bf16.mxu0 0
    %108 = vmatpush1.bf16.msra.mxu0 %v97
    %109 = vmatprep.subr.bf16.mxu0 0
    %110 = vmatpush1.bf16.msra.mxu0 %v98
    %111 = vmatprep.subr.bf16.mxu0 0
    %112 = vmatpush1.bf16.msra.mxu0 %v99
    %113 = vmatprep.subr.bf16.mxu0 0
    %114 = vmatpush1.bf16.msra.mxu0 %v100
    %115 = vmatprep.subr.bf16.mxu0 0
    %116 = vmatpush1.bf16.msra.mxu0 %v101
    %117 = vmatprep.subr.bf16.mxu0 0
    %118 = vmatpush1.bf16.msra.mxu0 %v102
    %119 = vmatprep.subr.bf16.mxu0 0
    %120 = vmatpush1.bf16.msra.mxu0 0
    %121 = vmatprep.subr.bf16.mxu0 0
    %122 = vmatpush1.bf16.msra.mxu0 0
    %123 = vmatprep.subr.bf16.mxu0 0
    %124 = vmatpush1.bf16.msra.mxu0 0
    %125 = vmatprep.subr.bf16.mxu0 0
    %126 = vmatpush1.bf16.msra.mxu0 0
    %127 = vmatprep.subr.bf16.mxu0 0
    %128 = vmatpush1.bf16.msra.mxu0 0
    %129 = vmatprep.subr.bf16.mxu0 0
    %130 = vmatpush1.bf16.msra.mxu0 0
    %131 = vmatprep.subr.bf16.mxu0 0
    %132 = vmatpush1.bf16.msra.mxu0 0
    %133 = vmatprep.subr.bf16.mxu0 0
    %134 = vmatpush1.bf16.msra.mxu0 0
    %135 = vmatprep.mubr.bf16.mxu0 0
    %136 = vmatmul.mubr.bf16.gmra.mrb[0].mxu0 %v94
    %v137 = vpop.f32.mrb[0].mxu0
    %v138 = vadd.f32 0.0, %v137
    %v139 = vpop.f32.mrb[0].mxu0
    %v140 = vpop.f32.mrb[0].mxu0
    %v141 = vpop.f32.mrb[0].mxu0
    %142 = vdwg.mxu0
    %v143 = vld [vmem:[%s4] sm:$0x3]
    %v144 = vld [vmem:[%s5] sm:$0x1]
    %v145 = vld [vmem:[%s6] sm:$0x1]
    %v146 = vsel %vm50, %v143, 0.0
    %147 = vadd.xlane.f32.xlu0 %v146
    %v148 = vpop.xlane.xlu0 %147
    %v149 = vmul.f32 %v148, 0.0078125
    %v150 = vsub.f32 %v143, %v149
    %v151 = vmul.f32 %v150, %v150
    %v152 = vsel %vm50, %v151, 0.0
    %153 = vadd.xlane.f32.xlu0 %v152
    %v154 = vpop.xlane.xlu0 %153
    %v155 = vmul.f32 %v154, 0.0078125
    %v156 = vadd.f32 %v155, 1e-05
    %v157 = vrsqrt.pop %v156
    %v158 = vmul.f32 %v150, %v157
    %v160 = vlaneseq
    %v161 = vshrl.u32 %v160, 7
    %v162 = vsub.s32 0, %v161
    %v163 = vrot.slane %v144, %v162
    %v165 = vmul.f32 %v158, %v163
    %v167 = vlaneseq
    %v168 = vshrl.u32 %v167, 7
    %v169 = vsub.s32 0, %v168
    %v170 = vrot.slane %v145, %v169
    %v172 = vadd.f32 %v165, %v170
    %v173 = vld [vmem:[%s7] sm:$0xff]
    %v174 = vld [vmem:[%s7 + $0x8] sm:$0xff]
    %v175 = vld [vmem:[%s7 + $0x10] sm:$0xff]
    %v176 = vld [vmem:[%s7 + $0x18] sm:$0xff]
    %v177 = vld [vmem:[%s7 + $0x20] sm:$0xff]
    %v178 = vld [vmem:[%s7 + $0x28] sm:$0xff]
    %v179 = vld [vmem:[%s7 + $0x30] sm:$0xff]
    %v180 = vld [vmem:[%s7 + $0x38] sm:$0xff]
    %v181 = vld [vmem:[%s7 + $0x40] sm:$0xff]
    %v182 = vld [vmem:[%s7 + $0x48] sm:$0xff]
    %v183 = vld [vmem:[%s7 + $0x50] sm:$0xff]
    %v184 = vld [vmem:[%s7 + $0x58] sm:$0xff]
    %v185 = vld [vmem:[%s7 + $0x60] sm:$0xff]
    %v186 = vld [vmem:[%s7 + $0x68] sm:$0xff]
    %v187 = vld [vmem:[%s7 + $0x70] sm:$0xff]
    %v188 = vld [vmem:[%s7 + $0x78] sm:$0xff]
    %v189 = vpack.c.bf16 %v172, %v172
    %v190 = vpack.c.bf16 %v174, %v173
    %v191 = vpack.c.bf16 %v176, %v175
    %v192 = vpack.c.bf16 %v178, %v177
    %v193 = vpack.c.bf16 %v180, %v179
    %v194 = vpack.c.bf16 %v182, %v181
    %v195 = vpack.c.bf16 %v184, %v183
    %v196 = vpack.c.bf16 %v186, %v185
    %v197 = vpack.c.bf16 %v188, %v187
    %198 = vmatprep.subr.bf16.mxu0 0
    %199 = vmatpush1.bf16.msra.mxu0 %v190
    %200 = vmatprep.subr.bf16.mxu0 0
    %201 = vmatpush1.bf16.msra.mxu0 %v191
    %202 = vmatprep.subr.bf16.mxu0 0
    %203 = vmatpush1.bf16.msra.mxu0 %v192
    %204 = vmatprep.subr.bf16.mxu0 0
    %205 = vmatpush1.bf16.msra.mxu0 %v193
    %206 = vmatprep.subr.bf16.mxu0 0
    %207 = vmatpush1.bf16.msra.mxu0 %v194
    %208 = vmatprep.subr.bf16.mxu0 0
    %209 = vmatpush1.bf16.msra.mxu0 %v195
    %210 = vmatprep.subr.bf16.mxu0 0
    %211 = vmatpush1.bf16.msra.mxu0 %v196
    %212 = vmatprep.subr.bf16.mxu0 0
    %213 = vmatpush1.bf16.msra.mxu0 %v197
    %214 = vmatprep.subr.bf16.mxu0 0
    %215 = vmatpush1.bf16.msra.mxu0 0
    %216 = vmatprep.subr.bf16.mxu0 0
    %217 = vmatpush1.bf16.msra.mxu0 0
    %218 = vmatprep.subr.bf16.mxu0 0
    %219 = vmatpush1.bf16.msra.mxu0 0
    %220 = vmatprep.subr.bf16.mxu0 0
    %221 = vmatpush1.bf16.msra.mxu0 0
    %222 = vmatprep.subr.bf16.mxu0 0
    %223 = vmatpush1.bf16.msra.mxu0 0
    %224 = vmatprep.subr.bf16.mxu0 0
    %225 = vmatpush1.bf16.msra.mxu0 0
    %226 = vmatprep.subr.bf16.mxu0 0
    %227 = vmatpush1.bf16.msra.mxu0 0
    %228 = vmatprep.subr.bf16.mxu0 0
    %229 = vmatpush1.bf16.msra.mxu0 0
    %230 = vmatprep.mubr.bf16.mxu0 0
    %231 = vmatmul.mubr.bf16.gmra.mrb[0].mxu0 %v189
    %v232 = vpop.f32.mrb[0].mxu0
    %v233 = vadd.f32 0.0, %v232
    %v234 = vpop.f32.mrb[0].mxu0
    %v235 = vpop.f32.mrb[0].mxu0
    %v236 = vpop.f32.mrb[0].mxu0
    %237 = vdwg.mxu0
    %v238 = vld [vmem:[%s8] sm:$0xff]
    %v239 = vld [vmem:[%s8 + $0x8] sm:$0xff]
    %v240 = vld [vmem:[%s8 + $0x10] sm:$0xff]
    %v241 = vld [vmem:[%s8 + $0x18] sm:$0xff]
    %v242 = vld [vmem:[%s8 + $0x20] sm:$0xff]
    %v243 = vld [vmem:[%s8 + $0x28] sm:$0xff]
    %v244 = vld [vmem:[%s8 + $0x30] sm:$0xff]
    %v245 = vld [vmem:[%s8 + $0x38] sm:$0xff]
    %v246 = vld [vmem:[%s8 + $0x40] sm:$0xff]
    %v247 = vld [vmem:[%s8 + $0x48] sm:$0xff]
    %v248 = vld [vmem:[%s8 + $0x50] sm:$0xff]
    %v249 = vld [vmem:[%s8 + $0x58] sm:$0xff]
    %v250 = vld [vmem:[%s8 + $0x60] sm:$0xff]
    %v251 = vld [vmem:[%s8 + $0x68] sm:$0xff]
    %v252 = vld [vmem:[%s8 + $0x70] sm:$0xff]
    %v253 = vld [vmem:[%s8 + $0x78] sm:$0xff]
    %v254 = vpack.c.bf16 %v138, %v138
    %v255 = vpack.c.bf16 %v239, %v238
    %v256 = vpack.c.bf16 %v241, %v240
    %v257 = vpack.c.bf16 %v243, %v242
    %v258 = vpack.c.bf16 %v245, %v244
    %v259 = vpack.c.bf16 %v247, %v246
    %v260 = vpack.c.bf16 %v249, %v248
    %v261 = vpack.c.bf16 %v251, %v250
    %v262 = vpack.c.bf16 %v253, %v252
    %v263 = vld [vmem:[%s8 + $0x80] sm:$0xff]
    %v264 = vld [vmem:[%s8 + $0x88] sm:$0xff]
    %v265 = vld [vmem:[%s8 + $0x90] sm:$0xff]
    %v266 = vld [vmem:[%s8 + $0x98] sm:$0xff]
    %v267 = vld [vmem:[%s8 + $0xa0] sm:$0xff]
    %v268 = vld [vmem:[%s8 + $0xa8] sm:$0xff]
    %v269 = vld [vmem:[%s8 + $0xb0] sm:$0xff]
    %v270 = vld [vmem:[%s8 + $0xb8] sm:$0xff]
    %v271 = vld [vmem:[%s8 + $0xc0] sm:$0xff]
    %v272 = vld [vmem:[%s8 + $0xc8] sm:$0xff]
    %v273 = vld [vmem:[%s8 + $0xd0] sm:$0xff]
    %v274 = vld [vmem:[%s8 + $0xd8] sm:$0xff]
    %v275 = vld [vmem:[%s8 + $0xe0] sm:$0xff]
    %v276 = vld [vmem:[%s8 + $0xe8] sm:$0xff]
    %v277 = vld [vmem:[%s8 + $0xf0] sm:$0xff]
    %v278 = vld [vmem:[%s8 + $0xf8] sm:$0xff]
    %v279 = vpack.c.bf16 %v233, %v233
    %v280 = vpack.c.bf16 %v264, %v263
    %v281 = vpack.c.bf16 %v266, %v265
    %v282 = vpack.c.bf16 %v268, %v267
    %v283 = vpack.c.bf16 %v270, %v269
    %v284 = vpack.c.bf16 %v272, %v271
    %v285 = vpack.c.bf16 %v274, %v273
    %v286 = vpack.c.bf16 %v276, %v275
    %v287 = vpack.c.bf16 %v278, %v277
    %288 = vmatprep.subr.bf16.mxu0 0
    %289 = vmatpush1.bf16.msra.mxu0 %v280
    %290 = vmatprep.subr.bf16.mxu0 0
    %291 = vmatpush1.bf16.msra.mxu0 %v281
    %292 = vmatprep.subr.bf16.mxu0 0
    %293 = vmatpush1.bf16.msra.mxu0 %v282
    %294 = vmatprep.subr.bf16.mxu0 0
    %295 = vmatpush1.bf16.msra.mxu0 %v283
    %296 = vmatprep.subr.bf16.mxu0 0
    %297 = vmatpush1.bf16.msra.mxu0 %v284
    %298 = vmatprep.subr.bf16.mxu0 0
    %299 = vmatpush1.bf16.msra.mxu0 %v285
    %300 = vmatprep.subr.bf16.mxu0 0
    %301 = vmatpush1.bf16.msra.mxu0 %v286
    %302 = vmatprep.subr.bf16.mxu0 0
    %303 = vmatpush1.bf16.msra.mxu0 %v287
    %304 = vmatprep.subr.bf16.mxu0 0
    %305 = vmatpush1.bf16.msra.mxu0 0
    %306 = vmatprep.subr.bf16.mxu0 0
    %307 = vmatpush1.bf16.msra.mxu0 0
    %308 = vmatprep.subr.bf16.mxu0 0
    %309 = vmatpush1.bf16.msra.mxu0 0
    %310 = vmatprep.subr.bf16.mxu0 0
    %311 = vmatpush1.bf16.msra.mxu0 0
    %312 = vmatprep.subr.bf16.mxu0 0
    %313 = vmatpush1.bf16.msra.mxu0 0
    %314 = vmatprep.subr.bf16.mxu0 0
    %315 = vmatpush1.bf16.msra.mxu0 0
    %316 = vmatprep.subr.bf16.mxu0 0
    %317 = vmatpush1.bf16.msra.mxu0 0
    %318 = vmatprep.subr.bf16.mxu0 0
    %319 = vmatpush1.bf16.msra.mxu0 0
    %320 = vmatprep.mubr.bf16.mxu0 0
    %321 = vmatmul.mubr.bf16.gmra.mrb[0].mxu0 %v279
    %v322 = vpop.f32.mrb[0].mxu0
    %v323 = vadd.f32 0.0, %v322
    %v324 = vpop.f32.mrb[0].mxu0
    %v325 = vpop.f32.mrb[0].mxu0
    %v326 = vpop.f32.mrb[0].mxu0
    %327 = vdwg.mxu0
    %328 = vmatprep.subr.bf16.mxu0 0
    %329 = vmatpush1.bf16.msra.mxu0 %v255
    %330 = vmatprep.subr.bf16.mxu0 0
    %331 = vmatpush1.bf16.msra.mxu0 %v256
    %332 = vmatprep.subr.bf16.mxu0 0
    %333 = vmatpush1.bf16.msra.mxu0 %v257
    %334 = vmatprep.subr.bf16.mxu0 0
    %335 = vmatpush1.bf16.msra.mxu0 %v258
    %336 = vmatprep.subr.bf16.mxu0 0
    %337 = vmatpush1.bf16.msra.mxu0 %v259
    %338 = vmatprep.subr.bf16.mxu0 0
    %339 = vmatpush1.bf16.msra.mxu0 %v260
    %340 = vmatprep.subr.bf16.mxu0 0
    %341 = vmatpush1.bf16.msra.mxu0 %v261
    %342 = vmatprep.subr.bf16.mxu0 0
    %343 = vmatpush1.bf16.msra.mxu0 %v262
    %344 = vmatprep.subr.bf16.mxu0 0
    %345 = vmatpush1.bf16.msra.mxu0 0
    %346 = vmatprep.subr.bf16.mxu0 0
    %347 = vmatpush1.bf16.msra.mxu0 0
    %348 = vmatprep.subr.bf16.mxu0 0
    %349 = vmatpush1.bf16.msra.mxu0 0
    %350 = vmatprep.subr.bf16.mxu0 0
    %351 = vmatpush1.bf16.msra.mxu0 0
    %352 = vmatprep.subr.bf16.mxu0 0
    %353 = vmatpush1.bf16.msra.mxu0 0
    %354 = vmatprep.subr.bf16.mxu0 0
    %355 = vmatpush1.bf16.msra.mxu0 0
    %356 = vmatprep.subr.bf16.mxu0 0
    %357 = vmatpush1.bf16.msra.mxu0 0
    %358 = vmatprep.subr.bf16.mxu0 0
    %359 = vmatpush1.bf16.msra.mxu0 0
    %360 = vmatprep.mubr.bf16.mxu0 0
    %361 = vmatmul.mubr.bf16.gmra.mrb[0].mxu0 %v254
    %v362 = vpop.f32.mrb[0].mxu0
    %v363 = vadd.f32 %v323, %v362
    %v364 = vpop.f32.mrb[0].mxu0
    %v365 = vpop.f32.mrb[0].mxu0
    %v366 = vpop.f32.mrb[0].mxu0
    %367 = vdwg.mxu0
    %v368 = vld [vmem:[%s9] sm:$0x1]
    %v370 = vlaneseq
    %v371 = vshrl.u32 %v370, 7
    %v372 = vsub.s32 0, %v371
    %v373 = vrot.slane %v368, %v372
    %v375 = vadd.f32 %v363, %v373
    %v376 = vmax.f32 %v375, 0.0
    %v377 = vld [vmem:[%s10] sm:$0xff]
    %v378 = vld [vmem:[%s10 + $0x8] sm:$0xff]
    %v379 = vld [vmem:[%s10 + $0x10] sm:$0xff]
    %v380 = vld [vmem:[%s10 + $0x18] sm:$0xff]
    %v381 = vld [vmem:[%s10 + $0x20] sm:$0xff]
    %v382 = vld [vmem:[%s10 + $0x28] sm:$0xff]
    %v383 = vld [vmem:[%s10 + $0x30] sm:$0xff]
    %v384 = vld [vmem:[%s10 + $0x38] sm:$0xff]
    %v385 = vld [vmem:[%s10 + $0x40] sm:$0xff]
    %v386 = vld [vmem:[%s10 + $0x48] sm:$0xff]
    %v387 = vld [vmem:[%s10 + $0x50] sm:$0xff]
    %v388 = vld [vmem:[%s10 + $0x58] sm:$0xff]
    %v389 = vld [vmem:[%s10 + $0x60] sm:$0xff]
    %v390 = vld [vmem:[%s10 + $0x68] sm:$0xff]
    %v391 = vld [vmem:[%s10 + $0x70] sm:$0xff]
    %v392 = vld [vmem:[%s10 + $0x78] sm:$0xff]
    %v393 = vpack.c.bf16 %v376, %v376
    %v394 = vpack.c.bf16 %v378, %v377
    %v395 = vpack.c.bf16 %v380, %v379
    %v396 = vpack.c.bf16 %v382, %v381
    %v397 = vpack.c.bf16 %v384, %v383
    %v398 = vpack.c.bf16 %v386, %v385
    %v399 = vpack.c.bf16 %v388, %v387
    %v400 = vpack.c.bf16 %v390, %v389
    %v401 = vpack.c.bf16 %v392, %v391
    %v402 = vld [vmem:[%s11] sm:$0x1]
    %v404 = vlaneseq
    %v405 = vshrl.u32 %v404, 7
    %v406 = vsub.s32 0, %v405
    %v407 = vrot.slane %v402, %v406
    %409 = vmatprep.subr.bf16.mxu0 0
    %410 = vmatpush1.bf16.msra.mxu0 %v394
    %411 = vmatprep.subr.bf16.mxu0 0
    %412 = vmatpush1.bf16.msra.mxu0 %v395
    %413 = vmatprep.subr.bf16.mxu0 0
    %414 = vmatpush1.bf16.msra.mxu0 %v396
    %415 = vmatprep.subr.bf16.mxu0 0
    %416 = vmatpush1.bf16.msra.mxu0 %v397
    %417 = vmatprep.subr.bf16.mxu0 0
    %418 = vmatpush1.bf16.msra.mxu0 %v398
    %419 = vmatprep.subr.bf16.mxu0 0
    %420 = vmatpush1.bf16.msra.mxu0 %v399
    %421 = vmatprep.subr.bf16.mxu0 0
    %422 = vmatpush1.bf16.msra.mxu0 %v400
    %423 = vmatprep.subr.bf16.mxu0 0
    %424 = vmatpush1.bf16.msra.mxu0 %v401
    %425 = vmatprep.subr.bf16.mxu0 0
    %426 = vmatpush1.bf16.msra.mxu0 0
    %427 = vmatprep.subr.bf16.mxu0 0
    %428 = vmatpush1.bf16.msra.mxu0 0
    %429 = vmatprep.subr.bf16.mxu0 0
    %430 = vmatpush1.bf16.msra.mxu0 0
    %431 = vmatprep.subr.bf16.mxu0 0
    %432 = vmatpush1.bf16.msra.mxu0 0
    %433 = vmatprep.subr.bf16.mxu0 0
    %434 = vmatpush1.bf16.msra.mxu0 0
    %435 = vmatprep.subr.bf16.mxu0 0
    %436 = vmatpush1.bf16.msra.mxu0 0
    %437 = vmatprep.subr.bf16.mxu0 0
    %438 = vmatpush1.bf16.msra.mxu0 0
    %439 = vmatprep.subr.bf16.mxu0 0
    %440 = vmatpush1.bf16.msra.mxu0 0
    %441 = vmatprep.mubr.bf16.mxu0 0
    %442 = vmatmul.mubr.bf16.gmra.mrb[0].mxu0 %v393
    %v443 = vpop.f32.mrb[0].mxu0
    %v444 = vadd.f32 %v407, %v443
    %v445 = vpop.f32.mrb[0].mxu0
    %v446 = vpop.f32.mrb[0].mxu0
    %v447 = vpop.f32.mrb[0].mxu0
    %448 = vdwg.mxu0
    %449 = vst [vmem:[#allocation2] sm:$0x3] %v444
    %450 = vst [vmem:[#allocation4] sm:$0x3] %v138
    %451 = vst [vmem:[#allocation6] sm:$0x3] %v233
    // Predicated region
    $region50: #{_lambda_.11} parent=1 // pred_check
      _
    $region51: #{_lambda_.11} parent=1 // pred_check_branch
      %453 = sbr.rel (0) target = $region53
    $region52: #{_lambda_.11} parent=1 // pred_region
      %s455 = ssub.s32 32, 32
      %456 = vsyncadd [#allocation3], %s455
      %s458 = sshll.u32 [#allocation2], 4
      %s459 = int_to_ptr.vmem [resolvable:$true] %s458
      %461 = dma.vmem_to_hbm [thread:$0]  %s459, 32, %s12, [#allocation3]
    $region53: #{_lambda_.11} parent=1 // pred_fallthru
      _
    // Predicated region
    $region54: #{_lambda_.11} parent=1 // pred_check
      _
    $region55: #{_lambda_.11} parent=1 // pred_check_branch
      %463 = sbr.rel (0) target = $region57
    $region56: #{_lambda_.11} parent=1 // pred_region
      %s465 = ssub.s32 32, 32
      %466 = vsyncadd [#allocation5], %s465
      %s468 = sshll.u32 [#allocation4], 4
      %s469 = int_to_ptr.vmem [resolvable:$true] %s468
      %471 = dma.vmem_to_hbm [thread:$0]  %s469, 32, %s13, [#allocation5]
    $region57: #{_lambda_.11} parent=1 // pred_fallthru
      _
    // Predicated region
    $region58: #{_lambda_.11} parent=1 // pred_check
      _
    $region59: #{_lambda_.11} parent=1 // pred_check_branch
      %473 = sbr.rel (0) target = $region61
    $region60: #{_lambda_.11} parent=1 // pred_region
      %s475 = ssub.s32 32, 32
      %476 = vsyncadd [#allocation5], %s475
      %s478 = sshll.u32 [#allocation6], 4
      %s479 = int_to_ptr.vmem [resolvable:$true] %s478
      %481 = dma.vmem_to_hbm [thread:$0]  %s479, 32, %s14, [#allocation5]
    $region61: #{_lambda_.11} parent=1 // pred_fallthru
      _
    // Predicated region
    $region62: #{_lambda_.11} parent=1 // pred_check
      _
    $region63: #{_lambda_.11} parent=1 // pred_check_branch
      %483 = sbr.rel (0) target = $region65
    $region64: #{_lambda_.11} parent=1 // pred_region
      %484 = dma.done [#allocation3], 32
    $region65: #{_lambda_.11} parent=1 // pred_fallthru
      _
    // Predicated region
    $region66: #{_lambda_.11} parent=1 // pred_check
      _
    $region67: #{_lambda_.11} parent=1 // pred_check_branch
      %486 = sbr.rel (0) target = $region69
    $region68: #{_lambda_.11} parent=1 // pred_region
      %487 = dma.done [#allocation5], 32
    $region69: #{_lambda_.11} parent=1 // pred_fallthru
      _
    // Predicated region
    $region70: #{_lambda_.11} parent=1 // pred_check
      _
    $region71: #{_lambda_.11} parent=1 // pred_check_branch
      %489 = sbr.rel (0) target = $region73
    $region72: #{_lambda_.11} parent=1 // pred_region
      %490 = dma.done [#allocation5], 32
    $region73: #{_lambda_.11} parent=1 // pred_fallthru
      _
    %491 = vsyncpa [#allocation3], 1
    %492 = vsyncpa [#allocation5], 1

</llo_original>
